<compile_context>
chip_gen: v7x
topology: tpu7x:2x2x1
jax: 0.10.0
libtpu: 0.0.40
codegen_flags: <defaults>
</compile_context>

<pallas_src>
import functools

import jax
import jax.numpy as jnp
from jax.experimental import pallas as pl
from jax.experimental.pallas import tpu as pltpu


# ------------------------------- helpers ------------------------------------ #

def _pick_bblk(B):
    """Batch-block size: largest divisor of B that still yields >= 2 grid steps
    (so the parallel axis can be split across TensorCores)."""
    if B < 2:
        return max(B, 1)
    for cand in range(B // 2, 0, -1):
        if B % cand == 0:
            return cand
    return 1


# --------------------------- fused decoder-layer kernel ---------------------- #

def _decoder_layer_kernel(tgt_ref, mem_ref,
                          w_qkv_ref, b_qkv_ref, wo1_ref, bo1_ref, ln1g_ref, ln1b_ref,
                          wq2_ref, bq2_ref, wkv2_ref, bkv2_ref, wo2_ref, bo2_ref,
                          ln2g_ref, ln2b_ref,
                          w1_ref, b1_ref, w2_ref, b2_ref, ln3g_ref, ln3b_ref,
                          o_ref, *, num_heads, eps, ff_chunk):
    f32 = jnp.float32
    bf16 = jnp.bfloat16
    Bblk, Lt, D = tgt_ref.shape
    Ls = mem_ref.shape[1]
    H = num_heads
    Dh = D // H
    scale = float(Dh) ** -0.5
    M = Bblk * Lt

    def layer_norm(z, g, b):
        mean = jnp.mean(z, axis=-1, keepdims=True)
        c = z - mean
        var = jnp.mean(c * c, axis=-1, keepdims=True)
        return c * jax.lax.rsqrt(var + eps) * g + b

    def attention_out_proj(q2, k3, v3, wo_ref):
        # q2: [M, D] f32 (unscaled); k3/v3: [Bblk, Lkv, D] f32.
        # Returns concat_heads(softmax(q k^T / sqrt(Dh)) v) @ Wo  as [M, D] f32,
        # with the head-concat folded into per-head out-proj accumulation.
        q3 = q2.reshape(Bblk, Lt, D)
        acc = jnp.zeros((M, D), f32)
        for h in range(H):                      # static head loop (H small)
            sl = slice(h * Dh, (h + 1) * Dh)
            qh = q3[:, :, sl].astype(bf16)      # [Bblk, Lt, Dh]
            kh = k3[:, :, sl].astype(bf16)      # [Bblk, Lkv, Dh]
            vh = v3[:, :, sl].astype(bf16)      # [Bblk, Lkv, Dh]
            s = jnp.einsum('bqd,bkd->bqk', qh, kh,
                           preferred_element_type=f32) * scale   # [Bblk, Lt, Lkv]
            s = s - jnp.max(s, axis=-1, keepdims=True)
            p = jnp.exp(s)
            p = p * pl.reciprocal(jnp.sum(p, axis=-1, keepdims=True), approx=True)
            oh = jnp.einsum('bqk,bkd->bqd', p.astype(bf16), vh,
                            preferred_element_type=f32)          # [Bblk, Lt, Dh]
            acc = acc + jnp.dot(oh.reshape(M, Dh).astype(bf16), wo_ref[sl, :],
                                preferred_element_type=f32)
        return acc

    x = tgt_ref[...].reshape(M, D)                       # [M, D] f32
    mem = mem_ref[...].reshape(Bblk * Ls, D)             # [Bblk*Ls, D] f32

    # ---------------- self attention + residual + LN1 ----------------
    qkv = jnp.dot(x.astype(bf16), w_qkv_ref[...],
                  preferred_element_type=f32) + b_qkv_ref[...]   # [M, 3D]
    q = qkv[:, :D]
    k3 = qkv[:, D:2 * D].reshape(Bblk, Lt, D)
    v3 = qkv[:, 2 * D:].reshape(Bblk, Lt, D)
    sa = attention_out_proj(q, k3, v3, wo1_ref) + bo1_ref[...]
    x = layer_norm(x + sa, ln1g_ref[...], ln1b_ref[...])

    # --------------- cross attention + residual + LN2 ----------------
    qc = jnp.dot(x.astype(bf16), wq2_ref[...],
                 preferred_element_type=f32) + bq2_ref[...]      # [M, D]
    kv = jnp.dot(mem.astype(bf16), wkv2_ref[...],
                 preferred_element_type=f32) + bkv2_ref[...]     # [Bblk*Ls, 2D]
    kc3 = kv[:, :D].reshape(Bblk, Ls, D)
    vc3 = kv[:, D:].reshape(Bblk, Ls, D)
    ca = attention_out_proj(qc, kc3, vc3, wo2_ref) + bo2_ref[...]
    y = layer_norm(x + ca, ln2g_ref[...], ln2b_ref[...])

    # --------------------- FFN + residual + LN3 ----------------------
    Fdim = w1_ref.shape[1]
    step = min(ff_chunk, Fdim)
    y_bf = y.astype(bf16)
    acc = jnp.zeros((M, D), f32)
    for f0 in range(0, Fdim, step):                      # static chunk loop
        f1 = min(f0 + step, Fdim)
        h = jnp.dot(y_bf, w1_ref[:, f0:f1],
                    preferred_element_type=f32) + b1_ref[:, f0:f1]
        h = jnp.maximum(h, 0.0).astype(bf16)
        acc = acc + jnp.dot(h, w2_ref[f0:f1, :], preferred_element_type=f32)
    z = acc + b2_ref[...] + y
    o_ref[...] = layer_norm(z, ln3g_ref[...], ln3b_ref[...]).reshape(Bblk, Lt, D)


# --------------------------- DecoderLayer (Pallas) --------------------------- #

def prepare_params(params):
    """One-time parameter prep: fuse QKV / KV projection weights and cast all
    matmul weights to bf16 (biases / LayerNorm params stay f32)."""
    sa, ca = params["self_attn"], params["cross_attn"]
    bf = lambda w: w.astype(jnp.bfloat16)
    weights = [
        bf(jnp.concatenate([sa["wq"], sa["wk"], sa["wv"]], axis=1)),   # w_qkv [D,3D]
        jnp.concatenate([sa["bq"], sa["bk"], sa["bv"]], axis=1),       # b_qkv [1,3D]
        bf(sa["wo"]), sa["bo"],
        params["ln1_g"], params["ln1_b"],
        bf(ca["wq"]), ca["bq"],
        bf(jnp.concatenate([ca["wk"], ca["wv"]], axis=1)),             # w_kv [D,2D]
        jnp.concatenate([ca["bk"], ca["bv"]], axis=1),                 # b_kv [1,2D]
        bf(ca["wo"]), ca["bo"],
        params["ln2_g"], params["ln2_b"],
        bf(params["w1"]), params["b1"],
        bf(params["w2"]), params["b2"],
        params["ln3_g"], params["ln3_b"],
    ]
    return {"num_heads": sa["num_heads"], "weights": weights}


def decoder_layer(tgt, memory, fused_params, *, ff_chunk=512):
    # tgt [Lt, B, D], memory [Ls, B, D]; masks are None, dropout = identity.
    Lt, B, D = tgt.shape
    Ls = memory.shape[0]
    H = fused_params["num_heads"]
    weights = fused_params["weights"]

    Bblk = _pick_bblk(B)
    grid = (B // Bblk,)

    # batch-major internal layout (one cheap XLA transpose at entry/exit)
    x = tgt.transpose(1, 0, 2)        # [B, Lt, D]
    mem = memory.transpose(1, 0, 2)   # [B, Ls, D]

    weight_specs = [pl.BlockSpec(w.shape, lambda b: (0, 0)) for w in weights]
    in_specs = [
        pl.BlockSpec((Bblk, Lt, D), lambda b: (b, 0, 0)),
        pl.BlockSpec((Bblk, Ls, D), lambda b: (b, 0, 0)),
    ] + weight_specs

    out = pl.pallas_call(
        functools.partial(_decoder_layer_kernel,
                          num_heads=H, eps=1e-5, ff_chunk=ff_chunk),
        out_shape=jax.ShapeDtypeStruct((B, Lt, D), jnp.float32),
        grid=grid,
        in_specs=in_specs,
        out_specs=pl.BlockSpec((Bblk, Lt, D), lambda b: (b, 0, 0)),
        compiler_params=pltpu.CompilerParams(dimension_semantics=("parallel",)),
    )(x, mem, *weights)
    return out.transpose(1, 0, 2)     # [Lt, B, D]


# ------------------------- parameters & pure-JAX ref -------------------------- #

def _xavier_uniform(key, shape):
    fan_in, fan_out = shape
    a = (6.0 / (fan_in + fan_out)) ** 0.5
    return jax.random.uniform(key, shape, jnp.float32, -a, a)


def _init_mha_params(key, d_model, num_heads):
    ks = jax.random.split(key, 4)
    p = {"num_heads": num_heads}
    for name, k in zip(("q", "k", "v", "o"), ks):
        p["w" + name] = _xavier_uniform(k, (d_model, d_model))
        p["b" + name] = jnp.zeros((1, d_model), jnp.float32)
    return p


def init_params(key, d_model, nhead, dim_ff):
    k1, k2, k3, k4 = jax.random.split(key, 4)
    return {
        "self_attn": _init_mha_params(k1, d_model, nhead),
        "cross_attn": _init_mha_params(k2, d_model, nhead),
        "ln1_g": jnp.ones((1, d_model), jnp.float32), "ln1_b": jnp.zeros((1, d_model), jnp.float32),
        "ln2_g": jnp.ones((1, d_model), jnp.float32), "ln2_b": jnp.zeros((1, d_model), jnp.float32),
        "ln3_g": jnp.ones((1, d_model), jnp.float32), "ln3_b": jnp.zeros((1, d_model), jnp.float32),
        "w1": _xavier_uniform(k3, (d_model, dim_ff)), "b1": jnp.zeros((1, dim_ff), jnp.float32),
        "w2": _xavier_uniform(k4, (dim_ff, d_model)), "b2": jnp.zeros((1, d_model), jnp.float32),
    }


_HI = jax.lax.Precision.HIGHEST


def _mm(a, b):
    return jnp.matmul(a, b, precision=_HI)


def _mha_ref(query, key_, value, p):
    Lt, B, D = query.shape
    Ls = key_.shape[0]
    H = p["num_heads"]
    Dh = D // H
    Q = _mm(query, p["wq"]) + p["bq"][0]
    K = _mm(key_, p["wk"]) + p["bk"][0]
    V = _mm(value, p["wv"]) + p["bv"][0]
    Q = Q * (float(Dh) ** -0.5)
    to_heads = lambda x, L: x.reshape(L, B * H, Dh).transpose(1, 0, 2)
    Qh, Kh, Vh = to_heads(Q, Lt), to_heads(K, Ls), to_heads(V, Ls)
    w = jax.nn.softmax(jnp.einsum("bld,bmd->blm", Qh, Kh, precision=_HI), axis=-1)
    o = jnp.einsum("blm,bmd->bld", w, Vh, precision=_HI)
    o = o.transpose(1, 0, 2).reshape(Lt, B, D)
    return _mm(o, p["wo"]) + p["bo"][0]


def _ln_ref(z, g, b, eps=1e-5):
    m = z.mean(-1, keepdims=True)
    v = ((z - m) ** 2).mean(-1, keepdims=True)
    return (z - m) / jnp.sqrt(v + eps) * g + b


def decoder_layer_ref(tgt, memory, params):
    x = _ln_ref(tgt + _mha_ref(tgt, tgt, tgt, params["self_attn"]),
                params["ln1_g"], params["ln1_b"])
    y = _ln_ref(x + _mha_ref(x, memory, memory, params["cross_attn"]),
                params["ln2_g"], params["ln2_b"])
    h = jnp.maximum(_mm(y, params["w1"]) + params["b1"][0], 0.0)
    h = _mm(h, params["w2"]) + params["b2"][0]
    return _ln_ref(y + h, params["ln3_g"], params["ln3_b"])


# ------------------------------------ main ----------------------------------- #

if __name__ == "__main__":
    d_model, nhead, dim_ff = 128, 4, 512
    tgt_len, src_len, batch = 16, 16, 8

    root = jax.random.PRNGKey(0)
    kp, kt, km = jax.random.split(root, 3)
    params = init_params(kp, d_model, nhead, dim_ff)
    fused = prepare_params(params)            # one-time fusion + bf16 cast
    tgt = jax.random.normal(kt, (tgt_len, batch, d_model), jnp.float32)
    memory = jax.random.normal(km, (src_len, batch, d_model), jnp.float32)

    out = decoder_layer(tgt, memory, fused)
    out = jax.block_until_ready(out)

    ref = decoder_layer_ref(tgt, memory, params)
    assert out.shape == (tgt_len, batch, d_model)
    max_err = float(jnp.max(jnp.abs(out - ref)))
    # Tolerance accounts for bf16 MXU operands (f32 accumulation) and the approx
    # softmax reciprocal vs. the all-f32 HIGHEST-precision XLA reference.
    assert max_err < 5e-2, f"max abs err {max_err}"
    print("KERNEL_OK")
</pallas_src>

<mosaic_0001>
module attributes {stable_mosaic.version = 11 : i64} {
  func.func @_decoder_layer_kernel(%arg0: i32, %arg1: memref<4x16x128xf32, #tpu.memory_space<vmem>>, %arg2: memref<4x16x128xf32, #tpu.memory_space<vmem>>, %arg3: memref<128x384xbf16, #tpu.memory_space<vmem>>, %arg4: memref<1x384xf32, #tpu.memory_space<vmem>>, %arg5: memref<128x128xbf16, #tpu.memory_space<vmem>>, %arg6: memref<1x128xf32, #tpu.memory_space<vmem>>, %arg7: memref<1x128xf32, #tpu.memory_space<vmem>>, %arg8: memref<1x128xf32, #tpu.memory_space<vmem>>, %arg9: memref<128x128xbf16, #tpu.memory_space<vmem>>, %arg10: memref<1x128xf32, #tpu.memory_space<vmem>>, %arg11: memref<128x256xbf16, #tpu.memory_space<vmem>>, %arg12: memref<1x256xf32, #tpu.memory_space<vmem>>, %arg13: memref<128x128xbf16, #tpu.memory_space<vmem>>, %arg14: memref<1x128xf32, #tpu.memory_space<vmem>>, %arg15: memref<1x128xf32, #tpu.memory_space<vmem>>, %arg16: memref<1x128xf32, #tpu.memory_space<vmem>>, %arg17: memref<128x512xbf16, #tpu.memory_space<vmem>>, %arg18: memref<1x512xf32, #tpu.memory_space<vmem>>, %arg19: memref<512x128xbf16, #tpu.memory_space<vmem>>, %arg20: memref<1x128xf32, #tpu.memory_space<vmem>>, %arg21: memref<1x128xf32, #tpu.memory_space<vmem>>, %arg22: memref<1x128xf32, #tpu.memory_space<vmem>>, %arg23: memref<4x16x128xf32, #tpu.memory_space<vmem>>) attributes {dimension_semantics = [#tpu.dimension_semantics<parallel>], iteration_bounds = array<i64: 2>, scalar_prefetch = 0 : i64, scratch_operands = 0 : i64, tpu.core_type = #tpu.core_type<tc>, window_params = [{transform_indices = @transform_0, window_bounds = array<i64: 4, 16, 128>}, {transform_indices = @transform_1, window_bounds = array<i64: 4, 16, 128>}, {pipeline_mode = #tpu.pipeline_mode<synchronous>, transform_indices = @transform_2, window_bounds = array<i64: 128, 384>}, {pipeline_mode = #tpu.pipeline_mode<synchronous>, transform_indices = @transform_3, window_bounds = array<i64: 1, 384>}, {pipeline_mode = #tpu.pipeline_mode<synchronous>, transform_indices = @transform_4, window_bounds = array<i64: 128, 128>}, {pipeline_mode = #tpu.pipeline_mode<synchronous>, transform_indices = @transform_5, window_bounds = array<i64: 1, 128>}, {pipeline_mode = #tpu.pipeline_mode<synchronous>, transform_indices = @transform_6, window_bounds = array<i64: 1, 128>}, {pipeline_mode = #tpu.pipeline_mode<synchronous>, transform_indices = @transform_7, window_bounds = array<i64: 1, 128>}, {pipeline_mode = #tpu.pipeline_mode<synchronous>, transform_indices = @transform_8, window_bounds = array<i64: 128, 128>}, {pipeline_mode = #tpu.pipeline_mode<synchronous>, transform_indices = @transform_9, window_bounds = array<i64: 1, 128>}, {pipeline_mode = #tpu.pipeline_mode<synchronous>, transform_indices = @transform_10, window_bounds = array<i64: 128, 256>}, {pipeline_mode = #tpu.pipeline_mode<synchronous>, transform_indices = @transform_11, window_bounds = array<i64: 1, 256>}, {pipeline_mode = #tpu.pipeline_mode<synchronous>, transform_indices = @transform_12, window_bounds = array<i64: 128, 128>}, {pipeline_mode = #tpu.pipeline_mode<synchronous>, transform_indices = @transform_13, window_bounds = array<i64: 1, 128>}, {pipeline_mode = #tpu.pipeline_mode<synchronous>, transform_indices = @transform_14, window_bounds = array<i64: 1, 128>}, {pipeline_mode = #tpu.pipeline_mode<synchronous>, transform_indices = @transform_15, window_bounds = array<i64: 1, 128>}, {pipeline_mode = #tpu.pipeline_mode<synchronous>, transform_indices = @transform_16, window_bounds = array<i64: 128, 512>}, {pipeline_mode = #tpu.pipeline_mode<synchronous>, transform_indices = @transform_17, window_bounds = array<i64: 1, 512>}, {pipeline_mode = #tpu.pipeline_mode<synchronous>, transform_indices = @transform_18, window_bounds = array<i64: 512, 128>}, {pipeline_mode = #tpu.pipeline_mode<synchronous>, transform_indices = @transform_19, window_bounds = array<i64: 1, 128>}, {pipeline_mode = #tpu.pipeline_mode<synchronous>, transform_indices = @transform_20, window_bounds = array<i64: 1, 128>}, {pipeline_mode = #tpu.pipeline_mode<synchronous>, transform_indices = @transform_21, window_bounds = array<i64: 1, 128>}, {transform_indices = @transform_22, window_bounds = array<i64: 4, 16, 128>}]} {
    %c0 = arith.constant 0 : index
    %c0_0 = arith.constant 0 : index
    %c0_1 = arith.constant 0 : index
    %0 = vector.load %arg1[%c0, %c0_0, %c0_1] : memref<4x16x128xf32, #tpu.memory_space<vmem>>, vector<4x16x128xf32>
    %1 = vector.shape_cast %0 : vector<4x16x128xf32> to vector<64x128xf32>
    %c0_2 = arith.constant 0 : index
    %c0_3 = arith.constant 0 : index
    %c0_4 = arith.constant 0 : index
    %2 = vector.load %arg2[%c0_2, %c0_3, %c0_4] : memref<4x16x128xf32, #tpu.memory_space<vmem>>, vector<4x16x128xf32>
    %3 = vector.shape_cast %2 : vector<4x16x128xf32> to vector<64x128xf32>
    %4 = arith.truncf %1 : vector<64x128xf32> to vector<64x128xbf16>
    %c0_5 = arith.constant 0 : index
    %c0_6 = arith.constant 0 : index
    %5 = vector.load %arg3[%c0_5, %c0_6] : memref<128x384xbf16, #tpu.memory_space<vmem>>, vector<128x384xbf16>
    %cst = arith.constant dense<0.000000e+00> : vector<64x384xf32>
    %6 = tpu.matmul %4, %5, %cst {dimension_numbers = #tpu.dot_dimension_numbers<[1], [0], [0], [1], [0, 0, 1, 1], [], []>} : vector<64x128xbf16>, vector<128x384xbf16>, vector<64x384xf32> -> vector<64x384xf32>
    %c0_7 = arith.constant 0 : index
    %c0_8 = arith.constant 0 : index
    %7 = vector.load %arg4[%c0_7, %c0_8] : memref<1x384xf32, #tpu.memory_space<vmem>>, vector<1x384xf32>
    %8 = vector.broadcast %7 : vector<1x384xf32> to vector<64x384xf32>
    %9 = arith.addf %6, %8 : vector<64x384xf32>
    %10 = vector.extract_strided_slice %9 {offsets = [0, 0], sizes = [64, 128], strides = [1, 1]} : vector<64x384xf32> to vector<64x128xf32>
    %11 = vector.extract_strided_slice %9 {offsets = [0, 128], sizes = [64, 128], strides = [1, 1]} : vector<64x384xf32> to vector<64x128xf32>
    %12 = vector.shape_cast %11 : vector<64x128xf32> to vector<4x16x128xf32>
    %13 = vector.extract_strided_slice %9 {offsets = [0, 256], sizes = [64, 128], strides = [1, 1]} : vector<64x384xf32> to vector<64x128xf32>
    %14 = vector.shape_cast %13 : vector<64x128xf32> to vector<4x16x128xf32>
    %15 = vector.shape_cast %10 : vector<64x128xf32> to vector<4x16x128xf32>
    %cst_9 = arith.constant 0.000000e+00 : f32
    %16 = vector.broadcast %cst_9 : f32 to vector<64x128xf32>
    %17 = vector.extract_strided_slice %15 {offsets = [0, 0, 0], sizes = [4, 16, 32], strides = [1, 1, 1]} : vector<4x16x128xf32> to vector<4x16x32xf32>
    %18 = arith.truncf %17 : vector<4x16x32xf32> to vector<4x16x32xbf16>
    %19 = vector.extract_strided_slice %12 {offsets = [0, 0, 0], sizes = [4, 16, 32], strides = [1, 1, 1]} : vector<4x16x128xf32> to vector<4x16x32xf32>
    %20 = arith.truncf %19 : vector<4x16x32xf32> to vector<4x16x32xbf16>
    %21 = vector.extract_strided_slice %14 {offsets = [0, 0, 0], sizes = [4, 16, 32], strides = [1, 1, 1]} : vector<4x16x128xf32> to vector<4x16x32xf32>
    %22 = arith.truncf %21 : vector<4x16x32xf32> to vector<4x16x32xbf16>
    "tpu.trace_start"() <{level = 10 : i32, message = "bqd,bkd->bqk"}> : () -> ()
    %cst_10 = arith.constant dense<0.000000e+00> : vector<4x16x16xf32>
    %23 = tpu.matmul %18, %20, %cst_10 {dimension_numbers = #tpu.dot_dimension_numbers<[2], [2], [1], [1], [0, 0, 0, 1, 1, 1], [0], [0]>} : vector<4x16x32xbf16>, vector<4x16x32xbf16>, vector<4x16x16xf32> -> vector<4x16x16xf32>
    "tpu.trace_stop"() : () -> ()
    %cst_11 = arith.constant 0.176776692 : f32
    %24 = vector.broadcast %cst_11 : f32 to vector<4x16x16xf32>
    %25 = arith.mulf %23, %24 : vector<4x16x16xf32>
    %cst_12 = arith.constant dense<0xFF800000> : vector<4x16xf32>
    %26 = vector.multi_reduction <maximumf>, %25, %cst_12 [2] : vector<4x16x16xf32> to vector<4x16xf32>
    %27 = vector.shape_cast %26 : vector<4x16xf32> to vector<4x16x1xf32>
    %28 = vector.broadcast %27 : vector<4x16x1xf32> to vector<4x16x16xf32>
    %29 = arith.subf %25, %28 : vector<4x16x16xf32>
    %30 = math.exp %29 : vector<4x16x16xf32>
    %cst_13 = arith.constant dense<0.000000e+00> : vector<4x16xf32>
    %31 = vector.multi_reduction <add>, %30, %cst_13 [2] : vector<4x16x16xf32> to vector<4x16xf32>
    %32 = vector.shape_cast %31 : vector<4x16xf32> to vector<4x16x1xf32>
    %33 = tpu.reciprocal %32 {approx = true} : vector<4x16x1xf32> -> vector<4x16x1xf32>
    %34 = vector.broadcast %33 : vector<4x16x1xf32> to vector<4x16x16xf32>
    %35 = arith.mulf %30, %34 : vector<4x16x16xf32>
    %36 = arith.truncf %35 : vector<4x16x16xf32> to vector<4x16x16xbf16>
    "tpu.trace_start"() <{level = 10 : i32, message = "bqk,bkd->bqd"}> : () -> ()
    %cst_14 = arith.constant dense<0.000000e+00> : vector<4x16x32xf32>
    %37 = tpu.matmul %36, %22, %cst_14 {dimension_numbers = #tpu.dot_dimension_numbers<[2], [1], [1], [2], [0, 0, 0, 1, 1, 2], [0], [0]>} : vector<4x16x16xbf16>, vector<4x16x32xbf16>, vector<4x16x32xf32> -> vector<4x16x32xf32>
    "tpu.trace_stop"() : () -> ()
    %38 = vector.shape_cast %37 : vector<4x16x32xf32> to vector<64x32xf32>
    %39 = arith.truncf %38 : vector<64x32xf32> to vector<64x32xbf16>
    %c0_15 = arith.constant 0 : index
    %c0_16 = arith.constant 0 : index
    %40 = vector.load %arg5[%c0_15, %c0_16] : memref<128x128xbf16, #tpu.memory_space<vmem>>, vector<32x128xbf16>
    %cst_17 = arith.constant dense<0.000000e+00> : vector<64x128xf32>
    %41 = tpu.matmul %39, %40, %cst_17 {dimension_numbers = #tpu.dot_dimension_numbers<[1], [0], [0], [1], [0, 0, 1, 1], [], []>} : vector<64x32xbf16>, vector<32x128xbf16>, vector<64x128xf32> -> vector<64x128xf32>
    %42 = arith.addf %16, %41 : vector<64x128xf32>
    %43 = vector.extract_strided_slice %15 {offsets = [0, 0, 32], sizes = [4, 16, 32], strides = [1, 1, 1]} : vector<4x16x128xf32> to vector<4x16x32xf32>
    %44 = arith.truncf %43 : vector<4x16x32xf32> to vector<4x16x32xbf16>
    %45 = vector.extract_strided_slice %12 {offsets = [0, 0, 32], sizes = [4, 16, 32], strides = [1, 1, 1]} : vector<4x16x128xf32> to vector<4x16x32xf32>
    %46 = arith.truncf %45 : vector<4x16x32xf32> to vector<4x16x32xbf16>
    %47 = vector.extract_strided_slice %14 {offsets = [0, 0, 32], sizes = [4, 16, 32], strides = [1, 1, 1]} : vector<4x16x128xf32> to vector<4x16x32xf32>
    %48 = arith.truncf %47 : vector<4x16x32xf32> to vector<4x16x32xbf16>
    "tpu.trace_start"() <{level = 10 : i32, message = "bqd,bkd->bqk"}> : () -> ()
    %cst_18 = arith.constant dense<0.000000e+00> : vector<4x16x16xf32>
    %49 = tpu.matmul %44, %46, %cst_18 {dimension_numbers = #tpu.dot_dimension_numbers<[2], [2], [1], [1], [0, 0, 0, 1, 1, 1], [0], [0]>} : vector<4x16x32xbf16>, vector<4x16x32xbf16>, vector<4x16x16xf32> -> vector<4x16x16xf32>
    "tpu.trace_stop"() : () -> ()
    %cst_19 = arith.constant 0.176776692 : f32
    %50 = vector.broadcast %cst_19 : f32 to vector<4x16x16xf32>
    %51 = arith.mulf %49, %50 : vector<4x16x16xf32>
    %cst_20 = arith.constant dense<0xFF800000> : vector<4x16xf32>
    %52 = vector.multi_reduction <maximumf>, %51, %cst_20 [2] : vector<4x16x16xf32> to vector<4x16xf32>
    %53 = vector.shape_cast %52 : vector<4x16xf32> to vector<4x16x1xf32>
    %54 = vector.broadcast %53 : vector<4x16x1xf32> to vector<4x16x16xf32>
    %55 = arith.subf %51, %54 : vector<4x16x16xf32>
    %56 = math.exp %55 : vector<4x16x16xf32>
    %cst_21 = arith.constant dense<0.000000e+00> : vector<4x16xf32>
    %57 = vector.multi_reduction <add>, %56, %cst_21 [2] : vector<4x16x16xf32> to vector<4x16xf32>
    %58 = vector.shape_cast %57 : vector<4x16xf32> to vector<4x16x1xf32>
    %59 = tpu.reciprocal %58 {approx = true} : vector<4x16x1xf32> -> vector<4x16x1xf32>
    %60 = vector.broadcast %59 : vector<4x16x1xf32> to vector<4x16x16xf32>
    %61 = arith.mulf %56, %60 : vector<4x16x16xf32>
    %62 = arith.truncf %61 : vector<4x16x16xf32> to vector<4x16x16xbf16>
    "tpu.trace_start"() <{level = 10 : i32, message = "bqk,bkd->bqd"}> : () -> ()
    %cst_22 = arith.constant dense<0.000000e+00> : vector<4x16x32xf32>
    %63 = tpu.matmul %62, %48, %cst_22 {dimension_numbers = #tpu.dot_dimension_numbers<[2], [1], [1], [2], [0, 0, 0, 1, 1, 2], [0], [0]>} : vector<4x16x16xbf16>, vector<4x16x32xbf16>, vector<4x16x32xf32> -> vector<4x16x32xf32>
    "tpu.trace_stop"() : () -> ()
    %64 = vector.shape_cast %63 : vector<4x16x32xf32> to vector<64x32xf32>
    %65 = arith.truncf %64 : vector<64x32xf32> to vector<64x32xbf16>
    %c32 = arith.constant 32 : index
    %c0_23 = arith.constant 0 : index
    %66 = vector.load %arg5[%c32, %c0_23] : memref<128x128xbf16, #tpu.memory_space<vmem>>, vector<32x128xbf16>
    %cst_24 = arith.constant dense<0.000000e+00> : vector<64x128xf32>
    %67 = tpu.matmul %65, %66, %cst_24 {dimension_numbers = #tpu.dot_dimension_numbers<[1], [0], [0], [1], [0, 0, 1, 1], [], []>} : vector<64x32xbf16>, vector<32x128xbf16>, vector<64x128xf32> -> vector<64x128xf32>
    %68 = arith.addf %42, %67 : vector<64x128xf32>
    %69 = vector.extract_strided_slice %15 {offsets = [0, 0, 64], sizes = [4, 16, 32], strides = [1, 1, 1]} : vector<4x16x128xf32> to vector<4x16x32xf32>
    %70 = arith.truncf %69 : vector<4x16x32xf32> to vector<4x16x32xbf16>
    %71 = vector.extract_strided_slice %12 {offsets = [0, 0, 64], sizes = [4, 16, 32], strides = [1, 1, 1]} : vector<4x16x128xf32> to vector<4x16x32xf32>
    %72 = arith.truncf %71 : vector<4x16x32xf32> to vector<4x16x32xbf16>
    %73 = vector.extract_strided_slice %14 {offsets = [0, 0, 64], sizes = [4, 16, 32], strides = [1, 1, 1]} : vector<4x16x128xf32> to vector<4x16x32xf32>
    %74 = arith.truncf %73 : vector<4x16x32xf32> to vector<4x16x32xbf16>
    "tpu.trace_start"() <{level = 10 : i32, message = "bqd,bkd->bqk"}> : () -> ()
    %cst_25 = arith.constant dense<0.000000e+00> : vector<4x16x16xf32>
    %75 = tpu.matmul %70, %72, %cst_25 {dimension_numbers = #tpu.dot_dimension_numbers<[2], [2], [1], [1], [0, 0, 0, 1, 1, 1], [0], [0]>} : vector<4x16x32xbf16>, vector<4x16x32xbf16>, vector<4x16x16xf32> -> vector<4x16x16xf32>
    "tpu.trace_stop"() : () -> ()
    %cst_26 = arith.constant 0.176776692 : f32
    %76 = vector.broadcast %cst_26 : f32 to vector<4x16x16xf32>
    %77 = arith.mulf %75, %76 : vector<4x16x16xf32>
    %cst_27 = arith.constant dense<0xFF800000> : vector<4x16xf32>
    %78 = vector.multi_reduction <maximumf>, %77, %cst_27 [2] : vector<4x16x16xf32> to vector<4x16xf32>
    %79 = vector.shape_cast %78 : vector<4x16xf32> to vector<4x16x1xf32>
    %80 = vector.broadcast %79 : vector<4x16x1xf32> to vector<4x16x16xf32>
    %81 = arith.subf %77, %80 : vector<4x16x16xf32>
    %82 = math.exp %81 : vector<4x16x16xf32>
    %cst_28 = arith.constant dense<0.000000e+00> : vector<4x16xf32>
    %83 = vector.multi_reduction <add>, %82, %cst_28 [2] : vector<4x16x16xf32> to vector<4x16xf32>
    %84 = vector.shape_cast %83 : vector<4x16xf32> to vector<4x16x1xf32>
    %85 = tpu.reciprocal %84 {approx = true} : vector<4x16x1xf32> -> vector<4x16x1xf32>
    %86 = vector.broadcast %85 : vector<4x16x1xf32> to vector<4x16x16xf32>
    %87 = arith.mulf %82, %86 : vector<4x16x16xf32>
    %88 = arith.truncf %87 : vector<4x16x16xf32> to vector<4x16x16xbf16>
    "tpu.trace_start"() <{level = 10 : i32, message = "bqk,bkd->bqd"}> : () -> ()
    %cst_29 = arith.constant dense<0.000000e+00> : vector<4x16x32xf32>
    %89 = tpu.matmul %88, %74, %cst_29 {dimension_numbers = #tpu.dot_dimension_numbers<[2], [1], [1], [2], [0, 0, 0, 1, 1, 2], [0], [0]>} : vector<4x16x16xbf16>, vector<4x16x32xbf16>, vector<4x16x32xf32> -> vector<4x16x32xf32>
    "tpu.trace_stop"() : () -> ()
    %90 = vector.shape_cast %89 : vector<4x16x32xf32> to vector<64x32xf32>
    %91 = arith.truncf %90 : vector<64x32xf32> to vector<64x32xbf16>
    %c64 = arith.constant 64 : index
    %c0_30 = arith.constant 0 : index
    %92 = vector.load %arg5[%c64, %c0_30] : memref<128x128xbf16, #tpu.memory_space<vmem>>, vector<32x128xbf16>
    %cst_31 = arith.constant dense<0.000000e+00> : vector<64x128xf32>
    %93 = tpu.matmul %91, %92, %cst_31 {dimension_numbers = #tpu.dot_dimension_numbers<[1], [0], [0], [1], [0, 0, 1, 1], [], []>} : vector<64x32xbf16>, vector<32x128xbf16>, vector<64x128xf32> -> vector<64x128xf32>
    %94 = arith.addf %68, %93 : vector<64x128xf32>
    %95 = vector.extract_strided_slice %15 {offsets = [0, 0, 96], sizes = [4, 16, 32], strides = [1, 1, 1]} : vector<4x16x128xf32> to vector<4x16x32xf32>
    %96 = arith.truncf %95 : vector<4x16x32xf32> to vector<4x16x32xbf16>
    %97 = vector.extract_strided_slice %12 {offsets = [0, 0, 96], sizes = [4, 16, 32], strides = [1, 1, 1]} : vector<4x16x128xf32> to vector<4x16x32xf32>
    %98 = arith.truncf %97 : vector<4x16x32xf32> to vector<4x16x32xbf16>
    %99 = vector.extract_strided_slice %14 {offsets = [0, 0, 96], sizes = [4, 16, 32], strides = [1, 1, 1]} : vector<4x16x128xf32> to vector<4x16x32xf32>
    %100 = arith.truncf %99 : vector<4x16x32xf32> to vector<4x16x32xbf16>
    "tpu.trace_start"() <{level = 10 : i32, message = "bqd,bkd->bqk"}> : () -> ()
    %cst_32 = arith.constant dense<0.000000e+00> : vector<4x16x16xf32>
    %101 = tpu.matmul %96, %98, %cst_32 {dimension_numbers = #tpu.dot_dimension_numbers<[2], [2], [1], [1], [0, 0, 0, 1, 1, 1], [0], [0]>} : vector<4x16x32xbf16>, vector<4x16x32xbf16>, vector<4x16x16xf32> -> vector<4x16x16xf32>
    "tpu.trace_stop"() : () -> ()
    %cst_33 = arith.constant 0.176776692 : f32
    %102 = vector.broadcast %cst_33 : f32 to vector<4x16x16xf32>
    %103 = arith.mulf %101, %102 : vector<4x16x16xf32>
    %cst_34 = arith.constant dense<0xFF800000> : vector<4x16xf32>
    %104 = vector.multi_reduction <maximumf>, %103, %cst_34 [2] : vector<4x16x16xf32> to vector<4x16xf32>
    %105 = vector.shape_cast %104 : vector<4x16xf32> to vector<4x16x1xf32>
    %106 = vector.broadcast %105 : vector<4x16x1xf32> to vector<4x16x16xf32>
    %107 = arith.subf %103, %106 : vector<4x16x16xf32>
    %108 = math.exp %107 : vector<4x16x16xf32>
    %cst_35 = arith.constant dense<0.000000e+00> : vector<4x16xf32>
    %109 = vector.multi_reduction <add>, %108, %cst_35 [2] : vector<4x16x16xf32> to vector<4x16xf32>
    %110 = vector.shape_cast %109 : vector<4x16xf32> to vector<4x16x1xf32>
    %111 = tpu.reciprocal %110 {approx = true} : vector<4x16x1xf32> -> vector<4x16x1xf32>
    %112 = vector.broadcast %111 : vector<4x16x1xf32> to vector<4x16x16xf32>
    %113 = arith.mulf %108, %112 : vector<4x16x16xf32>
    %114 = arith.truncf %113 : vector<4x16x16xf32> to vector<4x16x16xbf16>
    "tpu.trace_start"() <{level = 10 : i32, message = "bqk,bkd->bqd"}> : () -> ()
    %cst_36 = arith.constant dense<0.000000e+00> : vector<4x16x32xf32>
    %115 = tpu.matmul %114, %100, %cst_36 {dimension_numbers = #tpu.dot_dimension_numbers<[2], [1], [1], [2], [0, 0, 0, 1, 1, 2], [0], [0]>} : vector<4x16x16xbf16>, vector<4x16x32xbf16>, vector<4x16x32xf32> -> vector<4x16x32xf32>
    "tpu.trace_stop"() : () -> ()
    %116 = vector.shape_cast %115 : vector<4x16x32xf32> to vector<64x32xf32>
    %117 = arith.truncf %116 : vector<64x32xf32> to vector<64x32xbf16>
    %c96 = arith.constant 96 : index
    %c0_37 = arith.constant 0 : index
    %118 = vector.load %arg5[%c96, %c0_37] : memref<128x128xbf16, #tpu.memory_space<vmem>>, vector<32x128xbf16>
    %cst_38 = arith.constant dense<0.000000e+00> : vector<64x128xf32>
    %119 = tpu.matmul %117, %118, %cst_38 {dimension_numbers = #tpu.dot_dimension_numbers<[1], [0], [0], [1], [0, 0, 1, 1], [], []>} : vector<64x32xbf16>, vector<32x128xbf16>, vector<64x128xf32> -> vector<64x128xf32>
    %120 = arith.addf %94, %119 : vector<64x128xf32>
    %c0_39 = arith.constant 0 : index
    %c0_40 = arith.constant 0 : index
    %121 = vector.load %arg6[%c0_39, %c0_40] : memref<1x128xf32, #tpu.memory_space<vmem>>, vector<1x128xf32>
    %122 = vector.broadcast %121 : vector<1x128xf32> to vector<64x128xf32>
    %123 = arith.addf %120, %122 : vector<64x128xf32>
    %124 = arith.addf %1, %123 : vector<64x128xf32>
    %c0_41 = arith.constant 0 : index
    %c0_42 = arith.constant 0 : index
    %125 = vector.load %arg7[%c0_41, %c0_42] : memref<1x128xf32, #tpu.memory_space<vmem>>, vector<1x128xf32>
    %c0_43 = arith.constant 0 : index
    %c0_44 = arith.constant 0 : index
    %126 = vector.load %arg8[%c0_43, %c0_44] : memref<1x128xf32, #tpu.memory_space<vmem>>, vector<1x128xf32>
    %cst_45 = arith.constant dense<0.000000e+00> : vector<64xf32>
    %127 = vector.multi_reduction <add>, %124, %cst_45 [1] : vector<64x128xf32> to vector<64xf32>
    %128 = vector.shape_cast %127 : vector<64xf32> to vector<64x1xf32>
    %cst_46 = arith.constant 1.280000e+02 : f32
    %129 = vector.broadcast %cst_46 : f32 to vector<64x1xf32>
    %130 = arith.divf %128, %129 : vector<64x1xf32>
    %131 = vector.broadcast %130 : vector<64x1xf32> to vector<64x128xf32>
    %132 = arith.subf %124, %131 : vector<64x128xf32>
    %133 = arith.mulf %132, %132 : vector<64x128xf32>
    %cst_47 = arith.constant dense<0.000000e+00> : vector<64xf32>
    %134 = vector.multi_reduction <add>, %133, %cst_47 [1] : vector<64x128xf32> to vector<64xf32>
    %135 = vector.shape_cast %134 : vector<64xf32> to vector<64x1xf32>
    %cst_48 = arith.constant 1.280000e+02 : f32
    %136 = vector.broadcast %cst_48 : f32 to vector<64x1xf32>
    %137 = arith.divf %135, %136 : vector<64x1xf32>
    %cst_49 = arith.constant 9.99999974E-6 : f32
    %138 = vector.broadcast %cst_49 : f32 to vector<64x1xf32>
    %139 = arith.addf %137, %138 : vector<64x1xf32>
    %140 = math.rsqrt %139 : vector<64x1xf32>
    %141 = vector.broadcast %140 : vector<64x1xf32> to vector<64x128xf32>
    %142 = arith.mulf %132, %141 : vector<64x128xf32>
    %143 = vector.broadcast %125 : vector<1x128xf32> to vector<64x128xf32>
    %144 = arith.mulf %142, %143 : vector<64x128xf32>
    %145 = vector.broadcast %126 : vector<1x128xf32> to vector<64x128xf32>
    %146 = arith.addf %144, %145 : vector<64x128xf32>
    %147 = arith.truncf %146 : vector<64x128xf32> to vector<64x128xbf16>
    %c0_50 = arith.constant 0 : index
    %c0_51 = arith.constant 0 : index
    %148 = vector.load %arg9[%c0_50, %c0_51] : memref<128x128xbf16, #tpu.memory_space<vmem>>, vector<128x128xbf16>
    %cst_52 = arith.constant dense<0.000000e+00> : vector<64x128xf32>
    %149 = tpu.matmul %147, %148, %cst_52 {dimension_numbers = #tpu.dot_dimension_numbers<[1], [0], [0], [1], [0, 0, 1, 1], [], []>} : vector<64x128xbf16>, vector<128x128xbf16>, vector<64x128xf32> -> vector<64x128xf32>
    %c0_53 = arith.constant 0 : index
    %c0_54 = arith.constant 0 : index
    %150 = vector.load %arg10[%c0_53, %c0_54] : memref<1x128xf32, #tpu.memory_space<vmem>>, vector<1x128xf32>
    %151 = vector.broadcast %150 : vector<1x128xf32> to vector<64x128xf32>
    %152 = arith.addf %149, %151 : vector<64x128xf32>
    %153 = arith.truncf %3 : vector<64x128xf32> to vector<64x128xbf16>
    %c0_55 = arith.constant 0 : index
    %c0_56 = arith.constant 0 : index
    %154 = vector.load %arg11[%c0_55, %c0_56] : memref<128x256xbf16, #tpu.memory_space<vmem>>, vector<128x256xbf16>
    %cst_57 = arith.constant dense<0.000000e+00> : vector<64x256xf32>
    %155 = tpu.matmul %153, %154, %cst_57 {dimension_numbers = #tpu.dot_dimension_numbers<[1], [0], [0], [1], [0, 0, 1, 1], [], []>} : vector<64x128xbf16>, vector<128x256xbf16>, vector<64x256xf32> -> vector<64x256xf32>
    %c0_58 = arith.constant 0 : index
    %c0_59 = arith.constant 0 : index
    %156 = vector.load %arg12[%c0_58, %c0_59] : memref<1x256xf32, #tpu.memory_space<vmem>>, vector<1x256xf32>
    %157 = vector.broadcast %156 : vector<1x256xf32> to vector<64x256xf32>
    %158 = arith.addf %155, %157 : vector<64x256xf32>
    %159 = vector.extract_strided_slice %158 {offsets = [0, 0], sizes = [64, 128], strides = [1, 1]} : vector<64x256xf32> to vector<64x128xf32>
    %160 = vector.shape_cast %159 : vector<64x128xf32> to vector<4x16x128xf32>
    %161 = vector.extract_strided_slice %158 {offsets = [0, 128], sizes = [64, 128], strides = [1, 1]} : vector<64x256xf32> to vector<64x128xf32>
    %162 = vector.shape_cast %161 : vector<64x128xf32> to vector<4x16x128xf32>
    %163 = vector.shape_cast %152 : vector<64x128xf32> to vector<4x16x128xf32>
    %cst_60 = arith.constant 0.000000e+00 : f32
    %164 = vector.broadcast %cst_60 : f32 to vector<64x128xf32>
    %165 = vector.extract_strided_slice %163 {offsets = [0, 0, 0], sizes = [4, 16, 32], strides = [1, 1, 1]} : vector<4x16x128xf32> to vector<4x16x32xf32>
    %166 = arith.truncf %165 : vector<4x16x32xf32> to vector<4x16x32xbf16>
    %167 = vector.extract_strided_slice %160 {offsets = [0, 0, 0], sizes = [4, 16, 32], strides = [1, 1, 1]} : vector<4x16x128xf32> to vector<4x16x32xf32>
    %168 = arith.truncf %167 : vector<4x16x32xf32> to vector<4x16x32xbf16>
    %169 = vector.extract_strided_slice %162 {offsets = [0, 0, 0], sizes = [4, 16, 32], strides = [1, 1, 1]} : vector<4x16x128xf32> to vector<4x16x32xf32>
    %170 = arith.truncf %169 : vector<4x16x32xf32> to vector<4x16x32xbf16>
    "tpu.trace_start"() <{level = 10 : i32, message = "bqd,bkd->bqk"}> : () -> ()
    %cst_61 = arith.constant dense<0.000000e+00> : vector<4x16x16xf32>
    %171 = tpu.matmul %166, %168, %cst_61 {dimension_numbers = #tpu.dot_dimension_numbers<[2], [2], [1], [1], [0, 0, 0, 1, 1, 1], [0], [0]>} : vector<4x16x32xbf16>, vector<4x16x32xbf16>, vector<4x16x16xf32> -> vector<4x16x16xf32>
    "tpu.trace_stop"() : () -> ()
    %cst_62 = arith.constant 0.176776692 : f32
    %172 = vector.broadcast %cst_62 : f32 to vector<4x16x16xf32>
    %173 = arith.mulf %171, %172 : vector<4x16x16xf32>
    %cst_63 = arith.constant dense<0xFF800000> : vector<4x16xf32>
    %174 = vector.multi_reduction <maximumf>, %173, %cst_63 [2] : vector<4x16x16xf32> to vector<4x16xf32>
    %175 = vector.shape_cast %174 : vector<4x16xf32> to vector<4x16x1xf32>
    %176 = vector.broadcast %175 : vector<4x16x1xf32> to vector<4x16x16xf32>
    %177 = arith.subf %173, %176 : vector<4x16x16xf32>
    %178 = math.exp %177 : vector<4x16x16xf32>
    %cst_64 = arith.constant dense<0.000000e+00> : vector<4x16xf32>
    %179 = vector.multi_reduction <add>, %178, %cst_64 [2] : vector<4x16x16xf32> to vector<4x16xf32>
    %180 = vector.shape_cast %179 : vector<4x16xf32> to vector<4x16x1xf32>
    %181 = tpu.reciprocal %180 {approx = true} : vector<4x16x1xf32> -> vector<4x16x1xf32>
    %182 = vector.broadcast %181 : vector<4x16x1xf32> to vector<4x16x16xf32>
    %183 = arith.mulf %178, %182 : vector<4x16x16xf32>
    %184 = arith.truncf %183 : vector<4x16x16xf32> to vector<4x16x16xbf16>
    "tpu.trace_start"() <{level = 10 : i32, message = "bqk,bkd->bqd"}> : () -> ()
    %cst_65 = arith.constant dense<0.000000e+00> : vector<4x16x32xf32>
    %185 = tpu.matmul %184, %170, %cst_65 {dimension_numbers = #tpu.dot_dimension_numbers<[2], [1], [1], [2], [0, 0, 0, 1, 1, 2], [0], [0]>} : vector<4x16x16xbf16>, vector<4x16x32xbf16>, vector<4x16x32xf32> -> vector<4x16x32xf32>
    "tpu.trace_stop"() : () -> ()
    %186 = vector.shape_cast %185 : vector<4x16x32xf32> to vector<64x32xf32>
    %187 = arith.truncf %186 : vector<64x32xf32> to vector<64x32xbf16>
    %c0_66 = arith.constant 0 : index
    %c0_67 = arith.constant 0 : index
    %188 = vector.load %arg13[%c0_66, %c0_67] : memref<128x128xbf16, #tpu.memory_space<vmem>>, vector<32x128xbf16>
    %cst_68 = arith.constant dense<0.000000e+00> : vector<64x128xf32>
    %189 = tpu.matmul %187, %188, %cst_68 {dimension_numbers = #tpu.dot_dimension_numbers<[1], [0], [0], [1], [0, 0, 1, 1], [], []>} : vector<64x32xbf16>, vector<32x128xbf16>, vector<64x128xf32> -> vector<64x128xf32>
    %190 = arith.addf %164, %189 : vector<64x128xf32>
    %191 = vector.extract_strided_slice %163 {offsets = [0, 0, 32], sizes = [4, 16, 32], strides = [1, 1, 1]} : vector<4x16x128xf32> to vector<4x16x32xf32>
    %192 = arith.truncf %191 : vector<4x16x32xf32> to vector<4x16x32xbf16>
    %193 = vector.extract_strided_slice %160 {offsets = [0, 0, 32], sizes = [4, 16, 32], strides = [1, 1, 1]} : vector<4x16x128xf32> to vector<4x16x32xf32>
    %194 = arith.truncf %193 : vector<4x16x32xf32> to vector<4x16x32xbf16>
    %195 = vector.extract_strided_slice %162 {offsets = [0, 0, 32], sizes = [4, 16, 32], strides = [1, 1, 1]} : vector<4x16x128xf32> to vector<4x16x32xf32>
    %196 = arith.truncf %195 : vector<4x16x32xf32> to vector<4x16x32xbf16>
    "tpu.trace_start"() <{level = 10 : i32, message = "bqd,bkd->bqk"}> : () -> ()
    %cst_69 = arith.constant dense<0.000000e+00> : vector<4x16x16xf32>
    %197 = tpu.matmul %192, %194, %cst_69 {dimension_numbers = #tpu.dot_dimension_numbers<[2], [2], [1], [1], [0, 0, 0, 1, 1, 1], [0], [0]>} : vector<4x16x32xbf16>, vector<4x16x32xbf16>, vector<4x16x16xf32> -> vector<4x16x16xf32>
    "tpu.trace_stop"() : () -> ()
    %cst_70 = arith.constant 0.176776692 : f32
    %198 = vector.broadcast %cst_70 : f32 to vector<4x16x16xf32>
    %199 = arith.mulf %197, %198 : vector<4x16x16xf32>
    %cst_71 = arith.constant dense<0xFF800000> : vector<4x16xf32>
    %200 = vector.multi_reduction <maximumf>, %199, %cst_71 [2] : vector<4x16x16xf32> to vector<4x16xf32>
    %201 = vector.shape_cast %200 : vector<4x16xf32> to vector<4x16x1xf32>
    %202 = vector.broadcast %201 : vector<4x16x1xf32> to vector<4x16x16xf32>
    %203 = arith.subf %199, %202 : vector<4x16x16xf32>
    %204 = math.exp %203 : vector<4x16x16xf32>
    %cst_72 = arith.constant dense<0.000000e+00> : vector<4x16xf32>
    %205 = vector.multi_reduction <add>, %204, %cst_72 [2] : vector<4x16x16xf32> to vector<4x16xf32>
    %206 = vector.shape_cast %205 : vector<4x16xf32> to vector<4x16x1xf32>
    %207 = tpu.reciprocal %206 {approx = true} : vector<4x16x1xf32> -> vector<4x16x1xf32>
    %208 = vector.broadcast %207 : vector<4x16x1xf32> to vector<4x16x16xf32>
    %209 = arith.mulf %204, %208 : vector<4x16x16xf32>
    %210 = arith.truncf %209 : vector<4x16x16xf32> to vector<4x16x16xbf16>
    "tpu.trace_start"() <{level = 10 : i32, message = "bqk,bkd->bqd"}> : () -> ()
    %cst_73 = arith.constant dense<0.000000e+00> : vector<4x16x32xf32>
    %211 = tpu.matmul %210, %196, %cst_73 {dimension_numbers = #tpu.dot_dimension_numbers<[2], [1], [1], [2], [0, 0, 0, 1, 1, 2], [0], [0]>} : vector<4x16x16xbf16>, vector<4x16x32xbf16>, vector<4x16x32xf32> -> vector<4x16x32xf32>
    "tpu.trace_stop"() : () -> ()
    %212 = vector.shape_cast %211 : vector<4x16x32xf32> to vector<64x32xf32>
    %213 = arith.truncf %212 : vector<64x32xf32> to vector<64x32xbf16>
    %c32_74 = arith.constant 32 : index
    %c0_75 = arith.constant 0 : index
    %214 = vector.load %arg13[%c32_74, %c0_75] : memref<128x128xbf16, #tpu.memory_space<vmem>>, vector<32x128xbf16>
    %cst_76 = arith.constant dense<0.000000e+00> : vector<64x128xf32>
    %215 = tpu.matmul %213, %214, %cst_76 {dimension_numbers = #tpu.dot_dimension_numbers<[1], [0], [0], [1], [0, 0, 1, 1], [], []>} : vector<64x32xbf16>, vector<32x128xbf16>, vector<64x128xf32> -> vector<64x128xf32>
    %216 = arith.addf %190, %215 : vector<64x128xf32>
    %217 = vector.extract_strided_slice %163 {offsets = [0, 0, 64], sizes = [4, 16, 32], strides = [1, 1, 1]} : vector<4x16x128xf32> to vector<4x16x32xf32>
    %218 = arith.truncf %217 : vector<4x16x32xf32> to vector<4x16x32xbf16>
    %219 = vector.extract_strided_slice %160 {offsets = [0, 0, 64], sizes = [4, 16, 32], strides = [1, 1, 1]} : vector<4x16x128xf32> to vector<4x16x32xf32>
    %220 = arith.truncf %219 : vector<4x16x32xf32> to vector<4x16x32xbf16>
    %221 = vector.extract_strided_slice %162 {offsets = [0, 0, 64], sizes = [4, 16, 32], strides = [1, 1, 1]} : vector<4x16x128xf32> to vector<4x16x32xf32>
    %222 = arith.truncf %221 : vector<4x16x32xf32> to vector<4x16x32xbf16>
    "tpu.trace_start"() <{level = 10 : i32, message = "bqd,bkd->bqk"}> : () -> ()
    %cst_77 = arith.constant dense<0.000000e+00> : vector<4x16x16xf32>
    %223 = tpu.matmul %218, %220, %cst_77 {dimension_numbers = #tpu.dot_dimension_numbers<[2], [2], [1], [1], [0, 0, 0, 1, 1, 1], [0], [0]>} : vector<4x16x32xbf16>, vector<4x16x32xbf16>, vector<4x16x16xf32> -> vector<4x16x16xf32>
    "tpu.trace_stop"() : () -> ()
    %cst_78 = arith.constant 0.176776692 : f32
    %224 = vector.broadcast %cst_78 : f32 to vector<4x16x16xf32>
    %225 = arith.mulf %223, %224 : vector<4x16x16xf32>
    %cst_79 = arith.constant dense<0xFF800000> : vector<4x16xf32>
    %226 = vector.multi_reduction <maximumf>, %225, %cst_79 [2] : vector<4x16x16xf32> to vector<4x16xf32>
    %227 = vector.shape_cast %226 : vector<4x16xf32> to vector<4x16x1xf32>
    %228 = vector.broadcast %227 : vector<4x16x1xf32> to vector<4x16x16xf32>
    %229 = arith.subf %225, %228 : vector<4x16x16xf32>
    %230 = math.exp %229 : vector<4x16x16xf32>
    %cst_80 = arith.constant dense<0.000000e+00> : vector<4x16xf32>
    %231 = vector.multi_reduction <add>, %230, %cst_80 [2] : vector<4x16x16xf32> to vector<4x16xf32>
    %232 = vector.shape_cast %231 : vector<4x16xf32> to vector<4x16x1xf32>
    %233 = tpu.reciprocal %232 {approx = true} : vector<4x16x1xf32> -> vector<4x16x1xf32>
    %234 = vector.broadcast %233 : vector<4x16x1xf32> to vector<4x16x16xf32>
    %235 = arith.mulf %230, %234 : vector<4x16x16xf32>
    %236 = arith.truncf %235 : vector<4x16x16xf32> to vector<4x16x16xbf16>
    "tpu.trace_start"() <{level = 10 : i32, message = "bqk,bkd->bqd"}> : () -> ()
    %cst_81 = arith.constant dense<0.000000e+00> : vector<4x16x32xf32>
    %237 = tpu.matmul %236, %222, %cst_81 {dimension_numbers = #tpu.dot_dimension_numbers<[2], [1], [1], [2], [0, 0, 0, 1, 1, 2], [0], [0]>} : vector<4x16x16xbf16>, vector<4x16x32xbf16>, vector<4x16x32xf32> -> vector<4x16x32xf32>
    "tpu.trace_stop"() : () -> ()
    %238 = vector.shape_cast %237 : vector<4x16x32xf32> to vector<64x32xf32>
    %239 = arith.truncf %238 : vector<64x32xf32> to vector<64x32xbf16>
    %c64_82 = arith.constant 64 : index
    %c0_83 = arith.constant 0 : index
    %240 = vector.load %arg13[%c64_82, %c0_83] : memref<128x128xbf16, #tpu.memory_space<vmem>>, vector<32x128xbf16>
    %cst_84 = arith.constant dense<0.000000e+00> : vector<64x128xf32>
    %241 = tpu.matmul %239, %240, %cst_84 {dimension_numbers = #tpu.dot_dimension_numbers<[1], [0], [0], [1], [0, 0, 1, 1], [], []>} : vector<64x32xbf16>, vector<32x128xbf16>, vector<64x128xf32> -> vector<64x128xf32>
    %242 = arith.addf %216, %241 : vector<64x128xf32>
    %243 = vector.extract_strided_slice %163 {offsets = [0, 0, 96], sizes = [4, 16, 32], strides = [1, 1, 1]} : vector<4x16x128xf32> to vector<4x16x32xf32>
    %244 = arith.truncf %243 : vector<4x16x32xf32> to vector<4x16x32xbf16>
    %245 = vector.extract_strided_slice %160 {offsets = [0, 0, 96], sizes = [4, 16, 32], strides = [1, 1, 1]} : vector<4x16x128xf32> to vector<4x16x32xf32>
    %246 = arith.truncf %245 : vector<4x16x32xf32> to vector<4x16x32xbf16>
    %247 = vector.extract_strided_slice %162 {offsets = [0, 0, 96], sizes = [4, 16, 32], strides = [1, 1, 1]} : vector<4x16x128xf32> to vector<4x16x32xf32>
    %248 = arith.truncf %247 : vector<4x16x32xf32> to vector<4x16x32xbf16>
    "tpu.trace_start"() <{level = 10 : i32, message = "bqd,bkd->bqk"}> : () -> ()
    %cst_85 = arith.constant dense<0.000000e+00> : vector<4x16x16xf32>
    %249 = tpu.matmul %244, %246, %cst_85 {dimension_numbers = #tpu.dot_dimension_numbers<[2], [2], [1], [1], [0, 0, 0, 1, 1, 1], [0], [0]>} : vector<4x16x32xbf16>, vector<4x16x32xbf16>, vector<4x16x16xf32> -> vector<4x16x16xf32>
    "tpu.trace_stop"() : () -> ()
    %cst_86 = arith.constant 0.176776692 : f32
    %250 = vector.broadcast %cst_86 : f32 to vector<4x16x16xf32>
    %251 = arith.mulf %249, %250 : vector<4x16x16xf32>
    %cst_87 = arith.constant dense<0xFF800000> : vector<4x16xf32>
    %252 = vector.multi_reduction <maximumf>, %251, %cst_87 [2] : vector<4x16x16xf32> to vector<4x16xf32>
    %253 = vector.shape_cast %252 : vector<4x16xf32> to vector<4x16x1xf32>
    %254 = vector.broadcast %253 : vector<4x16x1xf32> to vector<4x16x16xf32>
    %255 = arith.subf %251, %254 : vector<4x16x16xf32>
    %256 = math.exp %255 : vector<4x16x16xf32>
    %cst_88 = arith.constant dense<0.000000e+00> : vector<4x16xf32>
    %257 = vector.multi_reduction <add>, %256, %cst_88 [2] : vector<4x16x16xf32> to vector<4x16xf32>
    %258 = vector.shape_cast %257 : vector<4x16xf32> to vector<4x16x1xf32>
    %259 = tpu.reciprocal %258 {approx = true} : vector<4x16x1xf32> -> vector<4x16x1xf32>
    %260 = vector.broadcast %259 : vector<4x16x1xf32> to vector<4x16x16xf32>
    %261 = arith.mulf %256, %260 : vector<4x16x16xf32>
    %262 = arith.truncf %261 : vector<4x16x16xf32> to vector<4x16x16xbf16>
    "tpu.trace_start"() <{level = 10 : i32, message = "bqk,bkd->bqd"}> : () -> ()
    %cst_89 = arith.constant dense<0.000000e+00> : vector<4x16x32xf32>
    %263 = tpu.matmul %262, %248, %cst_89 {dimension_numbers = #tpu.dot_dimension_numbers<[2], [1], [1], [2], [0, 0, 0, 1, 1, 2], [0], [0]>} : vector<4x16x16xbf16>, vector<4x16x32xbf16>, vector<4x16x32xf32> -> vector<4x16x32xf32>
    "tpu.trace_stop"() : () -> ()
    %264 = vector.shape_cast %263 : vector<4x16x32xf32> to vector<64x32xf32>
    %265 = arith.truncf %264 : vector<64x32xf32> to vector<64x32xbf16>
    %c96_90 = arith.constant 96 : index
    %c0_91 = arith.constant 0 : index
    %266 = vector.load %arg13[%c96_90, %c0_91] : memref<128x128xbf16, #tpu.memory_space<vmem>>, vector<32x128xbf16>
    %cst_92 = arith.constant dense<0.000000e+00> : vector<64x128xf32>
    %267 = tpu.matmul %265, %266, %cst_92 {dimension_numbers = #tpu.dot_dimension_numbers<[1], [0], [0], [1], [0, 0, 1, 1], [], []>} : vector<64x32xbf16>, vector<32x128xbf16>, vector<64x128xf32> -> vector<64x128xf32>
    %268 = arith.addf %242, %267 : vector<64x128xf32>
    %c0_93 = arith.constant 0 : index
    %c0_94 = arith.constant 0 : index
    %269 = vector.load %arg14[%c0_93, %c0_94] : memref<1x128xf32, #tpu.memory_space<vmem>>, vector<1x128xf32>
    %270 = vector.broadcast %269 : vector<1x128xf32> to vector<64x128xf32>
    %271 = arith.addf %268, %270 : vector<64x128xf32>
    %272 = arith.addf %146, %271 : vector<64x128xf32>
    %c0_95 = arith.constant 0 : index
    %c0_96 = arith.constant 0 : index
    %273 = vector.load %arg15[%c0_95, %c0_96] : memref<1x128xf32, #tpu.memory_space<vmem>>, vector<1x128xf32>
    %c0_97 = arith.constant 0 : index
    %c0_98 = arith.constant 0 : index
    %274 = vector.load %arg16[%c0_97, %c0_98] : memref<1x128xf32, #tpu.memory_space<vmem>>, vector<1x128xf32>
    %cst_99 = arith.constant dense<0.000000e+00> : vector<64xf32>
    %275 = vector.multi_reduction <add>, %272, %cst_99 [1] : vector<64x128xf32> to vector<64xf32>
    %276 = vector.shape_cast %275 : vector<64xf32> to vector<64x1xf32>
    %cst_100 = arith.constant 1.280000e+02 : f32
    %277 = vector.broadcast %cst_100 : f32 to vector<64x1xf32>
    %278 = arith.divf %276, %277 : vector<64x1xf32>
    %279 = vector.broadcast %278 : vector<64x1xf32> to vector<64x128xf32>
    %280 = arith.subf %272, %279 : vector<64x128xf32>
    %281 = arith.mulf %280, %280 : vector<64x128xf32>
    %cst_101 = arith.constant dense<0.000000e+00> : vector<64xf32>
    %282 = vector.multi_reduction <add>, %281, %cst_101 [1] : vector<64x128xf32> to vector<64xf32>
    %283 = vector.shape_cast %282 : vector<64xf32> to vector<64x1xf32>
    %cst_102 = arith.constant 1.280000e+02 : f32
    %284 = vector.broadcast %cst_102 : f32 to vector<64x1xf32>
    %285 = arith.divf %283, %284 : vector<64x1xf32>
    %cst_103 = arith.constant 9.99999974E-6 : f32
    %286 = vector.broadcast %cst_103 : f32 to vector<64x1xf32>
    %287 = arith.addf %285, %286 : vector<64x1xf32>
    %288 = math.rsqrt %287 : vector<64x1xf32>
    %289 = vector.broadcast %288 : vector<64x1xf32> to vector<64x128xf32>
    %290 = arith.mulf %280, %289 : vector<64x128xf32>
    %291 = vector.broadcast %273 : vector<1x128xf32> to vector<64x128xf32>
    %292 = arith.mulf %290, %291 : vector<64x128xf32>
    %293 = vector.broadcast %274 : vector<1x128xf32> to vector<64x128xf32>
    %294 = arith.addf %292, %293 : vector<64x128xf32>
    %295 = arith.truncf %294 : vector<64x128xf32> to vector<64x128xbf16>
    %cst_104 = arith.constant 0.000000e+00 : f32
    %296 = vector.broadcast %cst_104 : f32 to vector<64x128xf32>
    %c0_105 = arith.constant 0 : index
    %c0_106 = arith.constant 0 : index
    %297 = vector.load %arg17[%c0_105, %c0_106] : memref<128x512xbf16, #tpu.memory_space<vmem>>, vector<128x512xbf16>
    %cst_107 = arith.constant dense<0.000000e+00> : vector<64x512xf32>
    %298 = tpu.matmul %295, %297, %cst_107 {dimension_numbers = #tpu.dot_dimension_numbers<[1], [0], [0], [1], [0, 0, 1, 1], [], []>} : vector<64x128xbf16>, vector<128x512xbf16>, vector<64x512xf32> -> vector<64x512xf32>
    %c0_108 = arith.constant 0 : index
    %c0_109 = arith.constant 0 : index
    %299 = vector.load %arg18[%c0_108, %c0_109] : memref<1x512xf32, #tpu.memory_space<vmem>>, vector<1x512xf32>
    %300 = vector.broadcast %299 : vector<1x512xf32> to vector<64x512xf32>
    %301 = arith.addf %298, %300 : vector<64x512xf32>
    %cst_110 = arith.constant 0.000000e+00 : f32
    %302 = vector.broadcast %cst_110 : f32 to vector<64x512xf32>
    %303 = arith.maximumf %301, %302 : vector<64x512xf32>
    %304 = arith.truncf %303 : vector<64x512xf32> to vector<64x512xbf16>
    %c0_111 = arith.constant 0 : index
    %c0_112 = arith.constant 0 : index
    %305 = vector.load %arg19[%c0_111, %c0_112] : memref<512x128xbf16, #tpu.memory_space<vmem>>, vector<512x128xbf16>
    %cst_113 = arith.constant dense<0.000000e+00> : vector<64x128xf32>
    %306 = tpu.matmul %304, %305, %cst_113 {dimension_numbers = #tpu.dot_dimension_numbers<[1], [0], [0], [1], [0, 0, 1, 1], [], []>} : vector<64x512xbf16>, vector<512x128xbf16>, vector<64x128xf32> -> vector<64x128xf32>
    %307 = arith.addf %296, %306 : vector<64x128xf32>
    %c0_114 = arith.constant 0 : index
    %c0_115 = arith.constant 0 : index
    %308 = vector.load %arg20[%c0_114, %c0_115] : memref<1x128xf32, #tpu.memory_space<vmem>>, vector<1x128xf32>
    %309 = vector.broadcast %308 : vector<1x128xf32> to vector<64x128xf32>
    %310 = arith.addf %307, %309 : vector<64x128xf32>
    %311 = arith.addf %310, %294 : vector<64x128xf32>
    %c0_116 = arith.constant 0 : index
    %c0_117 = arith.constant 0 : index
    %312 = vector.load %arg21[%c0_116, %c0_117] : memref<1x128xf32, #tpu.memory_space<vmem>>, vector<1x128xf32>
    %c0_118 = arith.constant 0 : index
    %c0_119 = arith.constant 0 : index
    %313 = vector.load %arg22[%c0_118, %c0_119] : memref<1x128xf32, #tpu.memory_space<vmem>>, vector<1x128xf32>
    %cst_120 = arith.constant dense<0.000000e+00> : vector<64xf32>
    %314 = vector.multi_reduction <add>, %311, %cst_120 [1] : vector<64x128xf32> to vector<64xf32>
    %315 = vector.shape_cast %314 : vector<64xf32> to vector<64x1xf32>
    %cst_121 = arith.constant 1.280000e+02 : f32
    %316 = vector.broadcast %cst_121 : f32 to vector<64x1xf32>
    %317 = arith.divf %315, %316 : vector<64x1xf32>
    %318 = vector.broadcast %317 : vector<64x1xf32> to vector<64x128xf32>
    %319 = arith.subf %311, %318 : vector<64x128xf32>
    %320 = arith.mulf %319, %319 : vector<64x128xf32>
    %cst_122 = arith.constant dense<0.000000e+00> : vector<64xf32>
    %321 = vector.multi_reduction <add>, %320, %cst_122 [1] : vector<64x128xf32> to vector<64xf32>
    %322 = vector.shape_cast %321 : vector<64xf32> to vector<64x1xf32>
    %cst_123 = arith.constant 1.280000e+02 : f32
    %323 = vector.broadcast %cst_123 : f32 to vector<64x1xf32>
    %324 = arith.divf %322, %323 : vector<64x1xf32>
    %cst_124 = arith.constant 9.99999974E-6 : f32
    %325 = vector.broadcast %cst_124 : f32 to vector<64x1xf32>
    %326 = arith.addf %324, %325 : vector<64x1xf32>
    %327 = math.rsqrt %326 : vector<64x1xf32>
    %328 = vector.broadcast %327 : vector<64x1xf32> to vector<64x128xf32>
    %329 = arith.mulf %319, %328 : vector<64x128xf32>
    %330 = vector.broadcast %312 : vector<1x128xf32> to vector<64x128xf32>
    %331 = arith.mulf %329, %330 : vector<64x128xf32>
    %332 = vector.broadcast %313 : vector<1x128xf32> to vector<64x128xf32>
    %333 = arith.addf %331, %332 : vector<64x128xf32>
    %334 = vector.shape_cast %333 : vector<64x128xf32> to vector<4x16x128xf32>
    %c0_125 = arith.constant 0 : index
    %c0_126 = arith.constant 0 : index
    %c0_127 = arith.constant 0 : index
    %335 = vector.load %arg23[%c0_125, %c0_126, %c0_127] : memref<4x16x128xf32, #tpu.memory_space<vmem>>, vector<4x16x128xf32>
    tpu.vector_store %arg23[%c0_125, %c0_126, %c0_127], %334 {strides = array<i32>} : memref<4x16x128xf32, #tpu.memory_space<vmem>>, vector<4x16x128xf32>,
    return
  }
  func.func @transform_0(%arg0: i32) -> (i32, i32, i32) {
    %c0_i32 = arith.constant 0 : i32
    %c0_i32_0 = arith.constant 0 : i32
    %c0_i32_1 = arith.constant 0 : i32
    return %arg0, %c0_i32, %c0_i32_0 : i32, i32, i32
  }
  func.func @transform_1(%arg0: i32) -> (i32, i32, i32) {
    %c0_i32 = arith.constant 0 : i32
    %c0_i32_0 = arith.constant 0 : i32
    %c0_i32_1 = arith.constant 0 : i32
    return %arg0, %c0_i32, %c0_i32_0 : i32, i32, i32
  }
  func.func @transform_2(%arg0: i32) -> (i32, i32) {
    %c0_i32 = arith.constant 0 : i32
    %c0_i32_0 = arith.constant 0 : i32
    %c0_i32_1 = arith.constant 0 : i32
    return %c0_i32, %c0_i32_0 : i32, i32
  }
  func.func @transform_3(%arg0: i32) -> (i32, i32) {
    %c0_i32 = arith.constant 0 : i32
    %c0_i32_0 = arith.constant 0 : i32
    %c0_i32_1 = arith.constant 0 : i32
    return %c0_i32, %c0_i32_0 : i32, i32
  }
  func.func @transform_4(%arg0: i32) -> (i32, i32) {
    %c0_i32 = arith.constant 0 : i32
    %c0_i32_0 = arith.constant 0 : i32
    %c0_i32_1 = arith.constant 0 : i32
    return %c0_i32, %c0_i32_0 : i32, i32
  }
  func.func @transform_5(%arg0: i32) -> (i32, i32) {
    %c0_i32 = arith.constant 0 : i32
    %c0_i32_0 = arith.constant 0 : i32
    %c0_i32_1 = arith.constant 0 : i32
    return %c0_i32, %c0_i32_0 : i32, i32
  }
  func.func @transform_6(%arg0: i32) -> (i32, i32) {
    %c0_i32 = arith.constant 0 : i32
    %c0_i32_0 = arith.constant 0 : i32
    %c0_i32_1 = arith.constant 0 : i32
    return %c0_i32, %c0_i32_0 : i32, i32
  }
  func.func @transform_7(%arg0: i32) -> (i32, i32) {
    %c0_i32 = arith.constant 0 : i32
    %c0_i32_0 = arith.constant 0 : i32
    %c0_i32_1 = arith.constant 0 : i32
    return %c0_i32, %c0_i32_0 : i32, i32
  }
  func.func @transform_8(%arg0: i32) -> (i32, i32) {
    %c0_i32 = arith.constant 0 : i32
    %c0_i32_0 = arith.constant 0 : i32
    %c0_i32_1 = arith.constant 0 : i32
    return %c0_i32, %c0_i32_0 : i32, i32
  }
  func.func @transform_9(%arg0: i32) -> (i32, i32) {
    %c0_i32 = arith.constant 0 : i32
    %c0_i32_0 = arith.constant 0 : i32
    %c0_i32_1 = arith.constant 0 : i32
    return %c0_i32, %c0_i32_0 : i32, i32
  }
  func.func @transform_10(%arg0: i32) -> (i32, i32) {
    %c0_i32 = arith.constant 0 : i32
    %c0_i32_0 = arith.constant 0 : i32
    %c0_i32_1 = arith.constant 0 : i32
    return %c0_i32, %c0_i32_0 : i32, i32
  }
  func.func @transform_11(%arg0: i32) -> (i32, i32) {
    %c0_i32 = arith.constant 0 : i32
    %c0_i32_0 = arith.constant 0 : i32
    %c0_i32_1 = arith.constant 0 : i32
    return %c0_i32, %c0_i32_0 : i32, i32
  }
  func.func @transform_12(%arg0: i32) -> (i32, i32) {
    %c0_i32 = arith.constant 0 : i32
    %c0_i32_0 = arith.constant 0 : i32
    %c0_i32_1 = arith.constant 0 : i32
    return %c0_i32, %c0_i32_0 : i32, i32
  }
  func.func @transform_13(%arg0: i32) -> (i32, i32) {
    %c0_i32 = arith.constant 0 : i32
    %c0_i32_0 = arith.constant 0 : i32
    %c0_i32_1 = arith.constant 0 : i32
    return %c0_i32, %c0_i32_0 : i32, i32
  }
  func.func @transform_14(%arg0: i32) -> (i32, i32) {
    %c0_i32 = arith.constant 0 : i32
    %c0_i32_0 = arith.constant 0 : i32
    %c0_i32_1 = arith.constant 0 : i32
    return %c0_i32, %c0_i32_0 : i32, i32
  }
  func.func @transform_15(%arg0: i32) -> (i32, i32) {
    %c0_i32 = arith.constant 0 : i32
    %c0_i32_0 = arith.constant 0 : i32
    %c0_i32_1 = arith.constant 0 : i32
    return %c0_i32, %c0_i32_0 : i32, i32
  }
  func.func @transform_16(%arg0: i32) -> (i32, i32) {
    %c0_i32 = arith.constant 0 : i32
    %c0_i32_0 = arith.constant 0 : i32
    %c0_i32_1 = arith.constant 0 : i32
    return %c0_i32, %c0_i32_0 : i32, i32
  }
  func.func @transform_17(%arg0: i32) -> (i32, i32) {
    %c0_i32 = arith.constant 0 : i32
    %c0_i32_0 = arith.constant 0 : i32
    %c0_i32_1 = arith.constant 0 : i32
    return %c0_i32, %c0_i32_0 : i32, i32
  }
  func.func @transform_18(%arg0: i32) -> (i32, i32) {
    %c0_i32 = arith.constant 0 : i32
    %c0_i32_0 = arith.constant 0 : i32
    %c0_i32_1 = arith.constant 0 : i32
    return %c0_i32, %c0_i32_0 : i32, i32
  }
  func.func @transform_19(%arg0: i32) -> (i32, i32) {
    %c0_i32 = arith.constant 0 : i32
    %c0_i32_0 = arith.constant 0 : i32
    %c0_i32_1 = arith.constant 0 : i32
    return %c0_i32, %c0_i32_0 : i32, i32
  }
  func.func @transform_20(%arg0: i32) -> (i32, i32) {
    %c0_i32 = arith.constant 0 : i32
    %c0_i32_0 = arith.constant 0 : i32
    %c0_i32_1 = arith.constant 0 : i32
    return %c0_i32, %c0_i32_0 : i32, i32
  }
  func.func @transform_21(%arg0: i32) -> (i32, i32) {
    %c0_i32 = arith.constant 0 : i32
    %c0_i32_0 = arith.constant 0 : i32
    %c0_i32_1 = arith.constant 0 : i32
    return %c0_i32, %c0_i32_0 : i32, i32
  }
  func.func @transform_22(%arg0: i32) -> (i32, i32, i32) {
    %c0_i32 = arith.constant 0 : i32
    %c0_i32_0 = arith.constant 0 : i32
    %c0_i32_1 = arith.constant 0 : i32
    return %arg0, %c0_i32, %c0_i32_0 : i32, i32, i32
  }
}

</mosaic_0001>

<llo_original>
// kernel: tpu_custom_call.1
$region0: #{tpu_custom_call.1}
  #allocation0 [shape = 'u32[]', space=smem, size = 0x4, offset = 0x4, fixed_abs, tag = 'smem constant byte address 0x4 - core index']
  #allocation1 [shape = 'u32[144,128]{1,0:T(1,128)}', space=vmem, size = 0x12000, scoped, tag = 'internal scratch']
  %s0 = inlined_call_operand.hbm [shape: f32[8,16,128], index: 0, kind: input, shape index: {}]
  %s1 = inlined_call_operand.hbm [shape: f32[8,16,128], index: 1, kind: input, shape index: {}]
  %s2 = inlined_call_operand.hbm [shape: bf16[128,384], index: 2, kind: input, shape index: {}]
  %s3 = inlined_call_operand.vmem [shape: f32[1,384], index: 3, kind: input, shape index: {}]
  %s4 = inlined_call_operand.hbm [shape: bf16[128,128], index: 4, kind: input, shape index: {}]
  %s5 = inlined_call_operand.vmem [shape: f32[1,128], index: 5, kind: input, shape index: {}]
  %s6 = inlined_call_operand.vmem [shape: f32[1,128], index: 6, kind: input, shape index: {}]
  %s7 = inlined_call_operand.vmem [shape: f32[1,128], index: 7, kind: input, shape index: {}]
  %s8 = inlined_call_operand.hbm [shape: bf16[128,128], index: 8, kind: input, shape index: {}]
  %s9 = inlined_call_operand.vmem [shape: f32[1,128], index: 9, kind: input, shape index: {}]
  %s10 = inlined_call_operand.hbm [shape: bf16[128,256], index: 10, kind: input, shape index: {}]
  %s11 = inlined_call_operand.vmem [shape: f32[1,256], index: 11, kind: input, shape index: {}]
  %s12 = inlined_call_operand.hbm [shape: bf16[128,128], index: 12, kind: input, shape index: {}]
  %s13 = inlined_call_operand.vmem [shape: f32[1,128], index: 13, kind: input, shape index: {}]
  %s14 = inlined_call_operand.vmem [shape: f32[1,128], index: 14, kind: input, shape index: {}]
  %s15 = inlined_call_operand.vmem [shape: f32[1,128], index: 15, kind: input, shape index: {}]
  %s16 = inlined_call_operand.hbm [shape: bf16[128,512], index: 16, kind: input, shape index: {}]
  %s17 = inlined_call_operand.vmem [shape: f32[1,512], index: 17, kind: input, shape index: {}]
  %s18 = inlined_call_operand.hbm [shape: bf16[512,128], index: 18, kind: input, shape index: {}]
  %s19 = inlined_call_operand.vmem [shape: f32[1,128], index: 19, kind: input, shape index: {}]
  %s20 = inlined_call_operand.vmem [shape: f32[1,128], index: 20, kind: input, shape index: {}]
  %s21 = inlined_call_operand.vmem [shape: f32[1,128], index: 21, kind: input, shape index: {}]
  %s22 = inlined_call_operand.hbm [shape: f32[8,16,128], index: 22, kind: output, shape index: {}]
  %s23 = sld [smem:[#allocation0]]
  $region157: #{tpu_custom_call.1} parent=0
    _
  %s25 = ssub.s32 1, %s23
  %s26 = scalar_select 0, %s25, %s23
  $region1: #{tpu_custom_call.1} parent=0
    #allocation2 [shape = 'u8[65536]{0}', space=vmem, size = 0x10000, scoped, tag = 'input window, operand 0']
    #allocation3 [shape = 's32[2]{0}', space=sflag, size = 0x8, scoped, tag = 'scoped memory for tpu_custom_call.1']
    #allocation4 [shape = 's32[2]{0}', space=sflag, size = 0x8, scoped, tag = 'scoped memory for tpu_custom_call.1']
    #allocation5 [shape = 'u8[65536]{0}', space=vmem, size = 0x10000, scoped, tag = 'input window, operand 1']
    #allocation6 [shape = 's32[2]{0}', space=sflag, size = 0x8, scoped, tag = 'scoped memory for tpu_custom_call.1']
    #allocation7 [shape = 'u8[98304]{0}', space=vmem, size = 0x18000, scoped, tag = 'input window, operand 2, single buffered']
    #allocation8 [shape = 'u8[32768]{0}', space=vmem, size = 0x8000, scoped, tag = 'input window, operand 4, single buffered']
    #allocation9 [shape = 's32[1]{0}', space=sflag, size = 0x4, scoped, tag = 'scoped memory for tpu_custom_call.1']
    #allocation10 [shape = 'u8[32768]{0}', space=vmem, size = 0x8000, scoped, tag = 'input window, operand 8, single buffered']
    #allocation11 [shape = 'u8[65536]{0}', space=vmem, size = 0x10000, scoped, tag = 'input window, operand 10, single buffered']
    #allocation12 [shape = 's32[1]{0}', space=sflag, size = 0x4, scoped, tag = 'scoped memory for tpu_custom_call.1']
    #allocation13 [shape = 'u8[32768]{0}', space=vmem, size = 0x8000, scoped, tag = 'input window, operand 12, single buffered']
    #allocation14 [shape = 'u8[131072]{0}', space=vmem, size = 0x20000, scoped, tag = 'input window, operand 16, single buffered']
    #allocation15 [shape = 's32[1]{0}', space=sflag, size = 0x4, scoped, tag = 'scoped memory for tpu_custom_call.1']
    #allocation16 [shape = 'u8[131072]{0}', space=vmem, size = 0x20000, scoped, tag = 'input window, operand 18, single buffered']
    #allocation17 [shape = 'u8[65536]{0}', space=vmem, size = 0x10000, scoped, tag = 'output window, operand 0']
    %27 = vsyncpa [#allocation3], 0
    %s28 = scalar_lea.sflag [#allocation3], 1
    %29 = vsyncpa %s28, 0
    %30 = vsyncpa [#allocation6], 0
    %s31 = scalar_lea.sflag [#allocation6], 1
    %32 = vsyncpa %s31, 0
    %33 = vsyncpa [#allocation9], 0
    %34 = vsyncpa [#allocation12], 0
    %35 = vsyncpa [#allocation15], 0
    %36 = vsyncpa [#allocation4], 0
    %s37 = scalar_lea.sflag [#allocation4], 1
    %38 = vsyncpa %s37, 0
    loop: start=0, step=1, limit=4
    $region2: #{tpu_custom_call.1} parent=1 // loop_pre_header
      _
    $region3: #{tpu_custom_call.1} parent=1 // loop_header
      %s40 = sphi 0, %s44
      %p41 = scmp.ge.s32.totalorder %s40, 4
      %s50 = sphi 0, %s52
      %s53 = sphi 0, %s50
      %s54 = sphi 0, %s53
      %s70 = sphi 0, %s54
      %s76 = sphi 0, %s78
      %s79 = sphi 0, %s76
      %s80 = sphi 0, %s79
      %s96 = sphi 0, %s80
      %s100 = sphi 0, %s100
      %s102 = sphi 0, %s100
      %s103 = sphi 0, %s102
      %s117 = sphi 0, %s103
      %s121 = sphi 0, %s121
      %s123 = sphi 0, %s121
      %s124 = sphi 0, %s123
      %s138 = sphi 0, %s124
      %s142 = sphi 0, %s142
      %s144 = sphi 0, %s142
      %s145 = sphi 0, %s144
      %s159 = sphi 0, %s145
      %s163 = sphi 0, %s163
      %s165 = sphi 0, %s163
      %s166 = sphi 0, %s165
      %s180 = sphi 0, %s166
      %s184 = sphi 0, %s184
      %s186 = sphi 0, %s184
      %s187 = sphi 0, %s186
      %s201 = sphi 0, %s187
      %s205 = sphi 0, %s205
      %s207 = sphi 0, %s205
      %s208 = sphi 0, %s207
      %s222 = sphi 0, %s208
      %s226 = sphi 0, %s226
      %s228 = sphi 0, %s226
      %s229 = sphi 0, %s228
      %s243 = sphi 0, %s229
      %s247 = sphi 0, %s247
      %s249 = sphi 0, %s247
      %s250 = sphi 0, %s249
      %s264 = sphi 0, %s250
      %s268 = sphi 0, %s268
      %s270 = sphi 0, %s268
      %s271 = sphi 0, %s270
      %s285 = sphi 0, %s271
      %s289 = sphi 0, %s289
      %s291 = sphi 0, %s289
      %s292 = sphi 0, %s291
      %s306 = sphi 0, %s292
      %s310 = sphi 0, %s310
      %s312 = sphi 0, %s310
      %s313 = sphi 0, %s312
      %s327 = sphi 0, %s313
      %s331 = sphi 0, %s331
      %s333 = sphi 0, %s331
      %s334 = sphi 0, %s333
      %s348 = sphi 0, %s334
      %s352 = sphi 0, %s352
      %s354 = sphi 0, %s352
      %s355 = sphi 0, %s354
      %s369 = sphi 0, %s355
      %s373 = sphi 0, %s373
      %s375 = sphi 0, %s373
      %s376 = sphi 0, %s375
      %s390 = sphi 0, %s376
      %s394 = sphi 0, %s394
      %s396 = sphi 0, %s394
      %s397 = sphi 0, %s396
      %s411 = sphi 0, %s397
      %s415 = sphi 0, %s415
      %s417 = sphi 0, %s415
      %s418 = sphi 0, %s417
      %s432 = sphi 0, %s418
      %s436 = sphi 0, %s436
      %s438 = sphi 0, %s436
      %s439 = sphi 0, %s438
      %s453 = sphi 0, %s439
      %s457 = sphi 0, %s457
      %s459 = sphi 0, %s457
      %s460 = sphi 0, %s459
      %s474 = sphi 0, %s460
      %s478 = sphi 0, %s478
      %s480 = sphi 0, %s478
      %s481 = sphi 0, %s480
      %s495 = sphi 0, %s481
      %s499 = sphi 0, %s499
      %s501 = sphi 0, %s499
      %s502 = sphi 0, %s501
      %s516 = sphi 0, %s502
      %s522 = sphi 0, %s524
      %s525 = sphi 0, %s522
      %s526 = sphi 0, %s525
      %s542 = sphi 0, %s526
    $region4: #{tpu_custom_call.1} parent=1 // loop_header_branch
      %43 = sbr.rel (%p41) target = $region8
    $region5: #{tpu_custom_call.1} parent=1 // loop_body
      %s45 = ssub.s32 %s40, 1
      %s46 = ssub.s32 %s40, 2
      %s47 = sadd.s32 %s40, 1
      %s48 = ssub.s32 %s40, %s47
      %p49 = scmp.eq.s32.totalorder %s48, 0
      %s51 = sadd.s32 %s50, 1
      %s52 = scalar_select %p49, %s50, %s51
      %p55 = pneg %p49
      %p56 = scmp.eq.s32.totalorder %s40, 1
      %p57 = por %p55, %p56
      %p58 = scmp.ne.s32.totalorder %s50, %s53
      %p59 = scmp.eq.s32.totalorder %s40, 0
      %p60 = por %p58, %p59
      %p61 = scmp.ne.s32.totalorder %s50, %s53
      %p62 = scmp.eq.s32.totalorder %s45, 1
      %p63 = por %p61, %p62
      %p64 = scmp.ne.s32.totalorder %s53, %s54
      %p65 = scmp.eq.s32.totalorder %s45, 0
      %p66 = por %p64, %p65
      %p67 = scmp.ne.s32.totalorder %s53, %s54
      %p68 = scmp.eq.s32.totalorder %s46, 1
      %p69 = por %p67, %p68
      %p71 = scmp.ne.s32.totalorder %s54, %s70
      %p72 = scmp.eq.s32.totalorder %s46, 0
      %p73 = por %p71, %p72
      %s74 = ssub.s32 %s40, %s47
      %p75 = scmp.eq.s32.totalorder %s74, 0
      %s77 = sadd.s32 %s76, 1
      %s78 = scalar_select %p75, %s76, %s77
      %p81 = pneg %p75
      %p82 = scmp.eq.s32.totalorder %s40, 1
      %p83 = por %p81, %p82
      %p84 = scmp.ne.s32.totalorder %s76, %s79
      %p85 = scmp.eq.s32.totalorder %s40, 0
      %p86 = por %p84, %p85
      %p87 = scmp.ne.s32.totalorder %s76, %s79
      %p88 = scmp.eq.s32.totalorder %s45, 1
      %p89 = por %p87, %p88
      %p90 = scmp.ne.s32.totalorder %s79, %s80
      %p91 = scmp.eq.s32.totalorder %s45, 0
      %p92 = por %p90, %p91
      %p93 = scmp.ne.s32.totalorder %s79, %s80
      %p94 = scmp.eq.s32.totalorder %s46, 1
      %p95 = por %p93, %p94
      %p97 = scmp.ne.s32.totalorder %s80, %s96
      %p98 = scmp.eq.s32.totalorder %s46, 0
      %p99 = por %p97, %p98
      %s101 = sadd.s32 %s100, 1
      %p104 = scmp.eq.s32.totalorder %s40, 1
      %p105 = scmp.ne.s32.totalorder %s100, %s102
      %p106 = scmp.eq.s32.totalorder %s40, 0
      %p107 = por %p105, %p106
      %p108 = scmp.ne.s32.totalorder %s100, %s102
      %p109 = scmp.eq.s32.totalorder %s45, 1
      %p110 = por %p108, %p109
      %p111 = scmp.ne.s32.totalorder %s102, %s103
      %p112 = scmp.eq.s32.totalorder %s45, 0
      %p113 = por %p111, %p112
      %p114 = scmp.ne.s32.totalorder %s102, %s103
      %p115 = scmp.eq.s32.totalorder %s46, 1
      %p116 = por %p114, %p115
      %p118 = scmp.ne.s32.totalorder %s103, %s117
      %p119 = scmp.eq.s32.totalorder %s46, 0
      %p120 = por %p118, %p119
      %s122 = sadd.s32 %s121, 1
      %p125 = scmp.eq.s32.totalorder %s40, 1
      %p126 = scmp.ne.s32.totalorder %s121, %s123
      %p127 = scmp.eq.s32.totalorder %s40, 0
      %p128 = por %p126, %p127
      %p129 = scmp.ne.s32.totalorder %s121, %s123
      %p130 = scmp.eq.s32.totalorder %s45, 1
      %p131 = por %p129, %p130
      %p132 = scmp.ne.s32.totalorder %s123, %s124
      %p133 = scmp.eq.s32.totalorder %s45, 0
      %p134 = por %p132, %p133
      %p135 = scmp.ne.s32.totalorder %s123, %s124
      %p136 = scmp.eq.s32.totalorder %s46, 1
      %p137 = por %p135, %p136
      %p139 = scmp.ne.s32.totalorder %s124, %s138
      %p140 = scmp.eq.s32.totalorder %s46, 0
      %p141 = por %p139, %p140
      %s143 = sadd.s32 %s142, 1
      %p146 = scmp.eq.s32.totalorder %s40, 1
      %p147 = scmp.ne.s32.totalorder %s142, %s144
      %p148 = scmp.eq.s32.totalorder %s40, 0
      %p149 = por %p147, %p148
      %p150 = scmp.ne.s32.totalorder %s142, %s144
      %p151 = scmp.eq.s32.totalorder %s45, 1
      %p152 = por %p150, %p151
      %p153 = scmp.ne.s32.totalorder %s144, %s145
      %p154 = scmp.eq.s32.totalorder %s45, 0
      %p155 = por %p153, %p154
      %p156 = scmp.ne.s32.totalorder %s144, %s145
      %p157 = scmp.eq.s32.totalorder %s46, 1
      %p158 = por %p156, %p157
      %p160 = scmp.ne.s32.totalorder %s145, %s159
      %p161 = scmp.eq.s32.totalorder %s46, 0
      %p162 = por %p160, %p161
      %s164 = sadd.s32 %s163, 1
      %p167 = scmp.eq.s32.totalorder %s40, 1
      %p168 = scmp.ne.s32.totalorder %s163, %s165
      %p169 = scmp.eq.s32.totalorder %s40, 0
      %p170 = por %p168, %p169
      %p171 = scmp.ne.s32.totalorder %s163, %s165
      %p172 = scmp.eq.s32.totalorder %s45, 1
      %p173 = por %p171, %p172
      %p174 = scmp.ne.s32.totalorder %s165, %s166
      %p175 = scmp.eq.s32.totalorder %s45, 0
      %p176 = por %p174, %p175
      %p177 = scmp.ne.s32.totalorder %s165, %s166
      %p178 = scmp.eq.s32.totalorder %s46, 1
      %p179 = por %p177, %p178
      %p181 = scmp.ne.s32.totalorder %s166, %s180
      %p182 = scmp.eq.s32.totalorder %s46, 0
      %p183 = por %p181, %p182
      %s185 = sadd.s32 %s184, 1
      %p188 = scmp.eq.s32.totalorder %s40, 1
      %p189 = scmp.ne.s32.totalorder %s184, %s186
      %p190 = scmp.eq.s32.totalorder %s40, 0
      %p191 = por %p189, %p190
      %p192 = scmp.ne.s32.totalorder %s184, %s186
      %p193 = scmp.eq.s32.totalorder %s45, 1
      %p194 = por %p192, %p193
      %p195 = scmp.ne.s32.totalorder %s186, %s187
      %p196 = scmp.eq.s32.totalorder %s45, 0
      %p197 = por %p195, %p196
      %p198 = scmp.ne.s32.totalorder %s186, %s187
      %p199 = scmp.eq.s32.totalorder %s46, 1
      %p200 = por %p198, %p199
      %p202 = scmp.ne.s32.totalorder %s187, %s201
      %p203 = scmp.eq.s32.totalorder %s46, 0
      %p204 = por %p202, %p203
      %s206 = sadd.s32 %s205, 1
      %p209 = scmp.eq.s32.totalorder %s40, 1
      %p210 = scmp.ne.s32.totalorder %s205, %s207
      %p211 = scmp.eq.s32.totalorder %s40, 0
      %p212 = por %p210, %p211
      %p213 = scmp.ne.s32.totalorder %s205, %s207
      %p214 = scmp.eq.s32.totalorder %s45, 1
      %p215 = por %p213, %p214
      %p216 = scmp.ne.s32.totalorder %s207, %s208
      %p217 = scmp.eq.s32.totalorder %s45, 0
      %p218 = por %p216, %p217
      %p219 = scmp.ne.s32.totalorder %s207, %s208
      %p220 = scmp.eq.s32.totalorder %s46, 1
      %p221 = por %p219, %p220
      %p223 = scmp.ne.s32.totalorder %s208, %s222
      %p224 = scmp.eq.s32.totalorder %s46, 0
      %p225 = por %p223, %p224
      %s227 = sadd.s32 %s226, 1
      %p230 = scmp.eq.s32.totalorder %s40, 1
      %p231 = scmp.ne.s32.totalorder %s226, %s228
      %p232 = scmp.eq.s32.totalorder %s40, 0
      %p233 = por %p231, %p232
      %p234 = scmp.ne.s32.totalorder %s226, %s228
      %p235 = scmp.eq.s32.totalorder %s45, 1
      %p236 = por %p234, %p235
      %p237 = scmp.ne.s32.totalorder %s228, %s229
      %p238 = scmp.eq.s32.totalorder %s45, 0
      %p239 = por %p237, %p238
      %p240 = scmp.ne.s32.totalorder %s228, %s229
      %p241 = scmp.eq.s32.totalorder %s46, 1
      %p242 = por %p240, %p241
      %p244 = scmp.ne.s32.totalorder %s229, %s243
      %p245 = scmp.eq.s32.totalorder %s46, 0
      %p246 = por %p244, %p245
      %s248 = sadd.s32 %s247, 1
      %p251 = scmp.eq.s32.totalorder %s40, 1
      %p252 = scmp.ne.s32.totalorder %s247, %s249
      %p253 = scmp.eq.s32.totalorder %s40, 0
      %p254 = por %p252, %p253
      %p255 = scmp.ne.s32.totalorder %s247, %s249
      %p256 = scmp.eq.s32.totalorder %s45, 1
      %p257 = por %p255, %p256
      %p258 = scmp.ne.s32.totalorder %s249, %s250
      %p259 = scmp.eq.s32.totalorder %s45, 0
      %p260 = por %p258, %p259
      %p261 = scmp.ne.s32.totalorder %s249, %s250
      %p262 = scmp.eq.s32.totalorder %s46, 1
      %p263 = por %p261, %p262
      %p265 = scmp.ne.s32.totalorder %s250, %s264
      %p266 = scmp.eq.s32.totalorder %s46, 0
      %p267 = por %p265, %p266
      %s269 = sadd.s32 %s268, 1
      %p272 = scmp.eq.s32.totalorder %s40, 1
      %p273 = scmp.ne.s32.totalorder %s268, %s270
      %p274 = scmp.eq.s32.totalorder %s40, 0
      %p275 = por %p273, %p274
      %p276 = scmp.ne.s32.totalorder %s268, %s270
      %p277 = scmp.eq.s32.totalorder %s45, 1
      %p278 = por %p276, %p277
      %p279 = scmp.ne.s32.totalorder %s270, %s271
      %p280 = scmp.eq.s32.totalorder %s45, 0
      %p281 = por %p279, %p280
      %p282 = scmp.ne.s32.totalorder %s270, %s271
      %p283 = scmp.eq.s32.totalorder %s46, 1
      %p284 = por %p282, %p283
      %p286 = scmp.ne.s32.totalorder %s271, %s285
      %p287 = scmp.eq.s32.totalorder %s46, 0
      %p288 = por %p286, %p287
      %s290 = sadd.s32 %s289, 1
      %p293 = scmp.eq.s32.totalorder %s40, 1
      %p294 = scmp.ne.s32.totalorder %s289, %s291
      %p295 = scmp.eq.s32.totalorder %s40, 0
      %p296 = por %p294, %p295
      %p297 = scmp.ne.s32.totalorder %s289, %s291
      %p298 = scmp.eq.s32.totalorder %s45, 1
      %p299 = por %p297, %p298
      %p300 = scmp.ne.s32.totalorder %s291, %s292
      %p301 = scmp.eq.s32.totalorder %s45, 0
      %p302 = por %p300, %p301
      %p303 = scmp.ne.s32.totalorder %s291, %s292
      %p304 = scmp.eq.s32.totalorder %s46, 1
      %p305 = por %p303, %p304
      %p307 = scmp.ne.s32.totalorder %s292, %s306
      %p308 = scmp.eq.s32.totalorder %s46, 0
      %p309 = por %p307, %p308
      %s311 = sadd.s32 %s310, 1
      %p314 = scmp.eq.s32.totalorder %s40, 1
      %p315 = scmp.ne.s32.totalorder %s310, %s312
      %p316 = scmp.eq.s32.totalorder %s40, 0
      %p317 = por %p315, %p316
      %p318 = scmp.ne.s32.totalorder %s310, %s312
      %p319 = scmp.eq.s32.totalorder %s45, 1
      %p320 = por %p318, %p319
      %p321 = scmp.ne.s32.totalorder %s312, %s313
      %p322 = scmp.eq.s32.totalorder %s45, 0
      %p323 = por %p321, %p322
      %p324 = scmp.ne.s32.totalorder %s312, %s313
      %p325 = scmp.eq.s32.totalorder %s46, 1
      %p326 = por %p324, %p325
      %p328 = scmp.ne.s32.totalorder %s313, %s327
      %p329 = scmp.eq.s32.totalorder %s46, 0
      %p330 = por %p328, %p329
      %s332 = sadd.s32 %s331, 1
      %p335 = scmp.eq.s32.totalorder %s40, 1
      %p336 = scmp.ne.s32.totalorder %s331, %s333
      %p337 = scmp.eq.s32.totalorder %s40, 0
      %p338 = por %p336, %p337
      %p339 = scmp.ne.s32.totalorder %s331, %s333
      %p340 = scmp.eq.s32.totalorder %s45, 1
      %p341 = por %p339, %p340
      %p342 = scmp.ne.s32.totalorder %s333, %s334
      %p343 = scmp.eq.s32.totalorder %s45, 0
      %p344 = por %p342, %p343
      %p345 = scmp.ne.s32.totalorder %s333, %s334
      %p346 = scmp.eq.s32.totalorder %s46, 1
      %p347 = por %p345, %p346
      %p349 = scmp.ne.s32.totalorder %s334, %s348
      %p350 = scmp.eq.s32.totalorder %s46, 0
      %p351 = por %p349, %p350
      %s353 = sadd.s32 %s352, 1
      %p356 = scmp.eq.s32.totalorder %s40, 1
      %p357 = scmp.ne.s32.totalorder %s352, %s354
      %p358 = scmp.eq.s32.totalorder %s40, 0
      %p359 = por %p357, %p358
      %p360 = scmp.ne.s32.totalorder %s352, %s354
      %p361 = scmp.eq.s32.totalorder %s45, 1
      %p362 = por %p360, %p361
      %p363 = scmp.ne.s32.totalorder %s354, %s355
      %p364 = scmp.eq.s32.totalorder %s45, 0
      %p365 = por %p363, %p364
      %p366 = scmp.ne.s32.totalorder %s354, %s355
      %p367 = scmp.eq.s32.totalorder %s46, 1
      %p368 = por %p366, %p367
      %p370 = scmp.ne.s32.totalorder %s355, %s369
      %p371 = scmp.eq.s32.totalorder %s46, 0
      %p372 = por %p370, %p371
      %s374 = sadd.s32 %s373, 1
      %p377 = scmp.eq.s32.totalorder %s40, 1
      %p378 = scmp.ne.s32.totalorder %s373, %s375
      %p379 = scmp.eq.s32.totalorder %s40, 0
      %p380 = por %p378, %p379
      %p381 = scmp.ne.s32.totalorder %s373, %s375
      %p382 = scmp.eq.s32.totalorder %s45, 1
      %p383 = por %p381, %p382
      %p384 = scmp.ne.s32.totalorder %s375, %s376
      %p385 = scmp.eq.s32.totalorder %s45, 0
      %p386 = por %p384, %p385
      %p387 = scmp.ne.s32.totalorder %s375, %s376
      %p388 = scmp.eq.s32.totalorder %s46, 1
      %p389 = por %p387, %p388
      %p391 = scmp.ne.s32.totalorder %s376, %s390
      %p392 = scmp.eq.s32.totalorder %s46, 0
      %p393 = por %p391, %p392
      %s395 = sadd.s32 %s394, 1
      %p398 = scmp.eq.s32.totalorder %s40, 1
      %p399 = scmp.ne.s32.totalorder %s394, %s396
      %p400 = scmp.eq.s32.totalorder %s40, 0
      %p401 = por %p399, %p400
      %p402 = scmp.ne.s32.totalorder %s394, %s396
      %p403 = scmp.eq.s32.totalorder %s45, 1
      %p404 = por %p402, %p403
      %p405 = scmp.ne.s32.totalorder %s396, %s397
      %p406 = scmp.eq.s32.totalorder %s45, 0
      %p407 = por %p405, %p406
      %p408 = scmp.ne.s32.totalorder %s396, %s397
      %p409 = scmp.eq.s32.totalorder %s46, 1
      %p410 = por %p408, %p409
      %p412 = scmp.ne.s32.totalorder %s397, %s411
      %p413 = scmp.eq.s32.totalorder %s46, 0
      %p414 = por %p412, %p413
      %s416 = sadd.s32 %s415, 1
      %p419 = scmp.eq.s32.totalorder %s40, 1
      %p420 = scmp.ne.s32.totalorder %s415, %s417
      %p421 = scmp.eq.s32.totalorder %s40, 0
      %p422 = por %p420, %p421
      %p423 = scmp.ne.s32.totalorder %s415, %s417
      %p424 = scmp.eq.s32.totalorder %s45, 1
      %p425 = por %p423, %p424
      %p426 = scmp.ne.s32.totalorder %s417, %s418
      %p427 = scmp.eq.s32.totalorder %s45, 0
      %p428 = por %p426, %p427
      %p429 = scmp.ne.s32.totalorder %s417, %s418
      %p430 = scmp.eq.s32.totalorder %s46, 1
      %p431 = por %p429, %p430
      %p433 = scmp.ne.s32.totalorder %s418, %s432
      %p434 = scmp.eq.s32.totalorder %s46, 0
      %p435 = por %p433, %p434
      %s437 = sadd.s32 %s436, 1
      %p440 = scmp.eq.s32.totalorder %s40, 1
      %p441 = scmp.ne.s32.totalorder %s436, %s438
      %p442 = scmp.eq.s32.totalorder %s40, 0
      %p443 = por %p441, %p442
      %p444 = scmp.ne.s32.totalorder %s436, %s438
      %p445 = scmp.eq.s32.totalorder %s45, 1
      %p446 = por %p444, %p445
      %p447 = scmp.ne.s32.totalorder %s438, %s439
      %p448 = scmp.eq.s32.totalorder %s45, 0
      %p449 = por %p447, %p448
      %p450 = scmp.ne.s32.totalorder %s438, %s439
      %p451 = scmp.eq.s32.totalorder %s46, 1
      %p452 = por %p450, %p451
      %p454 = scmp.ne.s32.totalorder %s439, %s453
      %p455 = scmp.eq.s32.totalorder %s46, 0
      %p456 = por %p454, %p455
      %s458 = sadd.s32 %s457, 1
      %p461 = scmp.eq.s32.totalorder %s40, 1
      %p462 = scmp.ne.s32.totalorder %s457, %s459
      %p463 = scmp.eq.s32.totalorder %s40, 0
      %p464 = por %p462, %p463
      %p465 = scmp.ne.s32.totalorder %s457, %s459
      %p466 = scmp.eq.s32.totalorder %s45, 1
      %p467 = por %p465, %p466
      %p468 = scmp.ne.s32.totalorder %s459, %s460
      %p469 = scmp.eq.s32.totalorder %s45, 0
      %p470 = por %p468, %p469
      %p471 = scmp.ne.s32.totalorder %s459, %s460
      %p472 = scmp.eq.s32.totalorder %s46, 1
      %p473 = por %p471, %p472
      %p475 = scmp.ne.s32.totalorder %s460, %s474
      %p476 = scmp.eq.s32.totalorder %s46, 0
      %p477 = por %p475, %p476
      %s479 = sadd.s32 %s478, 1
      %p482 = scmp.eq.s32.totalorder %s40, 1
      %p483 = scmp.ne.s32.totalorder %s478, %s480
      %p484 = scmp.eq.s32.totalorder %s40, 0
      %p485 = por %p483, %p484
      %p486 = scmp.ne.s32.totalorder %s478, %s480
      %p487 = scmp.eq.s32.totalorder %s45, 1
      %p488 = por %p486, %p487
      %p489 = scmp.ne.s32.totalorder %s480, %s481
      %p490 = scmp.eq.s32.totalorder %s45, 0
      %p491 = por %p489, %p490
      %p492 = scmp.ne.s32.totalorder %s480, %s481
      %p493 = scmp.eq.s32.totalorder %s46, 1
      %p494 = por %p492, %p493
      %p496 = scmp.ne.s32.totalorder %s481, %s495
      %p497 = scmp.eq.s32.totalorder %s46, 0
      %p498 = por %p496, %p497
      %s500 = sadd.s32 %s499, 1
      %p503 = scmp.eq.s32.totalorder %s40, 1
      %p504 = scmp.ne.s32.totalorder %s499, %s501
      %p505 = scmp.eq.s32.totalorder %s40, 0
      %p506 = por %p504, %p505
      %p507 = scmp.ne.s32.totalorder %s499, %s501
      %p508 = scmp.eq.s32.totalorder %s45, 1
      %p509 = por %p507, %p508
      %p510 = scmp.ne.s32.totalorder %s501, %s502
      %p511 = scmp.eq.s32.totalorder %s45, 0
      %p512 = por %p510, %p511
      %p513 = scmp.ne.s32.totalorder %s501, %s502
      %p514 = scmp.eq.s32.totalorder %s46, 1
      %p515 = por %p513, %p514
      %p517 = scmp.ne.s32.totalorder %s502, %s516
      %p518 = scmp.eq.s32.totalorder %s46, 0
      %p519 = por %p517, %p518
      %s520 = ssub.s32 %s40, %s47
      %p521 = scmp.eq.s32.totalorder %s520, 0
      %s523 = sadd.s32 %s522, 1
      %s524 = scalar_select %p521, %s522, %s523
      %p527 = pneg %p521
      %p528 = scmp.eq.s32.totalorder %s40, 1
      %p529 = por %p527, %p528
      %p530 = scmp.ne.s32.totalorder %s522, %s525
      %p531 = scmp.eq.s32.totalorder %s40, 0
      %p532 = por %p530, %p531
      %p533 = scmp.ne.s32.totalorder %s522, %s525
      %p534 = scmp.eq.s32.totalorder %s45, 1
      %p535 = por %p533, %p534
      %p536 = scmp.ne.s32.totalorder %s525, %s526
      %p537 = scmp.eq.s32.totalorder %s45, 0
      %p538 = por %p536, %p537
      %p539 = scmp.ne.s32.totalorder %s525, %s526
      %p540 = scmp.eq.s32.totalorder %s46, 1
      %p541 = por %p539, %p540
      %p543 = scmp.ne.s32.totalorder %s526, %s542
      %p544 = scmp.eq.s32.totalorder %s46, 0
      %p545 = por %p543, %p544
      %p546 = scmp.le.s32.totalorder 1, %s40
      %p547 = scmp.lt.s32.totalorder %s40, 3
      %p548 = pnand %p546, %p547
      %p549 = pneg %p548
      // Predicated region
      $region9: #{tpu_custom_call.1} parent=5 // pred_check
        _
      $region10: #{tpu_custom_call.1} parent=5 // pred_check_branch
        %551 = sbr.rel (%p548) target = $region12
      $region11: #{tpu_custom_call.1} parent=5 // pred_region
        %s552 = ssub.s32 %s40, 1
        // Predicated region
        $region13: #{tpu_custom_call.1} parent=11 // pred_check
          %p553 = pneg %p113
        $region14: #{tpu_custom_call.1} parent=11 // pred_check_branch
          %555 = sbr.rel (%p553) target = $region16
        $region15: #{tpu_custom_call.1} parent=11 // pred_region
          %s557 = ssub.s32 3072, 3072
          %558 = vsyncadd [#allocation6], %s557
          %s559 = sshll.u32 [#allocation7], 4
          %s560 = int_to_ptr.vmem [resolvable:$true] %s559
          %565 = dma.hbm_to_vmem [thread:$0]  %s2, 3072, %s560, [#allocation6], 192, 192, 12
        $region16: #{tpu_custom_call.1} parent=11 // pred_fallthru
          _
        // Predicated region
        $region17: #{tpu_custom_call.1} parent=11 // pred_check
          %p566 = pneg %p134
        $region18: #{tpu_custom_call.1} parent=11 // pred_check_branch
          %568 = sbr.rel (%p566) target = $region20
        $region19: #{tpu_custom_call.1} parent=11 // pred_region
          _
        $region20: #{tpu_custom_call.1} parent=11 // pred_fallthru
          _
        // Predicated region
        $region21: #{tpu_custom_call.1} parent=11 // pred_check
          %p569 = pneg %p155
        $region22: #{tpu_custom_call.1} parent=11 // pred_check_branch
          %571 = sbr.rel (%p569) target = $region24
        $region23: #{tpu_custom_call.1} parent=11 // pred_region
          %s573 = ssub.s32 1024, 1024
          %574 = vsyncadd [#allocation9], %s573
          %s575 = sshll.u32 [#allocation8], 4
          %s576 = int_to_ptr.vmem [resolvable:$true] %s575
          %581 = dma.hbm_to_vmem [thread:$0]  %s4, 1024, %s576, [#allocation9], 64, 64, 4
        $region24: #{tpu_custom_call.1} parent=11 // pred_fallthru
          _
        // Predicated region
        $region25: #{tpu_custom_call.1} parent=11 // pred_check
          %p582 = pneg %p176
        $region26: #{tpu_custom_call.1} parent=11 // pred_check_branch
          %584 = sbr.rel (%p582) target = $region28
        $region27: #{tpu_custom_call.1} parent=11 // pred_region
          _
        $region28: #{tpu_custom_call.1} parent=11 // pred_fallthru
          _
        // Predicated region
        $region29: #{tpu_custom_call.1} parent=11 // pred_check
          %p585 = pneg %p197
        $region30: #{tpu_custom_call.1} parent=11 // pred_check_branch
          %587 = sbr.rel (%p585) target = $region32
        $region31: #{tpu_custom_call.1} parent=11 // pred_region
          _
        $region32: #{tpu_custom_call.1} parent=11 // pred_fallthru
          _
        // Predicated region
        $region33: #{tpu_custom_call.1} parent=11 // pred_check
          %p588 = pneg %p218
        $region34: #{tpu_custom_call.1} parent=11 // pred_check_branch
          %590 = sbr.rel (%p588) target = $region36
        $region35: #{tpu_custom_call.1} parent=11 // pred_region
          _
        $region36: #{tpu_custom_call.1} parent=11 // pred_fallthru
          _
        // Predicated region
        $region37: #{tpu_custom_call.1} parent=11 // pred_check
          %p591 = pneg %p239
        $region38: #{tpu_custom_call.1} parent=11 // pred_check_branch
          %593 = sbr.rel (%p591) target = $region40
        $region39: #{tpu_custom_call.1} parent=11 // pred_region
          %s595 = ssub.s32 1024, 1024
          %596 = vsyncadd [#allocation9], %s595
          %s597 = sshll.u32 [#allocation10], 4
          %s598 = int_to_ptr.vmem [resolvable:$true] %s597
          %603 = dma.hbm_to_vmem [thread:$0]  %s8, 1024, %s598, [#allocation9], 64, 64, 4
        $region40: #{tpu_custom_call.1} parent=11 // pred_fallthru
          _
        // Predicated region
        $region41: #{tpu_custom_call.1} parent=11 // pred_check
          %p604 = pneg %p260
        $region42: #{tpu_custom_call.1} parent=11 // pred_check_branch
          %606 = sbr.rel (%p604) target = $region44
        $region43: #{tpu_custom_call.1} parent=11 // pred_region
          _
        $region44: #{tpu_custom_call.1} parent=11 // pred_fallthru
          _
        // Predicated region
        $region45: #{tpu_custom_call.1} parent=11 // pred_check
          %p607 = pneg %p281
        $region46: #{tpu_custom_call.1} parent=11 // pred_check_branch
          %609 = sbr.rel (%p607) target = $region48
        $region47: #{tpu_custom_call.1} parent=11 // pred_region
          %s611 = ssub.s32 2048, 2048
          %612 = vsyncadd [#allocation12], %s611
          %s613 = sshll.u32 [#allocation11], 4
          %s614 = int_to_ptr.vmem [resolvable:$true] %s613
          %619 = dma.hbm_to_vmem [thread:$0]  %s10, 2048, %s614, [#allocation12], 128, 128, 8
        $region48: #{tpu_custom_call.1} parent=11 // pred_fallthru
          _
        // Predicated region
        $region49: #{tpu_custom_call.1} parent=11 // pred_check
          %p620 = pneg %p302
        $region50: #{tpu_custom_call.1} parent=11 // pred_check_branch
          %622 = sbr.rel (%p620) target = $region52
        $region51: #{tpu_custom_call.1} parent=11 // pred_region
          _
        $region52: #{tpu_custom_call.1} parent=11 // pred_fallthru
          _
        // Predicated region
        $region53: #{tpu_custom_call.1} parent=11 // pred_check
          %p623 = pneg %p323
        $region54: #{tpu_custom_call.1} parent=11 // pred_check_branch
          %625 = sbr.rel (%p623) target = $region56
        $region55: #{tpu_custom_call.1} parent=11 // pred_region
          %s627 = ssub.s32 1024, 1024
          %628 = vsyncadd [#allocation12], %s627
          %s629 = sshll.u32 [#allocation13], 4
          %s630 = int_to_ptr.vmem [resolvable:$true] %s629
          %635 = dma.hbm_to_vmem [thread:$0]  %s12, 1024, %s630, [#allocation12], 64, 64, 4
        $region56: #{tpu_custom_call.1} parent=11 // pred_fallthru
          _
        // Predicated region
        $region57: #{tpu_custom_call.1} parent=11 // pred_check
          %p636 = pneg %p344
        $region58: #{tpu_custom_call.1} parent=11 // pred_check_branch
          %638 = sbr.rel (%p636) target = $region60
        $region59: #{tpu_custom_call.1} parent=11 // pred_region
          _
        $region60: #{tpu_custom_call.1} parent=11 // pred_fallthru
          _
        // Predicated region
        $region61: #{tpu_custom_call.1} parent=11 // pred_check
          %p639 = pneg %p365
        $region62: #{tpu_custom_call.1} parent=11 // pred_check_branch
          %641 = sbr.rel (%p639) target = $region64
        $region63: #{tpu_custom_call.1} parent=11 // pred_region
          _
        $region64: #{tpu_custom_call.1} parent=11 // pred_fallthru
          _
        // Predicated region
        $region65: #{tpu_custom_call.1} parent=11 // pred_check
          %p642 = pneg %p386
        $region66: #{tpu_custom_call.1} parent=11 // pred_check_branch
          %644 = sbr.rel (%p642) target = $region68
        $region67: #{tpu_custom_call.1} parent=11 // pred_region
          _
        $region68: #{tpu_custom_call.1} parent=11 // pred_fallthru
          _
        // Predicated region
        $region69: #{tpu_custom_call.1} parent=11 // pred_check
          %p645 = pneg %p407
        $region70: #{tpu_custom_call.1} parent=11 // pred_check_branch
          %647 = sbr.rel (%p645) target = $region72
        $region71: #{tpu_custom_call.1} parent=11 // pred_region
          %s649 = ssub.s32 4096, 4096
          %650 = vsyncadd [#allocation15], %s649
          %s651 = sshll.u32 [#allocation14], 4
          %s652 = int_to_ptr.vmem [resolvable:$true] %s651
          %657 = dma.hbm_to_vmem [thread:$0]  %s16, 4096, %s652, [#allocation15], 256, 256, 16
        $region72: #{tpu_custom_call.1} parent=11 // pred_fallthru
          _
        // Predicated region
        $region73: #{tpu_custom_call.1} parent=11 // pred_check
          %p658 = pneg %p428
        $region74: #{tpu_custom_call.1} parent=11 // pred_check_branch
          %660 = sbr.rel (%p658) target = $region76
        $region75: #{tpu_custom_call.1} parent=11 // pred_region
          _
        $region76: #{tpu_custom_call.1} parent=11 // pred_fallthru
          _
        // Predicated region
        $region77: #{tpu_custom_call.1} parent=11 // pred_check
          %p661 = pneg %p449
        $region78: #{tpu_custom_call.1} parent=11 // pred_check_branch
          %663 = sbr.rel (%p661) target = $region80
        $region79: #{tpu_custom_call.1} parent=11 // pred_region
          %s665 = ssub.s32 4096, 4096
          %666 = vsyncadd [#allocation15], %s665
          %s667 = sshll.u32 [#allocation16], 4
          %s668 = int_to_ptr.vmem [resolvable:$true] %s667
          %673 = dma.hbm_to_vmem [thread:$0]  %s18, 4096, %s668, [#allocation15], 64, 64, 4
        $region80: #{tpu_custom_call.1} parent=11 // pred_fallthru
          _
        // Predicated region
        $region81: #{tpu_custom_call.1} parent=11 // pred_check
          %p674 = pneg %p470
        $region82: #{tpu_custom_call.1} parent=11 // pred_check_branch
          %676 = sbr.rel (%p674) target = $region84
        $region83: #{tpu_custom_call.1} parent=11 // pred_region
          _
        $region84: #{tpu_custom_call.1} parent=11 // pred_fallthru
          _
        // Predicated region
        $region85: #{tpu_custom_call.1} parent=11 // pred_check
          %p677 = pneg %p491
        $region86: #{tpu_custom_call.1} parent=11 // pred_check_branch
          %679 = sbr.rel (%p677) target = $region88
        $region87: #{tpu_custom_call.1} parent=11 // pred_region
          _
        $region88: #{tpu_custom_call.1} parent=11 // pred_fallthru
          _
        // Predicated region
        $region89: #{tpu_custom_call.1} parent=11 // pred_check
          %p680 = pneg %p512
        $region90: #{tpu_custom_call.1} parent=11 // pred_check_branch
          %682 = sbr.rel (%p680) target = $region92
        $region91: #{tpu_custom_call.1} parent=11 // pred_region
          _
        $region92: #{tpu_custom_call.1} parent=11 // pred_fallthru
          _
      $region12: #{tpu_custom_call.1} parent=5 // pred_fallthru
        _
      %p683 = scmp.lt.s32.totalorder %s40, 2
      // Predicated region
      $region93: #{tpu_custom_call.1} parent=5 // pred_check
        %p684 = pneg %p683
      $region94: #{tpu_custom_call.1} parent=5 // pred_check_branch
        %686 = sbr.rel (%p684) target = $region96
      $region95: #{tpu_custom_call.1} parent=5 // pred_region
        // Predicated region
        $region97: #{tpu_custom_call.1} parent=95 // pred_check
          %p687 = pneg %p60
        $region98: #{tpu_custom_call.1} parent=95 // pred_check_branch
          %689 = sbr.rel (%p687) target = $region100
        $region99: #{tpu_custom_call.1} parent=95 // pred_region
          %s690 = sand.u32 %s50, 1
          %s691 = scalar_lea.sflag [#allocation3], %s690
          %s692 = sand.u32 %s50, 1
          %s693 = smul.addr %s692, 64
          %s694 = scalar_lea.vmem [#allocation2], %s693
          %s695 = smul.u32 4, %s40
          %s697 = ssub.s32 1024, 1024
          %698 = vsyncadd %s691, %s697
          %s699 = smul.addr %s695, 2
          %s700 = smul.addr %s699, 128
          %s701 = scalar_lea.hbm %s0, %s700
          %s702 = sshll.u32 %s694, 4
          %s703 = int_to_ptr.vmem [resolvable:$true] %s702
          %708 = dma.hbm_to_vmem [thread:$0]  %s701, 1024, %s703, %s691, 128, 128, 8
        $region100: #{tpu_custom_call.1} parent=95 // pred_fallthru
          _
        // Predicated region
        $region101: #{tpu_custom_call.1} parent=95 // pred_check
          %p709 = pneg %p86
        $region102: #{tpu_custom_call.1} parent=95 // pred_check_branch
          %711 = sbr.rel (%p709) target = $region104
        $region103: #{tpu_custom_call.1} parent=95 // pred_region
          %s712 = sand.u32 %s40, 1
          %s713 = scalar_lea.sflag [#allocation6], %s712
          %s714 = sand.u32 %s76, 1
          %s715 = smul.addr %s714, 64
          %s716 = scalar_lea.vmem [#allocation5], %s715
          %s717 = smul.u32 4, %s40
          %s719 = ssub.s32 1024, 1024
          %720 = vsyncadd %s713, %s719
          %s721 = smul.addr %s717, 2
          %s722 = smul.addr %s721, 128
          %s723 = scalar_lea.hbm %s1, %s722
          %s724 = sshll.u32 %s716, 4
          %s725 = int_to_ptr.vmem [resolvable:$true] %s724
          %730 = dma.hbm_to_vmem [thread:$0]  %s723, 1024, %s725, %s713, 128, 128, 8
        $region104: #{tpu_custom_call.1} parent=95 // pred_fallthru
          _
      $region96: #{tpu_custom_call.1} parent=5 // pred_fallthru
        _
      %p731 = scmp.le.s32.totalorder 1, %s40
      %p732 = scmp.lt.s32.totalorder %s40, 3
      %p733 = pnand %p731, %p732
      %p734 = pneg %p733
      // Predicated region
      $region105: #{tpu_custom_call.1} parent=5 // pred_check
        _
      $region106: #{tpu_custom_call.1} parent=5 // pred_check_branch
        %736 = sbr.rel (%p733) target = $region108
      $region107: #{tpu_custom_call.1} parent=5 // pred_region
        %s737 = ssub.s32 %s40, 1
        %s738 = sand.u32 %s53, 1
        %s739 = scalar_lea.sflag [#allocation3], %s738
        %s740 = sand.u32 %s53, 1
        %s741 = smul.addr %s740, 64
        %s742 = scalar_lea.vmem [#allocation2], %s741
        // Predicated region
        $region109: #{tpu_custom_call.1} parent=107 // pred_check
          %p743 = pneg %p66
        $region110: #{tpu_custom_call.1} parent=107 // pred_check_branch
          %745 = sbr.rel (%p743) target = $region112
        $region111: #{tpu_custom_call.1} parent=107 // pred_region
          %746 = dma.done %s739, 1024
        $region112: #{tpu_custom_call.1} parent=107 // pred_fallthru
          _
        %s747 = sand.u32 %s45, 1
        %s748 = scalar_lea.sflag [#allocation6], %s747
        %s749 = sand.u32 %s79, 1
        %s750 = smul.addr %s749, 64
        %s751 = scalar_lea.vmem [#allocation5], %s750
        // Predicated region
        $region113: #{tpu_custom_call.1} parent=107 // pred_check
          %p752 = pneg %p92
        $region114: #{tpu_custom_call.1} parent=107 // pred_check_branch
          %754 = sbr.rel (%p752) target = $region116
        $region115: #{tpu_custom_call.1} parent=107 // pred_region
          %755 = dma.done %s748, 1024
        $region116: #{tpu_custom_call.1} parent=107 // pred_fallthru
          _
        // Predicated region
        $region117: #{tpu_custom_call.1} parent=107 // pred_check
          %p756 = pneg %p113
        $region118: #{tpu_custom_call.1} parent=107 // pred_check_branch
          %758 = sbr.rel (%p756) target = $region120
        $region119: #{tpu_custom_call.1} parent=107 // pred_region
          %759 = dma.done [#allocation6], 3072
        $region120: #{tpu_custom_call.1} parent=107 // pred_fallthru
          _
        // Predicated region
        $region121: #{tpu_custom_call.1} parent=107 // pred_check
          %p760 = pneg %p155
        $region122: #{tpu_custom_call.1} parent=107 // pred_check_branch
          %762 = sbr.rel (%p760) target = $region124
        $region123: #{tpu_custom_call.1} parent=107 // pred_region
          %763 = dma.done [#allocation9], 1024
        $region124: #{tpu_custom_call.1} parent=107 // pred_fallthru
          _
        // Predicated region
        $region125: #{tpu_custom_call.1} parent=107 // pred_check
          %p764 = pneg %p239
        $region126: #{tpu_custom_call.1} parent=107 // pred_check_branch
          %766 = sbr.rel (%p764) target = $region128
        $region127: #{tpu_custom_call.1} parent=107 // pred_region
          %767 = dma.done [#allocation9], 1024
        $region128: #{tpu_custom_call.1} parent=107 // pred_fallthru
          _
        // Predicated region
        $region129: #{tpu_custom_call.1} parent=107 // pred_check
          %p768 = pneg %p281
        $region130: #{tpu_custom_call.1} parent=107 // pred_check_branch
          %770 = sbr.rel (%p768) target = $region132
        $region131: #{tpu_custom_call.1} parent=107 // pred_region
          %771 = dma.done [#allocation12], 2048
        $region132: #{tpu_custom_call.1} parent=107 // pred_fallthru
          _
        // Predicated region
        $region133: #{tpu_custom_call.1} parent=107 // pred_check
          %p772 = pneg %p323
        $region134: #{tpu_custom_call.1} parent=107 // pred_check_branch
          %774 = sbr.rel (%p772) target = $region136
        $region135: #{tpu_custom_call.1} parent=107 // pred_region
          %775 = dma.done [#allocation12], 1024
        $region136: #{tpu_custom_call.1} parent=107 // pred_fallthru
          _
        // Predicated region
        $region137: #{tpu_custom_call.1} parent=107 // pred_check
          %p776 = pneg %p407
        $region138: #{tpu_custom_call.1} parent=107 // pred_check_branch
          %778 = sbr.rel (%p776) target = $region140
        $region139: #{tpu_custom_call.1} parent=107 // pred_region
          %779 = dma.done [#allocation15], 4096
        $region140: #{tpu_custom_call.1} parent=107 // pred_fallthru
          _
        // Predicated region
        $region141: #{tpu_custom_call.1} parent=107 // pred_check
          %p780 = pneg %p449
        $region142: #{tpu_custom_call.1} parent=107 // pred_check_branch
          %782 = sbr.rel (%p780) target = $region144
        $region143: #{tpu_custom_call.1} parent=107 // pred_region
          %783 = dma.done [#allocation15], 4096
        $region144: #{tpu_custom_call.1} parent=107 // pred_fallthru
          _
        %s784 = sand.u32 %s53, 1
        %s785 = scalar_lea.sflag [#allocation3], %s784
        %s786 = sand.u32 %s53, 1
        %s787 = smul.addr %s786, 64
        %s788 = scalar_lea.vmem [#allocation2], %s787
        %p789 = pneg %p66
        %p790 = pneg %p63
        %s791 = sand.u32 %s45, 1
        %s792 = scalar_lea.sflag [#allocation6], %s791
        %s793 = sand.u32 %s79, 1
        %s794 = smul.addr %s793, 64
        %s795 = scalar_lea.vmem [#allocation5], %s794
        %p796 = pneg %p92
        %p797 = pneg %p89
        %p798 = pneg %p113
        %p799 = pneg %p110
        %p800 = pneg %p134
        %p801 = pneg %p131
        %p802 = pneg %p155
        %p803 = pneg %p152
        %p804 = pneg %p176
        %p805 = pneg %p173
        %p806 = pneg %p197
        %p807 = pneg %p194
        %p808 = pneg %p218
        %p809 = pneg %p215
        %p810 = pneg %p239
        %p811 = pneg %p236
        %p812 = pneg %p260
        %p813 = pneg %p257
        %p814 = pneg %p281
        %p815 = pneg %p278
        %p816 = pneg %p302
        %p817 = pneg %p299
        %p818 = pneg %p323
        %p819 = pneg %p320
        %p820 = pneg %p344
        %p821 = pneg %p341
        %p822 = pneg %p365
        %p823 = pneg %p362
        %p824 = pneg %p386
        %p825 = pneg %p383
        %p826 = pneg %p407
        %p827 = pneg %p404
        %p828 = pneg %p428
        %p829 = pneg %p425
        %p830 = pneg %p449
        %p831 = pneg %p446
        %p832 = pneg %p470
        %p833 = pneg %p467
        %p834 = pneg %p491
        %p835 = pneg %p488
        %p836 = pneg %p512
        %p837 = pneg %p509
        %p838 = pneg %p538
        %p839 = pneg %p535
        %s840 = sand.u32 %s525, 1
        %s841 = scalar_lea.sflag [#allocation4], %s840
        %s842 = sand.u32 %s525, 1
        %s843 = smul.addr %s842, 64
        %s844 = scalar_lea.vmem [#allocation17], %s843
        %s845 = smul.u32 4, %s45
        %s846 = smul.u32 4, %s45
        %s847 = smul.u32 4, %s45
        %v849 = vld [vmem:[%s742] sm:$0xff]
        %v850 = vld [vmem:[%s742 + $0x8] sm:$0xff]
        %v851 = vld [vmem:[%s742 + $0x10] sm:$0xff]
        %v852 = vld [vmem:[%s742 + $0x18] sm:$0xff]
        %v853 = vld [vmem:[%s742 + $0x20] sm:$0xff]
        %v854 = vld [vmem:[%s742 + $0x28] sm:$0xff]
        %v855 = vld [vmem:[%s742 + $0x30] sm:$0xff]
        %v856 = vld [vmem:[%s742 + $0x38] sm:$0xff]
        %v857 = vld [vmem:[%s751] sm:$0xff]
        %v858 = vld [vmem:[%s751 + $0x8] sm:$0xff]
        %v859 = vld [vmem:[%s751 + $0x10] sm:$0xff]
        %v860 = vld [vmem:[%s751 + $0x18] sm:$0xff]
        %v861 = vld [vmem:[%s751 + $0x20] sm:$0xff]
        %v862 = vld [vmem:[%s751 + $0x28] sm:$0xff]
        %v863 = vld [vmem:[%s751 + $0x30] sm:$0xff]
        %v864 = vld [vmem:[%s751 + $0x38] sm:$0xff]
        %v865 = vpack.c.bf16 %v850, %v849
        %v866 = vpack.c.bf16 %v852, %v851
        %v867 = vpack.c.bf16 %v854, %v853
        %v868 = vpack.c.bf16 %v856, %v855
        %v869 = vld [vmem:[#allocation7] sm:$0xff]
        %v870 = vld [vmem:[#allocation7 + $0x8] sm:$0xf]
        %v871 = vld [vmem:[#allocation7 + $0xc] sm:$0xff]
        %v872 = vld [vmem:[#allocation7 + $0x14] sm:$0xf]
        %v873 = vld [vmem:[#allocation7 + $0x18] sm:$0xff]
        %v874 = vld [vmem:[#allocation7 + $0x20] sm:$0xf]
        %v875 = vld [vmem:[#allocation7 + $0x24] sm:$0xff]
        %v876 = vld [vmem:[#allocation7 + $0x2c] sm:$0xf]
        %v877 = vld [vmem:[#allocation7 + $0x30] sm:$0xff]
        %v878 = vld [vmem:[#allocation7 + $0x38] sm:$0xf]
        %v879 = vld [vmem:[#allocation7 + $0x3c] sm:$0xff]
        %v880 = vld [vmem:[#allocation7 + $0x44] sm:$0xf]
        %v881 = vld [vmem:[#allocation7 + $0x48] sm:$0xff]
        %v882 = vld [vmem:[#allocation7 + $0x50] sm:$0xf]
        %v883 = vld [vmem:[#allocation7 + $0x54] sm:$0xff]
        %v884 = vld [vmem:[#allocation7 + $0x5c] sm:$0xf]
        %v885 = vld [vmem:[#allocation7 + $0x60] sm:$0xff]
        %v886 = vld [vmem:[#allocation7 + $0x68] sm:$0xf]
        %v887 = vld [vmem:[#allocation7 + $0x6c] sm:$0xff]
        %v888 = vld [vmem:[#allocation7 + $0x74] sm:$0xf]
        %v889 = vld [vmem:[#allocation7 + $0x78] sm:$0xff]
        %v890 = vld [vmem:[#allocation7 + $0x80] sm:$0xf]
        %v891 = vld [vmem:[#allocation7 + $0x84] sm:$0xff]
        %v892 = vld [vmem:[#allocation7 + $0x8c] sm:$0xf]
        %v893 = vld [vmem:[#allocation7 + $0x90] sm:$0xff]
        %v894 = vld [vmem:[#allocation7 + $0x98] sm:$0xf]
        %v895 = vld [vmem:[#allocation7 + $0x9c] sm:$0xff]
        %v896 = vld [vmem:[#allocation7 + $0xa4] sm:$0xf]
        %v897 = vld [vmem:[#allocation7 + $0xa8] sm:$0xff]
        %v898 = vld [vmem:[#allocation7 + $0xb0] sm:$0xf]
        %v899 = vld [vmem:[#allocation7 + $0xb4] sm:$0xff]
        %v900 = vld [vmem:[#allocation7 + $0xbc] sm:$0xf]
        %v901 = vld [vmem:[%s3] sm:$0x7]
        %v903 = vlaneseq
        %v904 = vshrl.u32 %v903, 7
        %v905 = vsub.s32 0, %v904
        %v906 = vrot.slane %v901, %v905
        %v907 = vlaneseq
        %v908 = vshrl.u32 %v907, 7
        %v909 = vsub.s32 1, %v908
        %v910 = vrot.slane %v901, %v909
        %v911 = vlaneseq
        %v912 = vshrl.u32 %v911, 7
        %v913 = vsub.s32 2, %v912
        %v914 = vrot.slane %v901, %v913
        %v950 = vunpack.c.l.b16 %v869
        %v951 = vunpack.c.h.b16 %v869
        %v952 = vunpack.c.l.b16 %v870
        %v953 = vunpack.c.l.b16 %v871
        %v954 = vunpack.c.h.b16 %v871
        %v955 = vunpack.c.l.b16 %v872
        %v956 = vunpack.c.l.b16 %v873
        %v957 = vunpack.c.h.b16 %v873
        %v958 = vunpack.c.l.b16 %v874
        %v959 = vunpack.c.l.b16 %v875
        %v960 = vunpack.c.h.b16 %v875
        %v961 = vunpack.c.l.b16 %v876
        %v962 = vunpack.c.l.b16 %v877
        %v963 = vunpack.c.h.b16 %v877
        %v964 = vunpack.c.l.b16 %v878
        %v965 = vunpack.c.l.b16 %v879
        %v966 = vunpack.c.h.b16 %v879
        %v967 = vunpack.c.l.b16 %v880
        %v968 = vunpack.c.l.b16 %v881
        %v969 = vunpack.c.h.b16 %v881
        %v970 = vunpack.c.l.b16 %v882
        %v971 = vunpack.c.l.b16 %v883
        %v972 = vunpack.c.h.b16 %v883
        %v973 = vunpack.c.l.b16 %v884
        %v974 = vunpack.c.l.b16 %v885
        %v975 = vunpack.c.h.b16 %v885
        %v976 = vunpack.c.l.b16 %v886
        %v977 = vunpack.c.l.b16 %v887
        %v978 = vunpack.c.h.b16 %v887
        %v979 = vunpack.c.l.b16 %v888
        %v980 = vunpack.c.l.b16 %v889
        %v981 = vunpack.c.h.b16 %v889
        %v982 = vunpack.c.l.b16 %v890
        %v983 = vunpack.c.l.b16 %v891
        %v984 = vunpack.c.h.b16 %v891
        %v985 = vunpack.c.l.b16 %v892
        %v986 = vunpack.c.l.b16 %v893
        %v987 = vunpack.c.h.b16 %v893
        %v988 = vunpack.c.l.b16 %v894
        %v989 = vunpack.c.l.b16 %v895
        %v990 = vunpack.c.h.b16 %v895
        %v991 = vunpack.c.l.b16 %v896
        %v992 = vunpack.c.l.b16 %v897
        %v993 = vunpack.c.h.b16 %v897
        %v994 = vunpack.c.l.b16 %v898
        %v995 = vunpack.c.l.b16 %v899
        %v996 = vunpack.c.h.b16 %v899
        %v997 = vunpack.c.l.b16 %v900
        %v998 = vpack.c.b16 %v953, %v950
        %v999 = vpack.c.b16 %v954, %v951
        %v1000 = vpack.c.b16 %v955, %v952
        %v1001 = vpack.c.b16 %v959, %v956
        %v1002 = vpack.c.b16 %v960, %v957
        %v1003 = vpack.c.b16 %v961, %v958
        %v1004 = vpack.c.b16 %v965, %v962
        %v1005 = vpack.c.b16 %v966, %v963
        %v1006 = vpack.c.b16 %v967, %v964
        %v1007 = vpack.c.b16 %v971, %v968
        %v1008 = vpack.c.b16 %v972, %v969
        %v1009 = vpack.c.b16 %v973, %v970
        %v1010 = vpack.c.b16 %v977, %v974
        %v1011 = vpack.c.b16 %v978, %v975
        %v1012 = vpack.c.b16 %v979, %v976
        %v1013 = vpack.c.b16 %v983, %v980
        %v1014 = vpack.c.b16 %v984, %v981
        %v1015 = vpack.c.b16 %v985, %v982
        %v1016 = vpack.c.b16 %v989, %v986
        %v1017 = vpack.c.b16 %v990, %v987
        %v1018 = vpack.c.b16 %v991, %v988
        %v1019 = vpack.c.b16 %v995, %v992
        %v1020 = vpack.c.b16 %v996, %v993
        %v1021 = vpack.c.b16 %v997, %v994
        %1046 = vmatprep.subr.bf16.mxu0 %v999
        %1047 = vmatpush1.bf16.msra.mxu0 %v998
        %1048 = vmatprep.subr.bf16.mxu0 %v1002
        %1049 = vmatpush1.bf16.msra.mxu0 %v1001
        %1050 = vmatprep.subr.bf16.mxu0 %v1005
        %1051 = vmatpush1.bf16.msra.mxu0 %v1004
        %1052 = vmatprep.subr.bf16.mxu0 %v1008
        %1053 = vmatpush1.bf16.msra.mxu0 %v1007
        %1054 = vmatprep.subr.bf16.mxu0 %v1011
        %1055 = vmatpush1.bf16.msra.mxu0 %v1010
        %1056 = vmatprep.subr.bf16.mxu0 %v1014
        %1057 = vmatpush1.bf16.msra.mxu0 %v1013
        %1058 = vmatprep.subr.bf16.mxu0 %v1017
        %1059 = vmatpush1.bf16.msra.mxu0 %v1016
        %1060 = vmatprep.subr.bf16.mxu0 %v1020
        %1061 = vmatpush1.bf16.msra.mxu0 %v1019
        %1062 = vmatprep.subr.bf16.mxu0 0
        %1063 = vmatpush1.bf16.msra.mxu0 0
        %1064 = vmatprep.subr.bf16.mxu0 0
        %1065 = vmatpush1.bf16.msra.mxu0 0
        %1066 = vmatprep.subr.bf16.mxu0 0
        %1067 = vmatpush1.bf16.msra.mxu0 0
        %1068 = vmatprep.subr.bf16.mxu0 0
        %1069 = vmatpush1.bf16.msra.mxu0 0
        %1070 = vmatprep.subr.bf16.mxu0 0
        %1071 = vmatpush1.bf16.msra.mxu0 0
        %1072 = vmatprep.subr.bf16.mxu0 0
        %1073 = vmatpush1.bf16.msra.mxu0 0
        %1074 = vmatprep.subr.bf16.mxu0 0
        %1075 = vmatpush1.bf16.msra.mxu0 0
        %1076 = vmatprep.subr.bf16.mxu0 0
        %1077 = vmatpush1.bf16.msra.mxu0 0
        %1078 = vmatprep.mubr.bf16.mxu0 0
        %1079 = vmatmul.mubr.bf16.gmra.mrb[0].mxu0 %v865
        %v1080 = vpop.f32.mrb[0].mxu0
        %v1081 = vadd.f32 %v906, %v1080
        %v1082 = vpop.f32.mrb[0].mxu0
        %v1083 = vadd.f32 %v910, %v1082
        %v1084 = vpop.f32.mrb[0].mxu0
        %v1085 = vadd.f32 %v906, %v1084
        %v1086 = vpop.f32.mrb[0].mxu0
        %v1087 = vadd.f32 %v910, %v1086
        %1088 = vmatprep.mubr.bf16.mxu0 0
        %1089 = vmatmul.mubr.bf16.gmra.mrb[0].mxu0 %v866
        %v1090 = vpop.f32.mrb[0].mxu0
        %v1091 = vadd.f32 %v906, %v1090
        %v1092 = vpop.f32.mrb[0].mxu0
        %v1093 = vadd.f32 %v910, %v1092
        %v1094 = vpop.f32.mrb[0].mxu0
        %v1095 = vadd.f32 %v906, %v1094
        %v1096 = vpop.f32.mrb[0].mxu0
        %v1097 = vadd.f32 %v910, %v1096
        %1098 = vmatprep.mubr.bf16.mxu0 0
        %1099 = vmatmul.mubr.bf16.gmra.mrb[0].mxu0 %v867
        %v1100 = vpop.f32.mrb[0].mxu0
        %v1101 = vadd.f32 %v906, %v1100
        %v1102 = vpop.f32.mrb[0].mxu0
        %v1103 = vadd.f32 %v910, %v1102
        %v1104 = vpop.f32.mrb[0].mxu0
        %v1105 = vadd.f32 %v906, %v1104
        %v1106 = vpop.f32.mrb[0].mxu0
        %v1107 = vadd.f32 %v910, %v1106
        %1108 = vmatprep.mubr.bf16.mxu0 0
        %1109 = vmatmul.mubr.bf16.gmra.mrb[0].mxu0 %v868
        %v1110 = vpop.f32.mrb[0].mxu0
        %v1111 = vadd.f32 %v906, %v1110
        %v1112 = vpop.f32.mrb[0].mxu0
        %v1113 = vadd.f32 %v910, %v1112
        %v1114 = vpop.f32.mrb[0].mxu0
        %v1115 = vadd.f32 %v906, %v1114
        %v1116 = vpop.f32.mrb[0].mxu0
        %v1117 = vadd.f32 %v910, %v1116
        %1118 = vdwg.mxu0
        %1119 = vmatprep.subr.bf16.mxu0 0
        %1120 = vmatpush1.bf16.msra.mxu0 %v1000
        %1121 = vmatprep.subr.bf16.mxu0 0
        %1122 = vmatpush1.bf16.msra.mxu0 %v1003
        %1123 = vmatprep.subr.bf16.mxu0 0
        %1124 = vmatpush1.bf16.msra.mxu0 %v1006
        %1125 = vmatprep.subr.bf16.mxu0 0
        %1126 = vmatpush1.bf16.msra.mxu0 %v1009
        %1127 = vmatprep.subr.bf16.mxu0 0
        %1128 = vmatpush1.bf16.msra.mxu0 %v1012
        %1129 = vmatprep.subr.bf16.mxu0 0
        %1130 = vmatpush1.bf16.msra.mxu0 %v1015
        %1131 = vmatprep.subr.bf16.mxu0 0
        %1132 = vmatpush1.bf16.msra.mxu0 %v1018
        %1133 = vmatprep.subr.bf16.mxu0 0
        %1134 = vmatpush1.bf16.msra.mxu0 %v1021
        %1135 = vmatprep.subr.bf16.mxu0 0
        %1136 = vmatpush1.bf16.msra.mxu0 0
        %1137 = vmatprep.subr.bf16.mxu0 0
        %1138 = vmatpush1.bf16.msra.mxu0 0
        %1139 = vmatprep.subr.bf16.mxu0 0
        %1140 = vmatpush1.bf16.msra.mxu0 0
        %1141 = vmatprep.subr.bf16.mxu0 0
        %1142 = vmatpush1.bf16.msra.mxu0 0
        %1143 = vmatprep.subr.bf16.mxu0 0
        %1144 = vmatpush1.bf16.msra.mxu0 0
        %1145 = vmatprep.subr.bf16.mxu0 0
        %1146 = vmatpush1.bf16.msra.mxu0 0
        %1147 = vmatprep.subr.bf16.mxu0 0
        %1148 = vmatpush1.bf16.msra.mxu0 0
        %1149 = vmatprep.subr.bf16.mxu0 0
        %1150 = vmatpush1.bf16.msra.mxu0 0
        %1151 = vmatprep.mubr.bf16.mxu0 0
        %1152 = vmatmul.mubr.bf16.gmra.mrb[0].mxu0 %v865
        %v1153 = vpop.f32.mrb[0].mxu0
        %v1154 = vadd.f32 %v914, %v1153
        %v1155 = vpop.f32.mrb[0].mxu0
        %v1156 = vpop.f32.mrb[0].mxu0
        %v1157 = vadd.f32 %v914, %v1156
        %v1158 = vpop.f32.mrb[0].mxu0
        %1159 = vmatprep.mubr.bf16.mxu0 0
        %1160 = vmatmul.mubr.bf16.gmra.mrb[0].mxu0 %v866
        %v1161 = vpop.f32.mrb[0].mxu0
        %v1162 = vadd.f32 %v914, %v1161
        %v1163 = vpop.f32.mrb[0].mxu0
        %v1164 = vpop.f32.mrb[0].mxu0
        %v1165 = vadd.f32 %v914, %v1164
        %v1166 = vpop.f32.mrb[0].mxu0
        %1167 = vmatprep.mubr.bf16.mxu0 0
        %1168 = vmatmul.mubr.bf16.gmra.mrb[0].mxu0 %v867
        %v1169 = vpop.f32.mrb[0].mxu0
        %v1170 = vadd.f32 %v914, %v1169
        %v1171 = vpop.f32.mrb[0].mxu0
        %v1172 = vpop.f32.mrb[0].mxu0
        %v1173 = vadd.f32 %v914, %v1172
        %v1174 = vpop.f32.mrb[0].mxu0
        %1175 = vmatprep.mubr.bf16.mxu0 0
        %1176 = vmatmul.mubr.bf16.gmra.mrb[0].mxu0 %v868
        %v1177 = vpop.f32.mrb[0].mxu0
        %v1178 = vadd.f32 %v914, %v1177
        %v1179 = vpop.f32.mrb[0].mxu0
        %v1180 = vpop.f32.mrb[0].mxu0
        %v1181 = vadd.f32 %v914, %v1180
        %v1182 = vpop.f32.mrb[0].mxu0
        %1183 = vdwg.mxu0
        %v1184 = vpack.c.bf16 %v1085, %v1081
        %v1185 = vpack.c.bf16 %v1095, %v1091
        %v1186 = vpack.c.bf16 %v1105, %v1101
        %v1187 = vpack.c.bf16 %v1115, %v1111
        %v1188 = vpack.c.bf16 %v1087, %v1083
        %v1189 = vpack.c.bf16 %v1097, %v1093
        %v1190 = vpack.c.bf16 %v1107, %v1103
        %v1191 = vpack.c.bf16 %v1117, %v1113
        %v1192 = vpack.c.bf16 %v1157, %v1154
        %v1193 = vpack.c.bf16 %v1165, %v1162
        %v1194 = vpack.c.bf16 %v1173, %v1170
        %v1195 = vpack.c.bf16 %v1181, %v1178
        %vm1196 = vcmask 261120
        %v1198 = vsel %vm1196, %v1184, 0
        %v1201 = vsel %vm1196, %v1188, 0
        %1203 = vmatprep.subr.bf16.mxu0 0
        %1204 = vmatpush1.bf16.xpose.msra.mxu0 %v1201
        %1205 = vmatprep.subr.bf16.mxu0 0
        %1206 = vmatpush1.bf16.xpose.msra.mxu0 0
        %1207 = vmatprep.subr.bf16.mxu0 0
        %1208 = vmatpush1.bf16.xpose.msra.mxu0 0
        %1209 = vmatprep.subr.bf16.mxu0 0
        %1210 = vmatpush1.bf16.xpose.msra.mxu0 0
        %1211 = vmatprep.subr.bf16.mxu0 0
        %1212 = vmatpush1.bf16.xpose.msra.mxu0 0
        %1213 = vmatprep.subr.bf16.mxu0 0
        %1214 = vmatpush1.bf16.xpose.msra.mxu0 0
        %1215 = vmatprep.subr.bf16.mxu0 0
        %1216 = vmatpush1.bf16.xpose.msra.mxu0 0
        %1217 = vmatprep.subr.bf16.mxu0 0
        %1218 = vmatpush1.bf16.xpose.msra.mxu0 0
        %1219 = vmatprep.subr.bf16.mxu0 0
        %1220 = vmatpush1.bf16.xpose.msra.mxu0 0
        %1221 = vmatprep.subr.bf16.mxu0 0
        %1222 = vmatpush1.bf16.xpose.msra.mxu0 0
        %1223 = vmatprep.subr.bf16.mxu0 0
        %1224 = vmatpush1.bf16.xpose.msra.mxu0 0
        %1225 = vmatprep.subr.bf16.mxu0 0
        %1226 = vmatpush1.bf16.xpose.msra.mxu0 0
        %1227 = vmatprep.subr.bf16.mxu0 0
        %1228 = vmatpush1.bf16.xpose.msra.mxu0 0
        %1229 = vmatprep.subr.bf16.mxu0 0
        %1230 = vmatpush1.bf16.xpose.msra.mxu0 0
        %1231 = vmatprep.subr.bf16.mxu0 0
        %1232 = vmatpush1.bf16.xpose.msra.mxu0 0
        %1233 = vmatprep.subr.bf16.mxu0 0
        %1234 = vmatpush1.bf16.xpose.msra.mxu0 0
        %1235 = vmatprep.mubr.bf16.mxu0 0
        %1236 = vmatmul.mubr.bf16.gmra.mrb[0].mxu0 %v1198
        %v1237 = vpop.f32.mrb[0].mxu0
        %v1238 = vadd.f32 0.0, %v1237
        %v1239 = vpop.f32.mrb[0].mxu0
        %v1240 = vpop.f32.mrb[0].mxu0
        %v1241 = vadd.f32 0.0, %v1240
        %v1242 = vpop.f32.mrb[0].mxu0
        %1243 = vdwg.mxu0
        %v1245 = vsel %vm1196, %v1185, 0
        %v1248 = vsel %vm1196, %v1189, 0
        %1250 = vmatprep.subr.bf16.mxu0 0
        %1251 = vmatpush1.bf16.xpose.msra.mxu0 %v1248
        %1252 = vmatprep.subr.bf16.mxu0 0
        %1253 = vmatpush1.bf16.xpose.msra.mxu0 0
        %1254 = vmatprep.subr.bf16.mxu0 0
        %1255 = vmatpush1.bf16.xpose.msra.mxu0 0
        %1256 = vmatprep.subr.bf16.mxu0 0
        %1257 = vmatpush1.bf16.xpose.msra.mxu0 0
        %1258 = vmatprep.subr.bf16.mxu0 0
        %1259 = vmatpush1.bf16.xpose.msra.mxu0 0
        %1260 = vmatprep.subr.bf16.mxu0 0
        %1261 = vmatpush1.bf16.xpose.msra.mxu0 0
        %1262 = vmatprep.subr.bf16.mxu0 0
        %1263 = vmatpush1.bf16.xpose.msra.mxu0 0
        %1264 = vmatprep.subr.bf16.mxu0 0
        %1265 = vmatpush1.bf16.xpose.msra.mxu0 0
        %1266 = vmatprep.subr.bf16.mxu0 0
        %1267 = vmatpush1.bf16.xpose.msra.mxu0 0
        %1268 = vmatprep.subr.bf16.mxu0 0
        %1269 = vmatpush1.bf16.xpose.msra.mxu0 0
        %1270 = vmatprep.subr.bf16.mxu0 0
        %1271 = vmatpush1.bf16.xpose.msra.mxu0 0
        %1272 = vmatprep.subr.bf16.mxu0 0
        %1273 = vmatpush1.bf16.xpose.msra.mxu0 0
        %1274 = vmatprep.subr.bf16.mxu0 0
        %1275 = vmatpush1.bf16.xpose.msra.mxu0 0
        %1276 = vmatprep.subr.bf16.mxu0 0
        %1277 = vmatpush1.bf16.xpose.msra.mxu0 0
        %1278 = vmatprep.subr.bf16.mxu0 0
        %1279 = vmatpush1.bf16.xpose.msra.mxu0 0
        %1280 = vmatprep.subr.bf16.mxu0 0
        %1281 = vmatpush1.bf16.xpose.msra.mxu0 0
        %1282 = vmatprep.mubr.bf16.mxu0 0
        %1283 = vmatmul.mubr.bf16.gmra.mrb[0].mxu0 %v1245
        %v1284 = vpop.f32.mrb[0].mxu0
        %v1285 = vadd.f32 0.0, %v1284
        %v1286 = vpop.f32.mrb[0].mxu0
        %v1287 = vpop.f32.mrb[0].mxu0
        %v1288 = vadd.f32 0.0, %v1287
        %v1289 = vpop.f32.mrb[0].mxu0
        %1290 = vdwg.mxu0
        %v1292 = vsel %vm1196, %v1186, 0
        %v1295 = vsel %vm1196, %v1190, 0
        %1297 = vmatprep.subr.bf16.mxu0 0
        %1298 = vmatpush1.bf16.xpose.msra.mxu0 %v1295
        %1299 = vmatprep.subr.bf16.mxu0 0
        %1300 = vmatpush1.bf16.xpose.msra.mxu0 0
        %1301 = vmatprep.subr.bf16.mxu0 0
        %1302 = vmatpush1.bf16.xpose.msra.mxu0 0
        %1303 = vmatprep.subr.bf16.mxu0 0
        %1304 = vmatpush1.bf16.xpose.msra.mxu0 0
        %1305 = vmatprep.subr.bf16.mxu0 0
        %1306 = vmatpush1.bf16.xpose.msra.mxu0 0
        %1307 = vmatprep.subr.bf16.mxu0 0
        %1308 = vmatpush1.bf16.xpose.msra.mxu0 0
        %1309 = vmatprep.subr.bf16.mxu0 0
        %1310 = vmatpush1.bf16.xpose.msra.mxu0 0
        %1311 = vmatprep.subr.bf16.mxu0 0
        %1312 = vmatpush1.bf16.xpose.msra.mxu0 0
        %1313 = vmatprep.subr.bf16.mxu0 0
        %1314 = vmatpush1.bf16.xpose.msra.mxu0 0
        %1315 = vmatprep.subr.bf16.mxu0 0
        %1316 = vmatpush1.bf16.xpose.msra.mxu0 0
        %1317 = vmatprep.subr.bf16.mxu0 0
        %1318 = vmatpush1.bf16.xpose.msra.mxu0 0
        %1319 = vmatprep.subr.bf16.mxu0 0
        %1320 = vmatpush1.bf16.xpose.msra.mxu0 0
        %1321 = vmatprep.subr.bf16.mxu0 0
        %1322 = vmatpush1.bf16.xpose.msra.mxu0 0
        %1323 = vmatprep.subr.bf16.mxu0 0
        %1324 = vmatpush1.bf16.xpose.msra.mxu0 0
        %1325 = vmatprep.subr.bf16.mxu0 0
        %1326 = vmatpush1.bf16.xpose.msra.mxu0 0
        %1327 = vmatprep.subr.bf16.mxu0 0
        %1328 = vmatpush1.bf16.xpose.msra.mxu0 0
        %1329 = vmatprep.mubr.bf16.mxu0 0
        %1330 = vmatmul.mubr.bf16.gmra.mrb[0].mxu0 %v1292
        %v1331 = vpop.f32.mrb[0].mxu0
        %v1332 = vadd.f32 0.0, %v1331
        %v1333 = vpop.f32.mrb[0].mxu0
        %v1334 = vpop.f32.mrb[0].mxu0
        %v1335 = vadd.f32 0.0, %v1334
        %v1336 = vpop.f32.mrb[0].mxu0
        %1337 = vdwg.mxu0
        %v1339 = vsel %vm1196, %v1187, 0
        %v1342 = vsel %vm1196, %v1191, 0
        %1344 = vmatprep.subr.bf16.mxu0 0
        %1345 = vmatpush1.bf16.xpose.msra.mxu0 %v1342
        %1346 = vmatprep.subr.bf16.mxu0 0
        %1347 = vmatpush1.bf16.xpose.msra.mxu0 0
        %1348 = vmatprep.subr.bf16.mxu0 0
        %1349 = vmatpush1.bf16.xpose.msra.mxu0 0
        %1350 = vmatprep.subr.bf16.mxu0 0
        %1351 = vmatpush1.bf16.xpose.msra.mxu0 0
        %1352 = vmatprep.subr.bf16.mxu0 0
        %1353 = vmatpush1.bf16.xpose.msra.mxu0 0
        %1354 = vmatprep.subr.bf16.mxu0 0
        %1355 = vmatpush1.bf16.xpose.msra.mxu0 0
        %1356 = vmatprep.subr.bf16.mxu0 0
        %1357 = vmatpush1.bf16.xpose.msra.mxu0 0
        %1358 = vmatprep.subr.bf16.mxu0 0
        %1359 = vmatpush1.bf16.xpose.msra.mxu0 0
        %1360 = vmatprep.subr.bf16.mxu0 0
        %1361 = vmatpush1.bf16.xpose.msra.mxu0 0
        %1362 = vmatprep.subr.bf16.mxu0 0
        %1363 = vmatpush1.bf16.xpose.msra.mxu0 0
        %1364 = vmatprep.subr.bf16.mxu0 0
        %1365 = vmatpush1.bf16.xpose.msra.mxu0 0
        %1366 = vmatprep.subr.bf16.mxu0 0
        %1367 = vmatpush1.bf16.xpose.msra.mxu0 0
        %1368 = vmatprep.subr.bf16.mxu0 0
        %1369 = vmatpush1.bf16.xpose.msra.mxu0 0
        %1370 = vmatprep.subr.bf16.mxu0 0
        %1371 = vmatpush1.bf16.xpose.msra.mxu0 0
        %1372 = vmatprep.subr.bf16.mxu0 0
        %1373 = vmatpush1.bf16.xpose.msra.mxu0 0
        %1374 = vmatprep.subr.bf16.mxu0 0
        %1375 = vmatpush1.bf16.xpose.msra.mxu0 0
        %1376 = vmatprep.mubr.bf16.mxu0 0
        %1377 = vmatmul.mubr.bf16.gmra.mrb[0].mxu0 %v1339
        %v1378 = vpop.f32.mrb[0].mxu0
        %v1379 = vadd.f32 0.0, %v1378
        %v1380 = vpop.f32.mrb[0].mxu0
        %v1381 = vpop.f32.mrb[0].mxu0
        %v1382 = vadd.f32 0.0, %v1381
        %v1383 = vpop.f32.mrb[0].mxu0
        %1384 = vdwg.mxu0
        %v1385 = vmul.f32 %v1238, 0.17677669
        %v1386 = vmul.f32 %v1241, 0.17677669
        %v1387 = vmul.f32 %v1285, 0.17677669
        %v1388 = vmul.f32 %v1288, 0.17677669
        %v1389 = vmul.f32 %v1332, 0.17677669
        %v1390 = vmul.f32 %v1335, 0.17677669
        %v1391 = vmul.f32 %v1379, 0.17677669
        %v1392 = vmul.f32 %v1382, 0.17677669
        %vm1393 = vcmask 130048
        %v1394 = vsel %vm1393, %v1385, -inf
        %1395 = vmax.xlane.f32.xlu0 %v1394
        %v1396 = vpop.xlane.xlu0 %1395
        %v1397 = vsel %vm1393, %v1386, -inf
        %1398 = vmax.xlane.f32.xlu0 %v1397
        %v1399 = vpop.xlane.xlu0 %1398
        %v1400 = vsel %vm1393, %v1387, -inf
        %1401 = vmax.xlane.f32.xlu0 %v1400
        %v1402 = vpop.xlane.xlu0 %1401
        %v1403 = vsel %vm1393, %v1388, -inf
        %1404 = vmax.xlane.f32.xlu0 %v1403
        %v1405 = vpop.xlane.xlu0 %1404
        %v1406 = vsel %vm1393, %v1389, -inf
        %1407 = vmax.xlane.f32.xlu0 %v1406
        %v1408 = vpop.xlane.xlu0 %1407
        %v1409 = vsel %vm1393, %v1390, -inf
        %1410 = vmax.xlane.f32.xlu0 %v1409
        %v1411 = vpop.xlane.xlu0 %1410
        %v1412 = vsel %vm1393, %v1391, -inf
        %1413 = vmax.xlane.f32.xlu0 %v1412
        %v1414 = vpop.xlane.xlu0 %1413
        %v1415 = vsel %vm1393, %v1392, -inf
        %1416 = vmax.xlane.f32.xlu0 %v1415
        %v1417 = vpop.xlane.xlu0 %1416
        %v1418 = vsub.f32 %v1385, %v1396
        %v1419 = vsub.f32 %v1386, %v1399
        %v1420 = vsub.f32 %v1387, %v1402
        %v1421 = vsub.f32 %v1388, %v1405
        %v1422 = vsub.f32 %v1389, %v1408
        %v1423 = vsub.f32 %v1390, %v1411
        %v1424 = vsub.f32 %v1391, %v1414
        %v1425 = vsub.f32 %v1392, %v1417
        %v1426 = vmul.f32 %v1418, 1.442695
        %v1427 = vpow.pop %v1426
        %v1428 = vmul.f32 %v1419, 1.442695
        %v1429 = vpow.pop %v1428
        %v1430 = vmul.f32 %v1420, 1.442695
        %v1431 = vpow.pop %v1430
        %v1432 = vmul.f32 %v1421, 1.442695
        %v1433 = vpow.pop %v1432
        %v1434 = vmul.f32 %v1422, 1.442695
        %v1435 = vpow.pop %v1434
        %v1436 = vmul.f32 %v1423, 1.442695
        %v1437 = vpow.pop %v1436
        %v1438 = vmul.f32 %v1424, 1.442695
        %v1439 = vpow.pop %v1438
        %v1440 = vmul.f32 %v1425, 1.442695
        %v1441 = vpow.pop %v1440
        %v1442 = vsel %vm1393, %v1427, 0.0
        %1443 = vadd.xlane.f32.xlu0 %v1442
        %v1444 = vpop.xlane.xlu0 %1443
        %v1445 = vsel %vm1393, %v1429, 0.0
        %1446 = vadd.xlane.f32.xlu0 %v1445
        %v1447 = vpop.xlane.xlu0 %1446
        %v1448 = vsel %vm1393, %v1431, 0.0
        %1449 = vadd.xlane.f32.xlu0 %v1448
        %v1450 = vpop.xlane.xlu0 %1449
        %v1451 = vsel %vm1393, %v1433, 0.0
        %1452 = vadd.xlane.f32.xlu0 %v1451
        %v1453 = vpop.xlane.xlu0 %1452
        %v1454 = vsel %vm1393, %v1435, 0.0
        %1455 = vadd.xlane.f32.xlu0 %v1454
        %v1456 = vpop.xlane.xlu0 %1455
        %v1457 = vsel %vm1393, %v1437, 0.0
        %1458 = vadd.xlane.f32.xlu0 %v1457
        %v1459 = vpop.xlane.xlu0 %1458
        %v1460 = vsel %vm1393, %v1439, 0.0
        %1461 = vadd.xlane.f32.xlu0 %v1460
        %v1462 = vpop.xlane.xlu0 %1461
        %v1463 = vsel %vm1393, %v1441, 0.0
        %1464 = vadd.xlane.f32.xlu0 %v1463
        %v1465 = vpop.xlane.xlu0 %1464
        %v1466 = vrcp.pop %v1444
        %v1467 = vrcp.pop %v1447
        %v1468 = vrcp.pop %v1450
        %v1469 = vrcp.pop %v1453
        %v1470 = vrcp.pop %v1456
        %v1471 = vrcp.pop %v1459
        %v1472 = vrcp.pop %v1462
        %v1473 = vrcp.pop %v1465
        %v1474 = vmul.f32 %v1427, %v1466
        %v1475 = vmul.f32 %v1429, %v1467
        %v1476 = vmul.f32 %v1431, %v1468
        %v1477 = vmul.f32 %v1433, %v1469
        %v1478 = vmul.f32 %v1435, %v1470
        %v1479 = vmul.f32 %v1437, %v1471
        %v1480 = vmul.f32 %v1439, %v1472
        %v1481 = vmul.f32 %v1441, %v1473
        %v1482 = vpack.c.bf16 %v1475, %v1474
        %v1483 = vpack.c.bf16 %v1477, %v1476
        %v1484 = vpack.c.bf16 %v1479, %v1478
        %v1485 = vpack.c.bf16 %v1481, %v1480
        %v1487 = vsel %vm1393, %v1482, 0
        %1489 = vmatprep.subr.bf16.mxu0 0
        %1490 = vmatpush1.bf16.msra.mxu0 %v1192
        %1491 = vmatprep.subr.bf16.mxu0 0
        %1492 = vmatpush1.bf16.msra.mxu0 0
        %1493 = vmatprep.subr.bf16.mxu0 0
        %1494 = vmatpush1.bf16.msra.mxu0 0
        %1495 = vmatprep.subr.bf16.mxu0 0
        %1496 = vmatpush1.bf16.msra.mxu0 0
        %1497 = vmatprep.subr.bf16.mxu0 0
        %1498 = vmatpush1.bf16.msra.mxu0 0
        %1499 = vmatprep.subr.bf16.mxu0 0
        %1500 = vmatpush1.bf16.msra.mxu0 0
        %1501 = vmatprep.subr.bf16.mxu0 0
        %1502 = vmatpush1.bf16.msra.mxu0 0
        %1503 = vmatprep.subr.bf16.mxu0 0
        %1504 = vmatpush1.bf16.msra.mxu0 0
        %1505 = vmatprep.subr.bf16.mxu0 0
        %1506 = vmatpush1.bf16.msra.mxu0 0
        %1507 = vmatprep.subr.bf16.mxu0 0
        %1508 = vmatpush1.bf16.msra.mxu0 0
        %1509 = vmatprep.subr.bf16.mxu0 0
        %1510 = vmatpush1.bf16.msra.mxu0 0
        %1511 = vmatprep.subr.bf16.mxu0 0
        %1512 = vmatpush1.bf16.msra.mxu0 0
        %1513 = vmatprep.subr.bf16.mxu0 0
        %1514 = vmatpush1.bf16.msra.mxu0 0
        %1515 = vmatprep.subr.bf16.mxu0 0
        %1516 = vmatpush1.bf16.msra.mxu0 0
        %1517 = vmatprep.subr.bf16.mxu0 0
        %1518 = vmatpush1.bf16.msra.mxu0 0
        %1519 = vmatprep.subr.bf16.mxu0 0
        %1520 = vmatpush1.bf16.msra.mxu0 0
        %1521 = vmatprep.mubr.bf16.mxu0 0
        %1522 = vmatmul.mubr.bf16.gmra.mrb[0].mxu0 %v1487
        %v1523 = vpop.f32.mrb[0].mxu0
        %v1524 = vadd.f32 0.0, %v1523
        %v1525 = vpop.f32.mrb[0].mxu0
        %v1526 = vpop.f32.mrb[0].mxu0
        %v1527 = vadd.f32 0.0, %v1526
        %v1528 = vpop.f32.mrb[0].mxu0
        %1529 = vdwg.mxu0
        %v1531 = vsel %vm1393, %v1483, 0
        %1533 = vmatprep.subr.bf16.mxu0 0
        %1534 = vmatpush1.bf16.msra.mxu0 %v1193
        %1535 = vmatprep.subr.bf16.mxu0 0
        %1536 = vmatpush1.bf16.msra.mxu0 0
        %1537 = vmatprep.subr.bf16.mxu0 0
        %1538 = vmatpush1.bf16.msra.mxu0 0
        %1539 = vmatprep.subr.bf16.mxu0 0
        %1540 = vmatpush1.bf16.msra.mxu0 0
        %1541 = vmatprep.subr.bf16.mxu0 0
        %1542 = vmatpush1.bf16.msra.mxu0 0
        %1543 = vmatprep.subr.bf16.mxu0 0
        %1544 = vmatpush1.bf16.msra.mxu0 0
        %1545 = vmatprep.subr.bf16.mxu0 0
        %1546 = vmatpush1.bf16.msra.mxu0 0
        %1547 = vmatprep.subr.bf16.mxu0 0
        %1548 = vmatpush1.bf16.msra.mxu0 0
        %1549 = vmatprep.subr.bf16.mxu0 0
        %1550 = vmatpush1.bf16.msra.mxu0 0
        %1551 = vmatprep.subr.bf16.mxu0 0
        %1552 = vmatpush1.bf16.msra.mxu0 0
        %1553 = vmatprep.subr.bf16.mxu0 0
        %1554 = vmatpush1.bf16.msra.mxu0 0
        %1555 = vmatprep.subr.bf16.mxu0 0
        %1556 = vmatpush1.bf16.msra.mxu0 0
        %1557 = vmatprep.subr.bf16.mxu0 0
        %1558 = vmatpush1.bf16.msra.mxu0 0
        %1559 = vmatprep.subr.bf16.mxu0 0
        %1560 = vmatpush1.bf16.msra.mxu0 0
        %1561 = vmatprep.subr.bf16.mxu0 0
        %1562 = vmatpush1.bf16.msra.mxu0 0
        %1563 = vmatprep.subr.bf16.mxu0 0
        %1564 = vmatpush1.bf16.msra.mxu0 0
        %1565 = vmatprep.mubr.bf16.mxu0 0
        %1566 = vmatmul.mubr.bf16.gmra.mrb[0].mxu0 %v1531
        %v1567 = vpop.f32.mrb[0].mxu0
        %v1568 = vadd.f32 0.0, %v1567
        %v1569 = vpop.f32.mrb[0].mxu0
        %v1570 = vpop.f32.mrb[0].mxu0
        %v1571 = vadd.f32 0.0, %v1570
        %v1572 = vpop.f32.mrb[0].mxu0
        %1573 = vdwg.mxu0
        %v1575 = vsel %vm1393, %v1484, 0
        %1577 = vmatprep.subr.bf16.mxu0 0
        %1578 = vmatpush1.bf16.msra.mxu0 %v1194
        %1579 = vmatprep.subr.bf16.mxu0 0
        %1580 = vmatpush1.bf16.msra.mxu0 0
        %1581 = vmatprep.subr.bf16.mxu0 0
        %1582 = vmatpush1.bf16.msra.mxu0 0
        %1583 = vmatprep.subr.bf16.mxu0 0
        %1584 = vmatpush1.bf16.msra.mxu0 0
        %1585 = vmatprep.subr.bf16.mxu0 0
        %1586 = vmatpush1.bf16.msra.mxu0 0
        %1587 = vmatprep.subr.bf16.mxu0 0
        %1588 = vmatpush1.bf16.msra.mxu0 0
        %1589 = vmatprep.subr.bf16.mxu0 0
        %1590 = vmatpush1.bf16.msra.mxu0 0
        %1591 = vmatprep.subr.bf16.mxu0 0
        %1592 = vmatpush1.bf16.msra.mxu0 0
        %1593 = vmatprep.subr.bf16.mxu0 0
        %1594 = vmatpush1.bf16.msra.mxu0 0
        %1595 = vmatprep.subr.bf16.mxu0 0
        %1596 = vmatpush1.bf16.msra.mxu0 0
        %1597 = vmatprep.subr.bf16.mxu0 0
        %1598 = vmatpush1.bf16.msra.mxu0 0
        %1599 = vmatprep.subr.bf16.mxu0 0
        %1600 = vmatpush1.bf16.msra.mxu0 0
        %1601 = vmatprep.subr.bf16.mxu0 0
        %1602 = vmatpush1.bf16.msra.mxu0 0
        %1603 = vmatprep.subr.bf16.mxu0 0
        %1604 = vmatpush1.bf16.msra.mxu0 0
        %1605 = vmatprep.subr.bf16.mxu0 0
        %1606 = vmatpush1.bf16.msra.mxu0 0
        %1607 = vmatprep.subr.bf16.mxu0 0
        %1608 = vmatpush1.bf16.msra.mxu0 0
        %1609 = vmatprep.mubr.bf16.mxu0 0
        %1610 = vmatmul.mubr.bf16.gmra.mrb[0].mxu0 %v1575
        %v1611 = vpop.f32.mrb[0].mxu0
        %v1612 = vadd.f32 0.0, %v1611
        %v1613 = vpop.f32.mrb[0].mxu0
        %v1614 = vpop.f32.mrb[0].mxu0
        %v1615 = vadd.f32 0.0, %v1614
        %v1616 = vpop.f32.mrb[0].mxu0
        %1617 = vdwg.mxu0
        %v1619 = vsel %vm1393, %v1485, 0
        %1621 = vmatprep.subr.bf16.mxu0 0
        %1622 = vmatpush1.bf16.msra.mxu0 %v1195
        %1623 = vmatprep.subr.bf16.mxu0 0
        %1624 = vmatpush1.bf16.msra.mxu0 0
        %1625 = vmatprep.subr.bf16.mxu0 0
        %1626 = vmatpush1.bf16.msra.mxu0 0
        %1627 = vmatprep.subr.bf16.mxu0 0
        %1628 = vmatpush1.bf16.msra.mxu0 0
        %1629 = vmatprep.subr.bf16.mxu0 0
        %1630 = vmatpush1.bf16.msra.mxu0 0
        %1631 = vmatprep.subr.bf16.mxu0 0
        %1632 = vmatpush1.bf16.msra.mxu0 0
        %1633 = vmatprep.subr.bf16.mxu0 0
        %1634 = vmatpush1.bf16.msra.mxu0 0
        %1635 = vmatprep.subr.bf16.mxu0 0
        %1636 = vmatpush1.bf16.msra.mxu0 0
        %1637 = vmatprep.subr.bf16.mxu0 0
        %1638 = vmatpush1.bf16.msra.mxu0 0
        %1639 = vmatprep.subr.bf16.mxu0 0
        %1640 = vmatpush1.bf16.msra.mxu0 0
        %1641 = vmatprep.subr.bf16.mxu0 0
        %1642 = vmatpush1.bf16.msra.mxu0 0
        %1643 = vmatprep.subr.bf16.mxu0 0
        %1644 = vmatpush1.bf16.msra.mxu0 0
        %1645 = vmatprep.subr.bf16.mxu0 0
        %1646 = vmatpush1.bf16.msra.mxu0 0
        %1647 = vmatprep.subr.bf16.mxu0 0
        %1648 = vmatpush1.bf16.msra.mxu0 0
        %1649 = vmatprep.subr.bf16.mxu0 0
        %1650 = vmatpush1.bf16.msra.mxu0 0
        %1651 = vmatprep.subr.bf16.mxu0 0
        %1652 = vmatpush1.bf16.msra.mxu0 0
        %1653 = vmatprep.mubr.bf16.mxu0 0
        %1654 = vmatmul.mubr.bf16.gmra.mrb[0].mxu0 %v1619
        %v1655 = vpop.f32.mrb[0].mxu0
        %v1656 = vadd.f32 0.0, %v1655
        %v1657 = vpop.f32.mrb[0].mxu0
        %v1658 = vpop.f32.mrb[0].mxu0
        %v1659 = vadd.f32 0.0, %v1658
        %v1660 = vpop.f32.mrb[0].mxu0
        %1661 = vdwg.mxu0
        %v1662 = vpack.c.bf16 %v1527, %v1524
        %v1663 = vpack.c.bf16 %v1571, %v1568
        %v1664 = vpack.c.bf16 %v1615, %v1612
        %v1665 = vpack.c.bf16 %v1659, %v1656
        %v1666 = vld [vmem:[#allocation8] sm:$0xf]
        %v1667 = vld [vmem:[#allocation8 + $0x4] sm:$0xf]
        %v1668 = vld [vmem:[#allocation8 + $0x8] sm:$0xf]
        %v1669 = vld [vmem:[#allocation8 + $0xc] sm:$0xf]
        %1671 = vrot.lane.b32.xlu0 %v1184, 96
        %v1672 = vpop.permute.xlu0 %1671
        %1674 = vrot.lane.b32.xlu0 %v1188, 96
        %v1675 = vpop.permute.xlu0 %1674
        %v1677 = vsel %vm1196, %v1672, 0
        %v1680 = vsel %vm1196, %v1675, 0
        %1682 = vmatprep.subr.bf16.mxu0 0
        %1683 = vmatpush1.bf16.xpose.msra.mxu0 %v1680
        %1684 = vmatprep.subr.bf16.mxu0 0
        %1685 = vmatpush1.bf16.xpose.msra.mxu0 0
        %1686 = vmatprep.subr.bf16.mxu0 0
        %1687 = vmatpush1.bf16.xpose.msra.mxu0 0
        %1688 = vmatprep.subr.bf16.mxu0 0
        %1689 = vmatpush1.bf16.xpose.msra.mxu0 0
        %1690 = vmatprep.subr.bf16.mxu0 0
        %1691 = vmatpush1.bf16.xpose.msra.mxu0 0
        %1692 = vmatprep.subr.bf16.mxu0 0
        %1693 = vmatpush1.bf16.xpose.msra.mxu0 0
        %1694 = vmatprep.subr.bf16.mxu0 0
        %1695 = vmatpush1.bf16.xpose.msra.mxu0 0
        %1696 = vmatprep.subr.bf16.mxu0 0
        %1697 = vmatpush1.bf16.xpose.msra.mxu0 0
        %1698 = vmatprep.subr.bf16.mxu0 0
        %1699 = vmatpush1.bf16.xpose.msra.mxu0 0
        %1700 = vmatprep.subr.bf16.mxu0 0
        %1701 = vmatpush1.bf16.xpose.msra.mxu0 0
        %1702 = vmatprep.subr.bf16.mxu0 0
        %1703 = vmatpush1.bf16.xpose.msra.mxu0 0
        %1704 = vmatprep.subr.bf16.mxu0 0
        %1705 = vmatpush1.bf16.xpose.msra.mxu0 0
        %1706 = vmatprep.subr.bf16.mxu0 0
        %1707 = vmatpush1.bf16.xpose.msra.mxu0 0
        %1708 = vmatprep.subr.bf16.mxu0 0
        %1709 = vmatpush1.bf16.xpose.msra.mxu0 0
        %1710 = vmatprep.subr.bf16.mxu0 0
        %1711 = vmatpush1.bf16.xpose.msra.mxu0 0
        %1712 = vmatprep.subr.bf16.mxu0 0
        %1713 = vmatpush1.bf16.xpose.msra.mxu0 0
        %1714 = vmatprep.mubr.bf16.mxu0 0
        %1715 = vmatmul.mubr.bf16.gmra.mrb[0].mxu0 %v1677
        %v1716 = vpop.f32.mrb[0].mxu0
        %v1717 = vadd.f32 0.0, %v1716
        %v1718 = vpop.f32.mrb[0].mxu0
        %v1719 = vpop.f32.mrb[0].mxu0
        %v1720 = vadd.f32 0.0, %v1719
        %v1721 = vpop.f32.mrb[0].mxu0
        %1722 = vdwg.mxu0
        %1724 = vrot.lane.b32.xlu0 %v1185, 96
        %v1725 = vpop.permute.xlu0 %1724
        %1727 = vrot.lane.b32.xlu0 %v1189, 96
        %v1728 = vpop.permute.xlu0 %1727
        %v1730 = vsel %vm1196, %v1725, 0
        %v1733 = vsel %vm1196, %v1728, 0
        %1735 = vmatprep.subr.bf16.mxu0 0
        %1736 = vmatpush1.bf16.xpose.msra.mxu0 %v1733
        %1737 = vmatprep.subr.bf16.mxu0 0
        %1738 = vmatpush1.bf16.xpose.msra.mxu0 0
        %1739 = vmatprep.subr.bf16.mxu0 0
        %1740 = vmatpush1.bf16.xpose.msra.mxu0 0
        %1741 = vmatprep.subr.bf16.mxu0 0
        %1742 = vmatpush1.bf16.xpose.msra.mxu0 0
        %1743 = vmatprep.subr.bf16.mxu0 0
        %1744 = vmatpush1.bf16.xpose.msra.mxu0 0
        %1745 = vmatprep.subr.bf16.mxu0 0
        %1746 = vmatpush1.bf16.xpose.msra.mxu0 0
        %1747 = vmatprep.subr.bf16.mxu0 0
        %1748 = vmatpush1.bf16.xpose.msra.mxu0 0
        %1749 = vmatprep.subr.bf16.mxu0 0
        %1750 = vmatpush1.bf16.xpose.msra.mxu0 0
        %1751 = vmatprep.subr.bf16.mxu0 0
        %1752 = vmatpush1.bf16.xpose.msra.mxu0 0
        %1753 = vmatprep.subr.bf16.mxu0 0
        %1754 = vmatpush1.bf16.xpose.msra.mxu0 0
        %1755 = vmatprep.subr.bf16.mxu0 0
        %1756 = vmatpush1.bf16.xpose.msra.mxu0 0
        %1757 = vmatprep.subr.bf16.mxu0 0
        %1758 = vmatpush1.bf16.xpose.msra.mxu0 0
        %1759 = vmatprep.subr.bf16.mxu0 0
        %1760 = vmatpush1.bf16.xpose.msra.mxu0 0
        %1761 = vmatprep.subr.bf16.mxu0 0
        %1762 = vmatpush1.bf16.xpose.msra.mxu0 0
        %1763 = vmatprep.subr.bf16.mxu0 0
        %1764 = vmatpush1.bf16.xpose.msra.mxu0 0
        %1765 = vmatprep.subr.bf16.mxu0 0
        %1766 = vmatpush1.bf16.xpose.msra.mxu0 0
        %1767 = vmatprep.mubr.bf16.mxu0 0
        %1768 = vmatmul.mubr.bf16.gmra.mrb[0].mxu0 %v1730
        %v1769 = vpop.f32.mrb[0].mxu0
        %v1770 = vadd.f32 0.0, %v1769
        %v1771 = vpop.f32.mrb[0].mxu0
        %v1772 = vpop.f32.mrb[0].mxu0
        %v1773 = vadd.f32 0.0, %v1772
        %v1774 = vpop.f32.mrb[0].mxu0
        %1775 = vdwg.mxu0
        %1777 = vrot.lane.b32.xlu0 %v1186, 96
        %v1778 = vpop.permute.xlu0 %1777
        %1780 = vrot.lane.b32.xlu0 %v1190, 96
        %v1781 = vpop.permute.xlu0 %1780
        %v1783 = vsel %vm1196, %v1778, 0
        %v1786 = vsel %vm1196, %v1781, 0
        %1788 = vmatprep.subr.bf16.mxu0 0
        %1789 = vmatpush1.bf16.xpose.msra.mxu0 %v1786
        %1790 = vmatprep.subr.bf16.mxu0 0
        %1791 = vmatpush1.bf16.xpose.msra.mxu0 0
        %1792 = vmatprep.subr.bf16.mxu0 0
        %1793 = vmatpush1.bf16.xpose.msra.mxu0 0
        %1794 = vmatprep.subr.bf16.mxu0 0
        %1795 = vmatpush1.bf16.xpose.msra.mxu0 0
        %1796 = vmatprep.subr.bf16.mxu0 0
        %1797 = vmatpush1.bf16.xpose.msra.mxu0 0
        %1798 = vmatprep.subr.bf16.mxu0 0
        %1799 = vmatpush1.bf16.xpose.msra.mxu0 0
        %1800 = vmatprep.subr.bf16.mxu0 0
        %1801 = vmatpush1.bf16.xpose.msra.mxu0 0
        %1802 = vmatprep.subr.bf16.mxu0 0
        %1803 = vmatpush1.bf16.xpose.msra.mxu0 0
        %1804 = vmatprep.subr.bf16.mxu0 0
        %1805 = vmatpush1.bf16.xpose.msra.mxu0 0
        %1806 = vmatprep.subr.bf16.mxu0 0
        %1807 = vmatpush1.bf16.xpose.msra.mxu0 0
        %1808 = vmatprep.subr.bf16.mxu0 0
        %1809 = vmatpush1.bf16.xpose.msra.mxu0 0
        %1810 = vmatprep.subr.bf16.mxu0 0
        %1811 = vmatpush1.bf16.xpose.msra.mxu0 0
        %1812 = vmatprep.subr.bf16.mxu0 0
        %1813 = vmatpush1.bf16.xpose.msra.mxu0 0
        %1814 = vmatprep.subr.bf16.mxu0 0
        %1815 = vmatpush1.bf16.xpose.msra.mxu0 0
        %1816 = vmatprep.subr.bf16.mxu0 0
        %1817 = vmatpush1.bf16.xpose.msra.mxu0 0
        %1818 = vmatprep.subr.bf16.mxu0 0
        %1819 = vmatpush1.bf16.xpose.msra.mxu0 0
        %1820 = vmatprep.mubr.bf16.mxu0 0
        %1821 = vmatmul.mubr.bf16.gmra.mrb[0].mxu0 %v1783
        %v1822 = vpop.f32.mrb[0].mxu0
        %v1823 = vadd.f32 0.0, %v1822
        %v1824 = vpop.f32.mrb[0].mxu0
        %v1825 = vpop.f32.mrb[0].mxu0
        %v1826 = vadd.f32 0.0, %v1825
        %v1827 = vpop.f32.mrb[0].mxu0
        %1828 = vdwg.mxu0
        %1830 = vrot.lane.b32.xlu0 %v1187, 96
        %v1831 = vpop.permute.xlu0 %1830
        %1833 = vrot.lane.b32.xlu0 %v1191, 96
        %v1834 = vpop.permute.xlu0 %1833
        %v1836 = vsel %vm1196, %v1831, 0
        %v1839 = vsel %vm1196, %v1834, 0
        %1841 = vmatprep.subr.bf16.mxu0 0
        %1842 = vmatpush1.bf16.xpose.msra.mxu0 %v1839
        %1843 = vmatprep.subr.bf16.mxu0 0
        %1844 = vmatpush1.bf16.xpose.msra.mxu0 0
        %1845 = vmatprep.subr.bf16.mxu0 0
        %1846 = vmatpush1.bf16.xpose.msra.mxu0 0
        %1847 = vmatprep.subr.bf16.mxu0 0
        %1848 = vmatpush1.bf16.xpose.msra.mxu0 0
        %1849 = vmatprep.subr.bf16.mxu0 0
        %1850 = vmatpush1.bf16.xpose.msra.mxu0 0
        %1851 = vmatprep.subr.bf16.mxu0 0
        %1852 = vmatpush1.bf16.xpose.msra.mxu0 0
        %1853 = vmatprep.subr.bf16.mxu0 0
        %1854 = vmatpush1.bf16.xpose.msra.mxu0 0
        %1855 = vmatprep.subr.bf16.mxu0 0
        %1856 = vmatpush1.bf16.xpose.msra.mxu0 0
        %1857 = vmatprep.subr.bf16.mxu0 0
        %1858 = vmatpush1.bf16.xpose.msra.mxu0 0
        %1859 = vmatprep.subr.bf16.mxu0 0
        %1860 = vmatpush1.bf16.xpose.msra.mxu0 0
        %1861 = vmatprep.subr.bf16.mxu0 0
        %1862 = vmatpush1.bf16.xpose.msra.mxu0 0
        %1863 = vmatprep.subr.bf16.mxu0 0
        %1864 = vmatpush1.bf16.xpose.msra.mxu0 0
        %1865 = vmatprep.subr.bf16.mxu0 0
        %1866 = vmatpush1.bf16.xpose.msra.mxu0 0
        %1867 = vmatprep.subr.bf16.mxu0 0
        %1868 = vmatpush1.bf16.xpose.msra.mxu0 0
        %1869 = vmatprep.subr.bf16.mxu0 0
        %1870 = vmatpush1.bf16.xpose.msra.mxu0 0
        %1871 = vmatprep.subr.bf16.mxu0 0
        %1872 = vmatpush1.bf16.xpose.msra.mxu0 0
        %1873 = vmatprep.mubr.bf16.mxu0 0
        %1874 = vmatmul.mubr.bf16.gmra.mrb[0].mxu0 %v1836
        %v1875 = vpop.f32.mrb[0].mxu0
        %v1876 = vadd.f32 0.0, %v1875
        %v1877 = vpop.f32.mrb[0].mxu0
        %v1878 = vpop.f32.mrb[0].mxu0
        %v1879 = vadd.f32 0.0, %v1878
        %v1880 = vpop.f32.mrb[0].mxu0
        %1881 = vdwg.mxu0
        %v1882 = vmul.f32 %v1717, 0.17677669
        %v1883 = vmul.f32 %v1720, 0.17677669
        %v1884 = vmul.f32 %v1770, 0.17677669
        %v1885 = vmul.f32 %v1773, 0.17677669
        %v1886 = vmul.f32 %v1823, 0.17677669
        %v1887 = vmul.f32 %v1826, 0.17677669
        %v1888 = vmul.f32 %v1876, 0.17677669
        %v1889 = vmul.f32 %v1879, 0.17677669
        %v1890 = vsel %vm1393, %v1882, -inf
        %1891 = vmax.xlane.f32.xlu0 %v1890
        %v1892 = vpop.xlane.xlu0 %1891
        %v1893 = vsel %vm1393, %v1883, -inf
        %1894 = vmax.xlane.f32.xlu0 %v1893
        %v1895 = vpop.xlane.xlu0 %1894
        %v1896 = vsel %vm1393, %v1884, -inf
        %1897 = vmax.xlane.f32.xlu0 %v1896
        %v1898 = vpop.xlane.xlu0 %1897
        %v1899 = vsel %vm1393, %v1885, -inf
        %1900 = vmax.xlane.f32.xlu0 %v1899
        %v1901 = vpop.xlane.xlu0 %1900
        %v1902 = vsel %vm1393, %v1886, -inf
        %1903 = vmax.xlane.f32.xlu0 %v1902
        %v1904 = vpop.xlane.xlu0 %1903
        %v1905 = vsel %vm1393, %v1887, -inf
        %1906 = vmax.xlane.f32.xlu0 %v1905
        %v1907 = vpop.xlane.xlu0 %1906
        %v1908 = vsel %vm1393, %v1888, -inf
        %1909 = vmax.xlane.f32.xlu0 %v1908
        %v1910 = vpop.xlane.xlu0 %1909
        %v1911 = vsel %vm1393, %v1889, -inf
        %1912 = vmax.xlane.f32.xlu0 %v1911
        %v1913 = vpop.xlane.xlu0 %1912
        %v1914 = vsub.f32 %v1882, %v1892
        %v1915 = vsub.f32 %v1883, %v1895
        %v1916 = vsub.f32 %v1884, %v1898
        %v1917 = vsub.f32 %v1885, %v1901
        %v1918 = vsub.f32 %v1886, %v1904
        %v1919 = vsub.f32 %v1887, %v1907
        %v1920 = vsub.f32 %v1888, %v1910
        %v1921 = vsub.f32 %v1889, %v1913
        %v1922 = vmul.f32 %v1914, 1.442695
        %v1923 = vpow.pop %v1922
        %v1924 = vmul.f32 %v1915, 1.442695
        %v1925 = vpow.pop %v1924
        %v1926 = vmul.f32 %v1916, 1.442695
        %v1927 = vpow.pop %v1926
        %v1928 = vmul.f32 %v1917, 1.442695
        %v1929 = vpow.pop %v1928
        %v1930 = vmul.f32 %v1918, 1.442695
        %v1931 = vpow.pop %v1930
        %v1932 = vmul.f32 %v1919, 1.442695
        %v1933 = vpow.pop %v1932
        %v1934 = vmul.f32 %v1920, 1.442695
        %v1935 = vpow.pop %v1934
        %v1936 = vmul.f32 %v1921, 1.442695
        %v1937 = vpow.pop %v1936
        %v1938 = vsel %vm1393, %v1923, 0.0
        %1939 = vadd.xlane.f32.xlu0 %v1938
        %v1940 = vpop.xlane.xlu0 %1939
        %v1941 = vsel %vm1393, %v1925, 0.0
        %1942 = vadd.xlane.f32.xlu0 %v1941
        %v1943 = vpop.xlane.xlu0 %1942
        %v1944 = vsel %vm1393, %v1927, 0.0
        %1945 = vadd.xlane.f32.xlu0 %v1944
        %v1946 = vpop.xlane.xlu0 %1945
        %v1947 = vsel %vm1393, %v1929, 0.0
        %1948 = vadd.xlane.f32.xlu0 %v1947
        %v1949 = vpop.xlane.xlu0 %1948
        %v1950 = vsel %vm1393, %v1931, 0.0
        %1951 = vadd.xlane.f32.xlu0 %v1950
        %v1952 = vpop.xlane.xlu0 %1951
        %v1953 = vsel %vm1393, %v1933, 0.0
        %1954 = vadd.xlane.f32.xlu0 %v1953
        %v1955 = vpop.xlane.xlu0 %1954
        %v1956 = vsel %vm1393, %v1935, 0.0
        %1957 = vadd.xlane.f32.xlu0 %v1956
        %v1958 = vpop.xlane.xlu0 %1957
        %v1959 = vsel %vm1393, %v1937, 0.0
        %1960 = vadd.xlane.f32.xlu0 %v1959
        %v1961 = vpop.xlane.xlu0 %1960
        %v1962 = vrcp.pop %v1940
        %v1963 = vrcp.pop %v1943
        %v1964 = vrcp.pop %v1946
        %v1965 = vrcp.pop %v1949
        %v1966 = vrcp.pop %v1952
        %v1967 = vrcp.pop %v1955
        %v1968 = vrcp.pop %v1958
        %v1969 = vrcp.pop %v1961
        %v1970 = vmul.f32 %v1923, %v1962
        %v1971 = vmul.f32 %v1925, %v1963
        %v1972 = vmul.f32 %v1927, %v1964
        %v1973 = vmul.f32 %v1929, %v1965
        %v1974 = vmul.f32 %v1931, %v1966
        %v1975 = vmul.f32 %v1933, %v1967
        %v1976 = vmul.f32 %v1935, %v1968
        %v1977 = vmul.f32 %v1937, %v1969
        %v1978 = vpack.c.bf16 %v1971, %v1970
        %v1979 = vpack.c.bf16 %v1973, %v1972
        %v1980 = vpack.c.bf16 %v1975, %v1974
        %v1981 = vpack.c.bf16 %v1977, %v1976
        %1983 = vrot.lane.b32.xlu0 %v1192, 96
        %v1984 = vpop.permute.xlu0 %1983
        %v1987 = vsel %vm1393, %v1978, 0
        %1989 = vmatprep.subr.bf16.mxu0 0
        %1990 = vmatpush1.bf16.msra.mxu0 %v1984
        %1991 = vmatprep.subr.bf16.mxu0 0
        %1992 = vmatpush1.bf16.msra.mxu0 0
        %1993 = vmatprep.subr.bf16.mxu0 0
        %1994 = vmatpush1.bf16.msra.mxu0 0
        %1995 = vmatprep.subr.bf16.mxu0 0
        %1996 = vmatpush1.bf16.msra.mxu0 0
        %1997 = vmatprep.subr.bf16.mxu0 0
        %1998 = vmatpush1.bf16.msra.mxu0 0
        %1999 = vmatprep.subr.bf16.mxu0 0
        %2000 = vmatpush1.bf16.msra.mxu0 0
        %2001 = vmatprep.subr.bf16.mxu0 0
        %2002 = vmatpush1.bf16.msra.mxu0 0
        %2003 = vmatprep.subr.bf16.mxu0 0
        %2004 = vmatpush1.bf16.msra.mxu0 0
        %2005 = vmatprep.subr.bf16.mxu0 0
        %2006 = vmatpush1.bf16.msra.mxu0 0
        %2007 = vmatprep.subr.bf16.mxu0 0
        %2008 = vmatpush1.bf16.msra.mxu0 0
        %2009 = vmatprep.subr.bf16.mxu0 0
        %2010 = vmatpush1.bf16.msra.mxu0 0
        %2011 = vmatprep.subr.bf16.mxu0 0
        %2012 = vmatpush1.bf16.msra.mxu0 0
        %2013 = vmatprep.subr.bf16.mxu0 0
        %2014 = vmatpush1.bf16.msra.mxu0 0
        %2015 = vmatprep.subr.bf16.mxu0 0
        %2016 = vmatpush1.bf16.msra.mxu0 0
        %2017 = vmatprep.subr.bf16.mxu0 0
        %2018 = vmatpush1.bf16.msra.mxu0 0
        %2019 = vmatprep.subr.bf16.mxu0 0
        %2020 = vmatpush1.bf16.msra.mxu0 0
        %2021 = vmatprep.mubr.bf16.mxu0 0
        %2022 = vmatmul.mubr.bf16.gmra.mrb[0].mxu0 %v1987
        %v2023 = vpop.f32.mrb[0].mxu0
        %v2024 = vadd.f32 0.0, %v2023
        %v2025 = vpop.f32.mrb[0].mxu0
        %v2026 = vpop.f32.mrb[0].mxu0
        %v2027 = vadd.f32 0.0, %v2026
        %v2028 = vpop.f32.mrb[0].mxu0
        %2029 = vdwg.mxu0
        %2031 = vrot.lane.b32.xlu0 %v1193, 96
        %v2032 = vpop.permute.xlu0 %2031
        %v2035 = vsel %vm1393, %v1979, 0
        %2037 = vmatprep.subr.bf16.mxu0 0
        %2038 = vmatpush1.bf16.msra.mxu0 %v2032
        %2039 = vmatprep.subr.bf16.mxu0 0
        %2040 = vmatpush1.bf16.msra.mxu0 0
        %2041 = vmatprep.subr.bf16.mxu0 0
        %2042 = vmatpush1.bf16.msra.mxu0 0
        %2043 = vmatprep.subr.bf16.mxu0 0
        %2044 = vmatpush1.bf16.msra.mxu0 0
        %2045 = vmatprep.subr.bf16.mxu0 0
        %2046 = vmatpush1.bf16.msra.mxu0 0
        %2047 = vmatprep.subr.bf16.mxu0 0
        %2048 = vmatpush1.bf16.msra.mxu0 0
        %2049 = vmatprep.subr.bf16.mxu0 0
        %2050 = vmatpush1.bf16.msra.mxu0 0
        %2051 = vmatprep.subr.bf16.mxu0 0
        %2052 = vmatpush1.bf16.msra.mxu0 0
        %2053 = vmatprep.subr.bf16.mxu0 0
        %2054 = vmatpush1.bf16.msra.mxu0 0
        %2055 = vmatprep.subr.bf16.mxu0 0
        %2056 = vmatpush1.bf16.msra.mxu0 0
        %2057 = vmatprep.subr.bf16.mxu0 0
        %2058 = vmatpush1.bf16.msra.mxu0 0
        %2059 = vmatprep.subr.bf16.mxu0 0
        %2060 = vmatpush1.bf16.msra.mxu0 0
        %2061 = vmatprep.subr.bf16.mxu0 0
        %2062 = vmatpush1.bf16.msra.mxu0 0
        %2063 = vmatprep.subr.bf16.mxu0 0
        %2064 = vmatpush1.bf16.msra.mxu0 0
        %2065 = vmatprep.subr.bf16.mxu0 0
        %2066 = vmatpush1.bf16.msra.mxu0 0
        %2067 = vmatprep.subr.bf16.mxu0 0
        %2068 = vmatpush1.bf16.msra.mxu0 0
        %2069 = vmatprep.mubr.bf16.mxu0 0
        %2070 = vmatmul.mubr.bf16.gmra.mrb[0].mxu0 %v2035
        %v2071 = vpop.f32.mrb[0].mxu0
        %v2072 = vadd.f32 0.0, %v2071
        %v2073 = vpop.f32.mrb[0].mxu0
        %v2074 = vpop.f32.mrb[0].mxu0
        %v2075 = vadd.f32 0.0, %v2074
        %v2076 = vpop.f32.mrb[0].mxu0
        %2077 = vdwg.mxu0
        %2079 = vrot.lane.b32.xlu0 %v1194, 96
        %v2080 = vpop.permute.xlu0 %2079
        %v2083 = vsel %vm1393, %v1980, 0
        %2085 = vmatprep.subr.bf16.mxu0 0
        %2086 = vmatpush1.bf16.msra.mxu0 %v2080
        %2087 = vmatprep.subr.bf16.mxu0 0
        %2088 = vmatpush1.bf16.msra.mxu0 0
        %2089 = vmatprep.subr.bf16.mxu0 0
        %2090 = vmatpush1.bf16.msra.mxu0 0
        %2091 = vmatprep.subr.bf16.mxu0 0
        %2092 = vmatpush1.bf16.msra.mxu0 0
        %2093 = vmatprep.subr.bf16.mxu0 0
        %2094 = vmatpush1.bf16.msra.mxu0 0
        %2095 = vmatprep.subr.bf16.mxu0 0
        %2096 = vmatpush1.bf16.msra.mxu0 0
        %2097 = vmatprep.subr.bf16.mxu0 0
        %2098 = vmatpush1.bf16.msra.mxu0 0
        %2099 = vmatprep.subr.bf16.mxu0 0
        %2100 = vmatpush1.bf16.msra.mxu0 0
        %2101 = vmatprep.subr.bf16.mxu0 0
        %2102 = vmatpush1.bf16.msra.mxu0 0
        %2103 = vmatprep.subr.bf16.mxu0 0
        %2104 = vmatpush1.bf16.msra.mxu0 0
        %2105 = vmatprep.subr.bf16.mxu0 0
        %2106 = vmatpush1.bf16.msra.mxu0 0
        %2107 = vmatprep.subr.bf16.mxu0 0
        %2108 = vmatpush1.bf16.msra.mxu0 0
        %2109 = vmatprep.subr.bf16.mxu0 0
        %2110 = vmatpush1.bf16.msra.mxu0 0
        %2111 = vmatprep.subr.bf16.mxu0 0
        %2112 = vmatpush1.bf16.msra.mxu0 0
        %2113 = vmatprep.subr.bf16.mxu0 0
        %2114 = vmatpush1.bf16.msra.mxu0 0
        %2115 = vmatprep.subr.bf16.mxu0 0
        %2116 = vmatpush1.bf16.msra.mxu0 0
        %2117 = vmatprep.mubr.bf16.mxu0 0
        %2118 = vmatmul.mubr.bf16.gmra.mrb[0].mxu0 %v2083
        %v2119 = vpop.f32.mrb[0].mxu0
        %v2120 = vadd.f32 0.0, %v2119
        %v2121 = vpop.f32.mrb[0].mxu0
        %v2122 = vpop.f32.mrb[0].mxu0
        %v2123 = vadd.f32 0.0, %v2122
        %v2124 = vpop.f32.mrb[0].mxu0
        %2125 = vdwg.mxu0
        %2127 = vrot.lane.b32.xlu0 %v1195, 96
        %v2128 = vpop.permute.xlu0 %2127
        %v2131 = vsel %vm1393, %v1981, 0
        %2133 = vmatprep.subr.bf16.mxu0 0
        %2134 = vmatpush1.bf16.msra.mxu0 %v2128
        %2135 = vmatprep.subr.bf16.mxu0 0
        %2136 = vmatpush1.bf16.msra.mxu0 0
        %2137 = vmatprep.subr.bf16.mxu0 0
        %2138 = vmatpush1.bf16.msra.mxu0 0
        %2139 = vmatprep.subr.bf16.mxu0 0
        %2140 = vmatpush1.bf16.msra.mxu0 0
        %2141 = vmatprep.subr.bf16.mxu0 0
        %2142 = vmatpush1.bf16.msra.mxu0 0
        %2143 = vmatprep.subr.bf16.mxu0 0
        %2144 = vmatpush1.bf16.msra.mxu0 0
        %2145 = vmatprep.subr.bf16.mxu0 0
        %2146 = vmatpush1.bf16.msra.mxu0 0
        %2147 = vmatprep.subr.bf16.mxu0 0
        %2148 = vmatpush1.bf16.msra.mxu0 0
        %2149 = vmatprep.subr.bf16.mxu0 0
        %2150 = vmatpush1.bf16.msra.mxu0 0
        %2151 = vmatprep.subr.bf16.mxu0 0
        %2152 = vmatpush1.bf16.msra.mxu0 0
        %2153 = vmatprep.subr.bf16.mxu0 0
        %2154 = vmatpush1.bf16.msra.mxu0 0
        %2155 = vmatprep.subr.bf16.mxu0 0
        %2156 = vmatpush1.bf16.msra.mxu0 0
        %2157 = vmatprep.subr.bf16.mxu0 0
        %2158 = vmatpush1.bf16.msra.mxu0 0
        %2159 = vmatprep.subr.bf16.mxu0 0
        %2160 = vmatpush1.bf16.msra.mxu0 0
        %2161 = vmatprep.subr.bf16.mxu0 0
        %2162 = vmatpush1.bf16.msra.mxu0 0
        %2163 = vmatprep.subr.bf16.mxu0 0
        %2164 = vmatpush1.bf16.msra.mxu0 0
        %2165 = vmatprep.mubr.bf16.mxu0 0
        %2166 = vmatmul.mubr.bf16.gmra.mrb[0].mxu0 %v2131
        %v2167 = vpop.f32.mrb[0].mxu0
        %v2168 = vadd.f32 0.0, %v2167
        %v2169 = vpop.f32.mrb[0].mxu0
        %v2170 = vpop.f32.mrb[0].mxu0
        %v2171 = vadd.f32 0.0, %v2170
        %v2172 = vpop.f32.mrb[0].mxu0
        %2173 = vdwg.mxu0
        %v2174 = vpack.c.bf16 %v2027, %v2024
        %v2175 = vpack.c.bf16 %v2075, %v2072
        %v2176 = vpack.c.bf16 %v2123, %v2120
        %v2177 = vpack.c.bf16 %v2171, %v2168
        %v2178 = vld [vmem:[#allocation8 + $0x10] sm:$0xf]
        %v2179 = vld [vmem:[#allocation8 + $0x14] sm:$0xf]
        %v2180 = vld [vmem:[#allocation8 + $0x18] sm:$0xf]
        %v2181 = vld [vmem:[#allocation8 + $0x1c] sm:$0xf]
        %v2186 = vunpack.c.l.b16 %v2178
        %v2187 = vunpack.c.l.b16 %v2179
        %v2188 = vunpack.c.l.b16 %v2180
        %v2189 = vunpack.c.l.b16 %v2181
        %v2190 = vpack.c.b16 %v2187, %v2186
        %v2191 = vpack.c.b16 %v2189, %v2188
        %v2195 = vsel %vm1196, %v2174, 0
        %v2198 = vsel %vm1196, %v2175, 0
        %v2201 = vsel %vm1196, %v2176, 0
        %v2204 = vsel %vm1196, %v2177, 0
        %2206 = vmatprep.subr.bf16.mxu0 0
        %2207 = vmatpush1.bf16.msra.mxu0 %v2190
        %2208 = vmatprep.subr.bf16.mxu0 0
        %2209 = vmatpush1.bf16.msra.mxu0 %v2191
        %2210 = vmatprep.subr.bf16.mxu0 0
        %2211 = vmatpush1.bf16.msra.mxu0 0
        %2212 = vmatprep.subr.bf16.mxu0 0
        %2213 = vmatpush1.bf16.msra.mxu0 0
        %2214 = vmatprep.subr.bf16.mxu0 0
        %2215 = vmatpush1.bf16.msra.mxu0 0
        %2216 = vmatprep.subr.bf16.mxu0 0
        %2217 = vmatpush1.bf16.msra.mxu0 0
        %2218 = vmatprep.subr.bf16.mxu0 0
        %2219 = vmatpush1.bf16.msra.mxu0 0
        %2220 = vmatprep.subr.bf16.mxu0 0
        %2221 = vmatpush1.bf16.msra.mxu0 0
        %2222 = vmatprep.subr.bf16.mxu0 0
        %2223 = vmatpush1.bf16.msra.mxu0 0
        %2224 = vmatprep.subr.bf16.mxu0 0
        %2225 = vmatpush1.bf16.msra.mxu0 0
        %2226 = vmatprep.subr.bf16.mxu0 0
        %2227 = vmatpush1.bf16.msra.mxu0 0
        %2228 = vmatprep.subr.bf16.mxu0 0
        %2229 = vmatpush1.bf16.msra.mxu0 0
        %2230 = vmatprep.subr.bf16.mxu0 0
        %2231 = vmatpush1.bf16.msra.mxu0 0
        %2232 = vmatprep.subr.bf16.mxu0 0
        %2233 = vmatpush1.bf16.msra.mxu0 0
        %2234 = vmatprep.subr.bf16.mxu0 0
        %2235 = vmatpush1.bf16.msra.mxu0 0
        %2236 = vmatprep.subr.bf16.mxu0 0
        %2237 = vmatpush1.bf16.msra.mxu0 0
        %2238 = vmatprep.mubr.bf16.mxu0 0
        %2239 = vmatmul.mubr.bf16.gmra.mrb[0].mxu0 %v2195
        %v2240 = vpop.f32.mrb[0].mxu0
        %v2241 = vadd.f32 0.0, %v2240
        %v2242 = vpop.f32.mrb[0].mxu0
        %v2243 = vpop.f32.mrb[0].mxu0
        %v2244 = vadd.f32 0.0, %v2243
        %v2245 = vpop.f32.mrb[0].mxu0
        %2246 = vmatprep.mubr.bf16.mxu0 0
        %2247 = vmatmul.mubr.bf16.gmra.mrb[0].mxu0 %v2198
        %v2248 = vpop.f32.mrb[0].mxu0
        %v2249 = vadd.f32 0.0, %v2248
        %v2250 = vpop.f32.mrb[0].mxu0
        %v2251 = vpop.f32.mrb[0].mxu0
        %v2252 = vadd.f32 0.0, %v2251
        %v2253 = vpop.f32.mrb[0].mxu0
        %2254 = vmatprep.mubr.bf16.mxu0 0
        %2255 = vmatmul.mubr.bf16.gmra.mrb[0].mxu0 %v2201
        %v2256 = vpop.f32.mrb[0].mxu0
        %v2257 = vadd.f32 0.0, %v2256
        %v2258 = vpop.f32.mrb[0].mxu0
        %v2259 = vpop.f32.mrb[0].mxu0
        %v2260 = vadd.f32 0.0, %v2259
        %v2261 = vpop.f32.mrb[0].mxu0
        %2262 = vmatprep.mubr.bf16.mxu0 0
        %2263 = vmatmul.mubr.bf16.gmra.mrb[0].mxu0 %v2204
        %v2264 = vpop.f32.mrb[0].mxu0
        %v2265 = vadd.f32 0.0, %v2264
        %v2266 = vpop.f32.mrb[0].mxu0
        %v2267 = vpop.f32.mrb[0].mxu0
        %v2268 = vadd.f32 0.0, %v2267
        %v2269 = vpop.f32.mrb[0].mxu0
        %2270 = vdwg.mxu0
        %v2275 = vunpack.c.l.b16 %v1666
        %v2276 = vunpack.c.l.b16 %v1667
        %v2277 = vunpack.c.l.b16 %v1668
        %v2278 = vunpack.c.l.b16 %v1669
        %v2279 = vpack.c.b16 %v2276, %v2275
        %v2280 = vpack.c.b16 %v2278, %v2277
        %v2284 = vsel %vm1196, %v1662, 0
        %v2287 = vsel %vm1196, %v1663, 0
        %v2290 = vsel %vm1196, %v1664, 0
        %v2293 = vsel %vm1196, %v1665, 0
        %2295 = vmatprep.subr.bf16.mxu0 0
        %2296 = vmatpush1.bf16.msra.mxu0 %v2279
        %2297 = vmatprep.subr.bf16.mxu0 0
        %2298 = vmatpush1.bf16.msra.mxu0 %v2280
        %2299 = vmatprep.subr.bf16.mxu0 0
        %2300 = vmatpush1.bf16.msra.mxu0 0
        %2301 = vmatprep.subr.bf16.mxu0 0
        %2302 = vmatpush1.bf16.msra.mxu0 0
        %2303 = vmatprep.subr.bf16.mxu0 0
        %2304 = vmatpush1.bf16.msra.mxu0 0
        %2305 = vmatprep.subr.bf16.mxu0 0
        %2306 = vmatpush1.bf16.msra.mxu0 0
        %2307 = vmatprep.subr.bf16.mxu0 0
        %2308 = vmatpush1.bf16.msra.mxu0 0
        %2309 = vmatprep.subr.bf16.mxu0 0
        %2310 = vmatpush1.bf16.msra.mxu0 0
        %2311 = vmatprep.subr.bf16.mxu0 0
        %2312 = vmatpush1.bf16.msra.mxu0 0
        %2313 = vmatprep.subr.bf16.mxu0 0
        %2314 = vmatpush1.bf16.msra.mxu0 0
        %2315 = vmatprep.subr.bf16.mxu0 0
        %2316 = vmatpush1.bf16.msra.mxu0 0
        %2317 = vmatprep.subr.bf16.mxu0 0
        %2318 = vmatpush1.bf16.msra.mxu0 0
        %2319 = vmatprep.subr.bf16.mxu0 0
        %2320 = vmatpush1.bf16.msra.mxu0 0
        %2321 = vmatprep.subr.bf16.mxu0 0
        %2322 = vmatpush1.bf16.msra.mxu0 0
        %2323 = vmatprep.subr.bf16.mxu0 0
        %2324 = vmatpush1.bf16.msra.mxu0 0
        %2325 = vmatprep.subr.bf16.mxu0 0
        %2326 = vmatpush1.bf16.msra.mxu0 0
        %2327 = vmatprep.mubr.bf16.mxu0 0
        %2328 = vmatmul.mubr.bf16.gmra.mrb[0].mxu0 %v2284
        %v2329 = vpop.f32.mrb[0].mxu0
        %v2330 = vadd.f32 %v2241, %v2329
        %v2331 = vpop.f32.mrb[0].mxu0
        %v2332 = vpop.f32.mrb[0].mxu0
        %v2333 = vadd.f32 %v2244, %v2332
        %v2334 = vpop.f32.mrb[0].mxu0
        %2335 = vmatprep.mubr.bf16.mxu0 0
        %2336 = vmatmul.mubr.bf16.gmra.mrb[0].mxu0 %v2287
        %v2337 = vpop.f32.mrb[0].mxu0
        %v2338 = vadd.f32 %v2249, %v2337
        %v2339 = vpop.f32.mrb[0].mxu0
        %v2340 = vpop.f32.mrb[0].mxu0
        %v2341 = vadd.f32 %v2252, %v2340
        %v2342 = vpop.f32.mrb[0].mxu0
        %2343 = vmatprep.mubr.bf16.mxu0 0
        %2344 = vmatmul.mubr.bf16.gmra.mrb[0].mxu0 %v2290
        %v2345 = vpop.f32.mrb[0].mxu0
        %v2346 = vadd.f32 %v2257, %v2345
        %v2347 = vpop.f32.mrb[0].mxu0
        %v2348 = vpop.f32.mrb[0].mxu0
        %v2349 = vadd.f32 %v2260, %v2348
        %v2350 = vpop.f32.mrb[0].mxu0
        %2351 = vmatprep.mubr.bf16.mxu0 0
        %2352 = vmatmul.mubr.bf16.gmra.mrb[0].mxu0 %v2293
        %v2353 = vpop.f32.mrb[0].mxu0
        %v2354 = vadd.f32 %v2265, %v2353
        %v2355 = vpop.f32.mrb[0].mxu0
        %v2356 = vpop.f32.mrb[0].mxu0
        %v2357 = vadd.f32 %v2268, %v2356
        %v2358 = vpop.f32.mrb[0].mxu0
        %2359 = vdwg.mxu0
        %2360 = vrot.lane.b32.xlu0 %v1184, 64
        %v2361 = vpop.permute.xlu0 %2360
        %2362 = vrot.lane.b32.xlu0 %v1188, 64
        %v2363 = vpop.permute.xlu0 %2362
        %v2365 = vsel %vm1196, %v2361, 0
        %v2368 = vsel %vm1196, %v2363, 0
        %2370 = vmatprep.subr.bf16.mxu0 0
        %2371 = vmatpush1.bf16.xpose.msra.mxu0 %v2368
        %2372 = vmatprep.subr.bf16.mxu0 0
        %2373 = vmatpush1.bf16.xpose.msra.mxu0 0
        %2374 = vmatprep.subr.bf16.mxu0 0
        %2375 = vmatpush1.bf16.xpose.msra.mxu0 0
        %2376 = vmatprep.subr.bf16.mxu0 0
        %2377 = vmatpush1.bf16.xpose.msra.mxu0 0
        %2378 = vmatprep.subr.bf16.mxu0 0
        %2379 = vmatpush1.bf16.xpose.msra.mxu0 0
        %2380 = vmatprep.subr.bf16.mxu0 0
        %2381 = vmatpush1.bf16.xpose.msra.mxu0 0
        %2382 = vmatprep.subr.bf16.mxu0 0
        %2383 = vmatpush1.bf16.xpose.msra.mxu0 0
        %2384 = vmatprep.subr.bf16.mxu0 0
        %2385 = vmatpush1.bf16.xpose.msra.mxu0 0
        %2386 = vmatprep.subr.bf16.mxu0 0
        %2387 = vmatpush1.bf16.xpose.msra.mxu0 0
        %2388 = vmatprep.subr.bf16.mxu0 0
        %2389 = vmatpush1.bf16.xpose.msra.mxu0 0
        %2390 = vmatprep.subr.bf16.mxu0 0
        %2391 = vmatpush1.bf16.xpose.msra.mxu0 0
        %2392 = vmatprep.subr.bf16.mxu0 0
        %2393 = vmatpush1.bf16.xpose.msra.mxu0 0
        %2394 = vmatprep.subr.bf16.mxu0 0
        %2395 = vmatpush1.bf16.xpose.msra.mxu0 0
        %2396 = vmatprep.subr.bf16.mxu0 0
        %2397 = vmatpush1.bf16.xpose.msra.mxu0 0
        %2398 = vmatprep.subr.bf16.mxu0 0
        %2399 = vmatpush1.bf16.xpose.msra.mxu0 0
        %2400 = vmatprep.subr.bf16.mxu0 0
        %2401 = vmatpush1.bf16.xpose.msra.mxu0 0
        %2402 = vmatprep.mubr.bf16.mxu0 0
        %2403 = vmatmul.mubr.bf16.gmra.mrb[0].mxu0 %v2365
        %v2404 = vpop.f32.mrb[0].mxu0
        %v2405 = vadd.f32 0.0, %v2404
        %v2406 = vpop.f32.mrb[0].mxu0
        %v2407 = vpop.f32.mrb[0].mxu0
        %v2408 = vadd.f32 0.0, %v2407
        %v2409 = vpop.f32.mrb[0].mxu0
        %2410 = vdwg.mxu0
        %2411 = vrot.lane.b32.xlu0 %v1185, 64
        %v2412 = vpop.permute.xlu0 %2411
        %2413 = vrot.lane.b32.xlu0 %v1189, 64
        %v2414 = vpop.permute.xlu0 %2413
        %v2416 = vsel %vm1196, %v2412, 0
        %v2419 = vsel %vm1196, %v2414, 0
        %2421 = vmatprep.subr.bf16.mxu0 0
        %2422 = vmatpush1.bf16.xpose.msra.mxu0 %v2419
        %2423 = vmatprep.subr.bf16.mxu0 0
        %2424 = vmatpush1.bf16.xpose.msra.mxu0 0
        %2425 = vmatprep.subr.bf16.mxu0 0
        %2426 = vmatpush1.bf16.xpose.msra.mxu0 0
        %2427 = vmatprep.subr.bf16.mxu0 0
        %2428 = vmatpush1.bf16.xpose.msra.mxu0 0
        %2429 = vmatprep.subr.bf16.mxu0 0
        %2430 = vmatpush1.bf16.xpose.msra.mxu0 0
        %2431 = vmatprep.subr.bf16.mxu0 0
        %2432 = vmatpush1.bf16.xpose.msra.mxu0 0
        %2433 = vmatprep.subr.bf16.mxu0 0
        %2434 = vmatpush1.bf16.xpose.msra.mxu0 0
        %2435 = vmatprep.subr.bf16.mxu0 0
        %2436 = vmatpush1.bf16.xpose.msra.mxu0 0
        %2437 = vmatprep.subr.bf16.mxu0 0
        %2438 = vmatpush1.bf16.xpose.msra.mxu0 0
        %2439 = vmatprep.subr.bf16.mxu0 0
        %2440 = vmatpush1.bf16.xpose.msra.mxu0 0
        %2441 = vmatprep.subr.bf16.mxu0 0
        %2442 = vmatpush1.bf16.xpose.msra.mxu0 0
        %2443 = vmatprep.subr.bf16.mxu0 0
        %2444 = vmatpush1.bf16.xpose.msra.mxu0 0
        %2445 = vmatprep.subr.bf16.mxu0 0
        %2446 = vmatpush1.bf16.xpose.msra.mxu0 0
        %2447 = vmatprep.subr.bf16.mxu0 0
        %2448 = vmatpush1.bf16.xpose.msra.mxu0 0
        %2449 = vmatprep.subr.bf16.mxu0 0
        %2450 = vmatpush1.bf16.xpose.msra.mxu0 0
        %2451 = vmatprep.subr.bf16.mxu0 0
        %2452 = vmatpush1.bf16.xpose.msra.mxu0 0
        %2453 = vmatprep.mubr.bf16.mxu0 0
        %2454 = vmatmul.mubr.bf16.gmra.mrb[0].mxu0 %v2416
        %v2455 = vpop.f32.mrb[0].mxu0
        %v2456 = vadd.f32 0.0, %v2455
        %v2457 = vpop.f32.mrb[0].mxu0
        %v2458 = vpop.f32.mrb[0].mxu0
        %v2459 = vadd.f32 0.0, %v2458
        %v2460 = vpop.f32.mrb[0].mxu0
        %2461 = vdwg.mxu0
        %2462 = vrot.lane.b32.xlu0 %v1186, 64
        %v2463 = vpop.permute.xlu0 %2462
        %2464 = vrot.lane.b32.xlu0 %v1190, 64
        %v2465 = vpop.permute.xlu0 %2464
        %v2467 = vsel %vm1196, %v2463, 0
        %v2470 = vsel %vm1196, %v2465, 0
        %2472 = vmatprep.subr.bf16.mxu0 0
        %2473 = vmatpush1.bf16.xpose.msra.mxu0 %v2470
        %2474 = vmatprep.subr.bf16.mxu0 0
        %2475 = vmatpush1.bf16.xpose.msra.mxu0 0
        %2476 = vmatprep.subr.bf16.mxu0 0
        %2477 = vmatpush1.bf16.xpose.msra.mxu0 0
        %2478 = vmatprep.subr.bf16.mxu0 0
        %2479 = vmatpush1.bf16.xpose.msra.mxu0 0
        %2480 = vmatprep.subr.bf16.mxu0 0
        %2481 = vmatpush1.bf16.xpose.msra.mxu0 0
        %2482 = vmatprep.subr.bf16.mxu0 0
        %2483 = vmatpush1.bf16.xpose.msra.mxu0 0
        %2484 = vmatprep.subr.bf16.mxu0 0
        %2485 = vmatpush1.bf16.xpose.msra.mxu0 0
        %2486 = vmatprep.subr.bf16.mxu0 0
        %2487 = vmatpush1.bf16.xpose.msra.mxu0 0
        %2488 = vmatprep.subr.bf16.mxu0 0
        %2489 = vmatpush1.bf16.xpose.msra.mxu0 0
        %2490 = vmatprep.subr.bf16.mxu0 0
        %2491 = vmatpush1.bf16.xpose.msra.mxu0 0
        %2492 = vmatprep.subr.bf16.mxu0 0
        %2493 = vmatpush1.bf16.xpose.msra.mxu0 0
        %2494 = vmatprep.subr.bf16.mxu0 0
        %2495 = vmatpush1.bf16.xpose.msra.mxu0 0
        %2496 = vmatprep.subr.bf16.mxu0 0
        %2497 = vmatpush1.bf16.xpose.msra.mxu0 0
        %2498 = vmatprep.subr.bf16.mxu0 0
        %2499 = vmatpush1.bf16.xpose.msra.mxu0 0
        %2500 = vmatprep.subr.bf16.mxu0 0
        %2501 = vmatpush1.bf16.xpose.msra.mxu0 0
        %2502 = vmatprep.subr.bf16.mxu0 0
        %2503 = vmatpush1.bf16.xpose.msra.mxu0 0
        %2504 = vmatprep.mubr.bf16.mxu0 0
        %2505 = vmatmul.mubr.bf16.gmra.mrb[0].mxu0 %v2467
        %v2506 = vpop.f32.mrb[0].mxu0
        %v2507 = vadd.f32 0.0, %v2506
        %v2508 = vpop.f32.mrb[0].mxu0
        %v2509 = vpop.f32.mrb[0].mxu0
        %v2510 = vadd.f32 0.0, %v2509
        %v2511 = vpop.f32.mrb[0].mxu0
        %2512 = vdwg.mxu0
        %2513 = vrot.lane.b32.xlu0 %v1187, 64
        %v2514 = vpop.permute.xlu0 %2513
        %2515 = vrot.lane.b32.xlu0 %v1191, 64
        %v2516 = vpop.permute.xlu0 %2515
        %v2518 = vsel %vm1196, %v2514, 0
        %v2521 = vsel %vm1196, %v2516, 0
        %2523 = vmatprep.subr.bf16.mxu0 0
        %2524 = vmatpush1.bf16.xpose.msra.mxu0 %v2521
        %2525 = vmatprep.subr.bf16.mxu0 0
        %2526 = vmatpush1.bf16.xpose.msra.mxu0 0
        %2527 = vmatprep.subr.bf16.mxu0 0
        %2528 = vmatpush1.bf16.xpose.msra.mxu0 0
        %2529 = vmatprep.subr.bf16.mxu0 0
        %2530 = vmatpush1.bf16.xpose.msra.mxu0 0
        %2531 = vmatprep.subr.bf16.mxu0 0
        %2532 = vmatpush1.bf16.xpose.msra.mxu0 0
        %2533 = vmatprep.subr.bf16.mxu0 0
        %2534 = vmatpush1.bf16.xpose.msra.mxu0 0
        %2535 = vmatprep.subr.bf16.mxu0 0
        %2536 = vmatpush1.bf16.xpose.msra.mxu0 0
        %2537 = vmatprep.subr.bf16.mxu0 0
        %2538 = vmatpush1.bf16.xpose.msra.mxu0 0
        %2539 = vmatprep.subr.bf16.mxu0 0
        %2540 = vmatpush1.bf16.xpose.msra.mxu0 0
        %2541 = vmatprep.subr.bf16.mxu0 0
        %2542 = vmatpush1.bf16.xpose.msra.mxu0 0
        %2543 = vmatprep.subr.bf16.mxu0 0
        %2544 = vmatpush1.bf16.xpose.msra.mxu0 0
        %2545 = vmatprep.subr.bf16.mxu0 0
        %2546 = vmatpush1.bf16.xpose.msra.mxu0 0
        %2547 = vmatprep.subr.bf16.mxu0 0
        %2548 = vmatpush1.bf16.xpose.msra.mxu0 0
        %2549 = vmatprep.subr.bf16.mxu0 0
        %2550 = vmatpush1.bf16.xpose.msra.mxu0 0
        %2551 = vmatprep.subr.bf16.mxu0 0
        %2552 = vmatpush1.bf16.xpose.msra.mxu0 0
        %2553 = vmatprep.subr.bf16.mxu0 0
        %2554 = vmatpush1.bf16.xpose.msra.mxu0 0
        %2555 = vmatprep.mubr.bf16.mxu0 0
        %2556 = vmatmul.mubr.bf16.gmra.mrb[0].mxu0 %v2518
        %v2557 = vpop.f32.mrb[0].mxu0
        %v2558 = vadd.f32 0.0, %v2557
        %v2559 = vpop.f32.mrb[0].mxu0
        %v2560 = vpop.f32.mrb[0].mxu0
        %v2561 = vadd.f32 0.0, %v2560
        %v2562 = vpop.f32.mrb[0].mxu0
        %2563 = vdwg.mxu0
        %v2564 = vmul.f32 %v2405, 0.17677669
        %v2565 = vmul.f32 %v2408, 0.17677669
        %v2566 = vmul.f32 %v2456, 0.17677669
        %v2567 = vmul.f32 %v2459, 0.17677669
        %v2568 = vmul.f32 %v2507, 0.17677669
        %v2569 = vmul.f32 %v2510, 0.17677669
        %v2570 = vmul.f32 %v2558, 0.17677669
        %v2571 = vmul.f32 %v2561, 0.17677669
        %v2572 = vsel %vm1393, %v2564, -inf
        %2573 = vmax.xlane.f32.xlu0 %v2572
        %v2574 = vpop.xlane.xlu0 %2573
        %v2575 = vsel %vm1393, %v2565, -inf
        %2576 = vmax.xlane.f32.xlu0 %v2575
        %v2577 = vpop.xlane.xlu0 %2576
        %v2578 = vsel %vm1393, %v2566, -inf
        %2579 = vmax.xlane.f32.xlu0 %v2578
        %v2580 = vpop.xlane.xlu0 %2579
        %v2581 = vsel %vm1393, %v2567, -inf
        %2582 = vmax.xlane.f32.xlu0 %v2581
        %v2583 = vpop.xlane.xlu0 %2582
        %v2584 = vsel %vm1393, %v2568, -inf
        %2585 = vmax.xlane.f32.xlu0 %v2584
        %v2586 = vpop.xlane.xlu0 %2585
        %v2587 = vsel %vm1393, %v2569, -inf
        %2588 = vmax.xlane.f32.xlu0 %v2587
        %v2589 = vpop.xlane.xlu0 %2588
        %v2590 = vsel %vm1393, %v2570, -inf
        %2591 = vmax.xlane.f32.xlu0 %v2590
        %v2592 = vpop.xlane.xlu0 %2591
        %v2593 = vsel %vm1393, %v2571, -inf
        %2594 = vmax.xlane.f32.xlu0 %v2593
        %v2595 = vpop.xlane.xlu0 %2594
        %v2596 = vsub.f32 %v2564, %v2574
        %v2597 = vsub.f32 %v2565, %v2577
        %v2598 = vsub.f32 %v2566, %v2580
        %v2599 = vsub.f32 %v2567, %v2583
        %v2600 = vsub.f32 %v2568, %v2586
        %v2601 = vsub.f32 %v2569, %v2589
        %v2602 = vsub.f32 %v2570, %v2592
        %v2603 = vsub.f32 %v2571, %v2595
        %v2604 = vmul.f32 %v2596, 1.442695
        %v2605 = vpow.pop %v2604
        %v2606 = vmul.f32 %v2597, 1.442695
        %v2607 = vpow.pop %v2606
        %v2608 = vmul.f32 %v2598, 1.442695
        %v2609 = vpow.pop %v2608
        %v2610 = vmul.f32 %v2599, 1.442695
        %v2611 = vpow.pop %v2610
        %v2612 = vmul.f32 %v2600, 1.442695
        %v2613 = vpow.pop %v2612
        %v2614 = vmul.f32 %v2601, 1.442695
        %v2615 = vpow.pop %v2614
        %v2616 = vmul.f32 %v2602, 1.442695
        %v2617 = vpow.pop %v2616
        %v2618 = vmul.f32 %v2603, 1.442695
        %v2619 = vpow.pop %v2618
        %v2620 = vsel %vm1393, %v2605, 0.0
        %2621 = vadd.xlane.f32.xlu0 %v2620
        %v2622 = vpop.xlane.xlu0 %2621
        %v2623 = vsel %vm1393, %v2607, 0.0
        %2624 = vadd.xlane.f32.xlu0 %v2623
        %v2625 = vpop.xlane.xlu0 %2624
        %v2626 = vsel %vm1393, %v2609, 0.0
        %2627 = vadd.xlane.f32.xlu0 %v2626
        %v2628 = vpop.xlane.xlu0 %2627
        %v2629 = vsel %vm1393, %v2611, 0.0
        %2630 = vadd.xlane.f32.xlu0 %v2629
        %v2631 = vpop.xlane.xlu0 %2630
        %v2632 = vsel %vm1393, %v2613, 0.0
        %2633 = vadd.xlane.f32.xlu0 %v2632
        %v2634 = vpop.xlane.xlu0 %2633
        %v2635 = vsel %vm1393, %v2615, 0.0
        %2636 = vadd.xlane.f32.xlu0 %v2635
        %v2637 = vpop.xlane.xlu0 %2636
        %v2638 = vsel %vm1393, %v2617, 0.0
        %2639 = vadd.xlane.f32.xlu0 %v2638
        %v2640 = vpop.xlane.xlu0 %2639
        %v2641 = vsel %vm1393, %v2619, 0.0
        %2642 = vadd.xlane.f32.xlu0 %v2641
        %v2643 = vpop.xlane.xlu0 %2642
        %v2644 = vrcp.pop %v2622
        %v2645 = vrcp.pop %v2625
        %v2646 = vrcp.pop %v2628
        %v2647 = vrcp.pop %v2631
        %v2648 = vrcp.pop %v2634
        %v2649 = vrcp.pop %v2637
        %v2650 = vrcp.pop %v2640
        %v2651 = vrcp.pop %v2643
        %v2652 = vmul.f32 %v2605, %v2644
        %v2653 = vmul.f32 %v2607, %v2645
        %v2654 = vmul.f32 %v2609, %v2646
        %v2655 = vmul.f32 %v2611, %v2647
        %v2656 = vmul.f32 %v2613, %v2648
        %v2657 = vmul.f32 %v2615, %v2649
        %v2658 = vmul.f32 %v2617, %v2650
        %v2659 = vmul.f32 %v2619, %v2651
        %v2660 = vpack.c.bf16 %v2653, %v2652
        %v2661 = vpack.c.bf16 %v2655, %v2654
        %v2662 = vpack.c.bf16 %v2657, %v2656
        %v2663 = vpack.c.bf16 %v2659, %v2658
        %2664 = vrot.lane.b32.xlu0 %v1192, 64
        %v2665 = vpop.permute.xlu0 %2664
        %v2668 = vsel %vm1393, %v2660, 0
        %2670 = vmatprep.subr.bf16.mxu0 0
        %2671 = vmatpush1.bf16.msra.mxu0 %v2665
        %2672 = vmatprep.subr.bf16.mxu0 0
        %2673 = vmatpush1.bf16.msra.mxu0 0
        %2674 = vmatprep.subr.bf16.mxu0 0
        %2675 = vmatpush1.bf16.msra.mxu0 0
        %2676 = vmatprep.subr.bf16.mxu0 0
        %2677 = vmatpush1.bf16.msra.mxu0 0
        %2678 = vmatprep.subr.bf16.mxu0 0
        %2679 = vmatpush1.bf16.msra.mxu0 0
        %2680 = vmatprep.subr.bf16.mxu0 0
        %2681 = vmatpush1.bf16.msra.mxu0 0
        %2682 = vmatprep.subr.bf16.mxu0 0
        %2683 = vmatpush1.bf16.msra.mxu0 0
        %2684 = vmatprep.subr.bf16.mxu0 0
        %2685 = vmatpush1.bf16.msra.mxu0 0
        %2686 = vmatprep.subr.bf16.mxu0 0
        %2687 = vmatpush1.bf16.msra.mxu0 0
        %2688 = vmatprep.subr.bf16.mxu0 0
        %2689 = vmatpush1.bf16.msra.mxu0 0
        %2690 = vmatprep.subr.bf16.mxu0 0
        %2691 = vmatpush1.bf16.msra.mxu0 0
        %2692 = vmatprep.subr.bf16.mxu0 0
        %2693 = vmatpush1.bf16.msra.mxu0 0
        %2694 = vmatprep.subr.bf16.mxu0 0
        %2695 = vmatpush1.bf16.msra.mxu0 0
        %2696 = vmatprep.subr.bf16.mxu0 0
        %2697 = vmatpush1.bf16.msra.mxu0 0
        %2698 = vmatprep.subr.bf16.mxu0 0
        %2699 = vmatpush1.bf16.msra.mxu0 0
        %2700 = vmatprep.subr.bf16.mxu0 0
        %2701 = vmatpush1.bf16.msra.mxu0 0
        %2702 = vmatprep.mubr.bf16.mxu0 0
        %2703 = vmatmul.mubr.bf16.gmra.mrb[0].mxu0 %v2668
        %v2704 = vpop.f32.mrb[0].mxu0
        %v2705 = vadd.f32 0.0, %v2704
        %v2706 = vpop.f32.mrb[0].mxu0
        %v2707 = vpop.f32.mrb[0].mxu0
        %v2708 = vadd.f32 0.0, %v2707
        %v2709 = vpop.f32.mrb[0].mxu0
        %2710 = vdwg.mxu0
        %2711 = vrot.lane.b32.xlu0 %v1193, 64
        %v2712 = vpop.permute.xlu0 %2711
        %v2715 = vsel %vm1393, %v2661, 0
        %2717 = vmatprep.subr.bf16.mxu0 0
        %2718 = vmatpush1.bf16.msra.mxu0 %v2712
        %2719 = vmatprep.subr.bf16.mxu0 0
        %2720 = vmatpush1.bf16.msra.mxu0 0
        %2721 = vmatprep.subr.bf16.mxu0 0
        %2722 = vmatpush1.bf16.msra.mxu0 0
        %2723 = vmatprep.subr.bf16.mxu0 0
        %2724 = vmatpush1.bf16.msra.mxu0 0
        %2725 = vmatprep.subr.bf16.mxu0 0
        %2726 = vmatpush1.bf16.msra.mxu0 0
        %2727 = vmatprep.subr.bf16.mxu0 0
        %2728 = vmatpush1.bf16.msra.mxu0 0
        %2729 = vmatprep.subr.bf16.mxu0 0
        %2730 = vmatpush1.bf16.msra.mxu0 0
        %2731 = vmatprep.subr.bf16.mxu0 0
        %2732 = vmatpush1.bf16.msra.mxu0 0
        %2733 = vmatprep.subr.bf16.mxu0 0
        %2734 = vmatpush1.bf16.msra.mxu0 0
        %2735 = vmatprep.subr.bf16.mxu0 0
        %2736 = vmatpush1.bf16.msra.mxu0 0
        %2737 = vmatprep.subr.bf16.mxu0 0
        %2738 = vmatpush1.bf16.msra.mxu0 0
        %2739 = vmatprep.subr.bf16.mxu0 0
        %2740 = vmatpush1.bf16.msra.mxu0 0
        %2741 = vmatprep.subr.bf16.mxu0 0
        %2742 = vmatpush1.bf16.msra.mxu0 0
        %2743 = vmatprep.subr.bf16.mxu0 0
        %2744 = vmatpush1.bf16.msra.mxu0 0
        %2745 = vmatprep.subr.bf16.mxu0 0
        %2746 = vmatpush1.bf16.msra.mxu0 0
        %2747 = vmatprep.subr.bf16.mxu0 0
        %2748 = vmatpush1.bf16.msra.mxu0 0
        %2749 = vmatprep.mubr.bf16.mxu0 0
        %2750 = vmatmul.mubr.bf16.gmra.mrb[0].mxu0 %v2715
        %v2751 = vpop.f32.mrb[0].mxu0
        %v2752 = vadd.f32 0.0, %v2751
        %v2753 = vpop.f32.mrb[0].mxu0
        %v2754 = vpop.f32.mrb[0].mxu0
        %v2755 = vadd.f32 0.0, %v2754
        %v2756 = vpop.f32.mrb[0].mxu0
        %2757 = vdwg.mxu0
        %2758 = vrot.lane.b32.xlu0 %v1194, 64
        %v2759 = vpop.permute.xlu0 %2758
        %v2762 = vsel %vm1393, %v2662, 0
        %2764 = vmatprep.subr.bf16.mxu0 0
        %2765 = vmatpush1.bf16.msra.mxu0 %v2759
        %2766 = vmatprep.subr.bf16.mxu0 0
        %2767 = vmatpush1.bf16.msra.mxu0 0
        %2768 = vmatprep.subr.bf16.mxu0 0
        %2769 = vmatpush1.bf16.msra.mxu0 0
        %2770 = vmatprep.subr.bf16.mxu0 0
        %2771 = vmatpush1.bf16.msra.mxu0 0
        %2772 = vmatprep.subr.bf16.mxu0 0
        %2773 = vmatpush1.bf16.msra.mxu0 0
        %2774 = vmatprep.subr.bf16.mxu0 0
        %2775 = vmatpush1.bf16.msra.mxu0 0
        %2776 = vmatprep.subr.bf16.mxu0 0
        %2777 = vmatpush1.bf16.msra.mxu0 0
        %2778 = vmatprep.subr.bf16.mxu0 0
        %2779 = vmatpush1.bf16.msra.mxu0 0
        %2780 = vmatprep.subr.bf16.mxu0 0
        %2781 = vmatpush1.bf16.msra.mxu0 0
        %2782 = vmatprep.subr.bf16.mxu0 0
        %2783 = vmatpush1.bf16.msra.mxu0 0
        %2784 = vmatprep.subr.bf16.mxu0 0
        %2785 = vmatpush1.bf16.msra.mxu0 0
        %2786 = vmatprep.subr.bf16.mxu0 0
        %2787 = vmatpush1.bf16.msra.mxu0 0
        %2788 = vmatprep.subr.bf16.mxu0 0
        %2789 = vmatpush1.bf16.msra.mxu0 0
        %2790 = vmatprep.subr.bf16.mxu0 0
        %2791 = vmatpush1.bf16.msra.mxu0 0
        %2792 = vmatprep.subr.bf16.mxu0 0
        %2793 = vmatpush1.bf16.msra.mxu0 0
        %2794 = vmatprep.subr.bf16.mxu0 0
        %2795 = vmatpush1.bf16.msra.mxu0 0
        %2796 = vmatprep.mubr.bf16.mxu0 0
        %2797 = vmatmul.mubr.bf16.gmra.mrb[0].mxu0 %v2762
        %v2798 = vpop.f32.mrb[0].mxu0
        %v2799 = vadd.f32 0.0, %v2798
        %v2800 = vpop.f32.mrb[0].mxu0
        %v2801 = vpop.f32.mrb[0].mxu0
        %v2802 = vadd.f32 0.0, %v2801
        %v2803 = vpop.f32.mrb[0].mxu0
        %2804 = vdwg.mxu0
        %2805 = vrot.lane.b32.xlu0 %v1195, 64
        %v2806 = vpop.permute.xlu0 %2805
        %v2809 = vsel %vm1393, %v2663, 0
        %2811 = vmatprep.subr.bf16.mxu0 0
        %2812 = vmatpush1.bf16.msra.mxu0 %v2806
        %2813 = vmatprep.subr.bf16.mxu0 0
        %2814 = vmatpush1.bf16.msra.mxu0 0
        %2815 = vmatprep.subr.bf16.mxu0 0
        %2816 = vmatpush1.bf16.msra.mxu0 0
        %2817 = vmatprep.subr.bf16.mxu0 0
        %2818 = vmatpush1.bf16.msra.mxu0 0
        %2819 = vmatprep.subr.bf16.mxu0 0
        %2820 = vmatpush1.bf16.msra.mxu0 0
        %2821 = vmatprep.subr.bf16.mxu0 0
        %2822 = vmatpush1.bf16.msra.mxu0 0
        %2823 = vmatprep.subr.bf16.mxu0 0
        %2824 = vmatpush1.bf16.msra.mxu0 0
        %2825 = vmatprep.subr.bf16.mxu0 0
        %2826 = vmatpush1.bf16.msra.mxu0 0
        %2827 = vmatprep.subr.bf16.mxu0 0
        %2828 = vmatpush1.bf16.msra.mxu0 0
        %2829 = vmatprep.subr.bf16.mxu0 0
        %2830 = vmatpush1.bf16.msra.mxu0 0
        %2831 = vmatprep.subr.bf16.mxu0 0
        %2832 = vmatpush1.bf16.msra.mxu0 0
        %2833 = vmatprep.subr.bf16.mxu0 0
        %2834 = vmatpush1.bf16.msra.mxu0 0
        %2835 = vmatprep.subr.bf16.mxu0 0
        %2836 = vmatpush1.bf16.msra.mxu0 0
        %2837 = vmatprep.subr.bf16.mxu0 0
        %2838 = vmatpush1.bf16.msra.mxu0 0
        %2839 = vmatprep.subr.bf16.mxu0 0
        %2840 = vmatpush1.bf16.msra.mxu0 0
        %2841 = vmatprep.subr.bf16.mxu0 0
        %2842 = vmatpush1.bf16.msra.mxu0 0
        %2843 = vmatprep.mubr.bf16.mxu0 0
        %2844 = vmatmul.mubr.bf16.gmra.mrb[0].mxu0 %v2809
        %v2845 = vpop.f32.mrb[0].mxu0
        %v2846 = vadd.f32 0.0, %v2845
        %v2847 = vpop.f32.mrb[0].mxu0
        %v2848 = vpop.f32.mrb[0].mxu0
        %v2849 = vadd.f32 0.0, %v2848
        %v2850 = vpop.f32.mrb[0].mxu0
        %2851 = vdwg.mxu0
        %v2852 = vpack.c.bf16 %v2708, %v2705
        %v2853 = vpack.c.bf16 %v2755, %v2752
        %v2854 = vpack.c.bf16 %v2802, %v2799
        %v2855 = vpack.c.bf16 %v2849, %v2846
        %v2856 = vld [vmem:[#allocation8 + $0x20] sm:$0xf]
        %v2857 = vld [vmem:[#allocation8 + $0x24] sm:$0xf]
        %v2858 = vld [vmem:[#allocation8 + $0x28] sm:$0xf]
        %v2859 = vld [vmem:[#allocation8 + $0x2c] sm:$0xf]
        %v2864 = vunpack.c.l.b16 %v2856
        %v2865 = vunpack.c.l.b16 %v2857
        %v2866 = vunpack.c.l.b16 %v2858
        %v2867 = vunpack.c.l.b16 %v2859
        %v2868 = vpack.c.b16 %v2865, %v2864
        %v2869 = vpack.c.b16 %v2867, %v2866
        %v2873 = vsel %vm1196, %v2852, 0
        %v2876 = vsel %vm1196, %v2853, 0
        %v2879 = vsel %vm1196, %v2854, 0
        %v2882 = vsel %vm1196, %v2855, 0
        %2884 = vmatprep.subr.bf16.mxu0 0
        %2885 = vmatpush1.bf16.msra.mxu0 %v2868
        %2886 = vmatprep.subr.bf16.mxu0 0
        %2887 = vmatpush1.bf16.msra.mxu0 %v2869
        %2888 = vmatprep.subr.bf16.mxu0 0
        %2889 = vmatpush1.bf16.msra.mxu0 0
        %2890 = vmatprep.subr.bf16.mxu0 0
        %2891 = vmatpush1.bf16.msra.mxu0 0
        %2892 = vmatprep.subr.bf16.mxu0 0
        %2893 = vmatpush1.bf16.msra.mxu0 0
        %2894 = vmatprep.subr.bf16.mxu0 0
        %2895 = vmatpush1.bf16.msra.mxu0 0
        %2896 = vmatprep.subr.bf16.mxu0 0
        %2897 = vmatpush1.bf16.msra.mxu0 0
        %2898 = vmatprep.subr.bf16.mxu0 0
        %2899 = vmatpush1.bf16.msra.mxu0 0
        %2900 = vmatprep.subr.bf16.mxu0 0
        %2901 = vmatpush1.bf16.msra.mxu0 0
        %2902 = vmatprep.subr.bf16.mxu0 0
        %2903 = vmatpush1.bf16.msra.mxu0 0
        %2904 = vmatprep.subr.bf16.mxu0 0
        %2905 = vmatpush1.bf16.msra.mxu0 0
        %2906 = vmatprep.subr.bf16.mxu0 0
        %2907 = vmatpush1.bf16.msra.mxu0 0
        %2908 = vmatprep.subr.bf16.mxu0 0
        %2909 = vmatpush1.bf16.msra.mxu0 0
        %2910 = vmatprep.subr.bf16.mxu0 0
        %2911 = vmatpush1.bf16.msra.mxu0 0
        %2912 = vmatprep.subr.bf16.mxu0 0
        %2913 = vmatpush1.bf16.msra.mxu0 0
        %2914 = vmatprep.subr.bf16.mxu0 0
        %2915 = vmatpush1.bf16.msra.mxu0 0
        %2916 = vmatprep.mubr.bf16.mxu0 0
        %2917 = vmatmul.mubr.bf16.gmra.mrb[0].mxu0 %v2873
        %v2918 = vpop.f32.mrb[0].mxu0
        %v2919 = vadd.f32 0.0, %v2918
        %v2920 = vpop.f32.mrb[0].mxu0
        %v2921 = vpop.f32.mrb[0].mxu0
        %v2922 = vadd.f32 0.0, %v2921
        %v2923 = vpop.f32.mrb[0].mxu0
        %2924 = vmatprep.mubr.bf16.mxu0 0
        %2925 = vmatmul.mubr.bf16.gmra.mrb[0].mxu0 %v2876
        %v2926 = vpop.f32.mrb[0].mxu0
        %v2927 = vadd.f32 0.0, %v2926
        %v2928 = vpop.f32.mrb[0].mxu0
        %v2929 = vpop.f32.mrb[0].mxu0
        %v2930 = vadd.f32 0.0, %v2929
        %v2931 = vpop.f32.mrb[0].mxu0
        %2932 = vmatprep.mubr.bf16.mxu0 0
        %2933 = vmatmul.mubr.bf16.gmra.mrb[0].mxu0 %v2879
        %v2934 = vpop.f32.mrb[0].mxu0
        %v2935 = vadd.f32 0.0, %v2934
        %v2936 = vpop.f32.mrb[0].mxu0
        %v2937 = vpop.f32.mrb[0].mxu0
        %v2938 = vadd.f32 0.0, %v2937
        %v2939 = vpop.f32.mrb[0].mxu0
        %2940 = vmatprep.mubr.bf16.mxu0 0
        %2941 = vmatmul.mubr.bf16.gmra.mrb[0].mxu0 %v2882
        %v2942 = vpop.f32.mrb[0].mxu0
        %v2943 = vadd.f32 0.0, %v2942
        %v2944 = vpop.f32.mrb[0].mxu0
        %v2945 = vpop.f32.mrb[0].mxu0
        %v2946 = vadd.f32 0.0, %v2945
        %v2947 = vpop.f32.mrb[0].mxu0
        %2948 = vdwg.mxu0
        %v2949 = vadd.f32 %v2330, %v2919
        %v2950 = vadd.f32 %v2333, %v2922
        %v2951 = vadd.f32 %v2338, %v2927
        %v2952 = vadd.f32 %v2341, %v2930
        %v2953 = vadd.f32 %v2346, %v2935
        %v2954 = vadd.f32 %v2349, %v2938
        %v2955 = vadd.f32 %v2354, %v2943
        %v2956 = vadd.f32 %v2357, %v2946
        %2957 = vrot.lane.b32.xlu0 %v1184, 32
        %v2958 = vpop.permute.xlu0 %2957
        %2959 = vrot.lane.b32.xlu0 %v1188, 32
        %v2960 = vpop.permute.xlu0 %2959
        %v2962 = vsel %vm1196, %v2958, 0
        %v2965 = vsel %vm1196, %v2960, 0
        %2967 = vmatprep.subr.bf16.mxu0 0
        %2968 = vmatpush1.bf16.xpose.msra.mxu0 %v2965
        %2969 = vmatprep.subr.bf16.mxu0 0
        %2970 = vmatpush1.bf16.xpose.msra.mxu0 0
        %2971 = vmatprep.subr.bf16.mxu0 0
        %2972 = vmatpush1.bf16.xpose.msra.mxu0 0
        %2973 = vmatprep.subr.bf16.mxu0 0
        %2974 = vmatpush1.bf16.xpose.msra.mxu0 0
        %2975 = vmatprep.subr.bf16.mxu0 0
        %2976 = vmatpush1.bf16.xpose.msra.mxu0 0
        %2977 = vmatprep.subr.bf16.mxu0 0
        %2978 = vmatpush1.bf16.xpose.msra.mxu0 0
        %2979 = vmatprep.subr.bf16.mxu0 0
        %2980 = vmatpush1.bf16.xpose.msra.mxu0 0
        %2981 = vmatprep.subr.bf16.mxu0 0
        %2982 = vmatpush1.bf16.xpose.msra.mxu0 0
        %2983 = vmatprep.subr.bf16.mxu0 0
        %2984 = vmatpush1.bf16.xpose.msra.mxu0 0
        %2985 = vmatprep.subr.bf16.mxu0 0
        %2986 = vmatpush1.bf16.xpose.msra.mxu0 0
        %2987 = vmatprep.subr.bf16.mxu0 0
        %2988 = vmatpush1.bf16.xpose.msra.mxu0 0
        %2989 = vmatprep.subr.bf16.mxu0 0
        %2990 = vmatpush1.bf16.xpose.msra.mxu0 0
        %2991 = vmatprep.subr.bf16.mxu0 0
        %2992 = vmatpush1.bf16.xpose.msra.mxu0 0
        %2993 = vmatprep.subr.bf16.mxu0 0
        %2994 = vmatpush1.bf16.xpose.msra.mxu0 0
        %2995 = vmatprep.subr.bf16.mxu0 0
        %2996 = vmatpush1.bf16.xpose.msra.mxu0 0
        %2997 = vmatprep.subr.bf16.mxu0 0
        %2998 = vmatpush1.bf16.xpose.msra.mxu0 0
        %2999 = vmatprep.mubr.bf16.mxu0 0
        %3000 = vmatmul.mubr.bf16.gmra.mrb[0].mxu0 %v2962
        %v3001 = vpop.f32.mrb[0].mxu0
        %v3002 = vadd.f32 0.0, %v3001
        %v3003 = vpop.f32.mrb[0].mxu0
        %v3004 = vpop.f32.mrb[0].mxu0
        %v3005 = vadd.f32 0.0, %v3004
        %v3006 = vpop.f32.mrb[0].mxu0
        %3007 = vdwg.mxu0
        %3008 = vrot.lane.b32.xlu0 %v1185, 32
        %v3009 = vpop.permute.xlu0 %3008
        %3010 = vrot.lane.b32.xlu0 %v1189, 32
        %v3011 = vpop.permute.xlu0 %3010
        %v3013 = vsel %vm1196, %v3009, 0
        %v3016 = vsel %vm1196, %v3011, 0
        %3018 = vmatprep.subr.bf16.mxu0 0
        %3019 = vmatpush1.bf16.xpose.msra.mxu0 %v3016
        %3020 = vmatprep.subr.bf16.mxu0 0
        %3021 = vmatpush1.bf16.xpose.msra.mxu0 0
        %3022 = vmatprep.subr.bf16.mxu0 0
        %3023 = vmatpush1.bf16.xpose.msra.mxu0 0
        %3024 = vmatprep.subr.bf16.mxu0 0
        %3025 = vmatpush1.bf16.xpose.msra.mxu0 0
        %3026 = vmatprep.subr.bf16.mxu0 0
        %3027 = vmatpush1.bf16.xpose.msra.mxu0 0
        %3028 = vmatprep.subr.bf16.mxu0 0
        %3029 = vmatpush1.bf16.xpose.msra.mxu0 0
        %3030 = vmatprep.subr.bf16.mxu0 0
        %3031 = vmatpush1.bf16.xpose.msra.mxu0 0
        %3032 = vmatprep.subr.bf16.mxu0 0
        %3033 = vmatpush1.bf16.xpose.msra.mxu0 0
        %3034 = vmatprep.subr.bf16.mxu0 0
        %3035 = vmatpush1.bf16.xpose.msra.mxu0 0
        %3036 = vmatprep.subr.bf16.mxu0 0
        %3037 = vmatpush1.bf16.xpose.msra.mxu0 0
        %3038 = vmatprep.subr.bf16.mxu0 0
        %3039 = vmatpush1.bf16.xpose.msra.mxu0 0
        %3040 = vmatprep.subr.bf16.mxu0 0
        %3041 = vmatpush1.bf16.xpose.msra.mxu0 0
        %3042 = vmatprep.subr.bf16.mxu0 0
        %3043 = vmatpush1.bf16.xpose.msra.mxu0 0
        %3044 = vmatprep.subr.bf16.mxu0 0
        %3045 = vmatpush1.bf16.xpose.msra.mxu0 0
        %3046 = vmatprep.subr.bf16.mxu0 0
        %3047 = vmatpush1.bf16.xpose.msra.mxu0 0
        %3048 = vmatprep.subr.bf16.mxu0 0
        %3049 = vmatpush1.bf16.xpose.msra.mxu0 0
        %3050 = vmatprep.mubr.bf16.mxu0 0
        %3051 = vmatmul.mubr.bf16.gmra.mrb[0].mxu0 %v3013
        %v3052 = vpop.f32.mrb[0].mxu0
        %v3053 = vadd.f32 0.0, %v3052
        %v3054 = vpop.f32.mrb[0].mxu0
        %v3055 = vpop.f32.mrb[0].mxu0
        %v3056 = vadd.f32 0.0, %v3055
        %v3057 = vpop.f32.mrb[0].mxu0
        %3058 = vdwg.mxu0
        %3059 = vrot.lane.b32.xlu0 %v1186, 32
        %v3060 = vpop.permute.xlu0 %3059
        %3061 = vrot.lane.b32.xlu0 %v1190, 32
        %v3062 = vpop.permute.xlu0 %3061
        %v3064 = vsel %vm1196, %v3060, 0
        %v3067 = vsel %vm1196, %v3062, 0
        %3069 = vmatprep.subr.bf16.mxu0 0
        %3070 = vmatpush1.bf16.xpose.msra.mxu0 %v3067
        %3071 = vmatprep.subr.bf16.mxu0 0
        %3072 = vmatpush1.bf16.xpose.msra.mxu0 0
        %3073 = vmatprep.subr.bf16.mxu0 0
        %3074 = vmatpush1.bf16.xpose.msra.mxu0 0
        %3075 = vmatprep.subr.bf16.mxu0 0
        %3076 = vmatpush1.bf16.xpose.msra.mxu0 0
        %3077 = vmatprep.subr.bf16.mxu0 0
        %3078 = vmatpush1.bf16.xpose.msra.mxu0 0
        %3079 = vmatprep.subr.bf16.mxu0 0
        %3080 = vmatpush1.bf16.xpose.msra.mxu0 0
        %3081 = vmatprep.subr.bf16.mxu0 0
        %3082 = vmatpush1.bf16.xpose.msra.mxu0 0
        %3083 = vmatprep.subr.bf16.mxu0 0
        %3084 = vmatpush1.bf16.xpose.msra.mxu0 0
        %3085 = vmatprep.subr.bf16.mxu0 0
        %3086 = vmatpush1.bf16.xpose.msra.mxu0 0
        %3087 = vmatprep.subr.bf16.mxu0 0
        %3088 = vmatpush1.bf16.xpose.msra.mxu0 0
        %3089 = vmatprep.subr.bf16.mxu0 0
        %3090 = vmatpush1.bf16.xpose.msra.mxu0 0
        %3091 = vmatprep.subr.bf16.mxu0 0
        %3092 = vmatpush1.bf16.xpose.msra.mxu0 0
        %3093 = vmatprep.subr.bf16.mxu0 0
        %3094 = vmatpush1.bf16.xpose.msra.mxu0 0
        %3095 = vmatprep.subr.bf16.mxu0 0
        %3096 = vmatpush1.bf16.xpose.msra.mxu0 0
        %3097 = vmatprep.subr.bf16.mxu0 0
        %3098 = vmatpush1.bf16.xpose.msra.mxu0 0
        %3099 = vmatprep.subr.bf16.mxu0 0
        %3100 = vmatpush1.bf16.xpose.msra.mxu0 0
        %3101 = vmatprep.mubr.bf16.mxu0 0
        %3102 = vmatmul.mubr.bf16.gmra.mrb[0].mxu0 %v3064
        %v3103 = vpop.f32.mrb[0].mxu0
        %v3104 = vadd.f32 0.0, %v3103
        %v3105 = vpop.f32.mrb[0].mxu0
        %v3106 = vpop.f32.mrb[0].mxu0
        %v3107 = vadd.f32 0.0, %v3106
        %v3108 = vpop.f32.mrb[0].mxu0
        %3109 = vdwg.mxu0
        %3110 = vrot.lane.b32.xlu0 %v1187, 32
        %v3111 = vpop.permute.xlu0 %3110
        %3112 = vrot.lane.b32.xlu0 %v1191, 32
        %v3113 = vpop.permute.xlu0 %3112
        %v3115 = vsel %vm1196, %v3111, 0
        %v3118 = vsel %vm1196, %v3113, 0
        %3120 = vmatprep.subr.bf16.mxu0 0
        %3121 = vmatpush1.bf16.xpose.msra.mxu0 %v3118
        %3122 = vmatprep.subr.bf16.mxu0 0
        %3123 = vmatpush1.bf16.xpose.msra.mxu0 0
        %3124 = vmatprep.subr.bf16.mxu0 0
        %3125 = vmatpush1.bf16.xpose.msra.mxu0 0
        %3126 = vmatprep.subr.bf16.mxu0 0
        %3127 = vmatpush1.bf16.xpose.msra.mxu0 0
        %3128 = vmatprep.subr.bf16.mxu0 0
        %3129 = vmatpush1.bf16.xpose.msra.mxu0 0
        %3130 = vmatprep.subr.bf16.mxu0 0
        %3131 = vmatpush1.bf16.xpose.msra.mxu0 0
        %3132 = vmatprep.subr.bf16.mxu0 0
        %3133 = vmatpush1.bf16.xpose.msra.mxu0 0
        %3134 = vmatprep.subr.bf16.mxu0 0
        %3135 = vmatpush1.bf16.xpose.msra.mxu0 0
        %3136 = vmatprep.subr.bf16.mxu0 0
        %3137 = vmatpush1.bf16.xpose.msra.mxu0 0
        %3138 = vmatprep.subr.bf16.mxu0 0
        %3139 = vmatpush1.bf16.xpose.msra.mxu0 0
        %3140 = vmatprep.subr.bf16.mxu0 0
        %3141 = vmatpush1.bf16.xpose.msra.mxu0 0
        %3142 = vmatprep.subr.bf16.mxu0 0
        %3143 = vmatpush1.bf16.xpose.msra.mxu0 0
        %3144 = vmatprep.subr.bf16.mxu0 0
        %3145 = vmatpush1.bf16.xpose.msra.mxu0 0
        %3146 = vmatprep.subr.bf16.mxu0 0
        %3147 = vmatpush1.bf16.xpose.msra.mxu0 0
        %3148 = vmatprep.subr.bf16.mxu0 0
        %3149 = vmatpush1.bf16.xpose.msra.mxu0 0
        %3150 = vmatprep.subr.bf16.mxu0 0
        %3151 = vmatpush1.bf16.xpose.msra.mxu0 0
        %3152 = vmatprep.mubr.bf16.mxu0 0
        %3153 = vmatmul.mubr.bf16.gmra.mrb[0].mxu0 %v3115
        %v3154 = vpop.f32.mrb[0].mxu0
        %v3155 = vadd.f32 0.0, %v3154
        %v3156 = vpop.f32.mrb[0].mxu0
        %v3157 = vpop.f32.mrb[0].mxu0
        %v3158 = vadd.f32 0.0, %v3157
        %v3159 = vpop.f32.mrb[0].mxu0
        %3160 = vdwg.mxu0
        %v3161 = vmul.f32 %v3002, 0.17677669
        %v3162 = vmul.f32 %v3005, 0.17677669
        %v3163 = vmul.f32 %v3053, 0.17677669
        %v3164 = vmul.f32 %v3056, 0.17677669
        %v3165 = vmul.f32 %v3104, 0.17677669
        %v3166 = vmul.f32 %v3107, 0.17677669
        %v3167 = vmul.f32 %v3155, 0.17677669
        %v3168 = vmul.f32 %v3158, 0.17677669
        %v3169 = vsel %vm1393, %v3161, -inf
        %3170 = vmax.xlane.f32.xlu0 %v3169
        %v3171 = vpop.xlane.xlu0 %3170
        %v3172 = vsel %vm1393, %v3162, -inf
        %3173 = vmax.xlane.f32.xlu0 %v3172
        %v3174 = vpop.xlane.xlu0 %3173
        %v3175 = vsel %vm1393, %v3163, -inf
        %3176 = vmax.xlane.f32.xlu0 %v3175
        %v3177 = vpop.xlane.xlu0 %3176
        %v3178 = vsel %vm1393, %v3164, -inf
        %3179 = vmax.xlane.f32.xlu0 %v3178
        %v3180 = vpop.xlane.xlu0 %3179
        %v3181 = vsel %vm1393, %v3165, -inf
        %3182 = vmax.xlane.f32.xlu0 %v3181
        %v3183 = vpop.xlane.xlu0 %3182
        %v3184 = vsel %vm1393, %v3166, -inf
        %3185 = vmax.xlane.f32.xlu0 %v3184
        %v3186 = vpop.xlane.xlu0 %3185
        %v3187 = vsel %vm1393, %v3167, -inf
        %3188 = vmax.xlane.f32.xlu0 %v3187
        %v3189 = vpop.xlane.xlu0 %3188
        %v3190 = vsel %vm1393, %v3168, -inf
        %3191 = vmax.xlane.f32.xlu0 %v3190
        %v3192 = vpop.xlane.xlu0 %3191
        %v3193 = vsub.f32 %v3161, %v3171
        %v3194 = vsub.f32 %v3162, %v3174
        %v3195 = vsub.f32 %v3163, %v3177
        %v3196 = vsub.f32 %v3164, %v3180
        %v3197 = vsub.f32 %v3165, %v3183
        %v3198 = vsub.f32 %v3166, %v3186
        %v3199 = vsub.f32 %v3167, %v3189
        %v3200 = vsub.f32 %v3168, %v3192
        %v3201 = vmul.f32 %v3193, 1.442695
        %v3202 = vpow.pop %v3201
        %v3203 = vmul.f32 %v3194, 1.442695
        %v3204 = vpow.pop %v3203
        %v3205 = vmul.f32 %v3195, 1.442695
        %v3206 = vpow.pop %v3205
        %v3207 = vmul.f32 %v3196, 1.442695
        %v3208 = vpow.pop %v3207
        %v3209 = vmul.f32 %v3197, 1.442695
        %v3210 = vpow.pop %v3209
        %v3211 = vmul.f32 %v3198, 1.442695
        %v3212 = vpow.pop %v3211
        %v3213 = vmul.f32 %v3199, 1.442695
        %v3214 = vpow.pop %v3213
        %v3215 = vmul.f32 %v3200, 1.442695
        %v3216 = vpow.pop %v3215
        %v3217 = vsel %vm1393, %v3202, 0.0
        %3218 = vadd.xlane.f32.xlu0 %v3217
        %v3219 = vpop.xlane.xlu0 %3218
        %v3220 = vsel %vm1393, %v3204, 0.0
        %3221 = vadd.xlane.f32.xlu0 %v3220
        %v3222 = vpop.xlane.xlu0 %3221
        %v3223 = vsel %vm1393, %v3206, 0.0
        %3224 = vadd.xlane.f32.xlu0 %v3223
        %v3225 = vpop.xlane.xlu0 %3224
        %v3226 = vsel %vm1393, %v3208, 0.0
        %3227 = vadd.xlane.f32.xlu0 %v3226
        %v3228 = vpop.xlane.xlu0 %3227
        %v3229 = vsel %vm1393, %v3210, 0.0
        %3230 = vadd.xlane.f32.xlu0 %v3229
        %v3231 = vpop.xlane.xlu0 %3230
        %v3232 = vsel %vm1393, %v3212, 0.0
        %3233 = vadd.xlane.f32.xlu0 %v3232
        %v3234 = vpop.xlane.xlu0 %3233
        %v3235 = vsel %vm1393, %v3214, 0.0
        %3236 = vadd.xlane.f32.xlu0 %v3235
        %v3237 = vpop.xlane.xlu0 %3236
        %v3238 = vsel %vm1393, %v3216, 0.0
        %3239 = vadd.xlane.f32.xlu0 %v3238
        %v3240 = vpop.xlane.xlu0 %3239
        %v3241 = vrcp.pop %v3219
        %v3242 = vrcp.pop %v3222
        %v3243 = vrcp.pop %v3225
        %v3244 = vrcp.pop %v3228
        %v3245 = vrcp.pop %v3231
        %v3246 = vrcp.pop %v3234
        %v3247 = vrcp.pop %v3237
        %v3248 = vrcp.pop %v3240
        %v3249 = vmul.f32 %v3202, %v3241
        %v3250 = vmul.f32 %v3204, %v3242
        %v3251 = vmul.f32 %v3206, %v3243
        %v3252 = vmul.f32 %v3208, %v3244
        %v3253 = vmul.f32 %v3210, %v3245
        %v3254 = vmul.f32 %v3212, %v3246
        %v3255 = vmul.f32 %v3214, %v3247
        %v3256 = vmul.f32 %v3216, %v3248
        %v3257 = vpack.c.bf16 %v3250, %v3249
        %v3258 = vpack.c.bf16 %v3252, %v3251
        %v3259 = vpack.c.bf16 %v3254, %v3253
        %v3260 = vpack.c.bf16 %v3256, %v3255
        %3261 = vrot.lane.b32.xlu0 %v1192, 32
        %v3262 = vpop.permute.xlu0 %3261
        %v3265 = vsel %vm1393, %v3257, 0
        %3267 = vmatprep.subr.bf16.mxu0 0
        %3268 = vmatpush1.bf16.msra.mxu0 %v3262
        %3269 = vmatprep.subr.bf16.mxu0 0
        %3270 = vmatpush1.bf16.msra.mxu0 0
        %3271 = vmatprep.subr.bf16.mxu0 0
        %3272 = vmatpush1.bf16.msra.mxu0 0
        %3273 = vmatprep.subr.bf16.mxu0 0
        %3274 = vmatpush1.bf16.msra.mxu0 0
        %3275 = vmatprep.subr.bf16.mxu0 0
        %3276 = vmatpush1.bf16.msra.mxu0 0
        %3277 = vmatprep.subr.bf16.mxu0 0
        %3278 = vmatpush1.bf16.msra.mxu0 0
        %3279 = vmatprep.subr.bf16.mxu0 0
        %3280 = vmatpush1.bf16.msra.mxu0 0
        %3281 = vmatprep.subr.bf16.mxu0 0
        %3282 = vmatpush1.bf16.msra.mxu0 0
        %3283 = vmatprep.subr.bf16.mxu0 0
        %3284 = vmatpush1.bf16.msra.mxu0 0
        %3285 = vmatprep.subr.bf16.mxu0 0
        %3286 = vmatpush1.bf16.msra.mxu0 0
        %3287 = vmatprep.subr.bf16.mxu0 0
        %3288 = vmatpush1.bf16.msra.mxu0 0
        %3289 = vmatprep.subr.bf16.mxu0 0
        %3290 = vmatpush1.bf16.msra.mxu0 0
        %3291 = vmatprep.subr.bf16.mxu0 0
        %3292 = vmatpush1.bf16.msra.mxu0 0
        %3293 = vmatprep.subr.bf16.mxu0 0
        %3294 = vmatpush1.bf16.msra.mxu0 0
        %3295 = vmatprep.subr.bf16.mxu0 0
        %3296 = vmatpush1.bf16.msra.mxu0 0
        %3297 = vmatprep.subr.bf16.mxu0 0
        %3298 = vmatpush1.bf16.msra.mxu0 0
        %3299 = vmatprep.mubr.bf16.mxu0 0
        %3300 = vmatmul.mubr.bf16.gmra.mrb[0].mxu0 %v3265
        %v3301 = vpop.f32.mrb[0].mxu0
        %v3302 = vadd.f32 0.0, %v3301
        %v3303 = vpop.f32.mrb[0].mxu0
        %v3304 = vpop.f32.mrb[0].mxu0
        %v3305 = vadd.f32 0.0, %v3304
        %v3306 = vpop.f32.mrb[0].mxu0
        %3307 = vdwg.mxu0
        %3308 = vrot.lane.b32.xlu0 %v1193, 32
        %v3309 = vpop.permute.xlu0 %3308
        %v3312 = vsel %vm1393, %v3258, 0
        %3314 = vmatprep.subr.bf16.mxu0 0
        %3315 = vmatpush1.bf16.msra.mxu0 %v3309
        %3316 = vmatprep.subr.bf16.mxu0 0
        %3317 = vmatpush1.bf16.msra.mxu0 0
        %3318 = vmatprep.subr.bf16.mxu0 0
        %3319 = vmatpush1.bf16.msra.mxu0 0
        %3320 = vmatprep.subr.bf16.mxu0 0
        %3321 = vmatpush1.bf16.msra.mxu0 0
        %3322 = vmatprep.subr.bf16.mxu0 0
        %3323 = vmatpush1.bf16.msra.mxu0 0
        %3324 = vmatprep.subr.bf16.mxu0 0
        %3325 = vmatpush1.bf16.msra.mxu0 0
        %3326 = vmatprep.subr.bf16.mxu0 0
        %3327 = vmatpush1.bf16.msra.mxu0 0
        %3328 = vmatprep.subr.bf16.mxu0 0
        %3329 = vmatpush1.bf16.msra.mxu0 0
        %3330 = vmatprep.subr.bf16.mxu0 0
        %3331 = vmatpush1.bf16.msra.mxu0 0
        %3332 = vmatprep.subr.bf16.mxu0 0
        %3333 = vmatpush1.bf16.msra.mxu0 0
        %3334 = vmatprep.subr.bf16.mxu0 0
        %3335 = vmatpush1.bf16.msra.mxu0 0
        %3336 = vmatprep.subr.bf16.mxu0 0
        %3337 = vmatpush1.bf16.msra.mxu0 0
        %3338 = vmatprep.subr.bf16.mxu0 0
        %3339 = vmatpush1.bf16.msra.mxu0 0
        %3340 = vmatprep.subr.bf16.mxu0 0
        %3341 = vmatpush1.bf16.msra.mxu0 0
        %3342 = vmatprep.subr.bf16.mxu0 0
        %3343 = vmatpush1.bf16.msra.mxu0 0
        %3344 = vmatprep.subr.bf16.mxu0 0
        %3345 = vmatpush1.bf16.msra.mxu0 0
        %3346 = vmatprep.mubr.bf16.mxu0 0
        %3347 = vmatmul.mubr.bf16.gmra.mrb[0].mxu0 %v3312
        %v3348 = vpop.f32.mrb[0].mxu0
        %v3349 = vadd.f32 0.0, %v3348
        %v3350 = vpop.f32.mrb[0].mxu0
        %v3351 = vpop.f32.mrb[0].mxu0
        %v3352 = vadd.f32 0.0, %v3351
        %v3353 = vpop.f32.mrb[0].mxu0
        %3354 = vdwg.mxu0
        %3355 = vrot.lane.b32.xlu0 %v1194, 32
        %v3356 = vpop.permute.xlu0 %3355
        %v3359 = vsel %vm1393, %v3259, 0
        %3361 = vmatprep.subr.bf16.mxu0 0
        %3362 = vmatpush1.bf16.msra.mxu0 %v3356
        %3363 = vmatprep.subr.bf16.mxu0 0
        %3364 = vmatpush1.bf16.msra.mxu0 0
        %3365 = vmatprep.subr.bf16.mxu0 0
        %3366 = vmatpush1.bf16.msra.mxu0 0
        %3367 = vmatprep.subr.bf16.mxu0 0
        %3368 = vmatpush1.bf16.msra.mxu0 0
        %3369 = vmatprep.subr.bf16.mxu0 0
        %3370 = vmatpush1.bf16.msra.mxu0 0
        %3371 = vmatprep.subr.bf16.mxu0 0
        %3372 = vmatpush1.bf16.msra.mxu0 0
        %3373 = vmatprep.subr.bf16.mxu0 0
        %3374 = vmatpush1.bf16.msra.mxu0 0
        %3375 = vmatprep.subr.bf16.mxu0 0
        %3376 = vmatpush1.bf16.msra.mxu0 0
        %3377 = vmatprep.subr.bf16.mxu0 0
        %3378 = vmatpush1.bf16.msra.mxu0 0
        %3379 = vmatprep.subr.bf16.mxu0 0
        %3380 = vmatpush1.bf16.msra.mxu0 0
        %3381 = vmatprep.subr.bf16.mxu0 0
        %3382 = vmatpush1.bf16.msra.mxu0 0
        %3383 = vmatprep.subr.bf16.mxu0 0
        %3384 = vmatpush1.bf16.msra.mxu0 0
        %3385 = vmatprep.subr.bf16.mxu0 0
        %3386 = vmatpush1.bf16.msra.mxu0 0
        %3387 = vmatprep.subr.bf16.mxu0 0
        %3388 = vmatpush1.bf16.msra.mxu0 0
        %3389 = vmatprep.subr.bf16.mxu0 0
        %3390 = vmatpush1.bf16.msra.mxu0 0
        %3391 = vmatprep.subr.bf16.mxu0 0
        %3392 = vmatpush1.bf16.msra.mxu0 0
        %3393 = vmatprep.mubr.bf16.mxu0 0
        %3394 = vmatmul.mubr.bf16.gmra.mrb[0].mxu0 %v3359
        %v3395 = vpop.f32.mrb[0].mxu0
        %v3396 = vadd.f32 0.0, %v3395
        %v3397 = vpop.f32.mrb[0].mxu0
        %v3398 = vpop.f32.mrb[0].mxu0
        %v3399 = vadd.f32 0.0, %v3398
        %v3400 = vpop.f32.mrb[0].mxu0
        %3401 = vdwg.mxu0
        %3402 = vrot.lane.b32.xlu0 %v1195, 32
        %v3403 = vpop.permute.xlu0 %3402
        %v3406 = vsel %vm1393, %v3260, 0
        %3408 = vmatprep.subr.bf16.mxu0 0
        %3409 = vmatpush1.bf16.msra.mxu0 %v3403
        %3410 = vmatprep.subr.bf16.mxu0 0
        %3411 = vmatpush1.bf16.msra.mxu0 0
        %3412 = vmatprep.subr.bf16.mxu0 0
        %3413 = vmatpush1.bf16.msra.mxu0 0
        %3414 = vmatprep.subr.bf16.mxu0 0
        %3415 = vmatpush1.bf16.msra.mxu0 0
        %3416 = vmatprep.subr.bf16.mxu0 0
        %3417 = vmatpush1.bf16.msra.mxu0 0
        %3418 = vmatprep.subr.bf16.mxu0 0
        %3419 = vmatpush1.bf16.msra.mxu0 0
        %3420 = vmatprep.subr.bf16.mxu0 0
        %3421 = vmatpush1.bf16.msra.mxu0 0
        %3422 = vmatprep.subr.bf16.mxu0 0
        %3423 = vmatpush1.bf16.msra.mxu0 0
        %3424 = vmatprep.subr.bf16.mxu0 0
        %3425 = vmatpush1.bf16.msra.mxu0 0
        %3426 = vmatprep.subr.bf16.mxu0 0
        %3427 = vmatpush1.bf16.msra.mxu0 0
        %3428 = vmatprep.subr.bf16.mxu0 0
        %3429 = vmatpush1.bf16.msra.mxu0 0
        %3430 = vmatprep.subr.bf16.mxu0 0
        %3431 = vmatpush1.bf16.msra.mxu0 0
        %3432 = vmatprep.subr.bf16.mxu0 0
        %3433 = vmatpush1.bf16.msra.mxu0 0
        %3434 = vmatprep.subr.bf16.mxu0 0
        %3435 = vmatpush1.bf16.msra.mxu0 0
        %3436 = vmatprep.subr.bf16.mxu0 0
        %3437 = vmatpush1.bf16.msra.mxu0 0
        %3438 = vmatprep.subr.bf16.mxu0 0
        %3439 = vmatpush1.bf16.msra.mxu0 0
        %3440 = vmatprep.mubr.bf16.mxu0 0
        %3441 = vmatmul.mubr.bf16.gmra.mrb[0].mxu0 %v3406
        %v3442 = vpop.f32.mrb[0].mxu0
        %v3443 = vadd.f32 0.0, %v3442
        %v3444 = vpop.f32.mrb[0].mxu0
        %v3445 = vpop.f32.mrb[0].mxu0
        %v3446 = vadd.f32 0.0, %v3445
        %v3447 = vpop.f32.mrb[0].mxu0
        %3448 = vdwg.mxu0
        %v3449 = vpack.c.bf16 %v3305, %v3302
        %v3450 = vpack.c.bf16 %v3352, %v3349
        %v3451 = vpack.c.bf16 %v3399, %v3396
        %v3452 = vpack.c.bf16 %v3446, %v3443
        %v3453 = vld [vmem:[#allocation8 + $0x30] sm:$0xf]
        %v3454 = vld [vmem:[#allocation8 + $0x34] sm:$0xf]
        %v3455 = vld [vmem:[#allocation8 + $0x38] sm:$0xf]
        %v3456 = vld [vmem:[#allocation8 + $0x3c] sm:$0xf]
        %v3461 = vunpack.c.l.b16 %v3453
        %v3462 = vunpack.c.l.b16 %v3454
        %v3463 = vunpack.c.l.b16 %v3455
        %v3464 = vunpack.c.l.b16 %v3456
        %v3465 = vpack.c.b16 %v3462, %v3461
        %v3466 = vpack.c.b16 %v3464, %v3463
        %v3470 = vsel %vm1196, %v3449, 0
        %v3473 = vsel %vm1196, %v3450, 0
        %v3476 = vsel %vm1196, %v3451, 0
        %v3479 = vsel %vm1196, %v3452, 0
        %3481 = vmatprep.subr.bf16.mxu0 0
        %3482 = vmatpush1.bf16.msra.mxu0 %v3465
        %3483 = vmatprep.subr.bf16.mxu0 0
        %3484 = vmatpush1.bf16.msra.mxu0 %v3466
        %3485 = vmatprep.subr.bf16.mxu0 0
        %3486 = vmatpush1.bf16.msra.mxu0 0
        %3487 = vmatprep.subr.bf16.mxu0 0
        %3488 = vmatpush1.bf16.msra.mxu0 0
        %3489 = vmatprep.subr.bf16.mxu0 0
        %3490 = vmatpush1.bf16.msra.mxu0 0
        %3491 = vmatprep.subr.bf16.mxu0 0
        %3492 = vmatpush1.bf16.msra.mxu0 0
        %3493 = vmatprep.subr.bf16.mxu0 0
        %3494 = vmatpush1.bf16.msra.mxu0 0
        %3495 = vmatprep.subr.bf16.mxu0 0
        %3496 = vmatpush1.bf16.msra.mxu0 0
        %3497 = vmatprep.subr.bf16.mxu0 0
        %3498 = vmatpush1.bf16.msra.mxu0 0
        %3499 = vmatprep.subr.bf16.mxu0 0
        %3500 = vmatpush1.bf16.msra.mxu0 0
        %3501 = vmatprep.subr.bf16.mxu0 0
        %3502 = vmatpush1.bf16.msra.mxu0 0
        %3503 = vmatprep.subr.bf16.mxu0 0
        %3504 = vmatpush1.bf16.msra.mxu0 0
        %3505 = vmatprep.subr.bf16.mxu0 0
        %3506 = vmatpush1.bf16.msra.mxu0 0
        %3507 = vmatprep.subr.bf16.mxu0 0
        %3508 = vmatpush1.bf16.msra.mxu0 0
        %3509 = vmatprep.subr.bf16.mxu0 0
        %3510 = vmatpush1.bf16.msra.mxu0 0
        %3511 = vmatprep.subr.bf16.mxu0 0
        %3512 = vmatpush1.bf16.msra.mxu0 0
        %3513 = vmatprep.mubr.bf16.mxu0 0
        %3514 = vmatmul.mubr.bf16.gmra.mrb[0].mxu0 %v3470
        %v3515 = vpop.f32.mrb[0].mxu0
        %v3516 = vadd.f32 0.0, %v3515
        %v3517 = vpop.f32.mrb[0].mxu0
        %v3518 = vpop.f32.mrb[0].mxu0
        %v3519 = vadd.f32 0.0, %v3518
        %v3520 = vpop.f32.mrb[0].mxu0
        %3521 = vmatprep.mubr.bf16.mxu0 0
        %3522 = vmatmul.mubr.bf16.gmra.mrb[0].mxu0 %v3473
        %v3523 = vpop.f32.mrb[0].mxu0
        %v3524 = vadd.f32 0.0, %v3523
        %v3525 = vpop.f32.mrb[0].mxu0
        %v3526 = vpop.f32.mrb[0].mxu0
        %v3527 = vadd.f32 0.0, %v3526
        %v3528 = vpop.f32.mrb[0].mxu0
        %3529 = vmatprep.mubr.bf16.mxu0 0
        %3530 = vmatmul.mubr.bf16.gmra.mrb[0].mxu0 %v3476
        %v3531 = vpop.f32.mrb[0].mxu0
        %v3532 = vadd.f32 0.0, %v3531
        %v3533 = vpop.f32.mrb[0].mxu0
        %v3534 = vpop.f32.mrb[0].mxu0
        %v3535 = vadd.f32 0.0, %v3534
        %v3536 = vpop.f32.mrb[0].mxu0
        %3537 = vmatprep.mubr.bf16.mxu0 0
        %3538 = vmatmul.mubr.bf16.gmra.mrb[0].mxu0 %v3479
        %v3539 = vpop.f32.mrb[0].mxu0
        %v3540 = vadd.f32 0.0, %v3539
        %v3541 = vpop.f32.mrb[0].mxu0
        %v3542 = vpop.f32.mrb[0].mxu0
        %v3543 = vadd.f32 0.0, %v3542
        %v3544 = vpop.f32.mrb[0].mxu0
        %3545 = vdwg.mxu0
        %v3546 = vadd.f32 %v2949, %v3516
        %v3547 = vadd.f32 %v2950, %v3519
        %v3548 = vadd.f32 %v2951, %v3524
        %v3549 = vadd.f32 %v2952, %v3527
        %v3550 = vadd.f32 %v2953, %v3532
        %v3551 = vadd.f32 %v2954, %v3535
        %v3552 = vadd.f32 %v2955, %v3540
        %v3553 = vadd.f32 %v2956, %v3543
        %v3554 = vld [vmem:[%s5] sm:$0x1]
        %v3556 = vlaneseq
        %v3557 = vshrl.u32 %v3556, 7
        %v3558 = vsub.s32 0, %v3557
        %v3559 = vrot.slane %v3554, %v3558
        %v3561 = vadd.f32 %v3546, %v3559
        %v3562 = vadd.f32 %v3547, %v3559
        %v3563 = vadd.f32 %v3548, %v3559
        %v3564 = vadd.f32 %v3549, %v3559
        %v3565 = vadd.f32 %v3550, %v3559
        %v3566 = vadd.f32 %v3551, %v3559
        %v3567 = vadd.f32 %v3552, %v3559
        %v3568 = vadd.f32 %v3553, %v3559
        %v3569 = vadd.f32 %v849, %v3561
        %v3570 = vadd.f32 %v850, %v3562
        %v3571 = vadd.f32 %v851, %v3563
        %v3572 = vadd.f32 %v852, %v3564
        %v3573 = vadd.f32 %v853, %v3565
        %v3574 = vadd.f32 %v854, %v3566
        %v3575 = vadd.f32 %v855, %v3567
        %v3576 = vadd.f32 %v856, %v3568
        %v3577 = vld [vmem:[%s6] sm:$0x1]
        %v3578 = vld [vmem:[%s7] sm:$0x1]
        %3579 = vadd.xlane.f32.xlu0 %v3569
        %v3580 = vpop.xlane.xlu0 %3579
        %3581 = vadd.xlane.f32.xlu0 %v3570
        %v3582 = vpop.xlane.xlu0 %3581
        %3583 = vadd.xlane.f32.xlu0 %v3571
        %v3584 = vpop.xlane.xlu0 %3583
        %3585 = vadd.xlane.f32.xlu0 %v3572
        %v3586 = vpop.xlane.xlu0 %3585
        %3587 = vadd.xlane.f32.xlu0 %v3573
        %v3588 = vpop.xlane.xlu0 %3587
        %3589 = vadd.xlane.f32.xlu0 %v3574
        %v3590 = vpop.xlane.xlu0 %3589
        %3591 = vadd.xlane.f32.xlu0 %v3575
        %v3592 = vpop.xlane.xlu0 %3591
        %3593 = vadd.xlane.f32.xlu0 %v3576
        %v3594 = vpop.xlane.xlu0 %3593
        %v3595 = vrcp.pop 128.0
        %v3596 = vmul.f32 %v3580, %v3595
        %v3597 = vmul.f32 %v3582, %v3595
        %v3598 = vmul.f32 %v3584, %v3595
        %v3599 = vmul.f32 %v3586, %v3595
        %v3600 = vmul.f32 %v3588, %v3595
        %v3601 = vmul.f32 %v3590, %v3595
        %v3602 = vmul.f32 %v3592, %v3595
        %v3603 = vmul.f32 %v3594, %v3595
        %v3604 = vsub.f32 %v3569, %v3596
        %v3605 = vsub.f32 %v3570, %v3597
        %v3606 = vsub.f32 %v3571, %v3598
        %v3607 = vsub.f32 %v3572, %v3599
        %v3608 = vsub.f32 %v3573, %v3600
        %v3609 = vsub.f32 %v3574, %v3601
        %v3610 = vsub.f32 %v3575, %v3602
        %v3611 = vsub.f32 %v3576, %v3603
        %v3612 = vmul.f32 %v3604, %v3604
        %v3613 = vmul.f32 %v3605, %v3605
        %v3614 = vmul.f32 %v3606, %v3606
        %v3615 = vmul.f32 %v3607, %v3607
        %v3616 = vmul.f32 %v3608, %v3608
        %v3617 = vmul.f32 %v3609, %v3609
        %v3618 = vmul.f32 %v3610, %v3610
        %v3619 = vmul.f32 %v3611, %v3611
        %3620 = vadd.xlane.f32.xlu0 %v3612
        %v3621 = vpop.xlane.xlu0 %3620
        %3622 = vadd.xlane.f32.xlu0 %v3613
        %v3623 = vpop.xlane.xlu0 %3622
        %3624 = vadd.xlane.f32.xlu0 %v3614
        %v3625 = vpop.xlane.xlu0 %3624
        %3626 = vadd.xlane.f32.xlu0 %v3615
        %v3627 = vpop.xlane.xlu0 %3626
        %3628 = vadd.xlane.f32.xlu0 %v3616
        %v3629 = vpop.xlane.xlu0 %3628
        %3630 = vadd.xlane.f32.xlu0 %v3617
        %v3631 = vpop.xlane.xlu0 %3630
        %3632 = vadd.xlane.f32.xlu0 %v3618
        %v3633 = vpop.xlane.xlu0 %3632
        %3634 = vadd.xlane.f32.xlu0 %v3619
        %v3635 = vpop.xlane.xlu0 %3634
        %v3636 = vmul.f32 %v3621, %v3595
        %v3637 = vmul.f32 %v3623, %v3595
        %v3638 = vmul.f32 %v3625, %v3595
        %v3639 = vmul.f32 %v3627, %v3595
        %v3640 = vmul.f32 %v3629, %v3595
        %v3641 = vmul.f32 %v3631, %v3595
        %v3642 = vmul.f32 %v3633, %v3595
        %v3643 = vmul.f32 %v3635, %v3595
        %v3644 = vadd.f32 %v3636, 1e-05
        %v3645 = vadd.f32 %v3637, 1e-05
        %v3646 = vadd.f32 %v3638, 1e-05
        %v3647 = vadd.f32 %v3639, 1e-05
        %v3648 = vadd.f32 %v3640, 1e-05
        %v3649 = vadd.f32 %v3641, 1e-05
        %v3650 = vadd.f32 %v3642, 1e-05
        %v3651 = vadd.f32 %v3643, 1e-05
        %v3652 = vrsqrt.pop %v3644
        %v3653 = vrsqrt.pop %v3645
        %v3654 = vrsqrt.pop %v3646
        %v3655 = vrsqrt.pop %v3647
        %v3656 = vrsqrt.pop %v3648
        %v3657 = vrsqrt.pop %v3649
        %v3658 = vrsqrt.pop %v3650
        %v3659 = vrsqrt.pop %v3651
        %v3660 = vmul.f32 %v3604, %v3652
        %v3661 = vmul.f32 %v3605, %v3653
        %v3662 = vmul.f32 %v3606, %v3654
        %v3663 = vmul.f32 %v3607, %v3655
        %v3664 = vmul.f32 %v3608, %v3656
        %v3665 = vmul.f32 %v3609, %v3657
        %v3666 = vmul.f32 %v3610, %v3658
        %v3667 = vmul.f32 %v3611, %v3659
        %v3669 = vlaneseq
        %v3670 = vshrl.u32 %v3669, 7
        %v3671 = vsub.s32 0, %v3670
        %v3672 = vrot.slane %v3577, %v3671
        %v3674 = vmul.f32 %v3660, %v3672
        %v3675 = vmul.f32 %v3661, %v3672
        %v3676 = vmul.f32 %v3662, %v3672
        %v3677 = vmul.f32 %v3663, %v3672
        %v3678 = vmul.f32 %v3664, %v3672
        %v3679 = vmul.f32 %v3665, %v3672
        %v3680 = vmul.f32 %v3666, %v3672
        %v3681 = vmul.f32 %v3667, %v3672
        %v3683 = vlaneseq
        %v3684 = vshrl.u32 %v3683, 7
        %v3685 = vsub.s32 0, %v3684
        %v3686 = vrot.slane %v3578, %v3685
        %v3688 = vadd.f32 %v3674, %v3686
        %v3689 = vadd.f32 %v3675, %v3686
        %v3690 = vadd.f32 %v3676, %v3686
        %v3691 = vadd.f32 %v3677, %v3686
        %v3692 = vadd.f32 %v3678, %v3686
        %v3693 = vadd.f32 %v3679, %v3686
        %v3694 = vadd.f32 %v3680, %v3686
        %v3695 = vadd.f32 %v3681, %v3686
        %v3696 = vpack.c.bf16 %v3689, %v3688
        %v3697 = vpack.c.bf16 %v3691, %v3690
        %v3698 = vpack.c.bf16 %v3693, %v3692
        %v3699 = vpack.c.bf16 %v3695, %v3694
        %v3700 = vld [vmem:[#allocation10] sm:$0xf]
        %v3701 = vld [vmem:[#allocation10 + $0x4] sm:$0xf]
        %v3702 = vld [vmem:[#allocation10 + $0x8] sm:$0xf]
        %v3703 = vld [vmem:[#allocation10 + $0xc] sm:$0xf]
        %v3704 = vld [vmem:[#allocation10 + $0x10] sm:$0xf]
        %v3705 = vld [vmem:[#allocation10 + $0x14] sm:$0xf]
        %v3706 = vld [vmem:[#allocation10 + $0x18] sm:$0xf]
        %v3707 = vld [vmem:[#allocation10 + $0x1c] sm:$0xf]
        %v3708 = vld [vmem:[#allocation10 + $0x20] sm:$0xf]
        %v3709 = vld [vmem:[#allocation10 + $0x24] sm:$0xf]
        %v3710 = vld [vmem:[#allocation10 + $0x28] sm:$0xf]
        %v3711 = vld [vmem:[#allocation10 + $0x2c] sm:$0xf]
        %v3712 = vld [vmem:[#allocation10 + $0x30] sm:$0xf]
        %v3713 = vld [vmem:[#allocation10 + $0x34] sm:$0xf]
        %v3714 = vld [vmem:[#allocation10 + $0x38] sm:$0xf]
        %v3715 = vld [vmem:[#allocation10 + $0x3c] sm:$0xf]
        %v3716 = vld [vmem:[%s9] sm:$0x1]
        %v3718 = vlaneseq
        %v3719 = vshrl.u32 %v3718, 7
        %v3720 = vsub.s32 0, %v3719
        %v3721 = vrot.slane %v3716, %v3720
        %v3739 = vunpack.c.l.b16 %v3700
        %v3740 = vunpack.c.l.b16 %v3701
        %v3741 = vunpack.c.l.b16 %v3702
        %v3742 = vunpack.c.l.b16 %v3703
        %v3743 = vunpack.c.l.b16 %v3704
        %v3744 = vunpack.c.l.b16 %v3705
        %v3745 = vunpack.c.l.b16 %v3706
        %v3746 = vunpack.c.l.b16 %v3707
        %v3747 = vunpack.c.l.b16 %v3708
        %v3748 = vunpack.c.l.b16 %v3709
        %v3749 = vunpack.c.l.b16 %v3710
        %v3750 = vunpack.c.l.b16 %v3711
        %v3751 = vunpack.c.l.b16 %v3712
        %v3752 = vunpack.c.l.b16 %v3713
        %v3753 = vunpack.c.l.b16 %v3714
        %v3754 = vunpack.c.l.b16 %v3715
        %v3755 = vpack.c.b16 %v3740, %v3739
        %v3756 = vpack.c.b16 %v3742, %v3741
        %v3757 = vpack.c.b16 %v3744, %v3743
        %v3758 = vpack.c.b16 %v3746, %v3745
        %v3759 = vpack.c.b16 %v3748, %v3747
        %v3760 = vpack.c.b16 %v3750, %v3749
        %v3761 = vpack.c.b16 %v3752, %v3751
        %v3762 = vpack.c.b16 %v3754, %v3753
        %3771 = vmatprep.subr.bf16.mxu0 0
        %3772 = vmatpush1.bf16.msra.mxu0 %v3755
        %3773 = vmatprep.subr.bf16.mxu0 0
        %3774 = vmatpush1.bf16.msra.mxu0 %v3756
        %3775 = vmatprep.subr.bf16.mxu0 0
        %3776 = vmatpush1.bf16.msra.mxu0 %v3757
        %3777 = vmatprep.subr.bf16.mxu0 0
        %3778 = vmatpush1.bf16.msra.mxu0 %v3758
        %3779 = vmatprep.subr.bf16.mxu0 0
        %3780 = vmatpush1.bf16.msra.mxu0 %v3759
        %3781 = vmatprep.subr.bf16.mxu0 0
        %3782 = vmatpush1.bf16.msra.mxu0 %v3760
        %3783 = vmatprep.subr.bf16.mxu0 0
        %3784 = vmatpush1.bf16.msra.mxu0 %v3761
        %3785 = vmatprep.subr.bf16.mxu0 0
        %3786 = vmatpush1.bf16.msra.mxu0 %v3762
        %3787 = vmatprep.subr.bf16.mxu0 0
        %3788 = vmatpush1.bf16.msra.mxu0 0
        %3789 = vmatprep.subr.bf16.mxu0 0
        %3790 = vmatpush1.bf16.msra.mxu0 0
        %3791 = vmatprep.subr.bf16.mxu0 0
        %3792 = vmatpush1.bf16.msra.mxu0 0
        %3793 = vmatprep.subr.bf16.mxu0 0
        %3794 = vmatpush1.bf16.msra.mxu0 0
        %3795 = vmatprep.subr.bf16.mxu0 0
        %3796 = vmatpush1.bf16.msra.mxu0 0
        %3797 = vmatprep.subr.bf16.mxu0 0
        %3798 = vmatpush1.bf16.msra.mxu0 0
        %3799 = vmatprep.subr.bf16.mxu0 0
        %3800 = vmatpush1.bf16.msra.mxu0 0
        %3801 = vmatprep.subr.bf16.mxu0 0
        %3802 = vmatpush1.bf16.msra.mxu0 0
        %3803 = vmatprep.mubr.bf16.mxu0 0
        %3804 = vmatmul.mubr.bf16.gmra.mrb[0].mxu0 %v3696
        %v3805 = vpop.f32.mrb[0].mxu0
        %v3806 = vadd.f32 %v3721, %v3805
        %v3807 = vpop.f32.mrb[0].mxu0
        %v3808 = vpop.f32.mrb[0].mxu0
        %v3809 = vadd.f32 %v3721, %v3808
        %v3810 = vpop.f32.mrb[0].mxu0
        %3811 = vmatprep.mubr.bf16.mxu0 0
        %3812 = vmatmul.mubr.bf16.gmra.mrb[0].mxu0 %v3697
        %v3813 = vpop.f32.mrb[0].mxu0
        %v3814 = vadd.f32 %v3721, %v3813
        %v3815 = vpop.f32.mrb[0].mxu0
        %v3816 = vpop.f32.mrb[0].mxu0
        %v3817 = vadd.f32 %v3721, %v3816
        %v3818 = vpop.f32.mrb[0].mxu0
        %3819 = vmatprep.mubr.bf16.mxu0 0
        %3820 = vmatmul.mubr.bf16.gmra.mrb[0].mxu0 %v3698
        %v3821 = vpop.f32.mrb[0].mxu0
        %v3822 = vadd.f32 %v3721, %v3821
        %v3823 = vpop.f32.mrb[0].mxu0
        %v3824 = vpop.f32.mrb[0].mxu0
        %v3825 = vadd.f32 %v3721, %v3824
        %v3826 = vpop.f32.mrb[0].mxu0
        %3827 = vmatprep.mubr.bf16.mxu0 0
        %3828 = vmatmul.mubr.bf16.gmra.mrb[0].mxu0 %v3699
        %v3829 = vpop.f32.mrb[0].mxu0
        %v3830 = vadd.f32 %v3721, %v3829
        %v3831 = vpop.f32.mrb[0].mxu0
        %v3832 = vpop.f32.mrb[0].mxu0
        %v3833 = vadd.f32 %v3721, %v3832
        %v3834 = vpop.f32.mrb[0].mxu0
        %3835 = vdwg.mxu0
        %v3836 = vpack.c.bf16 %v858, %v857
        %v3837 = vpack.c.bf16 %v860, %v859
        %v3838 = vpack.c.bf16 %v862, %v861
        %v3839 = vpack.c.bf16 %v864, %v863
        %v3840 = vld [vmem:[#allocation11] sm:$0xff]
        %v3841 = vld [vmem:[#allocation11 + $0x8] sm:$0xff]
        %v3842 = vld [vmem:[#allocation11 + $0x10] sm:$0xff]
        %v3843 = vld [vmem:[#allocation11 + $0x18] sm:$0xff]
        %v3844 = vld [vmem:[#allocation11 + $0x20] sm:$0xff]
        %v3845 = vld [vmem:[#allocation11 + $0x28] sm:$0xff]
        %v3846 = vld [vmem:[#allocation11 + $0x30] sm:$0xff]
        %v3847 = vld [vmem:[#allocation11 + $0x38] sm:$0xff]
        %v3848 = vld [vmem:[#allocation11 + $0x40] sm:$0xff]
        %v3849 = vld [vmem:[#allocation11 + $0x48] sm:$0xff]
        %v3850 = vld [vmem:[#allocation11 + $0x50] sm:$0xff]
        %v3851 = vld [vmem:[#allocation11 + $0x58] sm:$0xff]
        %v3852 = vld [vmem:[#allocation11 + $0x60] sm:$0xff]
        %v3853 = vld [vmem:[#allocation11 + $0x68] sm:$0xff]
        %v3854 = vld [vmem:[#allocation11 + $0x70] sm:$0xff]
        %v3855 = vld [vmem:[#allocation11 + $0x78] sm:$0xff]
        %v3856 = vld [vmem:[%s11] sm:$0x3]
        %v3858 = vlaneseq
        %v3859 = vshrl.u32 %v3858, 7
        %v3860 = vsub.s32 0, %v3859
        %v3861 = vrot.slane %v3856, %v3860
        %v3862 = vlaneseq
        %v3863 = vshrl.u32 %v3862, 7
        %v3864 = vsub.s32 1, %v3863
        %v3865 = vrot.slane %v3856, %v3864
        %v3884 = vunpack.c.l.b16 %v3840
        %v3885 = vunpack.c.h.b16 %v3840
        %v3886 = vunpack.c.l.b16 %v3841
        %v3887 = vunpack.c.h.b16 %v3841
        %v3888 = vunpack.c.l.b16 %v3842
        %v3889 = vunpack.c.h.b16 %v3842
        %v3890 = vunpack.c.l.b16 %v3843
        %v3891 = vunpack.c.h.b16 %v3843
        %v3892 = vunpack.c.l.b16 %v3844
        %v3893 = vunpack.c.h.b16 %v3844
        %v3894 = vunpack.c.l.b16 %v3845
        %v3895 = vunpack.c.h.b16 %v3845
        %v3896 = vunpack.c.l.b16 %v3846
        %v3897 = vunpack.c.h.b16 %v3846
        %v3898 = vunpack.c.l.b16 %v3847
        %v3899 = vunpack.c.h.b16 %v3847
        %v3900 = vunpack.c.l.b16 %v3848
        %v3901 = vunpack.c.h.b16 %v3848
        %v3902 = vunpack.c.l.b16 %v3849
        %v3903 = vunpack.c.h.b16 %v3849
        %v3904 = vunpack.c.l.b16 %v3850
        %v3905 = vunpack.c.h.b16 %v3850
        %v3906 = vunpack.c.l.b16 %v3851
        %v3907 = vunpack.c.h.b16 %v3851
        %v3908 = vunpack.c.l.b16 %v3852
        %v3909 = vunpack.c.h.b16 %v3852
        %v3910 = vunpack.c.l.b16 %v3853
        %v3911 = vunpack.c.h.b16 %v3853
        %v3912 = vunpack.c.l.b16 %v3854
        %v3913 = vunpack.c.h.b16 %v3854
        %v3914 = vunpack.c.l.b16 %v3855
        %v3915 = vunpack.c.h.b16 %v3855
        %v3916 = vpack.c.b16 %v3886, %v3884
        %v3917 = vpack.c.b16 %v3887, %v3885
        %v3918 = vpack.c.b16 %v3890, %v3888
        %v3919 = vpack.c.b16 %v3891, %v3889
        %v3920 = vpack.c.b16 %v3894, %v3892
        %v3921 = vpack.c.b16 %v3895, %v3893
        %v3922 = vpack.c.b16 %v3898, %v3896
        %v3923 = vpack.c.b16 %v3899, %v3897
        %v3924 = vpack.c.b16 %v3902, %v3900
        %v3925 = vpack.c.b16 %v3903, %v3901
        %v3926 = vpack.c.b16 %v3906, %v3904
        %v3927 = vpack.c.b16 %v3907, %v3905
        %v3928 = vpack.c.b16 %v3910, %v3908
        %v3929 = vpack.c.b16 %v3911, %v3909
        %v3930 = vpack.c.b16 %v3914, %v3912
        %v3931 = vpack.c.b16 %v3915, %v3913
        %3948 = vmatprep.subr.bf16.mxu0 %v3917
        %3949 = vmatpush1.bf16.msra.mxu0 %v3916
        %3950 = vmatprep.subr.bf16.mxu0 %v3919
        %3951 = vmatpush1.bf16.msra.mxu0 %v3918
        %3952 = vmatprep.subr.bf16.mxu0 %v3921
        %3953 = vmatpush1.bf16.msra.mxu0 %v3920
        %3954 = vmatprep.subr.bf16.mxu0 %v3923
        %3955 = vmatpush1.bf16.msra.mxu0 %v3922
        %3956 = vmatprep.subr.bf16.mxu0 %v3925
        %3957 = vmatpush1.bf16.msra.mxu0 %v3924
        %3958 = vmatprep.subr.bf16.mxu0 %v3927
        %3959 = vmatpush1.bf16.msra.mxu0 %v3926
        %3960 = vmatprep.subr.bf16.mxu0 %v3929
        %3961 = vmatpush1.bf16.msra.mxu0 %v3928
        %3962 = vmatprep.subr.bf16.mxu0 %v3931
        %3963 = vmatpush1.bf16.msra.mxu0 %v3930
        %3964 = vmatprep.subr.bf16.mxu0 0
        %3965 = vmatpush1.bf16.msra.mxu0 0
        %3966 = vmatprep.subr.bf16.mxu0 0
        %3967 = vmatpush1.bf16.msra.mxu0 0
        %3968 = vmatprep.subr.bf16.mxu0 0
        %3969 = vmatpush1.bf16.msra.mxu0 0
        %3970 = vmatprep.subr.bf16.mxu0 0
        %3971 = vmatpush1.bf16.msra.mxu0 0
        %3972 = vmatprep.subr.bf16.mxu0 0
        %3973 = vmatpush1.bf16.msra.mxu0 0
        %3974 = vmatprep.subr.bf16.mxu0 0
        %3975 = vmatpush1.bf16.msra.mxu0 0
        %3976 = vmatprep.subr.bf16.mxu0 0
        %3977 = vmatpush1.bf16.msra.mxu0 0
        %3978 = vmatprep.subr.bf16.mxu0 0
        %3979 = vmatpush1.bf16.msra.mxu0 0
        %3980 = vmatprep.mubr.bf16.mxu0 0
        %3981 = vmatmul.mubr.bf16.gmra.mrb[0].mxu0 %v3836
        %v3982 = vpop.f32.mrb[0].mxu0
        %v3983 = vadd.f32 %v3861, %v3982
        %v3984 = vpop.f32.mrb[0].mxu0
        %v3985 = vadd.f32 %v3865, %v3984
        %v3986 = vpop.f32.mrb[0].mxu0
        %v3987 = vadd.f32 %v3861, %v3986
        %v3988 = vpop.f32.mrb[0].mxu0
        %v3989 = vadd.f32 %v3865, %v3988
        %3990 = vmatprep.mubr.bf16.mxu0 0
        %3991 = vmatmul.mubr.bf16.gmra.mrb[0].mxu0 %v3837
        %v3992 = vpop.f32.mrb[0].mxu0
        %v3993 = vadd.f32 %v3861, %v3992
        %v3994 = vpop.f32.mrb[0].mxu0
        %v3995 = vadd.f32 %v3865, %v3994
        %v3996 = vpop.f32.mrb[0].mxu0
        %v3997 = vadd.f32 %v3861, %v3996
        %v3998 = vpop.f32.mrb[0].mxu0
        %v3999 = vadd.f32 %v3865, %v3998
        %4000 = vmatprep.mubr.bf16.mxu0 0
        %4001 = vmatmul.mubr.bf16.gmra.mrb[0].mxu0 %v3838
        %v4002 = vpop.f32.mrb[0].mxu0
        %v4003 = vadd.f32 %v3861, %v4002
        %v4004 = vpop.f32.mrb[0].mxu0
        %v4005 = vadd.f32 %v3865, %v4004
        %v4006 = vpop.f32.mrb[0].mxu0
        %v4007 = vadd.f32 %v3861, %v4006
        %v4008 = vpop.f32.mrb[0].mxu0
        %v4009 = vadd.f32 %v3865, %v4008
        %4010 = vmatprep.mubr.bf16.mxu0 0
        %4011 = vmatmul.mubr.bf16.gmra.mrb[0].mxu0 %v3839
        %v4012 = vpop.f32.mrb[0].mxu0
        %v4013 = vadd.f32 %v3861, %v4012
        %v4014 = vpop.f32.mrb[0].mxu0
        %v4015 = vadd.f32 %v3865, %v4014
        %v4016 = vpop.f32.mrb[0].mxu0
        %v4017 = vadd.f32 %v3861, %v4016
        %v4018 = vpop.f32.mrb[0].mxu0
        %v4019 = vadd.f32 %v3865, %v4018
        %4020 = vdwg.mxu0
        %v4021 = vpack.c.bf16 %v3809, %v3806
        %v4022 = vpack.c.bf16 %v3817, %v3814
        %v4023 = vpack.c.bf16 %v3825, %v3822
        %v4024 = vpack.c.bf16 %v3833, %v3830
        %v4025 = vpack.c.bf16 %v3987, %v3983
        %v4026 = vpack.c.bf16 %v3997, %v3993
        %v4027 = vpack.c.bf16 %v4007, %v4003
        %v4028 = vpack.c.bf16 %v4017, %v4013
        %v4029 = vpack.c.bf16 %v3989, %v3985
        %v4030 = vpack.c.bf16 %v3999, %v3995
        %v4031 = vpack.c.bf16 %v4009, %v4005
        %v4032 = vpack.c.bf16 %v4019, %v4015
        %v4034 = vsel %vm1196, %v4021, 0
        %v4037 = vsel %vm1196, %v4025, 0
        %4039 = vmatprep.subr.bf16.mxu0 0
        %4040 = vmatpush1.bf16.xpose.msra.mxu0 %v4037
        %4041 = vmatprep.subr.bf16.mxu0 0
        %4042 = vmatpush1.bf16.xpose.msra.mxu0 0
        %4043 = vmatprep.subr.bf16.mxu0 0
        %4044 = vmatpush1.bf16.xpose.msra.mxu0 0
        %4045 = vmatprep.subr.bf16.mxu0 0
        %4046 = vmatpush1.bf16.xpose.msra.mxu0 0
        %4047 = vmatprep.subr.bf16.mxu0 0
        %4048 = vmatpush1.bf16.xpose.msra.mxu0 0
        %4049 = vmatprep.subr.bf16.mxu0 0
        %4050 = vmatpush1.bf16.xpose.msra.mxu0 0
        %4051 = vmatprep.subr.bf16.mxu0 0
        %4052 = vmatpush1.bf16.xpose.msra.mxu0 0
        %4053 = vmatprep.subr.bf16.mxu0 0
        %4054 = vmatpush1.bf16.xpose.msra.mxu0 0
        %4055 = vmatprep.subr.bf16.mxu0 0
        %4056 = vmatpush1.bf16.xpose.msra.mxu0 0
        %4057 = vmatprep.subr.bf16.mxu0 0
        %4058 = vmatpush1.bf16.xpose.msra.mxu0 0
        %4059 = vmatprep.subr.bf16.mxu0 0
        %4060 = vmatpush1.bf16.xpose.msra.mxu0 0
        %4061 = vmatprep.subr.bf16.mxu0 0
        %4062 = vmatpush1.bf16.xpose.msra.mxu0 0
        %4063 = vmatprep.subr.bf16.mxu0 0
        %4064 = vmatpush1.bf16.xpose.msra.mxu0 0
        %4065 = vmatprep.subr.bf16.mxu0 0
        %4066 = vmatpush1.bf16.xpose.msra.mxu0 0
        %4067 = vmatprep.subr.bf16.mxu0 0
        %4068 = vmatpush1.bf16.xpose.msra.mxu0 0
        %4069 = vmatprep.subr.bf16.mxu0 0
        %4070 = vmatpush1.bf16.xpose.msra.mxu0 0
        %4071 = vmatprep.mubr.bf16.mxu0 0
        %4072 = vmatmul.mubr.bf16.gmra.mrb[0].mxu0 %v4034
        %v4073 = vpop.f32.mrb[0].mxu0
        %v4074 = vadd.f32 0.0, %v4073
        %v4075 = vpop.f32.mrb[0].mxu0
        %v4076 = vpop.f32.mrb[0].mxu0
        %v4077 = vadd.f32 0.0, %v4076
        %v4078 = vpop.f32.mrb[0].mxu0
        %4079 = vdwg.mxu0
        %v4081 = vsel %vm1196, %v4022, 0
        %v4084 = vsel %vm1196, %v4026, 0
        %4086 = vmatprep.subr.bf16.mxu0 0
        %4087 = vmatpush1.bf16.xpose.msra.mxu0 %v4084
        %4088 = vmatprep.subr.bf16.mxu0 0
        %4089 = vmatpush1.bf16.xpose.msra.mxu0 0
        %4090 = vmatprep.subr.bf16.mxu0 0
        %4091 = vmatpush1.bf16.xpose.msra.mxu0 0
        %4092 = vmatprep.subr.bf16.mxu0 0
        %4093 = vmatpush1.bf16.xpose.msra.mxu0 0
        %4094 = vmatprep.subr.bf16.mxu0 0
        %4095 = vmatpush1.bf16.xpose.msra.mxu0 0
        %4096 = vmatprep.subr.bf16.mxu0 0
        %4097 = vmatpush1.bf16.xpose.msra.mxu0 0
        %4098 = vmatprep.subr.bf16.mxu0 0
        %4099 = vmatpush1.bf16.xpose.msra.mxu0 0
        %4100 = vmatprep.subr.bf16.mxu0 0
        %4101 = vmatpush1.bf16.xpose.msra.mxu0 0
        %4102 = vmatprep.subr.bf16.mxu0 0
        %4103 = vmatpush1.bf16.xpose.msra.mxu0 0
        %4104 = vmatprep.subr.bf16.mxu0 0
        %4105 = vmatpush1.bf16.xpose.msra.mxu0 0
        %4106 = vmatprep.subr.bf16.mxu0 0
        %4107 = vmatpush1.bf16.xpose.msra.mxu0 0
        %4108 = vmatprep.subr.bf16.mxu0 0
        %4109 = vmatpush1.bf16.xpose.msra.mxu0 0
        %4110 = vmatprep.subr.bf16.mxu0 0
        %4111 = vmatpush1.bf16.xpose.msra.mxu0 0
        %4112 = vmatprep.subr.bf16.mxu0 0
        %4113 = vmatpush1.bf16.xpose.msra.mxu0 0
        %4114 = vmatprep.subr.bf16.mxu0 0
        %4115 = vmatpush1.bf16.xpose.msra.mxu0 0
        %4116 = vmatprep.subr.bf16.mxu0 0
        %4117 = vmatpush1.bf16.xpose.msra.mxu0 0
        %4118 = vmatprep.mubr.bf16.mxu0 0
        %4119 = vmatmul.mubr.bf16.gmra.mrb[0].mxu0 %v4081
        %v4120 = vpop.f32.mrb[0].mxu0
        %v4121 = vadd.f32 0.0, %v4120
        %v4122 = vpop.f32.mrb[0].mxu0
        %v4123 = vpop.f32.mrb[0].mxu0
        %v4124 = vadd.f32 0.0, %v4123
        %v4125 = vpop.f32.mrb[0].mxu0
        %4126 = vdwg.mxu0
        %v4128 = vsel %vm1196, %v4023, 0
        %v4131 = vsel %vm1196, %v4027, 0
        %4133 = vmatprep.subr.bf16.mxu0 0
        %4134 = vmatpush1.bf16.xpose.msra.mxu0 %v4131
        %4135 = vmatprep.subr.bf16.mxu0 0
        %4136 = vmatpush1.bf16.xpose.msra.mxu0 0
        %4137 = vmatprep.subr.bf16.mxu0 0
        %4138 = vmatpush1.bf16.xpose.msra.mxu0 0
        %4139 = vmatprep.subr.bf16.mxu0 0
        %4140 = vmatpush1.bf16.xpose.msra.mxu0 0
        %4141 = vmatprep.subr.bf16.mxu0 0
        %4142 = vmatpush1.bf16.xpose.msra.mxu0 0
        %4143 = vmatprep.subr.bf16.mxu0 0
        %4144 = vmatpush1.bf16.xpose.msra.mxu0 0
        %4145 = vmatprep.subr.bf16.mxu0 0
        %4146 = vmatpush1.bf16.xpose.msra.mxu0 0
        %4147 = vmatprep.subr.bf16.mxu0 0
        %4148 = vmatpush1.bf16.xpose.msra.mxu0 0
        %4149 = vmatprep.subr.bf16.mxu0 0
        %4150 = vmatpush1.bf16.xpose.msra.mxu0 0
        %4151 = vmatprep.subr.bf16.mxu0 0
        %4152 = vmatpush1.bf16.xpose.msra.mxu0 0
        %4153 = vmatprep.subr.bf16.mxu0 0
        %4154 = vmatpush1.bf16.xpose.msra.mxu0 0
        %4155 = vmatprep.subr.bf16.mxu0 0
        %4156 = vmatpush1.bf16.xpose.msra.mxu0 0
        %4157 = vmatprep.subr.bf16.mxu0 0
        %4158 = vmatpush1.bf16.xpose.msra.mxu0 0
        %4159 = vmatprep.subr.bf16.mxu0 0
        %4160 = vmatpush1.bf16.xpose.msra.mxu0 0
        %4161 = vmatprep.subr.bf16.mxu0 0
        %4162 = vmatpush1.bf16.xpose.msra.mxu0 0
        %4163 = vmatprep.subr.bf16.mxu0 0
        %4164 = vmatpush1.bf16.xpose.msra.mxu0 0
        %4165 = vmatprep.mubr.bf16.mxu0 0
        %4166 = vmatmul.mubr.bf16.gmra.mrb[0].mxu0 %v4128
        %v4167 = vpop.f32.mrb[0].mxu0
        %v4168 = vadd.f32 0.0, %v4167
        %v4169 = vpop.f32.mrb[0].mxu0
        %v4170 = vpop.f32.mrb[0].mxu0
        %v4171 = vadd.f32 0.0, %v4170
        %v4172 = vpop.f32.mrb[0].mxu0
        %4173 = vdwg.mxu0
        %v4175 = vsel %vm1196, %v4024, 0
        %v4178 = vsel %vm1196, %v4028, 0
        %4180 = vmatprep.subr.bf16.mxu0 0
        %4181 = vmatpush1.bf16.xpose.msra.mxu0 %v4178
        %4182 = vmatprep.subr.bf16.mxu0 0
        %4183 = vmatpush1.bf16.xpose.msra.mxu0 0
        %4184 = vmatprep.subr.bf16.mxu0 0
        %4185 = vmatpush1.bf16.xpose.msra.mxu0 0
        %4186 = vmatprep.subr.bf16.mxu0 0
        %4187 = vmatpush1.bf16.xpose.msra.mxu0 0
        %4188 = vmatprep.subr.bf16.mxu0 0
        %4189 = vmatpush1.bf16.xpose.msra.mxu0 0
        %4190 = vmatprep.subr.bf16.mxu0 0
        %4191 = vmatpush1.bf16.xpose.msra.mxu0 0
        %4192 = vmatprep.subr.bf16.mxu0 0
        %4193 = vmatpush1.bf16.xpose.msra.mxu0 0
        %4194 = vmatprep.subr.bf16.mxu0 0
        %4195 = vmatpush1.bf16.xpose.msra.mxu0 0
        %4196 = vmatprep.subr.bf16.mxu0 0
        %4197 = vmatpush1.bf16.xpose.msra.mxu0 0
        %4198 = vmatprep.subr.bf16.mxu0 0
        %4199 = vmatpush1.bf16.xpose.msra.mxu0 0
        %4200 = vmatprep.subr.bf16.mxu0 0
        %4201 = vmatpush1.bf16.xpose.msra.mxu0 0
        %4202 = vmatprep.subr.bf16.mxu0 0
        %4203 = vmatpush1.bf16.xpose.msra.mxu0 0
        %4204 = vmatprep.subr.bf16.mxu0 0
        %4205 = vmatpush1.bf16.xpose.msra.mxu0 0
        %4206 = vmatprep.subr.bf16.mxu0 0
        %4207 = vmatpush1.bf16.xpose.msra.mxu0 0
        %4208 = vmatprep.subr.bf16.mxu0 0
        %4209 = vmatpush1.bf16.xpose.msra.mxu0 0
        %4210 = vmatprep.subr.bf16.mxu0 0
        %4211 = vmatpush1.bf16.xpose.msra.mxu0 0
        %4212 = vmatprep.mubr.bf16.mxu0 0
        %4213 = vmatmul.mubr.bf16.gmra.mrb[0].mxu0 %v4175
        %v4214 = vpop.f32.mrb[0].mxu0
        %v4215 = vadd.f32 0.0, %v4214
        %v4216 = vpop.f32.mrb[0].mxu0
        %v4217 = vpop.f32.mrb[0].mxu0
        %v4218 = vadd.f32 0.0, %v4217
        %v4219 = vpop.f32.mrb[0].mxu0
        %4220 = vdwg.mxu0
        %v4221 = vmul.f32 %v4074, 0.17677669
        %v4222 = vmul.f32 %v4077, 0.17677669
        %v4223 = vmul.f32 %v4121, 0.17677669
        %v4224 = vmul.f32 %v4124, 0.17677669
        %v4225 = vmul.f32 %v4168, 0.17677669
        %v4226 = vmul.f32 %v4171, 0.17677669
        %v4227 = vmul.f32 %v4215, 0.17677669
        %v4228 = vmul.f32 %v4218, 0.17677669
        %v4229 = vsel %vm1393, %v4221, -inf
        %4230 = vmax.xlane.f32.xlu0 %v4229
        %v4231 = vpop.xlane.xlu0 %4230
        %v4232 = vsel %vm1393, %v4222, -inf
        %4233 = vmax.xlane.f32.xlu0 %v4232
        %v4234 = vpop.xlane.xlu0 %4233
        %v4235 = vsel %vm1393, %v4223, -inf
        %4236 = vmax.xlane.f32.xlu0 %v4235
        %v4237 = vpop.xlane.xlu0 %4236
        %v4238 = vsel %vm1393, %v4224, -inf
        %4239 = vmax.xlane.f32.xlu0 %v4238
        %v4240 = vpop.xlane.xlu0 %4239
        %v4241 = vsel %vm1393, %v4225, -inf
        %4242 = vmax.xlane.f32.xlu0 %v4241
        %v4243 = vpop.xlane.xlu0 %4242
        %v4244 = vsel %vm1393, %v4226, -inf
        %4245 = vmax.xlane.f32.xlu0 %v4244
        %v4246 = vpop.xlane.xlu0 %4245
        %v4247 = vsel %vm1393, %v4227, -inf
        %4248 = vmax.xlane.f32.xlu0 %v4247
        %v4249 = vpop.xlane.xlu0 %4248
        %v4250 = vsel %vm1393, %v4228, -inf
        %4251 = vmax.xlane.f32.xlu0 %v4250
        %v4252 = vpop.xlane.xlu0 %4251
        %v4253 = vsub.f32 %v4221, %v4231
        %v4254 = vsub.f32 %v4222, %v4234
        %v4255 = vsub.f32 %v4223, %v4237
        %v4256 = vsub.f32 %v4224, %v4240
        %v4257 = vsub.f32 %v4225, %v4243
        %v4258 = vsub.f32 %v4226, %v4246
        %v4259 = vsub.f32 %v4227, %v4249
        %v4260 = vsub.f32 %v4228, %v4252
        %v4261 = vmul.f32 %v4253, 1.442695
        %v4262 = vpow.pop %v4261
        %v4263 = vmul.f32 %v4254, 1.442695
        %v4264 = vpow.pop %v4263
        %v4265 = vmul.f32 %v4255, 1.442695
        %v4266 = vpow.pop %v4265
        %v4267 = vmul.f32 %v4256, 1.442695
        %v4268 = vpow.pop %v4267
        %v4269 = vmul.f32 %v4257, 1.442695
        %v4270 = vpow.pop %v4269
        %v4271 = vmul.f32 %v4258, 1.442695
        %v4272 = vpow.pop %v4271
        %v4273 = vmul.f32 %v4259, 1.442695
        %v4274 = vpow.pop %v4273
        %v4275 = vmul.f32 %v4260, 1.442695
        %v4276 = vpow.pop %v4275
        %v4277 = vsel %vm1393, %v4262, 0.0
        %4278 = vadd.xlane.f32.xlu0 %v4277
        %v4279 = vpop.xlane.xlu0 %4278
        %v4280 = vsel %vm1393, %v4264, 0.0
        %4281 = vadd.xlane.f32.xlu0 %v4280
        %v4282 = vpop.xlane.xlu0 %4281
        %v4283 = vsel %vm1393, %v4266, 0.0
        %4284 = vadd.xlane.f32.xlu0 %v4283
        %v4285 = vpop.xlane.xlu0 %4284
        %v4286 = vsel %vm1393, %v4268, 0.0
        %4287 = vadd.xlane.f32.xlu0 %v4286
        %v4288 = vpop.xlane.xlu0 %4287
        %v4289 = vsel %vm1393, %v4270, 0.0
        %4290 = vadd.xlane.f32.xlu0 %v4289
        %v4291 = vpop.xlane.xlu0 %4290
        %v4292 = vsel %vm1393, %v4272, 0.0
        %4293 = vadd.xlane.f32.xlu0 %v4292
        %v4294 = vpop.xlane.xlu0 %4293
        %v4295 = vsel %vm1393, %v4274, 0.0
        %4296 = vadd.xlane.f32.xlu0 %v4295
        %v4297 = vpop.xlane.xlu0 %4296
        %v4298 = vsel %vm1393, %v4276, 0.0
        %4299 = vadd.xlane.f32.xlu0 %v4298
        %v4300 = vpop.xlane.xlu0 %4299
        %v4301 = vrcp.pop %v4279
        %v4302 = vrcp.pop %v4282
        %v4303 = vrcp.pop %v4285
        %v4304 = vrcp.pop %v4288
        %v4305 = vrcp.pop %v4291
        %v4306 = vrcp.pop %v4294
        %v4307 = vrcp.pop %v4297
        %v4308 = vrcp.pop %v4300
        %v4309 = vmul.f32 %v4262, %v4301
        %v4310 = vmul.f32 %v4264, %v4302
        %v4311 = vmul.f32 %v4266, %v4303
        %v4312 = vmul.f32 %v4268, %v4304
        %v4313 = vmul.f32 %v4270, %v4305
        %v4314 = vmul.f32 %v4272, %v4306
        %v4315 = vmul.f32 %v4274, %v4307
        %v4316 = vmul.f32 %v4276, %v4308
        %v4317 = vpack.c.bf16 %v4310, %v4309
        %v4318 = vpack.c.bf16 %v4312, %v4311
        %v4319 = vpack.c.bf16 %v4314, %v4313
        %v4320 = vpack.c.bf16 %v4316, %v4315
        %v4322 = vsel %vm1393, %v4317, 0
        %4324 = vmatprep.subr.bf16.mxu0 0
        %4325 = vmatpush1.bf16.msra.mxu0 %v4029
        %4326 = vmatprep.subr.bf16.mxu0 0
        %4327 = vmatpush1.bf16.msra.mxu0 0
        %4328 = vmatprep.subr.bf16.mxu0 0
        %4329 = vmatpush1.bf16.msra.mxu0 0
        %4330 = vmatprep.subr.bf16.mxu0 0
        %4331 = vmatpush1.bf16.msra.mxu0 0
        %4332 = vmatprep.subr.bf16.mxu0 0
        %4333 = vmatpush1.bf16.msra.mxu0 0
        %4334 = vmatprep.subr.bf16.mxu0 0
        %4335 = vmatpush1.bf16.msra.mxu0 0
        %4336 = vmatprep.subr.bf16.mxu0 0
        %4337 = vmatpush1.bf16.msra.mxu0 0
        %4338 = vmatprep.subr.bf16.mxu0 0
        %4339 = vmatpush1.bf16.msra.mxu0 0
        %4340 = vmatprep.subr.bf16.mxu0 0
        %4341 = vmatpush1.bf16.msra.mxu0 0
        %4342 = vmatprep.subr.bf16.mxu0 0
        %4343 = vmatpush1.bf16.msra.mxu0 0
        %4344 = vmatprep.subr.bf16.mxu0 0
        %4345 = vmatpush1.bf16.msra.mxu0 0
        %4346 = vmatprep.subr.bf16.mxu0 0
        %4347 = vmatpush1.bf16.msra.mxu0 0
        %4348 = vmatprep.subr.bf16.mxu0 0
        %4349 = vmatpush1.bf16.msra.mxu0 0
        %4350 = vmatprep.subr.bf16.mxu0 0
        %4351 = vmatpush1.bf16.msra.mxu0 0
        %4352 = vmatprep.subr.bf16.mxu0 0
        %4353 = vmatpush1.bf16.msra.mxu0 0
        %4354 = vmatprep.subr.bf16.mxu0 0
        %4355 = vmatpush1.bf16.msra.mxu0 0
        %4356 = vmatprep.mubr.bf16.mxu0 0
        %4357 = vmatmul.mubr.bf16.gmra.mrb[0].mxu0 %v4322
        %v4358 = vpop.f32.mrb[0].mxu0
        %v4359 = vadd.f32 0.0, %v4358
        %v4360 = vpop.f32.mrb[0].mxu0
        %v4361 = vpop.f32.mrb[0].mxu0
        %v4362 = vadd.f32 0.0, %v4361
        %v4363 = vpop.f32.mrb[0].mxu0
        %4364 = vdwg.mxu0
        %v4366 = vsel %vm1393, %v4318, 0
        %4368 = vmatprep.subr.bf16.mxu0 0
        %4369 = vmatpush1.bf16.msra.mxu0 %v4030
        %4370 = vmatprep.subr.bf16.mxu0 0
        %4371 = vmatpush1.bf16.msra.mxu0 0
        %4372 = vmatprep.subr.bf16.mxu0 0
        %4373 = vmatpush1.bf16.msra.mxu0 0
        %4374 = vmatprep.subr.bf16.mxu0 0
        %4375 = vmatpush1.bf16.msra.mxu0 0
        %4376 = vmatprep.subr.bf16.mxu0 0
        %4377 = vmatpush1.bf16.msra.mxu0 0
        %4378 = vmatprep.subr.bf16.mxu0 0
        %4379 = vmatpush1.bf16.msra.mxu0 0
        %4380 = vmatprep.subr.bf16.mxu0 0
        %4381 = vmatpush1.bf16.msra.mxu0 0
        %4382 = vmatprep.subr.bf16.mxu0 0
        %4383 = vmatpush1.bf16.msra.mxu0 0
        %4384 = vmatprep.subr.bf16.mxu0 0
        %4385 = vmatpush1.bf16.msra.mxu0 0
        %4386 = vmatprep.subr.bf16.mxu0 0
        %4387 = vmatpush1.bf16.msra.mxu0 0
        %4388 = vmatprep.subr.bf16.mxu0 0
        %4389 = vmatpush1.bf16.msra.mxu0 0
        %4390 = vmatprep.subr.bf16.mxu0 0
        %4391 = vmatpush1.bf16.msra.mxu0 0
        %4392 = vmatprep.subr.bf16.mxu0 0
        %4393 = vmatpush1.bf16.msra.mxu0 0
        %4394 = vmatprep.subr.bf16.mxu0 0
        %4395 = vmatpush1.bf16.msra.mxu0 0
        %4396 = vmatprep.subr.bf16.mxu0 0
        %4397 = vmatpush1.bf16.msra.mxu0 0
        %4398 = vmatprep.subr.bf16.mxu0 0
        %4399 = vmatpush1.bf16.msra.mxu0 0
        %4400 = vmatprep.mubr.bf16.mxu0 0
        %4401 = vmatmul.mubr.bf16.gmra.mrb[0].mxu0 %v4366
        %v4402 = vpop.f32.mrb[0].mxu0
        %v4403 = vadd.f32 0.0, %v4402
        %v4404 = vpop.f32.mrb[0].mxu0
        %v4405 = vpop.f32.mrb[0].mxu0
        %v4406 = vadd.f32 0.0, %v4405
        %v4407 = vpop.f32.mrb[0].mxu0
        %4408 = vdwg.mxu0
        %v4410 = vsel %vm1393, %v4319, 0
        %4412 = vmatprep.subr.bf16.mxu0 0
        %4413 = vmatpush1.bf16.msra.mxu0 %v4031
        %4414 = vmatprep.subr.bf16.mxu0 0
        %4415 = vmatpush1.bf16.msra.mxu0 0
        %4416 = vmatprep.subr.bf16.mxu0 0
        %4417 = vmatpush1.bf16.msra.mxu0 0
        %4418 = vmatprep.subr.bf16.mxu0 0
        %4419 = vmatpush1.bf16.msra.mxu0 0
        %4420 = vmatprep.subr.bf16.mxu0 0
        %4421 = vmatpush1.bf16.msra.mxu0 0
        %4422 = vmatprep.subr.bf16.mxu0 0
        %4423 = vmatpush1.bf16.msra.mxu0 0
        %4424 = vmatprep.subr.bf16.mxu0 0
        %4425 = vmatpush1.bf16.msra.mxu0 0
        %4426 = vmatprep.subr.bf16.mxu0 0
        %4427 = vmatpush1.bf16.msra.mxu0 0
        %4428 = vmatprep.subr.bf16.mxu0 0
        %4429 = vmatpush1.bf16.msra.mxu0 0
        %4430 = vmatprep.subr.bf16.mxu0 0
        %4431 = vmatpush1.bf16.msra.mxu0 0
        %4432 = vmatprep.subr.bf16.mxu0 0
        %4433 = vmatpush1.bf16.msra.mxu0 0
        %4434 = vmatprep.subr.bf16.mxu0 0
        %4435 = vmatpush1.bf16.msra.mxu0 0
        %4436 = vmatprep.subr.bf16.mxu0 0
        %4437 = vmatpush1.bf16.msra.mxu0 0
        %4438 = vmatprep.subr.bf16.mxu0 0
        %4439 = vmatpush1.bf16.msra.mxu0 0
        %4440 = vmatprep.subr.bf16.mxu0 0
        %4441 = vmatpush1.bf16.msra.mxu0 0
        %4442 = vmatprep.subr.bf16.mxu0 0
        %4443 = vmatpush1.bf16.msra.mxu0 0
        %4444 = vmatprep.mubr.bf16.mxu0 0
        %4445 = vmatmul.mubr.bf16.gmra.mrb[0].mxu0 %v4410
        %v4446 = vpop.f32.mrb[0].mxu0
        %v4447 = vadd.f32 0.0, %v4446
        %v4448 = vpop.f32.mrb[0].mxu0
        %v4449 = vpop.f32.mrb[0].mxu0
        %v4450 = vadd.f32 0.0, %v4449
        %v4451 = vpop.f32.mrb[0].mxu0
        %4452 = vdwg.mxu0
        %v4454 = vsel %vm1393, %v4320, 0
        %4456 = vmatprep.subr.bf16.mxu0 0
        %4457 = vmatpush1.bf16.msra.mxu0 %v4032
        %4458 = vmatprep.subr.bf16.mxu0 0
        %4459 = vmatpush1.bf16.msra.mxu0 0
        %4460 = vmatprep.subr.bf16.mxu0 0
        %4461 = vmatpush1.bf16.msra.mxu0 0
        %4462 = vmatprep.subr.bf16.mxu0 0
        %4463 = vmatpush1.bf16.msra.mxu0 0
        %4464 = vmatprep.subr.bf16.mxu0 0
        %4465 = vmatpush1.bf16.msra.mxu0 0
        %4466 = vmatprep.subr.bf16.mxu0 0
        %4467 = vmatpush1.bf16.msra.mxu0 0
        %4468 = vmatprep.subr.bf16.mxu0 0
        %4469 = vmatpush1.bf16.msra.mxu0 0
        %4470 = vmatprep.subr.bf16.mxu0 0
        %4471 = vmatpush1.bf16.msra.mxu0 0
        %4472 = vmatprep.subr.bf16.mxu0 0
        %4473 = vmatpush1.bf16.msra.mxu0 0
        %4474 = vmatprep.subr.bf16.mxu0 0
        %4475 = vmatpush1.bf16.msra.mxu0 0
        %4476 = vmatprep.subr.bf16.mxu0 0
        %4477 = vmatpush1.bf16.msra.mxu0 0
        %4478 = vmatprep.subr.bf16.mxu0 0
        %4479 = vmatpush1.bf16.msra.mxu0 0
        %4480 = vmatprep.subr.bf16.mxu0 0
        %4481 = vmatpush1.bf16.msra.mxu0 0
        %4482 = vmatprep.subr.bf16.mxu0 0
        %4483 = vmatpush1.bf16.msra.mxu0 0
        %4484 = vmatprep.subr.bf16.mxu0 0
        %4485 = vmatpush1.bf16.msra.mxu0 0
        %4486 = vmatprep.subr.bf16.mxu0 0
        %4487 = vmatpush1.bf16.msra.mxu0 0
        %4488 = vmatprep.mubr.bf16.mxu0 0
        %4489 = vmatmul.mubr.bf16.gmra.mrb[0].mxu0 %v4454
        %v4490 = vpop.f32.mrb[0].mxu0
        %v4491 = vadd.f32 0.0, %v4490
        %v4492 = vpop.f32.mrb[0].mxu0
        %v4493 = vpop.f32.mrb[0].mxu0
        %v4494 = vadd.f32 0.0, %v4493
        %v4495 = vpop.f32.mrb[0].mxu0
        %4496 = vdwg.mxu0
        %v4497 = vpack.c.bf16 %v4362, %v4359
        %v4498 = vpack.c.bf16 %v4406, %v4403
        %v4499 = vpack.c.bf16 %v4450, %v4447
        %v4500 = vpack.c.bf16 %v4494, %v4491
        %v4501 = vld [vmem:[#allocation13] sm:$0xf]
        %v4502 = vld [vmem:[#allocation13 + $0x4] sm:$0xf]
        %v4503 = vld [vmem:[#allocation13 + $0x8] sm:$0xf]
        %v4504 = vld [vmem:[#allocation13 + $0xc] sm:$0xf]
        %4506 = vrot.lane.b32.xlu0 %v4021, 96
        %v4507 = vpop.permute.xlu0 %4506
        %4509 = vrot.lane.b32.xlu0 %v4025, 96
        %v4510 = vpop.permute.xlu0 %4509
        %v4512 = vsel %vm1196, %v4507, 0
        %v4515 = vsel %vm1196, %v4510, 0
        %4517 = vmatprep.subr.bf16.mxu0 0
        %4518 = vmatpush1.bf16.xpose.msra.mxu0 %v4515
        %4519 = vmatprep.subr.bf16.mxu0 0
        %4520 = vmatpush1.bf16.xpose.msra.mxu0 0
        %4521 = vmatprep.subr.bf16.mxu0 0
        %4522 = vmatpush1.bf16.xpose.msra.mxu0 0
        %4523 = vmatprep.subr.bf16.mxu0 0
        %4524 = vmatpush1.bf16.xpose.msra.mxu0 0
        %4525 = vmatprep.subr.bf16.mxu0 0
        %4526 = vmatpush1.bf16.xpose.msra.mxu0 0
        %4527 = vmatprep.subr.bf16.mxu0 0
        %4528 = vmatpush1.bf16.xpose.msra.mxu0 0
        %4529 = vmatprep.subr.bf16.mxu0 0
        %4530 = vmatpush1.bf16.xpose.msra.mxu0 0
        %4531 = vmatprep.subr.bf16.mxu0 0
        %4532 = vmatpush1.bf16.xpose.msra.mxu0 0
        %4533 = vmatprep.subr.bf16.mxu0 0
        %4534 = vmatpush1.bf16.xpose.msra.mxu0 0
        %4535 = vmatprep.subr.bf16.mxu0 0
        %4536 = vmatpush1.bf16.xpose.msra.mxu0 0
        %4537 = vmatprep.subr.bf16.mxu0 0
        %4538 = vmatpush1.bf16.xpose.msra.mxu0 0
        %4539 = vmatprep.subr.bf16.mxu0 0
        %4540 = vmatpush1.bf16.xpose.msra.mxu0 0
        %4541 = vmatprep.subr.bf16.mxu0 0
        %4542 = vmatpush1.bf16.xpose.msra.mxu0 0
        %4543 = vmatprep.subr.bf16.mxu0 0
        %4544 = vmatpush1.bf16.xpose.msra.mxu0 0
        %4545 = vmatprep.subr.bf16.mxu0 0
        %4546 = vmatpush1.bf16.xpose.msra.mxu0 0
        %4547 = vmatprep.subr.bf16.mxu0 0
        %4548 = vmatpush1.bf16.xpose.msra.mxu0 0
        %4549 = vmatprep.mubr.bf16.mxu0 0
        %4550 = vmatmul.mubr.bf16.gmra.mrb[0].mxu0 %v4512
        %v4551 = vpop.f32.mrb[0].mxu0
        %v4552 = vadd.f32 0.0, %v4551
        %v4553 = vpop.f32.mrb[0].mxu0
        %v4554 = vpop.f32.mrb[0].mxu0
        %v4555 = vadd.f32 0.0, %v4554
        %v4556 = vpop.f32.mrb[0].mxu0
        %4557 = vdwg.mxu0
        %4559 = vrot.lane.b32.xlu0 %v4022, 96
        %v4560 = vpop.permute.xlu0 %4559
        %4562 = vrot.lane.b32.xlu0 %v4026, 96
        %v4563 = vpop.permute.xlu0 %4562
        %v4565 = vsel %vm1196, %v4560, 0
        %v4568 = vsel %vm1196, %v4563, 0
        %4570 = vmatprep.subr.bf16.mxu0 0
        %4571 = vmatpush1.bf16.xpose.msra.mxu0 %v4568
        %4572 = vmatprep.subr.bf16.mxu0 0
        %4573 = vmatpush1.bf16.xpose.msra.mxu0 0
        %4574 = vmatprep.subr.bf16.mxu0 0
        %4575 = vmatpush1.bf16.xpose.msra.mxu0 0
        %4576 = vmatprep.subr.bf16.mxu0 0
        %4577 = vmatpush1.bf16.xpose.msra.mxu0 0
        %4578 = vmatprep.subr.bf16.mxu0 0
        %4579 = vmatpush1.bf16.xpose.msra.mxu0 0
        %4580 = vmatprep.subr.bf16.mxu0 0
        %4581 = vmatpush1.bf16.xpose.msra.mxu0 0
        %4582 = vmatprep.subr.bf16.mxu0 0
        %4583 = vmatpush1.bf16.xpose.msra.mxu0 0
        %4584 = vmatprep.subr.bf16.mxu0 0
        %4585 = vmatpush1.bf16.xpose.msra.mxu0 0
        %4586 = vmatprep.subr.bf16.mxu0 0
        %4587 = vmatpush1.bf16.xpose.msra.mxu0 0
        %4588 = vmatprep.subr.bf16.mxu0 0
        %4589 = vmatpush1.bf16.xpose.msra.mxu0 0
        %4590 = vmatprep.subr.bf16.mxu0 0
        %4591 = vmatpush1.bf16.xpose.msra.mxu0 0
        %4592 = vmatprep.subr.bf16.mxu0 0
        %4593 = vmatpush1.bf16.xpose.msra.mxu0 0
        %4594 = vmatprep.subr.bf16.mxu0 0
        %4595 = vmatpush1.bf16.xpose.msra.mxu0 0
        %4596 = vmatprep.subr.bf16.mxu0 0
        %4597 = vmatpush1.bf16.xpose.msra.mxu0 0
        %4598 = vmatprep.subr.bf16.mxu0 0
        %4599 = vmatpush1.bf16.xpose.msra.mxu0 0
        %4600 = vmatprep.subr.bf16.mxu0 0
        %4601 = vmatpush1.bf16.xpose.msra.mxu0 0
        %4602 = vmatprep.mubr.bf16.mxu0 0
        %4603 = vmatmul.mubr.bf16.gmra.mrb[0].mxu0 %v4565
        %v4604 = vpop.f32.mrb[0].mxu0
        %v4605 = vadd.f32 0.0, %v4604
        %v4606 = vpop.f32.mrb[0].mxu0
        %v4607 = vpop.f32.mrb[0].mxu0
        %v4608 = vadd.f32 0.0, %v4607
        %v4609 = vpop.f32.mrb[0].mxu0
        %4610 = vdwg.mxu0
        %4612 = vrot.lane.b32.xlu0 %v4023, 96
        %v4613 = vpop.permute.xlu0 %4612
        %4615 = vrot.lane.b32.xlu0 %v4027, 96
        %v4616 = vpop.permute.xlu0 %4615
        %v4618 = vsel %vm1196, %v4613, 0
        %v4621 = vsel %vm1196, %v4616, 0
        %4623 = vmatprep.subr.bf16.mxu0 0
        %4624 = vmatpush1.bf16.xpose.msra.mxu0 %v4621
        %4625 = vmatprep.subr.bf16.mxu0 0
        %4626 = vmatpush1.bf16.xpose.msra.mxu0 0
        %4627 = vmatprep.subr.bf16.mxu0 0
        %4628 = vmatpush1.bf16.xpose.msra.mxu0 0
        %4629 = vmatprep.subr.bf16.mxu0 0
        %4630 = vmatpush1.bf16.xpose.msra.mxu0 0
        %4631 = vmatprep.subr.bf16.mxu0 0
        %4632 = vmatpush1.bf16.xpose.msra.mxu0 0
        %4633 = vmatprep.subr.bf16.mxu0 0
        %4634 = vmatpush1.bf16.xpose.msra.mxu0 0
        %4635 = vmatprep.subr.bf16.mxu0 0
        %4636 = vmatpush1.bf16.xpose.msra.mxu0 0
        %4637 = vmatprep.subr.bf16.mxu0 0
        %4638 = vmatpush1.bf16.xpose.msra.mxu0 0
        %4639 = vmatprep.subr.bf16.mxu0 0
        %4640 = vmatpush1.bf16.xpose.msra.mxu0 0
        %4641 = vmatprep.subr.bf16.mxu0 0
        %4642 = vmatpush1.bf16.xpose.msra.mxu0 0
        %4643 = vmatprep.subr.bf16.mxu0 0
        %4644 = vmatpush1.bf16.xpose.msra.mxu0 0
        %4645 = vmatprep.subr.bf16.mxu0 0
        %4646 = vmatpush1.bf16.xpose.msra.mxu0 0
        %4647 = vmatprep.subr.bf16.mxu0 0
        %4648 = vmatpush1.bf16.xpose.msra.mxu0 0
        %4649 = vmatprep.subr.bf16.mxu0 0
        %4650 = vmatpush1.bf16.xpose.msra.mxu0 0
        %4651 = vmatprep.subr.bf16.mxu0 0
        %4652 = vmatpush1.bf16.xpose.msra.mxu0 0
        %4653 = vmatprep.subr.bf16.mxu0 0
        %4654 = vmatpush1.bf16.xpose.msra.mxu0 0
        %4655 = vmatprep.mubr.bf16.mxu0 0
        %4656 = vmatmul.mubr.bf16.gmra.mrb[0].mxu0 %v4618
        %v4657 = vpop.f32.mrb[0].mxu0
        %v4658 = vadd.f32 0.0, %v4657
        %v4659 = vpop.f32.mrb[0].mxu0
        %v4660 = vpop.f32.mrb[0].mxu0
        %v4661 = vadd.f32 0.0, %v4660
        %v4662 = vpop.f32.mrb[0].mxu0
        %4663 = vdwg.mxu0
        %4665 = vrot.lane.b32.xlu0 %v4024, 96
        %v4666 = vpop.permute.xlu0 %4665
        %4668 = vrot.lane.b32.xlu0 %v4028, 96
        %v4669 = vpop.permute.xlu0 %4668
        %v4671 = vsel %vm1196, %v4666, 0
        %v4674 = vsel %vm1196, %v4669, 0
        %4676 = vmatprep.subr.bf16.mxu0 0
        %4677 = vmatpush1.bf16.xpose.msra.mxu0 %v4674
        %4678 = vmatprep.subr.bf16.mxu0 0
        %4679 = vmatpush1.bf16.xpose.msra.mxu0 0
        %4680 = vmatprep.subr.bf16.mxu0 0
        %4681 = vmatpush1.bf16.xpose.msra.mxu0 0
        %4682 = vmatprep.subr.bf16.mxu0 0
        %4683 = vmatpush1.bf16.xpose.msra.mxu0 0
        %4684 = vmatprep.subr.bf16.mxu0 0
        %4685 = vmatpush1.bf16.xpose.msra.mxu0 0
        %4686 = vmatprep.subr.bf16.mxu0 0
        %4687 = vmatpush1.bf16.xpose.msra.mxu0 0
        %4688 = vmatprep.subr.bf16.mxu0 0
        %4689 = vmatpush1.bf16.xpose.msra.mxu0 0
        %4690 = vmatprep.subr.bf16.mxu0 0
        %4691 = vmatpush1.bf16.xpose.msra.mxu0 0
        %4692 = vmatprep.subr.bf16.mxu0 0
        %4693 = vmatpush1.bf16.xpose.msra.mxu0 0
        %4694 = vmatprep.subr.bf16.mxu0 0
        %4695 = vmatpush1.bf16.xpose.msra.mxu0 0
        %4696 = vmatprep.subr.bf16.mxu0 0
        %4697 = vmatpush1.bf16.xpose.msra.mxu0 0
        %4698 = vmatprep.subr.bf16.mxu0 0
        %4699 = vmatpush1.bf16.xpose.msra.mxu0 0
        %4700 = vmatprep.subr.bf16.mxu0 0
        %4701 = vmatpush1.bf16.xpose.msra.mxu0 0
        %4702 = vmatprep.subr.bf16.mxu0 0
        %4703 = vmatpush1.bf16.xpose.msra.mxu0 0
        %4704 = vmatprep.subr.bf16.mxu0 0
        %4705 = vmatpush1.bf16.xpose.msra.mxu0 0
        %4706 = vmatprep.subr.bf16.mxu0 0
        %4707 = vmatpush1.bf16.xpose.msra.mxu0 0
        %4708 = vmatprep.mubr.bf16.mxu0 0
        %4709 = vmatmul.mubr.bf16.gmra.mrb[0].mxu0 %v4671
        %v4710 = vpop.f32.mrb[0].mxu0
        %v4711 = vadd.f32 0.0, %v4710
        %v4712 = vpop.f32.mrb[0].mxu0
        %v4713 = vpop.f32.mrb[0].mxu0
        %v4714 = vadd.f32 0.0, %v4713
        %v4715 = vpop.f32.mrb[0].mxu0
        %4716 = vdwg.mxu0
        %v4717 = vmul.f32 %v4552, 0.17677669
        %v4718 = vmul.f32 %v4555, 0.17677669
        %v4719 = vmul.f32 %v4605, 0.17677669
        %v4720 = vmul.f32 %v4608, 0.17677669
        %v4721 = vmul.f32 %v4658, 0.17677669
        %v4722 = vmul.f32 %v4661, 0.17677669
        %v4723 = vmul.f32 %v4711, 0.17677669
        %v4724 = vmul.f32 %v4714, 0.17677669
        %v4725 = vsel %vm1393, %v4717, -inf
        %4726 = vmax.xlane.f32.xlu0 %v4725
        %v4727 = vpop.xlane.xlu0 %4726
        %v4728 = vsel %vm1393, %v4718, -inf
        %4729 = vmax.xlane.f32.xlu0 %v4728
        %v4730 = vpop.xlane.xlu0 %4729
        %v4731 = vsel %vm1393, %v4719, -inf
        %4732 = vmax.xlane.f32.xlu0 %v4731
        %v4733 = vpop.xlane.xlu0 %4732
        %v4734 = vsel %vm1393, %v4720, -inf
        %4735 = vmax.xlane.f32.xlu0 %v4734
        %v4736 = vpop.xlane.xlu0 %4735
        %v4737 = vsel %vm1393, %v4721, -inf
        %4738 = vmax.xlane.f32.xlu0 %v4737
        %v4739 = vpop.xlane.xlu0 %4738
        %v4740 = vsel %vm1393, %v4722, -inf
        %4741 = vmax.xlane.f32.xlu0 %v4740
        %v4742 = vpop.xlane.xlu0 %4741
        %v4743 = vsel %vm1393, %v4723, -inf
        %4744 = vmax.xlane.f32.xlu0 %v4743
        %v4745 = vpop.xlane.xlu0 %4744
        %v4746 = vsel %vm1393, %v4724, -inf
        %4747 = vmax.xlane.f32.xlu0 %v4746
        %v4748 = vpop.xlane.xlu0 %4747
        %v4749 = vsub.f32 %v4717, %v4727
        %v4750 = vsub.f32 %v4718, %v4730
        %v4751 = vsub.f32 %v4719, %v4733
        %v4752 = vsub.f32 %v4720, %v4736
        %v4753 = vsub.f32 %v4721, %v4739
        %v4754 = vsub.f32 %v4722, %v4742
        %v4755 = vsub.f32 %v4723, %v4745
        %v4756 = vsub.f32 %v4724, %v4748
        %v4757 = vmul.f32 %v4749, 1.442695
        %v4758 = vpow.pop %v4757
        %v4759 = vmul.f32 %v4750, 1.442695
        %v4760 = vpow.pop %v4759
        %v4761 = vmul.f32 %v4751, 1.442695
        %v4762 = vpow.pop %v4761
        %v4763 = vmul.f32 %v4752, 1.442695
        %v4764 = vpow.pop %v4763
        %v4765 = vmul.f32 %v4753, 1.442695
        %v4766 = vpow.pop %v4765
        %v4767 = vmul.f32 %v4754, 1.442695
        %v4768 = vpow.pop %v4767
        %v4769 = vmul.f32 %v4755, 1.442695
        %v4770 = vpow.pop %v4769
        %v4771 = vmul.f32 %v4756, 1.442695
        %v4772 = vpow.pop %v4771
        %v4773 = vsel %vm1393, %v4758, 0.0
        %4774 = vadd.xlane.f32.xlu0 %v4773
        %v4775 = vpop.xlane.xlu0 %4774
        %v4776 = vsel %vm1393, %v4760, 0.0
        %4777 = vadd.xlane.f32.xlu0 %v4776
        %v4778 = vpop.xlane.xlu0 %4777
        %v4779 = vsel %vm1393, %v4762, 0.0
        %4780 = vadd.xlane.f32.xlu0 %v4779
        %v4781 = vpop.xlane.xlu0 %4780
        %v4782 = vsel %vm1393, %v4764, 0.0
        %4783 = vadd.xlane.f32.xlu0 %v4782
        %v4784 = vpop.xlane.xlu0 %4783
        %v4785 = vsel %vm1393, %v4766, 0.0
        %4786 = vadd.xlane.f32.xlu0 %v4785
        %v4787 = vpop.xlane.xlu0 %4786
        %v4788 = vsel %vm1393, %v4768, 0.0
        %4789 = vadd.xlane.f32.xlu0 %v4788
        %v4790 = vpop.xlane.xlu0 %4789
        %v4791 = vsel %vm1393, %v4770, 0.0
        %4792 = vadd.xlane.f32.xlu0 %v4791
        %v4793 = vpop.xlane.xlu0 %4792
        %v4794 = vsel %vm1393, %v4772, 0.0
        %4795 = vadd.xlane.f32.xlu0 %v4794
        %v4796 = vpop.xlane.xlu0 %4795
        %v4797 = vrcp.pop %v4775
        %v4798 = vrcp.pop %v4778
        %v4799 = vrcp.pop %v4781
        %v4800 = vrcp.pop %v4784
        %v4801 = vrcp.pop %v4787
        %v4802 = vrcp.pop %v4790
        %v4803 = vrcp.pop %v4793
        %v4804 = vrcp.pop %v4796
        %v4805 = vmul.f32 %v4758, %v4797
        %v4806 = vmul.f32 %v4760, %v4798
        %v4807 = vmul.f32 %v4762, %v4799
        %v4808 = vmul.f32 %v4764, %v4800
        %v4809 = vmul.f32 %v4766, %v4801
        %v4810 = vmul.f32 %v4768, %v4802
        %v4811 = vmul.f32 %v4770, %v4803
        %v4812 = vmul.f32 %v4772, %v4804
        %v4813 = vpack.c.bf16 %v4806, %v4805
        %v4814 = vpack.c.bf16 %v4808, %v4807
        %v4815 = vpack.c.bf16 %v4810, %v4809
        %v4816 = vpack.c.bf16 %v4812, %v4811
        %4818 = vrot.lane.b32.xlu0 %v4029, 96
        %v4819 = vpop.permute.xlu0 %4818
        %v4822 = vsel %vm1393, %v4813, 0
        %4824 = vmatprep.subr.bf16.mxu0 0
        %4825 = vmatpush1.bf16.msra.mxu0 %v4819
        %4826 = vmatprep.subr.bf16.mxu0 0
        %4827 = vmatpush1.bf16.msra.mxu0 0
        %4828 = vmatprep.subr.bf16.mxu0 0
        %4829 = vmatpush1.bf16.msra.mxu0 0
        %4830 = vmatprep.subr.bf16.mxu0 0
        %4831 = vmatpush1.bf16.msra.mxu0 0
        %4832 = vmatprep.subr.bf16.mxu0 0
        %4833 = vmatpush1.bf16.msra.mxu0 0
        %4834 = vmatprep.subr.bf16.mxu0 0
        %4835 = vmatpush1.bf16.msra.mxu0 0
        %4836 = vmatprep.subr.bf16.mxu0 0
        %4837 = vmatpush1.bf16.msra.mxu0 0
        %4838 = vmatprep.subr.bf16.mxu0 0
        %4839 = vmatpush1.bf16.msra.mxu0 0
        %4840 = vmatprep.subr.bf16.mxu0 0
        %4841 = vmatpush1.bf16.msra.mxu0 0
        %4842 = vmatprep.subr.bf16.mxu0 0
        %4843 = vmatpush1.bf16.msra.mxu0 0
        %4844 = vmatprep.subr.bf16.mxu0 0
        %4845 = vmatpush1.bf16.msra.mxu0 0
        %4846 = vmatprep.subr.bf16.mxu0 0
        %4847 = vmatpush1.bf16.msra.mxu0 0
        %4848 = vmatprep.subr.bf16.mxu0 0
        %4849 = vmatpush1.bf16.msra.mxu0 0
        %4850 = vmatprep.subr.bf16.mxu0 0
        %4851 = vmatpush1.bf16.msra.mxu0 0
        %4852 = vmatprep.subr.bf16.mxu0 0
        %4853 = vmatpush1.bf16.msra.mxu0 0
        %4854 = vmatprep.subr.bf16.mxu0 0
        %4855 = vmatpush1.bf16.msra.mxu0 0
        %4856 = vmatprep.mubr.bf16.mxu0 0
        %4857 = vmatmul.mubr.bf16.gmra.mrb[0].mxu0 %v4822
        %v4858 = vpop.f32.mrb[0].mxu0
        %v4859 = vadd.f32 0.0, %v4858
        %v4860 = vpop.f32.mrb[0].mxu0
        %v4861 = vpop.f32.mrb[0].mxu0
        %v4862 = vadd.f32 0.0, %v4861
        %v4863 = vpop.f32.mrb[0].mxu0
        %4864 = vdwg.mxu0
        %4866 = vrot.lane.b32.xlu0 %v4030, 96
        %v4867 = vpop.permute.xlu0 %4866
        %v4870 = vsel %vm1393, %v4814, 0
        %4872 = vmatprep.subr.bf16.mxu0 0
        %4873 = vmatpush1.bf16.msra.mxu0 %v4867
        %4874 = vmatprep.subr.bf16.mxu0 0
        %4875 = vmatpush1.bf16.msra.mxu0 0
        %4876 = vmatprep.subr.bf16.mxu0 0
        %4877 = vmatpush1.bf16.msra.mxu0 0
        %4878 = vmatprep.subr.bf16.mxu0 0
        %4879 = vmatpush1.bf16.msra.mxu0 0
        %4880 = vmatprep.subr.bf16.mxu0 0
        %4881 = vmatpush1.bf16.msra.mxu0 0
        %4882 = vmatprep.subr.bf16.mxu0 0
        %4883 = vmatpush1.bf16.msra.mxu0 0
        %4884 = vmatprep.subr.bf16.mxu0 0
        %4885 = vmatpush1.bf16.msra.mxu0 0
        %4886 = vmatprep.subr.bf16.mxu0 0
        %4887 = vmatpush1.bf16.msra.mxu0 0
        %4888 = vmatprep.subr.bf16.mxu0 0
        %4889 = vmatpush1.bf16.msra.mxu0 0
        %4890 = vmatprep.subr.bf16.mxu0 0
        %4891 = vmatpush1.bf16.msra.mxu0 0
        %4892 = vmatprep.subr.bf16.mxu0 0
        %4893 = vmatpush1.bf16.msra.mxu0 0
        %4894 = vmatprep.subr.bf16.mxu0 0
        %4895 = vmatpush1.bf16.msra.mxu0 0
        %4896 = vmatprep.subr.bf16.mxu0 0
        %4897 = vmatpush1.bf16.msra.mxu0 0
        %4898 = vmatprep.subr.bf16.mxu0 0
        %4899 = vmatpush1.bf16.msra.mxu0 0
        %4900 = vmatprep.subr.bf16.mxu0 0
        %4901 = vmatpush1.bf16.msra.mxu0 0
        %4902 = vmatprep.subr.bf16.mxu0 0
        %4903 = vmatpush1.bf16.msra.mxu0 0
        %4904 = vmatprep.mubr.bf16.mxu0 0
        %4905 = vmatmul.mubr.bf16.gmra.mrb[0].mxu0 %v4870
        %v4906 = vpop.f32.mrb[0].mxu0
        %v4907 = vadd.f32 0.0, %v4906
        %v4908 = vpop.f32.mrb[0].mxu0
        %v4909 = vpop.f32.mrb[0].mxu0
        %v4910 = vadd.f32 0.0, %v4909
        %v4911 = vpop.f32.mrb[0].mxu0
        %4912 = vdwg.mxu0
        %4914 = vrot.lane.b32.xlu0 %v4031, 96
        %v4915 = vpop.permute.xlu0 %4914
        %v4918 = vsel %vm1393, %v4815, 0
        %4920 = vmatprep.subr.bf16.mxu0 0
        %4921 = vmatpush1.bf16.msra.mxu0 %v4915
        %4922 = vmatprep.subr.bf16.mxu0 0
        %4923 = vmatpush1.bf16.msra.mxu0 0
        %4924 = vmatprep.subr.bf16.mxu0 0
        %4925 = vmatpush1.bf16.msra.mxu0 0
        %4926 = vmatprep.subr.bf16.mxu0 0
        %4927 = vmatpush1.bf16.msra.mxu0 0
        %4928 = vmatprep.subr.bf16.mxu0 0
        %4929 = vmatpush1.bf16.msra.mxu0 0
        %4930 = vmatprep.subr.bf16.mxu0 0
        %4931 = vmatpush1.bf16.msra.mxu0 0
        %4932 = vmatprep.subr.bf16.mxu0 0
        %4933 = vmatpush1.bf16.msra.mxu0 0
        %4934 = vmatprep.subr.bf16.mxu0 0
        %4935 = vmatpush1.bf16.msra.mxu0 0
        %4936 = vmatprep.subr.bf16.mxu0 0
        %4937 = vmatpush1.bf16.msra.mxu0 0
        %4938 = vmatprep.subr.bf16.mxu0 0
        %4939 = vmatpush1.bf16.msra.mxu0 0
        %4940 = vmatprep.subr.bf16.mxu0 0
        %4941 = vmatpush1.bf16.msra.mxu0 0
        %4942 = vmatprep.subr.bf16.mxu0 0
        %4943 = vmatpush1.bf16.msra.mxu0 0
        %4944 = vmatprep.subr.bf16.mxu0 0
        %4945 = vmatpush1.bf16.msra.mxu0 0
        %4946 = vmatprep.subr.bf16.mxu0 0
        %4947 = vmatpush1.bf16.msra.mxu0 0
        %4948 = vmatprep.subr.bf16.mxu0 0
        %4949 = vmatpush1.bf16.msra.mxu0 0
        %4950 = vmatprep.subr.bf16.mxu0 0
        %4951 = vmatpush1.bf16.msra.mxu0 0
        %4952 = vmatprep.mubr.bf16.mxu0 0
        %4953 = vmatmul.mubr.bf16.gmra.mrb[0].mxu0 %v4918
        %v4954 = vpop.f32.mrb[0].mxu0
        %v4955 = vadd.f32 0.0, %v4954
        %v4956 = vpop.f32.mrb[0].mxu0
        %v4957 = vpop.f32.mrb[0].mxu0
        %v4958 = vadd.f32 0.0, %v4957
        %v4959 = vpop.f32.mrb[0].mxu0
        %4960 = vdwg.mxu0
        %4962 = vrot.lane.b32.xlu0 %v4032, 96
        %v4963 = vpop.permute.xlu0 %4962
        %v4966 = vsel %vm1393, %v4816, 0
        %4968 = vmatprep.subr.bf16.mxu0 0
        %4969 = vmatpush1.bf16.msra.mxu0 %v4963
        %4970 = vmatprep.subr.bf16.mxu0 0
        %4971 = vmatpush1.bf16.msra.mxu0 0
        %4972 = vmatprep.subr.bf16.mxu0 0
        %4973 = vmatpush1.bf16.msra.mxu0 0
        %4974 = vmatprep.subr.bf16.mxu0 0
        %4975 = vmatpush1.bf16.msra.mxu0 0
        %4976 = vmatprep.subr.bf16.mxu0 0
        %4977 = vmatpush1.bf16.msra.mxu0 0
        %4978 = vmatprep.subr.bf16.mxu0 0
        %4979 = vmatpush1.bf16.msra.mxu0 0
        %4980 = vmatprep.subr.bf16.mxu0 0
        %4981 = vmatpush1.bf16.msra.mxu0 0
        %4982 = vmatprep.subr.bf16.mxu0 0
        %4983 = vmatpush1.bf16.msra.mxu0 0
        %4984 = vmatprep.subr.bf16.mxu0 0
        %4985 = vmatpush1.bf16.msra.mxu0 0
        %4986 = vmatprep.subr.bf16.mxu0 0
        %4987 = vmatpush1.bf16.msra.mxu0 0
        %4988 = vmatprep.subr.bf16.mxu0 0
        %4989 = vmatpush1.bf16.msra.mxu0 0
        %4990 = vmatprep.subr.bf16.mxu0 0
        %4991 = vmatpush1.bf16.msra.mxu0 0
        %4992 = vmatprep.subr.bf16.mxu0 0
        %4993 = vmatpush1.bf16.msra.mxu0 0
        %4994 = vmatprep.subr.bf16.mxu0 0
        %4995 = vmatpush1.bf16.msra.mxu0 0
        %4996 = vmatprep.subr.bf16.mxu0 0
        %4997 = vmatpush1.bf16.msra.mxu0 0
        %4998 = vmatprep.subr.bf16.mxu0 0
        %4999 = vmatpush1.bf16.msra.mxu0 0
        %5000 = vmatprep.mubr.bf16.mxu0 0
        %5001 = vmatmul.mubr.bf16.gmra.mrb[0].mxu0 %v4966
        %v5002 = vpop.f32.mrb[0].mxu0
        %v5003 = vadd.f32 0.0, %v5002
        %v5004 = vpop.f32.mrb[0].mxu0
        %v5005 = vpop.f32.mrb[0].mxu0
        %v5006 = vadd.f32 0.0, %v5005
        %v5007 = vpop.f32.mrb[0].mxu0
        %5008 = vdwg.mxu0
        %v5009 = vpack.c.bf16 %v4862, %v4859
        %v5010 = vpack.c.bf16 %v4910, %v4907
        %v5011 = vpack.c.bf16 %v4958, %v4955
        %v5012 = vpack.c.bf16 %v5006, %v5003
        %v5013 = vld [vmem:[#allocation13 + $0x10] sm:$0xf]
        %v5014 = vld [vmem:[#allocation13 + $0x14] sm:$0xf]
        %v5015 = vld [vmem:[#allocation13 + $0x18] sm:$0xf]
        %v5016 = vld [vmem:[#allocation13 + $0x1c] sm:$0xf]
        %v5021 = vunpack.c.l.b16 %v5013
        %v5022 = vunpack.c.l.b16 %v5014
        %v5023 = vunpack.c.l.b16 %v5015
        %v5024 = vunpack.c.l.b16 %v5016
        %v5025 = vpack.c.b16 %v5022, %v5021
        %v5026 = vpack.c.b16 %v5024, %v5023
        %v5030 = vsel %vm1196, %v5009, 0
        %v5033 = vsel %vm1196, %v5010, 0
        %v5036 = vsel %vm1196, %v5011, 0
        %v5039 = vsel %vm1196, %v5012, 0
        %5041 = vmatprep.subr.bf16.mxu0 0
        %5042 = vmatpush1.bf16.msra.mxu0 %v5025
        %5043 = vmatprep.subr.bf16.mxu0 0
        %5044 = vmatpush1.bf16.msra.mxu0 %v5026
        %5045 = vmatprep.subr.bf16.mxu0 0
        %5046 = vmatpush1.bf16.msra.mxu0 0
        %5047 = vmatprep.subr.bf16.mxu0 0
        %5048 = vmatpush1.bf16.msra.mxu0 0
        %5049 = vmatprep.subr.bf16.mxu0 0
        %5050 = vmatpush1.bf16.msra.mxu0 0
        %5051 = vmatprep.subr.bf16.mxu0 0
        %5052 = vmatpush1.bf16.msra.mxu0 0
        %5053 = vmatprep.subr.bf16.mxu0 0
        %5054 = vmatpush1.bf16.msra.mxu0 0
        %5055 = vmatprep.subr.bf16.mxu0 0
        %5056 = vmatpush1.bf16.msra.mxu0 0
        %5057 = vmatprep.subr.bf16.mxu0 0
        %5058 = vmatpush1.bf16.msra.mxu0 0
        %5059 = vmatprep.subr.bf16.mxu0 0
        %5060 = vmatpush1.bf16.msra.mxu0 0
        %5061 = vmatprep.subr.bf16.mxu0 0
        %5062 = vmatpush1.bf16.msra.mxu0 0
        %5063 = vmatprep.subr.bf16.mxu0 0
        %5064 = vmatpush1.bf16.msra.mxu0 0
        %5065 = vmatprep.subr.bf16.mxu0 0
        %5066 = vmatpush1.bf16.msra.mxu0 0
        %5067 = vmatprep.subr.bf16.mxu0 0
        %5068 = vmatpush1.bf16.msra.mxu0 0
        %5069 = vmatprep.subr.bf16.mxu0 0
        %5070 = vmatpush1.bf16.msra.mxu0 0
        %5071 = vmatprep.subr.bf16.mxu0 0
        %5072 = vmatpush1.bf16.msra.mxu0 0
        %5073 = vmatprep.mubr.bf16.mxu0 0
        %5074 = vmatmul.mubr.bf16.gmra.mrb[0].mxu0 %v5030
        %v5075 = vpop.f32.mrb[0].mxu0
        %v5076 = vadd.f32 0.0, %v5075
        %v5077 = vpop.f32.mrb[0].mxu0
        %v5078 = vpop.f32.mrb[0].mxu0
        %v5079 = vadd.f32 0.0, %v5078
        %v5080 = vpop.f32.mrb[0].mxu0
        %5081 = vmatprep.mubr.bf16.mxu0 0
        %5082 = vmatmul.mubr.bf16.gmra.mrb[0].mxu0 %v5033
        %v5083 = vpop.f32.mrb[0].mxu0
        %v5084 = vadd.f32 0.0, %v5083
        %v5085 = vpop.f32.mrb[0].mxu0
        %v5086 = vpop.f32.mrb[0].mxu0
        %v5087 = vadd.f32 0.0, %v5086
        %v5088 = vpop.f32.mrb[0].mxu0
        %5089 = vmatprep.mubr.bf16.mxu0 0
        %5090 = vmatmul.mubr.bf16.gmra.mrb[0].mxu0 %v5036
        %v5091 = vpop.f32.mrb[0].mxu0
        %v5092 = vadd.f32 0.0, %v5091
        %v5093 = vpop.f32.mrb[0].mxu0
        %v5094 = vpop.f32.mrb[0].mxu0
        %v5095 = vadd.f32 0.0, %v5094
        %v5096 = vpop.f32.mrb[0].mxu0
        %5097 = vmatprep.mubr.bf16.mxu0 0
        %5098 = vmatmul.mubr.bf16.gmra.mrb[0].mxu0 %v5039
        %v5099 = vpop.f32.mrb[0].mxu0
        %v5100 = vadd.f32 0.0, %v5099
        %v5101 = vpop.f32.mrb[0].mxu0
        %v5102 = vpop.f32.mrb[0].mxu0
        %v5103 = vadd.f32 0.0, %v5102
        %v5104 = vpop.f32.mrb[0].mxu0
        %5105 = vdwg.mxu0
        %v5110 = vunpack.c.l.b16 %v4501
        %v5111 = vunpack.c.l.b16 %v4502
        %v5112 = vunpack.c.l.b16 %v4503
        %v5113 = vunpack.c.l.b16 %v4504
        %v5114 = vpack.c.b16 %v5111, %v5110
        %v5115 = vpack.c.b16 %v5113, %v5112
        %v5119 = vsel %vm1196, %v4497, 0
        %v5122 = vsel %vm1196, %v4498, 0
        %v5125 = vsel %vm1196, %v4499, 0
        %v5128 = vsel %vm1196, %v4500, 0
        %5130 = vmatprep.subr.bf16.mxu0 0
        %5131 = vmatpush1.bf16.msra.mxu0 %v5114
        %5132 = vmatprep.subr.bf16.mxu0 0
        %5133 = vmatpush1.bf16.msra.mxu0 %v5115
        %5134 = vmatprep.subr.bf16.mxu0 0
        %5135 = vmatpush1.bf16.msra.mxu0 0
        %5136 = vmatprep.subr.bf16.mxu0 0
        %5137 = vmatpush1.bf16.msra.mxu0 0
        %5138 = vmatprep.subr.bf16.mxu0 0
        %5139 = vmatpush1.bf16.msra.mxu0 0
        %5140 = vmatprep.subr.bf16.mxu0 0
        %5141 = vmatpush1.bf16.msra.mxu0 0
        %5142 = vmatprep.subr.bf16.mxu0 0
        %5143 = vmatpush1.bf16.msra.mxu0 0
        %5144 = vmatprep.subr.bf16.mxu0 0
        %5145 = vmatpush1.bf16.msra.mxu0 0
        %5146 = vmatprep.subr.bf16.mxu0 0
        %5147 = vmatpush1.bf16.msra.mxu0 0
        %5148 = vmatprep.subr.bf16.mxu0 0
        %5149 = vmatpush1.bf16.msra.mxu0 0
        %5150 = vmatprep.subr.bf16.mxu0 0
        %5151 = vmatpush1.bf16.msra.mxu0 0
        %5152 = vmatprep.subr.bf16.mxu0 0
        %5153 = vmatpush1.bf16.msra.mxu0 0
        %5154 = vmatprep.subr.bf16.mxu0 0
        %5155 = vmatpush1.bf16.msra.mxu0 0
        %5156 = vmatprep.subr.bf16.mxu0 0
        %5157 = vmatpush1.bf16.msra.mxu0 0
        %5158 = vmatprep.subr.bf16.mxu0 0
        %5159 = vmatpush1.bf16.msra.mxu0 0
        %5160 = vmatprep.subr.bf16.mxu0 0
        %5161 = vmatpush1.bf16.msra.mxu0 0
        %5162 = vmatprep.mubr.bf16.mxu0 0
        %5163 = vmatmul.mubr.bf16.gmra.mrb[0].mxu0 %v5119
        %v5164 = vpop.f32.mrb[0].mxu0
        %v5165 = vadd.f32 %v5076, %v5164
        %v5166 = vpop.f32.mrb[0].mxu0
        %v5167 = vpop.f32.mrb[0].mxu0
        %v5168 = vadd.f32 %v5079, %v5167
        %v5169 = vpop.f32.mrb[0].mxu0
        %5170 = vmatprep.mubr.bf16.mxu0 0
        %5171 = vmatmul.mubr.bf16.gmra.mrb[0].mxu0 %v5122
        %v5172 = vpop.f32.mrb[0].mxu0
        %v5173 = vadd.f32 %v5084, %v5172
        %v5174 = vpop.f32.mrb[0].mxu0
        %v5175 = vpop.f32.mrb[0].mxu0
        %v5176 = vadd.f32 %v5087, %v5175
        %v5177 = vpop.f32.mrb[0].mxu0
        %5178 = vmatprep.mubr.bf16.mxu0 0
        %5179 = vmatmul.mubr.bf16.gmra.mrb[0].mxu0 %v5125
        %v5180 = vpop.f32.mrb[0].mxu0
        %v5181 = vadd.f32 %v5092, %v5180
        %v5182 = vpop.f32.mrb[0].mxu0
        %v5183 = vpop.f32.mrb[0].mxu0
        %v5184 = vadd.f32 %v5095, %v5183
        %v5185 = vpop.f32.mrb[0].mxu0
        %5186 = vmatprep.mubr.bf16.mxu0 0
        %5187 = vmatmul.mubr.bf16.gmra.mrb[0].mxu0 %v5128
        %v5188 = vpop.f32.mrb[0].mxu0
        %v5189 = vadd.f32 %v5100, %v5188
        %v5190 = vpop.f32.mrb[0].mxu0
        %v5191 = vpop.f32.mrb[0].mxu0
        %v5192 = vadd.f32 %v5103, %v5191
        %v5193 = vpop.f32.mrb[0].mxu0
        %5194 = vdwg.mxu0
        %5195 = vrot.lane.b32.xlu0 %v4021, 64
        %v5196 = vpop.permute.xlu0 %5195
        %5197 = vrot.lane.b32.xlu0 %v4025, 64
        %v5198 = vpop.permute.xlu0 %5197
        %v5200 = vsel %vm1196, %v5196, 0
        %v5203 = vsel %vm1196, %v5198, 0
        %5205 = vmatprep.subr.bf16.mxu0 0
        %5206 = vmatpush1.bf16.xpose.msra.mxu0 %v5203
        %5207 = vmatprep.subr.bf16.mxu0 0
        %5208 = vmatpush1.bf16.xpose.msra.mxu0 0
        %5209 = vmatprep.subr.bf16.mxu0 0
        %5210 = vmatpush1.bf16.xpose.msra.mxu0 0
        %5211 = vmatprep.subr.bf16.mxu0 0
        %5212 = vmatpush1.bf16.xpose.msra.mxu0 0
        %5213 = vmatprep.subr.bf16.mxu0 0
        %5214 = vmatpush1.bf16.xpose.msra.mxu0 0
        %5215 = vmatprep.subr.bf16.mxu0 0
        %5216 = vmatpush1.bf16.xpose.msra.mxu0 0
        %5217 = vmatprep.subr.bf16.mxu0 0
        %5218 = vmatpush1.bf16.xpose.msra.mxu0 0
        %5219 = vmatprep.subr.bf16.mxu0 0
        %5220 = vmatpush1.bf16.xpose.msra.mxu0 0
        %5221 = vmatprep.subr.bf16.mxu0 0
        %5222 = vmatpush1.bf16.xpose.msra.mxu0 0
        %5223 = vmatprep.subr.bf16.mxu0 0
        %5224 = vmatpush1.bf16.xpose.msra.mxu0 0
        %5225 = vmatprep.subr.bf16.mxu0 0
        %5226 = vmatpush1.bf16.xpose.msra.mxu0 0
        %5227 = vmatprep.subr.bf16.mxu0 0
        %5228 = vmatpush1.bf16.xpose.msra.mxu0 0
        %5229 = vmatprep.subr.bf16.mxu0 0
        %5230 = vmatpush1.bf16.xpose.msra.mxu0 0
        %5231 = vmatprep.subr.bf16.mxu0 0
        %5232 = vmatpush1.bf16.xpose.msra.mxu0 0
        %5233 = vmatprep.subr.bf16.mxu0 0
        %5234 = vmatpush1.bf16.xpose.msra.mxu0 0
        %5235 = vmatprep.subr.bf16.mxu0 0
        %5236 = vmatpush1.bf16.xpose.msra.mxu0 0
        %5237 = vmatprep.mubr.bf16.mxu0 0
        %5238 = vmatmul.mubr.bf16.gmra.mrb[0].mxu0 %v5200
        %v5239 = vpop.f32.mrb[0].mxu0
        %v5240 = vadd.f32 0.0, %v5239
        %v5241 = vpop.f32.mrb[0].mxu0
        %v5242 = vpop.f32.mrb[0].mxu0
        %v5243 = vadd.f32 0.0, %v5242
        %v5244 = vpop.f32.mrb[0].mxu0
        %5245 = vdwg.mxu0
        %5246 = vrot.lane.b32.xlu0 %v4022, 64
        %v5247 = vpop.permute.xlu0 %5246
        %5248 = vrot.lane.b32.xlu0 %v4026, 64
        %v5249 = vpop.permute.xlu0 %5248
        %v5251 = vsel %vm1196, %v5247, 0
        %v5254 = vsel %vm1196, %v5249, 0
        %5256 = vmatprep.subr.bf16.mxu0 0
        %5257 = vmatpush1.bf16.xpose.msra.mxu0 %v5254
        %5258 = vmatprep.subr.bf16.mxu0 0
        %5259 = vmatpush1.bf16.xpose.msra.mxu0 0
        %5260 = vmatprep.subr.bf16.mxu0 0
        %5261 = vmatpush1.bf16.xpose.msra.mxu0 0
        %5262 = vmatprep.subr.bf16.mxu0 0
        %5263 = vmatpush1.bf16.xpose.msra.mxu0 0
        %5264 = vmatprep.subr.bf16.mxu0 0
        %5265 = vmatpush1.bf16.xpose.msra.mxu0 0
        %5266 = vmatprep.subr.bf16.mxu0 0
        %5267 = vmatpush1.bf16.xpose.msra.mxu0 0
        %5268 = vmatprep.subr.bf16.mxu0 0
        %5269 = vmatpush1.bf16.xpose.msra.mxu0 0
        %5270 = vmatprep.subr.bf16.mxu0 0
        %5271 = vmatpush1.bf16.xpose.msra.mxu0 0
        %5272 = vmatprep.subr.bf16.mxu0 0
        %5273 = vmatpush1.bf16.xpose.msra.mxu0 0
        %5274 = vmatprep.subr.bf16.mxu0 0
        %5275 = vmatpush1.bf16.xpose.msra.mxu0 0
        %5276 = vmatprep.subr.bf16.mxu0 0
        %5277 = vmatpush1.bf16.xpose.msra.mxu0 0
        %5278 = vmatprep.subr.bf16.mxu0 0
        %5279 = vmatpush1.bf16.xpose.msra.mxu0 0
        %5280 = vmatprep.subr.bf16.mxu0 0
        %5281 = vmatpush1.bf16.xpose.msra.mxu0 0
        %5282 = vmatprep.subr.bf16.mxu0 0
        %5283 = vmatpush1.bf16.xpose.msra.mxu0 0
        %5284 = vmatprep.subr.bf16.mxu0 0
        %5285 = vmatpush1.bf16.xpose.msra.mxu0 0
        %5286 = vmatprep.subr.bf16.mxu0 0
        %5287 = vmatpush1.bf16.xpose.msra.mxu0 0
        %5288 = vmatprep.mubr.bf16.mxu0 0
        %5289 = vmatmul.mubr.bf16.gmra.mrb[0].mxu0 %v5251
        %v5290 = vpop.f32.mrb[0].mxu0
        %v5291 = vadd.f32 0.0, %v5290
        %v5292 = vpop.f32.mrb[0].mxu0
        %v5293 = vpop.f32.mrb[0].mxu0
        %v5294 = vadd.f32 0.0, %v5293
        %v5295 = vpop.f32.mrb[0].mxu0
        %5296 = vdwg.mxu0
        %5297 = vrot.lane.b32.xlu0 %v4023, 64
        %v5298 = vpop.permute.xlu0 %5297
        %5299 = vrot.lane.b32.xlu0 %v4027, 64
        %v5300 = vpop.permute.xlu0 %5299
        %v5302 = vsel %vm1196, %v5298, 0
        %v5305 = vsel %vm1196, %v5300, 0
        %5307 = vmatprep.subr.bf16.mxu0 0
        %5308 = vmatpush1.bf16.xpose.msra.mxu0 %v5305
        %5309 = vmatprep.subr.bf16.mxu0 0
        %5310 = vmatpush1.bf16.xpose.msra.mxu0 0
        %5311 = vmatprep.subr.bf16.mxu0 0
        %5312 = vmatpush1.bf16.xpose.msra.mxu0 0
        %5313 = vmatprep.subr.bf16.mxu0 0
        %5314 = vmatpush1.bf16.xpose.msra.mxu0 0
        %5315 = vmatprep.subr.bf16.mxu0 0
        %5316 = vmatpush1.bf16.xpose.msra.mxu0 0
        %5317 = vmatprep.subr.bf16.mxu0 0
        %5318 = vmatpush1.bf16.xpose.msra.mxu0 0
        %5319 = vmatprep.subr.bf16.mxu0 0
        %5320 = vmatpush1.bf16.xpose.msra.mxu0 0
        %5321 = vmatprep.subr.bf16.mxu0 0
        %5322 = vmatpush1.bf16.xpose.msra.mxu0 0
        %5323 = vmatprep.subr.bf16.mxu0 0
        %5324 = vmatpush1.bf16.xpose.msra.mxu0 0
        %5325 = vmatprep.subr.bf16.mxu0 0
        %5326 = vmatpush1.bf16.xpose.msra.mxu0 0
        %5327 = vmatprep.subr.bf16.mxu0 0
        %5328 = vmatpush1.bf16.xpose.msra.mxu0 0
        %5329 = vmatprep.subr.bf16.mxu0 0
        %5330 = vmatpush1.bf16.xpose.msra.mxu0 0
        %5331 = vmatprep.subr.bf16.mxu0 0
        %5332 = vmatpush1.bf16.xpose.msra.mxu0 0
        %5333 = vmatprep.subr.bf16.mxu0 0
        %5334 = vmatpush1.bf16.xpose.msra.mxu0 0
        %5335 = vmatprep.subr.bf16.mxu0 0
        %5336 = vmatpush1.bf16.xpose.msra.mxu0 0
        %5337 = vmatprep.subr.bf16.mxu0 0
        %5338 = vmatpush1.bf16.xpose.msra.mxu0 0
        %5339 = vmatprep.mubr.bf16.mxu0 0
        %5340 = vmatmul.mubr.bf16.gmra.mrb[0].mxu0 %v5302
        %v5341 = vpop.f32.mrb[0].mxu0
        %v5342 = vadd.f32 0.0, %v5341
        %v5343 = vpop.f32.mrb[0].mxu0
        %v5344 = vpop.f32.mrb[0].mxu0
        %v5345 = vadd.f32 0.0, %v5344
        %v5346 = vpop.f32.mrb[0].mxu0
        %5347 = vdwg.mxu0
        %5348 = vrot.lane.b32.xlu0 %v4024, 64
        %v5349 = vpop.permute.xlu0 %5348
        %5350 = vrot.lane.b32.xlu0 %v4028, 64
        %v5351 = vpop.permute.xlu0 %5350
        %v5353 = vsel %vm1196, %v5349, 0
        %v5356 = vsel %vm1196, %v5351, 0
        %5358 = vmatprep.subr.bf16.mxu0 0
        %5359 = vmatpush1.bf16.xpose.msra.mxu0 %v5356
        %5360 = vmatprep.subr.bf16.mxu0 0
        %5361 = vmatpush1.bf16.xpose.msra.mxu0 0
        %5362 = vmatprep.subr.bf16.mxu0 0
        %5363 = vmatpush1.bf16.xpose.msra.mxu0 0
        %5364 = vmatprep.subr.bf16.mxu0 0
        %5365 = vmatpush1.bf16.xpose.msra.mxu0 0
        %5366 = vmatprep.subr.bf16.mxu0 0
        %5367 = vmatpush1.bf16.xpose.msra.mxu0 0
        %5368 = vmatprep.subr.bf16.mxu0 0
        %5369 = vmatpush1.bf16.xpose.msra.mxu0 0
        %5370 = vmatprep.subr.bf16.mxu0 0
        %5371 = vmatpush1.bf16.xpose.msra.mxu0 0
        %5372 = vmatprep.subr.bf16.mxu0 0
        %5373 = vmatpush1.bf16.xpose.msra.mxu0 0
        %5374 = vmatprep.subr.bf16.mxu0 0
        %5375 = vmatpush1.bf16.xpose.msra.mxu0 0
        %5376 = vmatprep.subr.bf16.mxu0 0
        %5377 = vmatpush1.bf16.xpose.msra.mxu0 0
        %5378 = vmatprep.subr.bf16.mxu0 0
        %5379 = vmatpush1.bf16.xpose.msra.mxu0 0
        %5380 = vmatprep.subr.bf16.mxu0 0
        %5381 = vmatpush1.bf16.xpose.msra.mxu0 0
        %5382 = vmatprep.subr.bf16.mxu0 0
        %5383 = vmatpush1.bf16.xpose.msra.mxu0 0
        %5384 = vmatprep.subr.bf16.mxu0 0
        %5385 = vmatpush1.bf16.xpose.msra.mxu0 0
        %5386 = vmatprep.subr.bf16.mxu0 0
        %5387 = vmatpush1.bf16.xpose.msra.mxu0 0
        %5388 = vmatprep.subr.bf16.mxu0 0
        %5389 = vmatpush1.bf16.xpose.msra.mxu0 0
        %5390 = vmatprep.mubr.bf16.mxu0 0
        %5391 = vmatmul.mubr.bf16.gmra.mrb[0].mxu0 %v5353
        %v5392 = vpop.f32.mrb[0].mxu0
        %v5393 = vadd.f32 0.0, %v5392
        %v5394 = vpop.f32.mrb[0].mxu0
        %v5395 = vpop.f32.mrb[0].mxu0
        %v5396 = vadd.f32 0.0, %v5395
        %v5397 = vpop.f32.mrb[0].mxu0
        %5398 = vdwg.mxu0
        %v5399 = vmul.f32 %v5240, 0.17677669
        %v5400 = vmul.f32 %v5243, 0.17677669
        %v5401 = vmul.f32 %v5291, 0.17677669
        %v5402 = vmul.f32 %v5294, 0.17677669
        %v5403 = vmul.f32 %v5342, 0.17677669
        %v5404 = vmul.f32 %v5345, 0.17677669
        %v5405 = vmul.f32 %v5393, 0.17677669
        %v5406 = vmul.f32 %v5396, 0.17677669
        %v5407 = vsel %vm1393, %v5399, -inf
        %5408 = vmax.xlane.f32.xlu0 %v5407
        %v5409 = vpop.xlane.xlu0 %5408
        %v5410 = vsel %vm1393, %v5400, -inf
        %5411 = vmax.xlane.f32.xlu0 %v5410
        %v5412 = vpop.xlane.xlu0 %5411
        %v5413 = vsel %vm1393, %v5401, -inf
        %5414 = vmax.xlane.f32.xlu0 %v5413
        %v5415 = vpop.xlane.xlu0 %5414
        %v5416 = vsel %vm1393, %v5402, -inf
        %5417 = vmax.xlane.f32.xlu0 %v5416
        %v5418 = vpop.xlane.xlu0 %5417
        %v5419 = vsel %vm1393, %v5403, -inf
        %5420 = vmax.xlane.f32.xlu0 %v5419
        %v5421 = vpop.xlane.xlu0 %5420
        %v5422 = vsel %vm1393, %v5404, -inf
        %5423 = vmax.xlane.f32.xlu0 %v5422
        %v5424 = vpop.xlane.xlu0 %5423
        %v5425 = vsel %vm1393, %v5405, -inf
        %5426 = vmax.xlane.f32.xlu0 %v5425
        %v5427 = vpop.xlane.xlu0 %5426
        %v5428 = vsel %vm1393, %v5406, -inf
        %5429 = vmax.xlane.f32.xlu0 %v5428
        %v5430 = vpop.xlane.xlu0 %5429
        %v5431 = vsub.f32 %v5399, %v5409
        %v5432 = vsub.f32 %v5400, %v5412
        %v5433 = vsub.f32 %v5401, %v5415
        %v5434 = vsub.f32 %v5402, %v5418
        %v5435 = vsub.f32 %v5403, %v5421
        %v5436 = vsub.f32 %v5404, %v5424
        %v5437 = vsub.f32 %v5405, %v5427
        %v5438 = vsub.f32 %v5406, %v5430
        %v5439 = vmul.f32 %v5431, 1.442695
        %v5440 = vpow.pop %v5439
        %v5441 = vmul.f32 %v5432, 1.442695
        %v5442 = vpow.pop %v5441
        %v5443 = vmul.f32 %v5433, 1.442695
        %v5444 = vpow.pop %v5443
        %v5445 = vmul.f32 %v5434, 1.442695
        %v5446 = vpow.pop %v5445
        %v5447 = vmul.f32 %v5435, 1.442695
        %v5448 = vpow.pop %v5447
        %v5449 = vmul.f32 %v5436, 1.442695
        %v5450 = vpow.pop %v5449
        %v5451 = vmul.f32 %v5437, 1.442695
        %v5452 = vpow.pop %v5451
        %v5453 = vmul.f32 %v5438, 1.442695
        %v5454 = vpow.pop %v5453
        %v5455 = vsel %vm1393, %v5440, 0.0
        %5456 = vadd.xlane.f32.xlu0 %v5455
        %v5457 = vpop.xlane.xlu0 %5456
        %v5458 = vsel %vm1393, %v5442, 0.0
        %5459 = vadd.xlane.f32.xlu0 %v5458
        %v5460 = vpop.xlane.xlu0 %5459
        %v5461 = vsel %vm1393, %v5444, 0.0
        %5462 = vadd.xlane.f32.xlu0 %v5461
        %v5463 = vpop.xlane.xlu0 %5462
        %v5464 = vsel %vm1393, %v5446, 0.0
        %5465 = vadd.xlane.f32.xlu0 %v5464
        %v5466 = vpop.xlane.xlu0 %5465
        %v5467 = vsel %vm1393, %v5448, 0.0
        %5468 = vadd.xlane.f32.xlu0 %v5467
        %v5469 = vpop.xlane.xlu0 %5468
        %v5470 = vsel %vm1393, %v5450, 0.0
        %5471 = vadd.xlane.f32.xlu0 %v5470
        %v5472 = vpop.xlane.xlu0 %5471
        %v5473 = vsel %vm1393, %v5452, 0.0
        %5474 = vadd.xlane.f32.xlu0 %v5473
        %v5475 = vpop.xlane.xlu0 %5474
        %v5476 = vsel %vm1393, %v5454, 0.0
        %5477 = vadd.xlane.f32.xlu0 %v5476
        %v5478 = vpop.xlane.xlu0 %5477
        %v5479 = vrcp.pop %v5457
        %v5480 = vrcp.pop %v5460
        %v5481 = vrcp.pop %v5463
        %v5482 = vrcp.pop %v5466
        %v5483 = vrcp.pop %v5469
        %v5484 = vrcp.pop %v5472
        %v5485 = vrcp.pop %v5475
        %v5486 = vrcp.pop %v5478
        %v5487 = vmul.f32 %v5440, %v5479
        %v5488 = vmul.f32 %v5442, %v5480
        %v5489 = vmul.f32 %v5444, %v5481
        %v5490 = vmul.f32 %v5446, %v5482
        %v5491 = vmul.f32 %v5448, %v5483
        %v5492 = vmul.f32 %v5450, %v5484
        %v5493 = vmul.f32 %v5452, %v5485
        %v5494 = vmul.f32 %v5454, %v5486
        %v5495 = vpack.c.bf16 %v5488, %v5487
        %v5496 = vpack.c.bf16 %v5490, %v5489
        %v5497 = vpack.c.bf16 %v5492, %v5491
        %v5498 = vpack.c.bf16 %v5494, %v5493
        %5499 = vrot.lane.b32.xlu0 %v4029, 64
        %v5500 = vpop.permute.xlu0 %5499
        %v5503 = vsel %vm1393, %v5495, 0
        %5505 = vmatprep.subr.bf16.mxu0 0
        %5506 = vmatpush1.bf16.msra.mxu0 %v5500
        %5507 = vmatprep.subr.bf16.mxu0 0
        %5508 = vmatpush1.bf16.msra.mxu0 0
        %5509 = vmatprep.subr.bf16.mxu0 0
        %5510 = vmatpush1.bf16.msra.mxu0 0
        %5511 = vmatprep.subr.bf16.mxu0 0
        %5512 = vmatpush1.bf16.msra.mxu0 0
        %5513 = vmatprep.subr.bf16.mxu0 0
        %5514 = vmatpush1.bf16.msra.mxu0 0
        %5515 = vmatprep.subr.bf16.mxu0 0
        %5516 = vmatpush1.bf16.msra.mxu0 0
        %5517 = vmatprep.subr.bf16.mxu0 0
        %5518 = vmatpush1.bf16.msra.mxu0 0
        %5519 = vmatprep.subr.bf16.mxu0 0
        %5520 = vmatpush1.bf16.msra.mxu0 0
        %5521 = vmatprep.subr.bf16.mxu0 0
        %5522 = vmatpush1.bf16.msra.mxu0 0
        %5523 = vmatprep.subr.bf16.mxu0 0
        %5524 = vmatpush1.bf16.msra.mxu0 0
        %5525 = vmatprep.subr.bf16.mxu0 0
        %5526 = vmatpush1.bf16.msra.mxu0 0
        %5527 = vmatprep.subr.bf16.mxu0 0
        %5528 = vmatpush1.bf16.msra.mxu0 0
        %5529 = vmatprep.subr.bf16.mxu0 0
        %5530 = vmatpush1.bf16.msra.mxu0 0
        %5531 = vmatprep.subr.bf16.mxu0 0
        %5532 = vmatpush1.bf16.msra.mxu0 0
        %5533 = vmatprep.subr.bf16.mxu0 0
        %5534 = vmatpush1.bf16.msra.mxu0 0
        %5535 = vmatprep.subr.bf16.mxu0 0
        %5536 = vmatpush1.bf16.msra.mxu0 0
        %5537 = vmatprep.mubr.bf16.mxu0 0
        %5538 = vmatmul.mubr.bf16.gmra.mrb[0].mxu0 %v5503
        %v5539 = vpop.f32.mrb[0].mxu0
        %v5540 = vadd.f32 0.0, %v5539
        %v5541 = vpop.f32.mrb[0].mxu0
        %v5542 = vpop.f32.mrb[0].mxu0
        %v5543 = vadd.f32 0.0, %v5542
        %v5544 = vpop.f32.mrb[0].mxu0
        %5545 = vdwg.mxu0
        %5546 = vrot.lane.b32.xlu0 %v4030, 64
        %v5547 = vpop.permute.xlu0 %5546
        %v5550 = vsel %vm1393, %v5496, 0
        %5552 = vmatprep.subr.bf16.mxu0 0
        %5553 = vmatpush1.bf16.msra.mxu0 %v5547
        %5554 = vmatprep.subr.bf16.mxu0 0
        %5555 = vmatpush1.bf16.msra.mxu0 0
        %5556 = vmatprep.subr.bf16.mxu0 0
        %5557 = vmatpush1.bf16.msra.mxu0 0
        %5558 = vmatprep.subr.bf16.mxu0 0
        %5559 = vmatpush1.bf16.msra.mxu0 0
        %5560 = vmatprep.subr.bf16.mxu0 0
        %5561 = vmatpush1.bf16.msra.mxu0 0
        %5562 = vmatprep.subr.bf16.mxu0 0
        %5563 = vmatpush1.bf16.msra.mxu0 0
        %5564 = vmatprep.subr.bf16.mxu0 0
        %5565 = vmatpush1.bf16.msra.mxu0 0
        %5566 = vmatprep.subr.bf16.mxu0 0
        %5567 = vmatpush1.bf16.msra.mxu0 0
        %5568 = vmatprep.subr.bf16.mxu0 0
        %5569 = vmatpush1.bf16.msra.mxu0 0
        %5570 = vmatprep.subr.bf16.mxu0 0
        %5571 = vmatpush1.bf16.msra.mxu0 0
        %5572 = vmatprep.subr.bf16.mxu0 0
        %5573 = vmatpush1.bf16.msra.mxu0 0
        %5574 = vmatprep.subr.bf16.mxu0 0
        %5575 = vmatpush1.bf16.msra.mxu0 0
        %5576 = vmatprep.subr.bf16.mxu0 0
        %5577 = vmatpush1.bf16.msra.mxu0 0
        %5578 = vmatprep.subr.bf16.mxu0 0
        %5579 = vmatpush1.bf16.msra.mxu0 0
        %5580 = vmatprep.subr.bf16.mxu0 0
        %5581 = vmatpush1.bf16.msra.mxu0 0
        %5582 = vmatprep.subr.bf16.mxu0 0
        %5583 = vmatpush1.bf16.msra.mxu0 0
        %5584 = vmatprep.mubr.bf16.mxu0 0
        %5585 = vmatmul.mubr.bf16.gmra.mrb[0].mxu0 %v5550
        %v5586 = vpop.f32.mrb[0].mxu0
        %v5587 = vadd.f32 0.0, %v5586
        %v5588 = vpop.f32.mrb[0].mxu0
        %v5589 = vpop.f32.mrb[0].mxu0
        %v5590 = vadd.f32 0.0, %v5589
        %v5591 = vpop.f32.mrb[0].mxu0
        %5592 = vdwg.mxu0
        %5593 = vrot.lane.b32.xlu0 %v4031, 64
        %v5594 = vpop.permute.xlu0 %5593
        %v5597 = vsel %vm1393, %v5497, 0
        %5599 = vmatprep.subr.bf16.mxu0 0
        %5600 = vmatpush1.bf16.msra.mxu0 %v5594
        %5601 = vmatprep.subr.bf16.mxu0 0
        %5602 = vmatpush1.bf16.msra.mxu0 0
        %5603 = vmatprep.subr.bf16.mxu0 0
        %5604 = vmatpush1.bf16.msra.mxu0 0
        %5605 = vmatprep.subr.bf16.mxu0 0
        %5606 = vmatpush1.bf16.msra.mxu0 0
        %5607 = vmatprep.subr.bf16.mxu0 0
        %5608 = vmatpush1.bf16.msra.mxu0 0
        %5609 = vmatprep.subr.bf16.mxu0 0
        %5610 = vmatpush1.bf16.msra.mxu0 0
        %5611 = vmatprep.subr.bf16.mxu0 0
        %5612 = vmatpush1.bf16.msra.mxu0 0
        %5613 = vmatprep.subr.bf16.mxu0 0
        %5614 = vmatpush1.bf16.msra.mxu0 0
        %5615 = vmatprep.subr.bf16.mxu0 0
        %5616 = vmatpush1.bf16.msra.mxu0 0
        %5617 = vmatprep.subr.bf16.mxu0 0
        %5618 = vmatpush1.bf16.msra.mxu0 0
        %5619 = vmatprep.subr.bf16.mxu0 0
        %5620 = vmatpush1.bf16.msra.mxu0 0
        %5621 = vmatprep.subr.bf16.mxu0 0
        %5622 = vmatpush1.bf16.msra.mxu0 0
        %5623 = vmatprep.subr.bf16.mxu0 0
        %5624 = vmatpush1.bf16.msra.mxu0 0
        %5625 = vmatprep.subr.bf16.mxu0 0
        %5626 = vmatpush1.bf16.msra.mxu0 0
        %5627 = vmatprep.subr.bf16.mxu0 0
        %5628 = vmatpush1.bf16.msra.mxu0 0
        %5629 = vmatprep.subr.bf16.mxu0 0
        %5630 = vmatpush1.bf16.msra.mxu0 0
        %5631 = vmatprep.mubr.bf16.mxu0 0
        %5632 = vmatmul.mubr.bf16.gmra.mrb[0].mxu0 %v5597
        %v5633 = vpop.f32.mrb[0].mxu0
        %v5634 = vadd.f32 0.0, %v5633
        %v5635 = vpop.f32.mrb[0].mxu0
        %v5636 = vpop.f32.mrb[0].mxu0
        %v5637 = vadd.f32 0.0, %v5636
        %v5638 = vpop.f32.mrb[0].mxu0
        %5639 = vdwg.mxu0
        %5640 = vrot.lane.b32.xlu0 %v4032, 64
        %v5641 = vpop.permute.xlu0 %5640
        %v5644 = vsel %vm1393, %v5498, 0
        %5646 = vmatprep.subr.bf16.mxu0 0
        %5647 = vmatpush1.bf16.msra.mxu0 %v5641
        %5648 = vmatprep.subr.bf16.mxu0 0
        %5649 = vmatpush1.bf16.msra.mxu0 0
        %5650 = vmatprep.subr.bf16.mxu0 0
        %5651 = vmatpush1.bf16.msra.mxu0 0
        %5652 = vmatprep.subr.bf16.mxu0 0
        %5653 = vmatpush1.bf16.msra.mxu0 0
        %5654 = vmatprep.subr.bf16.mxu0 0
        %5655 = vmatpush1.bf16.msra.mxu0 0
        %5656 = vmatprep.subr.bf16.mxu0 0
        %5657 = vmatpush1.bf16.msra.mxu0 0
        %5658 = vmatprep.subr.bf16.mxu0 0
        %5659 = vmatpush1.bf16.msra.mxu0 0
        %5660 = vmatprep.subr.bf16.mxu0 0
        %5661 = vmatpush1.bf16.msra.mxu0 0
        %5662 = vmatprep.subr.bf16.mxu0 0
        %5663 = vmatpush1.bf16.msra.mxu0 0
        %5664 = vmatprep.subr.bf16.mxu0 0
        %5665 = vmatpush1.bf16.msra.mxu0 0
        %5666 = vmatprep.subr.bf16.mxu0 0
        %5667 = vmatpush1.bf16.msra.mxu0 0
        %5668 = vmatprep.subr.bf16.mxu0 0
        %5669 = vmatpush1.bf16.msra.mxu0 0
        %5670 = vmatprep.subr.bf16.mxu0 0
        %5671 = vmatpush1.bf16.msra.mxu0 0
        %5672 = vmatprep.subr.bf16.mxu0 0
        %5673 = vmatpush1.bf16.msra.mxu0 0
        %5674 = vmatprep.subr.bf16.mxu0 0
        %5675 = vmatpush1.bf16.msra.mxu0 0
        %5676 = vmatprep.subr.bf16.mxu0 0
        %5677 = vmatpush1.bf16.msra.mxu0 0
        %5678 = vmatprep.mubr.bf16.mxu0 0
        %5679 = vmatmul.mubr.bf16.gmra.mrb[0].mxu0 %v5644
        %v5680 = vpop.f32.mrb[0].mxu0
        %v5681 = vadd.f32 0.0, %v5680
        %v5682 = vpop.f32.mrb[0].mxu0
        %v5683 = vpop.f32.mrb[0].mxu0
        %v5684 = vadd.f32 0.0, %v5683
        %v5685 = vpop.f32.mrb[0].mxu0
        %5686 = vdwg.mxu0
        %v5687 = vpack.c.bf16 %v5543, %v5540
        %v5688 = vpack.c.bf16 %v5590, %v5587
        %v5689 = vpack.c.bf16 %v5637, %v5634
        %v5690 = vpack.c.bf16 %v5684, %v5681
        %v5691 = vld [vmem:[#allocation13 + $0x20] sm:$0xf]
        %v5692 = vld [vmem:[#allocation13 + $0x24] sm:$0xf]
        %v5693 = vld [vmem:[#allocation13 + $0x28] sm:$0xf]
        %v5694 = vld [vmem:[#allocation13 + $0x2c] sm:$0xf]
        %v5699 = vunpack.c.l.b16 %v5691
        %v5700 = vunpack.c.l.b16 %v5692
        %v5701 = vunpack.c.l.b16 %v5693
        %v5702 = vunpack.c.l.b16 %v5694
        %v5703 = vpack.c.b16 %v5700, %v5699
        %v5704 = vpack.c.b16 %v5702, %v5701
        %v5708 = vsel %vm1196, %v5687, 0
        %v5711 = vsel %vm1196, %v5688, 0
        %v5714 = vsel %vm1196, %v5689, 0
        %v5717 = vsel %vm1196, %v5690, 0
        %5719 = vmatprep.subr.bf16.mxu0 0
        %5720 = vmatpush1.bf16.msra.mxu0 %v5703
        %5721 = vmatprep.subr.bf16.mxu0 0
        %5722 = vmatpush1.bf16.msra.mxu0 %v5704
        %5723 = vmatprep.subr.bf16.mxu0 0
        %5724 = vmatpush1.bf16.msra.mxu0 0
        %5725 = vmatprep.subr.bf16.mxu0 0
        %5726 = vmatpush1.bf16.msra.mxu0 0
        %5727 = vmatprep.subr.bf16.mxu0 0
        %5728 = vmatpush1.bf16.msra.mxu0 0
        %5729 = vmatprep.subr.bf16.mxu0 0
        %5730 = vmatpush1.bf16.msra.mxu0 0
        %5731 = vmatprep.subr.bf16.mxu0 0
        %5732 = vmatpush1.bf16.msra.mxu0 0
        %5733 = vmatprep.subr.bf16.mxu0 0
        %5734 = vmatpush1.bf16.msra.mxu0 0
        %5735 = vmatprep.subr.bf16.mxu0 0
        %5736 = vmatpush1.bf16.msra.mxu0 0
        %5737 = vmatprep.subr.bf16.mxu0 0
        %5738 = vmatpush1.bf16.msra.mxu0 0
        %5739 = vmatprep.subr.bf16.mxu0 0
        %5740 = vmatpush1.bf16.msra.mxu0 0
        %5741 = vmatprep.subr.bf16.mxu0 0
        %5742 = vmatpush1.bf16.msra.mxu0 0
        %5743 = vmatprep.subr.bf16.mxu0 0
        %5744 = vmatpush1.bf16.msra.mxu0 0
        %5745 = vmatprep.subr.bf16.mxu0 0
        %5746 = vmatpush1.bf16.msra.mxu0 0
        %5747 = vmatprep.subr.bf16.mxu0 0
        %5748 = vmatpush1.bf16.msra.mxu0 0
        %5749 = vmatprep.subr.bf16.mxu0 0
        %5750 = vmatpush1.bf16.msra.mxu0 0
        %5751 = vmatprep.mubr.bf16.mxu0 0
        %5752 = vmatmul.mubr.bf16.gmra.mrb[0].mxu0 %v5708
        %v5753 = vpop.f32.mrb[0].mxu0
        %v5754 = vadd.f32 0.0, %v5753
        %v5755 = vpop.f32.mrb[0].mxu0
        %v5756 = vpop.f32.mrb[0].mxu0
        %v5757 = vadd.f32 0.0, %v5756
        %v5758 = vpop.f32.mrb[0].mxu0
        %5759 = vmatprep.mubr.bf16.mxu0 0
        %5760 = vmatmul.mubr.bf16.gmra.mrb[0].mxu0 %v5711
        %v5761 = vpop.f32.mrb[0].mxu0
        %v5762 = vadd.f32 0.0, %v5761
        %v5763 = vpop.f32.mrb[0].mxu0
        %v5764 = vpop.f32.mrb[0].mxu0
        %v5765 = vadd.f32 0.0, %v5764
        %v5766 = vpop.f32.mrb[0].mxu0
        %5767 = vmatprep.mubr.bf16.mxu0 0
        %5768 = vmatmul.mubr.bf16.gmra.mrb[0].mxu0 %v5714
        %v5769 = vpop.f32.mrb[0].mxu0
        %v5770 = vadd.f32 0.0, %v5769
        %v5771 = vpop.f32.mrb[0].mxu0
        %v5772 = vpop.f32.mrb[0].mxu0
        %v5773 = vadd.f32 0.0, %v5772
        %v5774 = vpop.f32.mrb[0].mxu0
        %5775 = vmatprep.mubr.bf16.mxu0 0
        %5776 = vmatmul.mubr.bf16.gmra.mrb[0].mxu0 %v5717
        %v5777 = vpop.f32.mrb[0].mxu0
        %v5778 = vadd.f32 0.0, %v5777
        %v5779 = vpop.f32.mrb[0].mxu0
        %v5780 = vpop.f32.mrb[0].mxu0
        %v5781 = vadd.f32 0.0, %v5780
        %v5782 = vpop.f32.mrb[0].mxu0
        %5783 = vdwg.mxu0
        %v5784 = vadd.f32 %v5165, %v5754
        %v5785 = vadd.f32 %v5168, %v5757
        %v5786 = vadd.f32 %v5173, %v5762
        %v5787 = vadd.f32 %v5176, %v5765
        %v5788 = vadd.f32 %v5181, %v5770
        %v5789 = vadd.f32 %v5184, %v5773
        %v5790 = vadd.f32 %v5189, %v5778
        %v5791 = vadd.f32 %v5192, %v5781
        %5792 = vrot.lane.b32.xlu0 %v4021, 32
        %v5793 = vpop.permute.xlu0 %5792
        %5794 = vrot.lane.b32.xlu0 %v4025, 32
        %v5795 = vpop.permute.xlu0 %5794
        %v5797 = vsel %vm1196, %v5793, 0
        %v5800 = vsel %vm1196, %v5795, 0
        %5802 = vmatprep.subr.bf16.mxu0 0
        %5803 = vmatpush1.bf16.xpose.msra.mxu0 %v5800
        %5804 = vmatprep.subr.bf16.mxu0 0
        %5805 = vmatpush1.bf16.xpose.msra.mxu0 0
        %5806 = vmatprep.subr.bf16.mxu0 0
        %5807 = vmatpush1.bf16.xpose.msra.mxu0 0
        %5808 = vmatprep.subr.bf16.mxu0 0
        %5809 = vmatpush1.bf16.xpose.msra.mxu0 0
        %5810 = vmatprep.subr.bf16.mxu0 0
        %5811 = vmatpush1.bf16.xpose.msra.mxu0 0
        %5812 = vmatprep.subr.bf16.mxu0 0
        %5813 = vmatpush1.bf16.xpose.msra.mxu0 0
        %5814 = vmatprep.subr.bf16.mxu0 0
        %5815 = vmatpush1.bf16.xpose.msra.mxu0 0
        %5816 = vmatprep.subr.bf16.mxu0 0
        %5817 = vmatpush1.bf16.xpose.msra.mxu0 0
        %5818 = vmatprep.subr.bf16.mxu0 0
        %5819 = vmatpush1.bf16.xpose.msra.mxu0 0
        %5820 = vmatprep.subr.bf16.mxu0 0
        %5821 = vmatpush1.bf16.xpose.msra.mxu0 0
        %5822 = vmatprep.subr.bf16.mxu0 0
        %5823 = vmatpush1.bf16.xpose.msra.mxu0 0
        %5824 = vmatprep.subr.bf16.mxu0 0
        %5825 = vmatpush1.bf16.xpose.msra.mxu0 0
        %5826 = vmatprep.subr.bf16.mxu0 0
        %5827 = vmatpush1.bf16.xpose.msra.mxu0 0
        %5828 = vmatprep.subr.bf16.mxu0 0
        %5829 = vmatpush1.bf16.xpose.msra.mxu0 0
        %5830 = vmatprep.subr.bf16.mxu0 0
        %5831 = vmatpush1.bf16.xpose.msra.mxu0 0
        %5832 = vmatprep.subr.bf16.mxu0 0
        %5833 = vmatpush1.bf16.xpose.msra.mxu0 0
        %5834 = vmatprep.mubr.bf16.mxu0 0
        %5835 = vmatmul.mubr.bf16.gmra.mrb[0].mxu0 %v5797
        %v5836 = vpop.f32.mrb[0].mxu0
        %v5837 = vadd.f32 0.0, %v5836
        %v5838 = vpop.f32.mrb[0].mxu0
        %v5839 = vpop.f32.mrb[0].mxu0
        %v5840 = vadd.f32 0.0, %v5839
        %v5841 = vpop.f32.mrb[0].mxu0
        %5842 = vdwg.mxu0
        %5843 = vrot.lane.b32.xlu0 %v4022, 32
        %v5844 = vpop.permute.xlu0 %5843
        %5845 = vrot.lane.b32.xlu0 %v4026, 32
        %v5846 = vpop.permute.xlu0 %5845
        %v5848 = vsel %vm1196, %v5844, 0
        %v5851 = vsel %vm1196, %v5846, 0
        %5853 = vmatprep.subr.bf16.mxu0 0
        %5854 = vmatpush1.bf16.xpose.msra.mxu0 %v5851
        %5855 = vmatprep.subr.bf16.mxu0 0
        %5856 = vmatpush1.bf16.xpose.msra.mxu0 0
        %5857 = vmatprep.subr.bf16.mxu0 0
        %5858 = vmatpush1.bf16.xpose.msra.mxu0 0
        %5859 = vmatprep.subr.bf16.mxu0 0
        %5860 = vmatpush1.bf16.xpose.msra.mxu0 0
        %5861 = vmatprep.subr.bf16.mxu0 0
        %5862 = vmatpush1.bf16.xpose.msra.mxu0 0
        %5863 = vmatprep.subr.bf16.mxu0 0
        %5864 = vmatpush1.bf16.xpose.msra.mxu0 0
        %5865 = vmatprep.subr.bf16.mxu0 0
        %5866 = vmatpush1.bf16.xpose.msra.mxu0 0
        %5867 = vmatprep.subr.bf16.mxu0 0
        %5868 = vmatpush1.bf16.xpose.msra.mxu0 0
        %5869 = vmatprep.subr.bf16.mxu0 0
        %5870 = vmatpush1.bf16.xpose.msra.mxu0 0
        %5871 = vmatprep.subr.bf16.mxu0 0
        %5872 = vmatpush1.bf16.xpose.msra.mxu0 0
        %5873 = vmatprep.subr.bf16.mxu0 0
        %5874 = vmatpush1.bf16.xpose.msra.mxu0 0
        %5875 = vmatprep.subr.bf16.mxu0 0
        %5876 = vmatpush1.bf16.xpose.msra.mxu0 0
        %5877 = vmatprep.subr.bf16.mxu0 0
        %5878 = vmatpush1.bf16.xpose.msra.mxu0 0
        %5879 = vmatprep.subr.bf16.mxu0 0
        %5880 = vmatpush1.bf16.xpose.msra.mxu0 0
        %5881 = vmatprep.subr.bf16.mxu0 0
        %5882 = vmatpush1.bf16.xpose.msra.mxu0 0
        %5883 = vmatprep.subr.bf16.mxu0 0
        %5884 = vmatpush1.bf16.xpose.msra.mxu0 0
        %5885 = vmatprep.mubr.bf16.mxu0 0
        %5886 = vmatmul.mubr.bf16.gmra.mrb[0].mxu0 %v5848
        %v5887 = vpop.f32.mrb[0].mxu0
        %v5888 = vadd.f32 0.0, %v5887
        %v5889 = vpop.f32.mrb[0].mxu0
        %v5890 = vpop.f32.mrb[0].mxu0
        %v5891 = vadd.f32 0.0, %v5890
        %v5892 = vpop.f32.mrb[0].mxu0
        %5893 = vdwg.mxu0
        %5894 = vrot.lane.b32.xlu0 %v4023, 32
        %v5895 = vpop.permute.xlu0 %5894
        %5896 = vrot.lane.b32.xlu0 %v4027, 32
        %v5897 = vpop.permute.xlu0 %5896
        %v5899 = vsel %vm1196, %v5895, 0
        %v5902 = vsel %vm1196, %v5897, 0
        %5904 = vmatprep.subr.bf16.mxu0 0
        %5905 = vmatpush1.bf16.xpose.msra.mxu0 %v5902
        %5906 = vmatprep.subr.bf16.mxu0 0
        %5907 = vmatpush1.bf16.xpose.msra.mxu0 0
        %5908 = vmatprep.subr.bf16.mxu0 0
        %5909 = vmatpush1.bf16.xpose.msra.mxu0 0
        %5910 = vmatprep.subr.bf16.mxu0 0
        %5911 = vmatpush1.bf16.xpose.msra.mxu0 0
        %5912 = vmatprep.subr.bf16.mxu0 0
        %5913 = vmatpush1.bf16.xpose.msra.mxu0 0
        %5914 = vmatprep.subr.bf16.mxu0 0
        %5915 = vmatpush1.bf16.xpose.msra.mxu0 0
        %5916 = vmatprep.subr.bf16.mxu0 0
        %5917 = vmatpush1.bf16.xpose.msra.mxu0 0
        %5918 = vmatprep.subr.bf16.mxu0 0
        %5919 = vmatpush1.bf16.xpose.msra.mxu0 0
        %5920 = vmatprep.subr.bf16.mxu0 0
        %5921 = vmatpush1.bf16.xpose.msra.mxu0 0
        %5922 = vmatprep.subr.bf16.mxu0 0
        %5923 = vmatpush1.bf16.xpose.msra.mxu0 0
        %5924 = vmatprep.subr.bf16.mxu0 0
        %5925 = vmatpush1.bf16.xpose.msra.mxu0 0
        %5926 = vmatprep.subr.bf16.mxu0 0
        %5927 = vmatpush1.bf16.xpose.msra.mxu0 0
        %5928 = vmatprep.subr.bf16.mxu0 0
        %5929 = vmatpush1.bf16.xpose.msra.mxu0 0
        %5930 = vmatprep.subr.bf16.mxu0 0
        %5931 = vmatpush1.bf16.xpose.msra.mxu0 0
        %5932 = vmatprep.subr.bf16.mxu0 0
        %5933 = vmatpush1.bf16.xpose.msra.mxu0 0
        %5934 = vmatprep.subr.bf16.mxu0 0
        %5935 = vmatpush1.bf16.xpose.msra.mxu0 0
        %5936 = vmatprep.mubr.bf16.mxu0 0
        %5937 = vmatmul.mubr.bf16.gmra.mrb[0].mxu0 %v5899
        %v5938 = vpop.f32.mrb[0].mxu0
        %v5939 = vadd.f32 0.0, %v5938
        %v5940 = vpop.f32.mrb[0].mxu0
        %v5941 = vpop.f32.mrb[0].mxu0
        %v5942 = vadd.f32 0.0, %v5941
        %v5943 = vpop.f32.mrb[0].mxu0
        %5944 = vdwg.mxu0
        %5945 = vrot.lane.b32.xlu0 %v4024, 32
        %v5946 = vpop.permute.xlu0 %5945
        %5947 = vrot.lane.b32.xlu0 %v4028, 32
        %v5948 = vpop.permute.xlu0 %5947
        %v5950 = vsel %vm1196, %v5946, 0
        %v5953 = vsel %vm1196, %v5948, 0
        %5955 = vmatprep.subr.bf16.mxu0 0
        %5956 = vmatpush1.bf16.xpose.msra.mxu0 %v5953
        %5957 = vmatprep.subr.bf16.mxu0 0
        %5958 = vmatpush1.bf16.xpose.msra.mxu0 0
        %5959 = vmatprep.subr.bf16.mxu0 0
        %5960 = vmatpush1.bf16.xpose.msra.mxu0 0
        %5961 = vmatprep.subr.bf16.mxu0 0
        %5962 = vmatpush1.bf16.xpose.msra.mxu0 0
        %5963 = vmatprep.subr.bf16.mxu0 0
        %5964 = vmatpush1.bf16.xpose.msra.mxu0 0
        %5965 = vmatprep.subr.bf16.mxu0 0
        %5966 = vmatpush1.bf16.xpose.msra.mxu0 0
        %5967 = vmatprep.subr.bf16.mxu0 0
        %5968 = vmatpush1.bf16.xpose.msra.mxu0 0
        %5969 = vmatprep.subr.bf16.mxu0 0
        %5970 = vmatpush1.bf16.xpose.msra.mxu0 0
        %5971 = vmatprep.subr.bf16.mxu0 0
        %5972 = vmatpush1.bf16.xpose.msra.mxu0 0
        %5973 = vmatprep.subr.bf16.mxu0 0
        %5974 = vmatpush1.bf16.xpose.msra.mxu0 0
        %5975 = vmatprep.subr.bf16.mxu0 0
        %5976 = vmatpush1.bf16.xpose.msra.mxu0 0
        %5977 = vmatprep.subr.bf16.mxu0 0
        %5978 = vmatpush1.bf16.xpose.msra.mxu0 0
        %5979 = vmatprep.subr.bf16.mxu0 0
        %5980 = vmatpush1.bf16.xpose.msra.mxu0 0
        %5981 = vmatprep.subr.bf16.mxu0 0
        %5982 = vmatpush1.bf16.xpose.msra.mxu0 0
        %5983 = vmatprep.subr.bf16.mxu0 0
        %5984 = vmatpush1.bf16.xpose.msra.mxu0 0
        %5985 = vmatprep.subr.bf16.mxu0 0
        %5986 = vmatpush1.bf16.xpose.msra.mxu0 0
        %5987 = vmatprep.mubr.bf16.mxu0 0
        %5988 = vmatmul.mubr.bf16.gmra.mrb[0].mxu0 %v5950
        %v5989 = vpop.f32.mrb[0].mxu0
        %v5990 = vadd.f32 0.0, %v5989
        %v5991 = vpop.f32.mrb[0].mxu0
        %v5992 = vpop.f32.mrb[0].mxu0
        %v5993 = vadd.f32 0.0, %v5992
        %v5994 = vpop.f32.mrb[0].mxu0
        %5995 = vdwg.mxu0
        %v5996 = vmul.f32 %v5837, 0.17677669
        %v5997 = vmul.f32 %v5840, 0.17677669
        %v5998 = vmul.f32 %v5888, 0.17677669
        %v5999 = vmul.f32 %v5891, 0.17677669
        %v6000 = vmul.f32 %v5939, 0.17677669
        %v6001 = vmul.f32 %v5942, 0.17677669
        %v6002 = vmul.f32 %v5990, 0.17677669
        %v6003 = vmul.f32 %v5993, 0.17677669
        %v6004 = vsel %vm1393, %v5996, -inf
        %6005 = vmax.xlane.f32.xlu0 %v6004
        %v6006 = vpop.xlane.xlu0 %6005
        %v6007 = vsel %vm1393, %v5997, -inf
        %6008 = vmax.xlane.f32.xlu0 %v6007
        %v6009 = vpop.xlane.xlu0 %6008
        %v6010 = vsel %vm1393, %v5998, -inf
        %6011 = vmax.xlane.f32.xlu0 %v6010
        %v6012 = vpop.xlane.xlu0 %6011
        %v6013 = vsel %vm1393, %v5999, -inf
        %6014 = vmax.xlane.f32.xlu0 %v6013
        %v6015 = vpop.xlane.xlu0 %6014
        %v6016 = vsel %vm1393, %v6000, -inf
        %6017 = vmax.xlane.f32.xlu0 %v6016
        %v6018 = vpop.xlane.xlu0 %6017
        %v6019 = vsel %vm1393, %v6001, -inf
        %6020 = vmax.xlane.f32.xlu0 %v6019
        %v6021 = vpop.xlane.xlu0 %6020
        %v6022 = vsel %vm1393, %v6002, -inf
        %6023 = vmax.xlane.f32.xlu0 %v6022
        %v6024 = vpop.xlane.xlu0 %6023
        %v6025 = vsel %vm1393, %v6003, -inf
        %6026 = vmax.xlane.f32.xlu0 %v6025
        %v6027 = vpop.xlane.xlu0 %6026
        %v6028 = vsub.f32 %v5996, %v6006
        %v6029 = vsub.f32 %v5997, %v6009
        %v6030 = vsub.f32 %v5998, %v6012
        %v6031 = vsub.f32 %v5999, %v6015
        %v6032 = vsub.f32 %v6000, %v6018
        %v6033 = vsub.f32 %v6001, %v6021
        %v6034 = vsub.f32 %v6002, %v6024
        %v6035 = vsub.f32 %v6003, %v6027
        %v6036 = vmul.f32 %v6028, 1.442695
        %v6037 = vpow.pop %v6036
        %v6038 = vmul.f32 %v6029, 1.442695
        %v6039 = vpow.pop %v6038
        %v6040 = vmul.f32 %v6030, 1.442695
        %v6041 = vpow.pop %v6040
        %v6042 = vmul.f32 %v6031, 1.442695
        %v6043 = vpow.pop %v6042
        %v6044 = vmul.f32 %v6032, 1.442695
        %v6045 = vpow.pop %v6044
        %v6046 = vmul.f32 %v6033, 1.442695
        %v6047 = vpow.pop %v6046
        %v6048 = vmul.f32 %v6034, 1.442695
        %v6049 = vpow.pop %v6048
        %v6050 = vmul.f32 %v6035, 1.442695
        %v6051 = vpow.pop %v6050
        %v6052 = vsel %vm1393, %v6037, 0.0
        %6053 = vadd.xlane.f32.xlu0 %v6052
        %v6054 = vpop.xlane.xlu0 %6053
        %v6055 = vsel %vm1393, %v6039, 0.0
        %6056 = vadd.xlane.f32.xlu0 %v6055
        %v6057 = vpop.xlane.xlu0 %6056
        %v6058 = vsel %vm1393, %v6041, 0.0
        %6059 = vadd.xlane.f32.xlu0 %v6058
        %v6060 = vpop.xlane.xlu0 %6059
        %v6061 = vsel %vm1393, %v6043, 0.0
        %6062 = vadd.xlane.f32.xlu0 %v6061
        %v6063 = vpop.xlane.xlu0 %6062
        %v6064 = vsel %vm1393, %v6045, 0.0
        %6065 = vadd.xlane.f32.xlu0 %v6064
        %v6066 = vpop.xlane.xlu0 %6065
        %v6067 = vsel %vm1393, %v6047, 0.0
        %6068 = vadd.xlane.f32.xlu0 %v6067
        %v6069 = vpop.xlane.xlu0 %6068
        %v6070 = vsel %vm1393, %v6049, 0.0
        %6071 = vadd.xlane.f32.xlu0 %v6070
        %v6072 = vpop.xlane.xlu0 %6071
        %v6073 = vsel %vm1393, %v6051, 0.0
        %6074 = vadd.xlane.f32.xlu0 %v6073
        %v6075 = vpop.xlane.xlu0 %6074
        %v6076 = vrcp.pop %v6054
        %v6077 = vrcp.pop %v6057
        %v6078 = vrcp.pop %v6060
        %v6079 = vrcp.pop %v6063
        %v6080 = vrcp.pop %v6066
        %v6081 = vrcp.pop %v6069
        %v6082 = vrcp.pop %v6072
        %v6083 = vrcp.pop %v6075
        %v6084 = vmul.f32 %v6037, %v6076
        %v6085 = vmul.f32 %v6039, %v6077
        %v6086 = vmul.f32 %v6041, %v6078
        %v6087 = vmul.f32 %v6043, %v6079
        %v6088 = vmul.f32 %v6045, %v6080
        %v6089 = vmul.f32 %v6047, %v6081
        %v6090 = vmul.f32 %v6049, %v6082
        %v6091 = vmul.f32 %v6051, %v6083
        %v6092 = vpack.c.bf16 %v6085, %v6084
        %v6093 = vpack.c.bf16 %v6087, %v6086
        %v6094 = vpack.c.bf16 %v6089, %v6088
        %v6095 = vpack.c.bf16 %v6091, %v6090
        %6096 = vrot.lane.b32.xlu0 %v4029, 32
        %v6097 = vpop.permute.xlu0 %6096
        %v6100 = vsel %vm1393, %v6092, 0
        %6102 = vmatprep.subr.bf16.mxu0 0
        %6103 = vmatpush1.bf16.msra.mxu0 %v6097
        %6104 = vmatprep.subr.bf16.mxu0 0
        %6105 = vmatpush1.bf16.msra.mxu0 0
        %6106 = vmatprep.subr.bf16.mxu0 0
        %6107 = vmatpush1.bf16.msra.mxu0 0
        %6108 = vmatprep.subr.bf16.mxu0 0
        %6109 = vmatpush1.bf16.msra.mxu0 0
        %6110 = vmatprep.subr.bf16.mxu0 0
        %6111 = vmatpush1.bf16.msra.mxu0 0
        %6112 = vmatprep.subr.bf16.mxu0 0
        %6113 = vmatpush1.bf16.msra.mxu0 0
        %6114 = vmatprep.subr.bf16.mxu0 0
        %6115 = vmatpush1.bf16.msra.mxu0 0
        %6116 = vmatprep.subr.bf16.mxu0 0
        %6117 = vmatpush1.bf16.msra.mxu0 0
        %6118 = vmatprep.subr.bf16.mxu0 0
        %6119 = vmatpush1.bf16.msra.mxu0 0
        %6120 = vmatprep.subr.bf16.mxu0 0
        %6121 = vmatpush1.bf16.msra.mxu0 0
        %6122 = vmatprep.subr.bf16.mxu0 0
        %6123 = vmatpush1.bf16.msra.mxu0 0
        %6124 = vmatprep.subr.bf16.mxu0 0
        %6125 = vmatpush1.bf16.msra.mxu0 0
        %6126 = vmatprep.subr.bf16.mxu0 0
        %6127 = vmatpush1.bf16.msra.mxu0 0
        %6128 = vmatprep.subr.bf16.mxu0 0
        %6129 = vmatpush1.bf16.msra.mxu0 0
        %6130 = vmatprep.subr.bf16.mxu0 0
        %6131 = vmatpush1.bf16.msra.mxu0 0
        %6132 = vmatprep.subr.bf16.mxu0 0
        %6133 = vmatpush1.bf16.msra.mxu0 0
        %6134 = vmatprep.mubr.bf16.mxu0 0
        %6135 = vmatmul.mubr.bf16.gmra.mrb[0].mxu0 %v6100
        %v6136 = vpop.f32.mrb[0].mxu0
        %v6137 = vadd.f32 0.0, %v6136
        %v6138 = vpop.f32.mrb[0].mxu0
        %v6139 = vpop.f32.mrb[0].mxu0
        %v6140 = vadd.f32 0.0, %v6139
        %v6141 = vpop.f32.mrb[0].mxu0
        %6142 = vdwg.mxu0
        %6143 = vrot.lane.b32.xlu0 %v4030, 32
        %v6144 = vpop.permute.xlu0 %6143
        %v6147 = vsel %vm1393, %v6093, 0
        %6149 = vmatprep.subr.bf16.mxu0 0
        %6150 = vmatpush1.bf16.msra.mxu0 %v6144
        %6151 = vmatprep.subr.bf16.mxu0 0
        %6152 = vmatpush1.bf16.msra.mxu0 0
        %6153 = vmatprep.subr.bf16.mxu0 0
        %6154 = vmatpush1.bf16.msra.mxu0 0
        %6155 = vmatprep.subr.bf16.mxu0 0
        %6156 = vmatpush1.bf16.msra.mxu0 0
        %6157 = vmatprep.subr.bf16.mxu0 0
        %6158 = vmatpush1.bf16.msra.mxu0 0
        %6159 = vmatprep.subr.bf16.mxu0 0
        %6160 = vmatpush1.bf16.msra.mxu0 0
        %6161 = vmatprep.subr.bf16.mxu0 0
        %6162 = vmatpush1.bf16.msra.mxu0 0
        %6163 = vmatprep.subr.bf16.mxu0 0
        %6164 = vmatpush1.bf16.msra.mxu0 0
        %6165 = vmatprep.subr.bf16.mxu0 0
        %6166 = vmatpush1.bf16.msra.mxu0 0
        %6167 = vmatprep.subr.bf16.mxu0 0
        %6168 = vmatpush1.bf16.msra.mxu0 0
        %6169 = vmatprep.subr.bf16.mxu0 0
        %6170 = vmatpush1.bf16.msra.mxu0 0
        %6171 = vmatprep.subr.bf16.mxu0 0
        %6172 = vmatpush1.bf16.msra.mxu0 0
        %6173 = vmatprep.subr.bf16.mxu0 0
        %6174 = vmatpush1.bf16.msra.mxu0 0
        %6175 = vmatprep.subr.bf16.mxu0 0
        %6176 = vmatpush1.bf16.msra.mxu0 0
        %6177 = vmatprep.subr.bf16.mxu0 0
        %6178 = vmatpush1.bf16.msra.mxu0 0
        %6179 = vmatprep.subr.bf16.mxu0 0
        %6180 = vmatpush1.bf16.msra.mxu0 0
        %6181 = vmatprep.mubr.bf16.mxu0 0
        %6182 = vmatmul.mubr.bf16.gmra.mrb[0].mxu0 %v6147
        %v6183 = vpop.f32.mrb[0].mxu0
        %v6184 = vadd.f32 0.0, %v6183
        %v6185 = vpop.f32.mrb[0].mxu0
        %v6186 = vpop.f32.mrb[0].mxu0
        %v6187 = vadd.f32 0.0, %v6186
        %v6188 = vpop.f32.mrb[0].mxu0
        %6189 = vdwg.mxu0
        %6190 = vrot.lane.b32.xlu0 %v4031, 32
        %v6191 = vpop.permute.xlu0 %6190
        %v6194 = vsel %vm1393, %v6094, 0
        %6196 = vmatprep.subr.bf16.mxu0 0
        %6197 = vmatpush1.bf16.msra.mxu0 %v6191
        %6198 = vmatprep.subr.bf16.mxu0 0
        %6199 = vmatpush1.bf16.msra.mxu0 0
        %6200 = vmatprep.subr.bf16.mxu0 0
        %6201 = vmatpush1.bf16.msra.mxu0 0
        %6202 = vmatprep.subr.bf16.mxu0 0
        %6203 = vmatpush1.bf16.msra.mxu0 0
        %6204 = vmatprep.subr.bf16.mxu0 0
        %6205 = vmatpush1.bf16.msra.mxu0 0
        %6206 = vmatprep.subr.bf16.mxu0 0
        %6207 = vmatpush1.bf16.msra.mxu0 0
        %6208 = vmatprep.subr.bf16.mxu0 0
        %6209 = vmatpush1.bf16.msra.mxu0 0
        %6210 = vmatprep.subr.bf16.mxu0 0
        %6211 = vmatpush1.bf16.msra.mxu0 0
        %6212 = vmatprep.subr.bf16.mxu0 0
        %6213 = vmatpush1.bf16.msra.mxu0 0
        %6214 = vmatprep.subr.bf16.mxu0 0
        %6215 = vmatpush1.bf16.msra.mxu0 0
        %6216 = vmatprep.subr.bf16.mxu0 0
        %6217 = vmatpush1.bf16.msra.mxu0 0
        %6218 = vmatprep.subr.bf16.mxu0 0
        %6219 = vmatpush1.bf16.msra.mxu0 0
        %6220 = vmatprep.subr.bf16.mxu0 0
        %6221 = vmatpush1.bf16.msra.mxu0 0
        %6222 = vmatprep.subr.bf16.mxu0 0
        %6223 = vmatpush1.bf16.msra.mxu0 0
        %6224 = vmatprep.subr.bf16.mxu0 0
        %6225 = vmatpush1.bf16.msra.mxu0 0
        %6226 = vmatprep.subr.bf16.mxu0 0
        %6227 = vmatpush1.bf16.msra.mxu0 0
        %6228 = vmatprep.mubr.bf16.mxu0 0
        %6229 = vmatmul.mubr.bf16.gmra.mrb[0].mxu0 %v6194
        %v6230 = vpop.f32.mrb[0].mxu0
        %v6231 = vadd.f32 0.0, %v6230
        %v6232 = vpop.f32.mrb[0].mxu0
        %v6233 = vpop.f32.mrb[0].mxu0
        %v6234 = vadd.f32 0.0, %v6233
        %v6235 = vpop.f32.mrb[0].mxu0
        %6236 = vdwg.mxu0
        %6237 = vrot.lane.b32.xlu0 %v4032, 32
        %v6238 = vpop.permute.xlu0 %6237
        %v6241 = vsel %vm1393, %v6095, 0
        %6243 = vmatprep.subr.bf16.mxu0 0
        %6244 = vmatpush1.bf16.msra.mxu0 %v6238
        %6245 = vmatprep.subr.bf16.mxu0 0
        %6246 = vmatpush1.bf16.msra.mxu0 0
        %6247 = vmatprep.subr.bf16.mxu0 0
        %6248 = vmatpush1.bf16.msra.mxu0 0
        %6249 = vmatprep.subr.bf16.mxu0 0
        %6250 = vmatpush1.bf16.msra.mxu0 0
        %6251 = vmatprep.subr.bf16.mxu0 0
        %6252 = vmatpush1.bf16.msra.mxu0 0
        %6253 = vmatprep.subr.bf16.mxu0 0
        %6254 = vmatpush1.bf16.msra.mxu0 0
        %6255 = vmatprep.subr.bf16.mxu0 0
        %6256 = vmatpush1.bf16.msra.mxu0 0
        %6257 = vmatprep.subr.bf16.mxu0 0
        %6258 = vmatpush1.bf16.msra.mxu0 0
        %6259 = vmatprep.subr.bf16.mxu0 0
        %6260 = vmatpush1.bf16.msra.mxu0 0
        %6261 = vmatprep.subr.bf16.mxu0 0
        %6262 = vmatpush1.bf16.msra.mxu0 0
        %6263 = vmatprep.subr.bf16.mxu0 0
        %6264 = vmatpush1.bf16.msra.mxu0 0
        %6265 = vmatprep.subr.bf16.mxu0 0
        %6266 = vmatpush1.bf16.msra.mxu0 0
        %6267 = vmatprep.subr.bf16.mxu0 0
        %6268 = vmatpush1.bf16.msra.mxu0 0
        %6269 = vmatprep.subr.bf16.mxu0 0
        %6270 = vmatpush1.bf16.msra.mxu0 0
        %6271 = vmatprep.subr.bf16.mxu0 0
        %6272 = vmatpush1.bf16.msra.mxu0 0
        %6273 = vmatprep.subr.bf16.mxu0 0
        %6274 = vmatpush1.bf16.msra.mxu0 0
        %6275 = vmatprep.mubr.bf16.mxu0 0
        %6276 = vmatmul.mubr.bf16.gmra.mrb[0].mxu0 %v6241
        %v6277 = vpop.f32.mrb[0].mxu0
        %v6278 = vadd.f32 0.0, %v6277
        %v6279 = vpop.f32.mrb[0].mxu0
        %v6280 = vpop.f32.mrb[0].mxu0
        %v6281 = vadd.f32 0.0, %v6280
        %v6282 = vpop.f32.mrb[0].mxu0
        %6283 = vdwg.mxu0
        %v6284 = vpack.c.bf16 %v6140, %v6137
        %v6285 = vpack.c.bf16 %v6187, %v6184
        %v6286 = vpack.c.bf16 %v6234, %v6231
        %v6287 = vpack.c.bf16 %v6281, %v6278
        %v6288 = vld [vmem:[#allocation13 + $0x30] sm:$0xf]
        %v6289 = vld [vmem:[#allocation13 + $0x34] sm:$0xf]
        %v6290 = vld [vmem:[#allocation13 + $0x38] sm:$0xf]
        %v6291 = vld [vmem:[#allocation13 + $0x3c] sm:$0xf]
        %v6296 = vunpack.c.l.b16 %v6288
        %v6297 = vunpack.c.l.b16 %v6289
        %v6298 = vunpack.c.l.b16 %v6290
        %v6299 = vunpack.c.l.b16 %v6291
        %v6300 = vpack.c.b16 %v6297, %v6296
        %v6301 = vpack.c.b16 %v6299, %v6298
        %v6305 = vsel %vm1196, %v6284, 0
        %v6308 = vsel %vm1196, %v6285, 0
        %v6311 = vsel %vm1196, %v6286, 0
        %v6314 = vsel %vm1196, %v6287, 0
        %6316 = vmatprep.subr.bf16.mxu0 0
        %6317 = vmatpush1.bf16.msra.mxu0 %v6300
        %6318 = vmatprep.subr.bf16.mxu0 0
        %6319 = vmatpush1.bf16.msra.mxu0 %v6301
        %6320 = vmatprep.subr.bf16.mxu0 0
        %6321 = vmatpush1.bf16.msra.mxu0 0
        %6322 = vmatprep.subr.bf16.mxu0 0
        %6323 = vmatpush1.bf16.msra.mxu0 0
        %6324 = vmatprep.subr.bf16.mxu0 0
        %6325 = vmatpush1.bf16.msra.mxu0 0
        %6326 = vmatprep.subr.bf16.mxu0 0
        %6327 = vmatpush1.bf16.msra.mxu0 0
        %6328 = vmatprep.subr.bf16.mxu0 0
        %6329 = vmatpush1.bf16.msra.mxu0 0
        %6330 = vmatprep.subr.bf16.mxu0 0
        %6331 = vmatpush1.bf16.msra.mxu0 0
        %6332 = vmatprep.subr.bf16.mxu0 0
        %6333 = vmatpush1.bf16.msra.mxu0 0
        %6334 = vmatprep.subr.bf16.mxu0 0
        %6335 = vmatpush1.bf16.msra.mxu0 0
        %6336 = vmatprep.subr.bf16.mxu0 0
        %6337 = vmatpush1.bf16.msra.mxu0 0
        %6338 = vmatprep.subr.bf16.mxu0 0
        %6339 = vmatpush1.bf16.msra.mxu0 0
        %6340 = vmatprep.subr.bf16.mxu0 0
        %6341 = vmatpush1.bf16.msra.mxu0 0
        %6342 = vmatprep.subr.bf16.mxu0 0
        %6343 = vmatpush1.bf16.msra.mxu0 0
        %6344 = vmatprep.subr.bf16.mxu0 0
        %6345 = vmatpush1.bf16.msra.mxu0 0
        %6346 = vmatprep.subr.bf16.mxu0 0
        %6347 = vmatpush1.bf16.msra.mxu0 0
        %6348 = vmatprep.mubr.bf16.mxu0 0
        %6349 = vmatmul.mubr.bf16.gmra.mrb[0].mxu0 %v6305
        %v6350 = vpop.f32.mrb[0].mxu0
        %v6351 = vadd.f32 0.0, %v6350
        %v6352 = vpop.f32.mrb[0].mxu0
        %v6353 = vpop.f32.mrb[0].mxu0
        %v6354 = vadd.f32 0.0, %v6353
        %v6355 = vpop.f32.mrb[0].mxu0
        %6356 = vmatprep.mubr.bf16.mxu0 0
        %6357 = vmatmul.mubr.bf16.gmra.mrb[0].mxu0 %v6308
        %v6358 = vpop.f32.mrb[0].mxu0
        %v6359 = vadd.f32 0.0, %v6358
        %v6360 = vpop.f32.mrb[0].mxu0
        %v6361 = vpop.f32.mrb[0].mxu0
        %v6362 = vadd.f32 0.0, %v6361
        %v6363 = vpop.f32.mrb[0].mxu0
        %6364 = vmatprep.mubr.bf16.mxu0 0
        %6365 = vmatmul.mubr.bf16.gmra.mrb[0].mxu0 %v6311
        %v6366 = vpop.f32.mrb[0].mxu0
        %v6367 = vadd.f32 0.0, %v6366
        %v6368 = vpop.f32.mrb[0].mxu0
        %v6369 = vpop.f32.mrb[0].mxu0
        %v6370 = vadd.f32 0.0, %v6369
        %v6371 = vpop.f32.mrb[0].mxu0
        %6372 = vmatprep.mubr.bf16.mxu0 0
        %6373 = vmatmul.mubr.bf16.gmra.mrb[0].mxu0 %v6314
        %v6374 = vpop.f32.mrb[0].mxu0
        %v6375 = vadd.f32 0.0, %v6374
        %v6376 = vpop.f32.mrb[0].mxu0
        %v6377 = vpop.f32.mrb[0].mxu0
        %v6378 = vadd.f32 0.0, %v6377
        %v6379 = vpop.f32.mrb[0].mxu0
        %6380 = vdwg.mxu0
        %v6381 = vadd.f32 %v5784, %v6351
        %v6382 = vadd.f32 %v5785, %v6354
        %v6383 = vadd.f32 %v5786, %v6359
        %v6384 = vadd.f32 %v5787, %v6362
        %v6385 = vadd.f32 %v5788, %v6367
        %v6386 = vadd.f32 %v5789, %v6370
        %v6387 = vadd.f32 %v5790, %v6375
        %v6388 = vadd.f32 %v5791, %v6378
        %v6389 = vld [vmem:[%s13] sm:$0x1]
        %v6391 = vlaneseq
        %v6392 = vshrl.u32 %v6391, 7
        %v6393 = vsub.s32 0, %v6392
        %v6394 = vrot.slane %v6389, %v6393
        %v6396 = vadd.f32 %v6381, %v6394
        %v6397 = vadd.f32 %v6382, %v6394
        %v6398 = vadd.f32 %v6383, %v6394
        %v6399 = vadd.f32 %v6384, %v6394
        %v6400 = vadd.f32 %v6385, %v6394
        %v6401 = vadd.f32 %v6386, %v6394
        %v6402 = vadd.f32 %v6387, %v6394
        %v6403 = vadd.f32 %v6388, %v6394
        %v6404 = vadd.f32 %v3688, %v6396
        %v6405 = vadd.f32 %v3689, %v6397
        %v6406 = vadd.f32 %v3690, %v6398
        %v6407 = vadd.f32 %v3691, %v6399
        %v6408 = vadd.f32 %v3692, %v6400
        %v6409 = vadd.f32 %v3693, %v6401
        %v6410 = vadd.f32 %v3694, %v6402
        %v6411 = vadd.f32 %v3695, %v6403
        %v6412 = vld [vmem:[%s14] sm:$0x1]
        %v6413 = vld [vmem:[%s15] sm:$0x1]
        %6414 = vadd.xlane.f32.xlu0 %v6404
        %v6415 = vpop.xlane.xlu0 %6414
        %6416 = vadd.xlane.f32.xlu0 %v6405
        %v6417 = vpop.xlane.xlu0 %6416
        %6418 = vadd.xlane.f32.xlu0 %v6406
        %v6419 = vpop.xlane.xlu0 %6418
        %6420 = vadd.xlane.f32.xlu0 %v6407
        %v6421 = vpop.xlane.xlu0 %6420
        %6422 = vadd.xlane.f32.xlu0 %v6408
        %v6423 = vpop.xlane.xlu0 %6422
        %6424 = vadd.xlane.f32.xlu0 %v6409
        %v6425 = vpop.xlane.xlu0 %6424
        %6426 = vadd.xlane.f32.xlu0 %v6410
        %v6427 = vpop.xlane.xlu0 %6426
        %6428 = vadd.xlane.f32.xlu0 %v6411
        %v6429 = vpop.xlane.xlu0 %6428
        %v6430 = vmul.f32 %v6415, %v3595
        %v6431 = vmul.f32 %v6417, %v3595
        %v6432 = vmul.f32 %v6419, %v3595
        %v6433 = vmul.f32 %v6421, %v3595
        %v6434 = vmul.f32 %v6423, %v3595
        %v6435 = vmul.f32 %v6425, %v3595
        %v6436 = vmul.f32 %v6427, %v3595
        %v6437 = vmul.f32 %v6429, %v3595
        %v6438 = vsub.f32 %v6404, %v6430
        %v6439 = vsub.f32 %v6405, %v6431
        %v6440 = vsub.f32 %v6406, %v6432
        %v6441 = vsub.f32 %v6407, %v6433
        %v6442 = vsub.f32 %v6408, %v6434
        %v6443 = vsub.f32 %v6409, %v6435
        %v6444 = vsub.f32 %v6410, %v6436
        %v6445 = vsub.f32 %v6411, %v6437
        %v6446 = vmul.f32 %v6438, %v6438
        %v6447 = vmul.f32 %v6439, %v6439
        %v6448 = vmul.f32 %v6440, %v6440
        %v6449 = vmul.f32 %v6441, %v6441
        %v6450 = vmul.f32 %v6442, %v6442
        %v6451 = vmul.f32 %v6443, %v6443
        %v6452 = vmul.f32 %v6444, %v6444
        %v6453 = vmul.f32 %v6445, %v6445
        %6454 = vadd.xlane.f32.xlu0 %v6446
        %v6455 = vpop.xlane.xlu0 %6454
        %6456 = vadd.xlane.f32.xlu0 %v6447
        %v6457 = vpop.xlane.xlu0 %6456
        %6458 = vadd.xlane.f32.xlu0 %v6448
        %v6459 = vpop.xlane.xlu0 %6458
        %6460 = vadd.xlane.f32.xlu0 %v6449
        %v6461 = vpop.xlane.xlu0 %6460
        %6462 = vadd.xlane.f32.xlu0 %v6450
        %v6463 = vpop.xlane.xlu0 %6462
        %6464 = vadd.xlane.f32.xlu0 %v6451
        %v6465 = vpop.xlane.xlu0 %6464
        %6466 = vadd.xlane.f32.xlu0 %v6452
        %v6467 = vpop.xlane.xlu0 %6466
        %6468 = vadd.xlane.f32.xlu0 %v6453
        %v6469 = vpop.xlane.xlu0 %6468
        %v6470 = vmul.f32 %v6455, %v3595
        %v6471 = vmul.f32 %v6457, %v3595
        %v6472 = vmul.f32 %v6459, %v3595
        %v6473 = vmul.f32 %v6461, %v3595
        %v6474 = vmul.f32 %v6463, %v3595
        %v6475 = vmul.f32 %v6465, %v3595
        %v6476 = vmul.f32 %v6467, %v3595
        %v6477 = vmul.f32 %v6469, %v3595
        %v6478 = vadd.f32 %v6470, 1e-05
        %v6479 = vadd.f32 %v6471, 1e-05
        %v6480 = vadd.f32 %v6472, 1e-05
        %v6481 = vadd.f32 %v6473, 1e-05
        %v6482 = vadd.f32 %v6474, 1e-05
        %v6483 = vadd.f32 %v6475, 1e-05
        %v6484 = vadd.f32 %v6476, 1e-05
        %v6485 = vadd.f32 %v6477, 1e-05
        %v6486 = vrsqrt.pop %v6478
        %v6487 = vrsqrt.pop %v6479
        %v6488 = vrsqrt.pop %v6480
        %v6489 = vrsqrt.pop %v6481
        %v6490 = vrsqrt.pop %v6482
        %v6491 = vrsqrt.pop %v6483
        %v6492 = vrsqrt.pop %v6484
        %v6493 = vrsqrt.pop %v6485
        %v6494 = vmul.f32 %v6438, %v6486
        %v6495 = vmul.f32 %v6439, %v6487
        %v6496 = vmul.f32 %v6440, %v6488
        %v6497 = vmul.f32 %v6441, %v6489
        %v6498 = vmul.f32 %v6442, %v6490
        %v6499 = vmul.f32 %v6443, %v6491
        %v6500 = vmul.f32 %v6444, %v6492
        %v6501 = vmul.f32 %v6445, %v6493
        %v6503 = vlaneseq
        %v6504 = vshrl.u32 %v6503, 7
        %v6505 = vsub.s32 0, %v6504
        %v6506 = vrot.slane %v6412, %v6505
        %v6508 = vmul.f32 %v6494, %v6506
        %v6509 = vmul.f32 %v6495, %v6506
        %v6510 = vmul.f32 %v6496, %v6506
        %v6511 = vmul.f32 %v6497, %v6506
        %v6512 = vmul.f32 %v6498, %v6506
        %v6513 = vmul.f32 %v6499, %v6506
        %v6514 = vmul.f32 %v6500, %v6506
        %v6515 = vmul.f32 %v6501, %v6506
        %v6517 = vlaneseq
        %v6518 = vshrl.u32 %v6517, 7
        %v6519 = vsub.s32 0, %v6518
        %v6520 = vrot.slane %v6413, %v6519
        %v6522 = vadd.f32 %v6508, %v6520
        %v6523 = vadd.f32 %v6509, %v6520
        %v6524 = vadd.f32 %v6510, %v6520
        %v6525 = vadd.f32 %v6511, %v6520
        %v6526 = vadd.f32 %v6512, %v6520
        %v6527 = vadd.f32 %v6513, %v6520
        %v6528 = vadd.f32 %v6514, %v6520
        %v6529 = vadd.f32 %v6515, %v6520
        %v6530 = vpack.c.bf16 %v6523, %v6522
        %v6531 = vpack.c.bf16 %v6525, %v6524
        %v6532 = vpack.c.bf16 %v6527, %v6526
        %v6533 = vpack.c.bf16 %v6529, %v6528
        %v6534 = vld [vmem:[#allocation14] sm:$0xff]
        %v6535 = vld [vmem:[#allocation14 + $0x8] sm:$0xff]
        %v6536 = vld [vmem:[#allocation14 + $0x10] sm:$0xff]
        %v6537 = vld [vmem:[#allocation14 + $0x18] sm:$0xff]
        %v6538 = vld [vmem:[#allocation14 + $0x20] sm:$0xff]
        %v6539 = vld [vmem:[#allocation14 + $0x28] sm:$0xff]
        %v6540 = vld [vmem:[#allocation14 + $0x30] sm:$0xff]
        %v6541 = vld [vmem:[#allocation14 + $0x38] sm:$0xff]
        %v6542 = vld [vmem:[#allocation14 + $0x40] sm:$0xff]
        %v6543 = vld [vmem:[#allocation14 + $0x48] sm:$0xff]
        %v6544 = vld [vmem:[#allocation14 + $0x50] sm:$0xff]
        %v6545 = vld [vmem:[#allocation14 + $0x58] sm:$0xff]
        %v6546 = vld [vmem:[#allocation14 + $0x60] sm:$0xff]
        %v6547 = vld [vmem:[#allocation14 + $0x68] sm:$0xff]
        %v6548 = vld [vmem:[#allocation14 + $0x70] sm:$0xff]
        %v6549 = vld [vmem:[#allocation14 + $0x78] sm:$0xff]
        %v6550 = vld [vmem:[#allocation14 + $0x80] sm:$0xff]
        %v6551 = vld [vmem:[#allocation14 + $0x88] sm:$0xff]
        %v6552 = vld [vmem:[#allocation14 + $0x90] sm:$0xff]
        %v6553 = vld [vmem:[#allocation14 + $0x98] sm:$0xff]
        %v6554 = vld [vmem:[#allocation14 + $0xa0] sm:$0xff]
        %v6555 = vld [vmem:[#allocation14 + $0xa8] sm:$0xff]
        %v6556 = vld [vmem:[#allocation14 + $0xb0] sm:$0xff]
        %v6557 = vld [vmem:[#allocation14 + $0xb8] sm:$0xff]
        %v6558 = vld [vmem:[#allocation14 + $0xc0] sm:$0xff]
        %v6559 = vld [vmem:[#allocation14 + $0xc8] sm:$0xff]
        %v6560 = vld [vmem:[#allocation14 + $0xd0] sm:$0xff]
        %v6561 = vld [vmem:[#allocation14 + $0xd8] sm:$0xff]
        %v6562 = vld [vmem:[#allocation14 + $0xe0] sm:$0xff]
        %v6563 = vld [vmem:[#allocation14 + $0xe8] sm:$0xff]
        %v6564 = vld [vmem:[#allocation14 + $0xf0] sm:$0xff]
        %v6565 = vld [vmem:[#allocation14 + $0xf8] sm:$0xff]
        %v6566 = vld [vmem:[%s17] sm:$0xf]
        %v6568 = vlaneseq
        %v6569 = vshrl.u32 %v6568, 7
        %v6570 = vsub.s32 0, %v6569
        %v6571 = vrot.slane %v6566, %v6570
        %v6572 = vlaneseq
        %v6573 = vshrl.u32 %v6572, 7
        %v6574 = vsub.s32 1, %v6573
        %v6575 = vrot.slane %v6566, %v6574
        %v6576 = vlaneseq
        %v6577 = vshrl.u32 %v6576, 7
        %v6578 = vsub.s32 2, %v6577
        %v6579 = vrot.slane %v6566, %v6578
        %v6580 = vlaneseq
        %v6581 = vshrl.u32 %v6580, 7
        %v6582 = vsub.s32 3, %v6581
        %v6583 = vrot.slane %v6566, %v6582
        %v6620 = vunpack.c.l.b16 %v6534
        %v6621 = vunpack.c.h.b16 %v6534
        %v6622 = vunpack.c.l.b16 %v6535
        %v6623 = vunpack.c.h.b16 %v6535
        %v6624 = vunpack.c.l.b16 %v6536
        %v6625 = vunpack.c.h.b16 %v6536
        %v6626 = vunpack.c.l.b16 %v6537
        %v6627 = vunpack.c.h.b16 %v6537
        %v6628 = vunpack.c.l.b16 %v6538
        %v6629 = vunpack.c.h.b16 %v6538
        %v6630 = vunpack.c.l.b16 %v6539
        %v6631 = vunpack.c.h.b16 %v6539
        %v6632 = vunpack.c.l.b16 %v6540
        %v6633 = vunpack.c.h.b16 %v6540
        %v6634 = vunpack.c.l.b16 %v6541
        %v6635 = vunpack.c.h.b16 %v6541
        %v6636 = vunpack.c.l.b16 %v6542
        %v6637 = vunpack.c.h.b16 %v6542
        %v6638 = vunpack.c.l.b16 %v6543
        %v6639 = vunpack.c.h.b16 %v6543
        %v6640 = vunpack.c.l.b16 %v6544
        %v6641 = vunpack.c.h.b16 %v6544
        %v6642 = vunpack.c.l.b16 %v6545
        %v6643 = vunpack.c.h.b16 %v6545
        %v6644 = vunpack.c.l.b16 %v6546
        %v6645 = vunpack.c.h.b16 %v6546
        %v6646 = vunpack.c.l.b16 %v6547
        %v6647 = vunpack.c.h.b16 %v6547
        %v6648 = vunpack.c.l.b16 %v6548
        %v6649 = vunpack.c.h.b16 %v6548
        %v6650 = vunpack.c.l.b16 %v6549
        %v6651 = vunpack.c.h.b16 %v6549
        %v6652 = vunpack.c.l.b16 %v6550
        %v6653 = vunpack.c.h.b16 %v6550
        %v6654 = vunpack.c.l.b16 %v6551
        %v6655 = vunpack.c.h.b16 %v6551
        %v6656 = vunpack.c.l.b16 %v6552
        %v6657 = vunpack.c.h.b16 %v6552
        %v6658 = vunpack.c.l.b16 %v6553
        %v6659 = vunpack.c.h.b16 %v6553
        %v6660 = vunpack.c.l.b16 %v6554
        %v6661 = vunpack.c.h.b16 %v6554
        %v6662 = vunpack.c.l.b16 %v6555
        %v6663 = vunpack.c.h.b16 %v6555
        %v6664 = vunpack.c.l.b16 %v6556
        %v6665 = vunpack.c.h.b16 %v6556
        %v6666 = vunpack.c.l.b16 %v6557
        %v6667 = vunpack.c.h.b16 %v6557
        %v6668 = vunpack.c.l.b16 %v6558
        %v6669 = vunpack.c.h.b16 %v6558
        %v6670 = vunpack.c.l.b16 %v6559
        %v6671 = vunpack.c.h.b16 %v6559
        %v6672 = vunpack.c.l.b16 %v6560
        %v6673 = vunpack.c.h.b16 %v6560
        %v6674 = vunpack.c.l.b16 %v6561
        %v6675 = vunpack.c.h.b16 %v6561
        %v6676 = vunpack.c.l.b16 %v6562
        %v6677 = vunpack.c.h.b16 %v6562
        %v6678 = vunpack.c.l.b16 %v6563
        %v6679 = vunpack.c.h.b16 %v6563
        %v6680 = vunpack.c.l.b16 %v6564
        %v6681 = vunpack.c.h.b16 %v6564
        %v6682 = vunpack.c.l.b16 %v6565
        %v6683 = vunpack.c.h.b16 %v6565
        %v6684 = vpack.c.b16 %v6624, %v6620
        %v6685 = vpack.c.b16 %v6625, %v6621
        %v6686 = vpack.c.b16 %v6626, %v6622
        %v6687 = vpack.c.b16 %v6627, %v6623
        %v6688 = vpack.c.b16 %v6632, %v6628
        %v6689 = vpack.c.b16 %v6633, %v6629
        %v6690 = vpack.c.b16 %v6634, %v6630
        %v6691 = vpack.c.b16 %v6635, %v6631
        %v6692 = vpack.c.b16 %v6640, %v6636
        %v6693 = vpack.c.b16 %v6641, %v6637
        %v6694 = vpack.c.b16 %v6642, %v6638
        %v6695 = vpack.c.b16 %v6643, %v6639
        %v6696 = vpack.c.b16 %v6648, %v6644
        %v6697 = vpack.c.b16 %v6649, %v6645
        %v6698 = vpack.c.b16 %v6650, %v6646
        %v6699 = vpack.c.b16 %v6651, %v6647
        %v6700 = vpack.c.b16 %v6656, %v6652
        %v6701 = vpack.c.b16 %v6657, %v6653
        %v6702 = vpack.c.b16 %v6658, %v6654
        %v6703 = vpack.c.b16 %v6659, %v6655
        %v6704 = vpack.c.b16 %v6664, %v6660
        %v6705 = vpack.c.b16 %v6665, %v6661
        %v6706 = vpack.c.b16 %v6666, %v6662
        %v6707 = vpack.c.b16 %v6667, %v6663
        %v6708 = vpack.c.b16 %v6672, %v6668
        %v6709 = vpack.c.b16 %v6673, %v6669
        %v6710 = vpack.c.b16 %v6674, %v6670
        %v6711 = vpack.c.b16 %v6675, %v6671
        %v6712 = vpack.c.b16 %v6680, %v6676
        %v6713 = vpack.c.b16 %v6681, %v6677
        %v6714 = vpack.c.b16 %v6682, %v6678
        %v6715 = vpack.c.b16 %v6683, %v6679
        %6748 = vmatprep.subr.bf16.mxu0 %v6685
        %6749 = vmatpush1.bf16.msra.mxu0 %v6684
        %6750 = vmatprep.subr.bf16.mxu0 %v6689
        %6751 = vmatpush1.bf16.msra.mxu0 %v6688
        %6752 = vmatprep.subr.bf16.mxu0 %v6693
        %6753 = vmatpush1.bf16.msra.mxu0 %v6692
        %6754 = vmatprep.subr.bf16.mxu0 %v6697
        %6755 = vmatpush1.bf16.msra.mxu0 %v6696
        %6756 = vmatprep.subr.bf16.mxu0 %v6701
        %6757 = vmatpush1.bf16.msra.mxu0 %v6700
        %6758 = vmatprep.subr.bf16.mxu0 %v6705
        %6759 = vmatpush1.bf16.msra.mxu0 %v6704
        %6760 = vmatprep.subr.bf16.mxu0 %v6709
        %6761 = vmatpush1.bf16.msra.mxu0 %v6708
        %6762 = vmatprep.subr.bf16.mxu0 %v6713
        %6763 = vmatpush1.bf16.msra.mxu0 %v6712
        %6764 = vmatprep.subr.bf16.mxu0 0
        %6765 = vmatpush1.bf16.msra.mxu0 0
        %6766 = vmatprep.subr.bf16.mxu0 0
        %6767 = vmatpush1.bf16.msra.mxu0 0
        %6768 = vmatprep.subr.bf16.mxu0 0
        %6769 = vmatpush1.bf16.msra.mxu0 0
        %6770 = vmatprep.subr.bf16.mxu0 0
        %6771 = vmatpush1.bf16.msra.mxu0 0
        %6772 = vmatprep.subr.bf16.mxu0 0
        %6773 = vmatpush1.bf16.msra.mxu0 0
        %6774 = vmatprep.subr.bf16.mxu0 0
        %6775 = vmatpush1.bf16.msra.mxu0 0
        %6776 = vmatprep.subr.bf16.mxu0 0
        %6777 = vmatpush1.bf16.msra.mxu0 0
        %6778 = vmatprep.subr.bf16.mxu0 0
        %6779 = vmatpush1.bf16.msra.mxu0 0
        %6780 = vmatprep.mubr.bf16.mxu0 0
        %6781 = vmatmul.mubr.bf16.gmra.mrb[0].mxu0 %v6530
        %v6782 = vpop.f32.mrb[0].mxu0
        %v6783 = vadd.f32 %v6571, %v6782
        %v6784 = vpop.f32.mrb[0].mxu0
        %v6785 = vadd.f32 %v6575, %v6784
        %v6786 = vpop.f32.mrb[0].mxu0
        %v6787 = vadd.f32 %v6571, %v6786
        %v6788 = vpop.f32.mrb[0].mxu0
        %v6789 = vadd.f32 %v6575, %v6788
        %6790 = vmatprep.mubr.bf16.mxu0 0
        %6791 = vmatmul.mubr.bf16.gmra.mrb[0].mxu0 %v6531
        %v6792 = vpop.f32.mrb[0].mxu0
        %v6793 = vadd.f32 %v6571, %v6792
        %v6794 = vpop.f32.mrb[0].mxu0
        %v6795 = vadd.f32 %v6575, %v6794
        %v6796 = vpop.f32.mrb[0].mxu0
        %v6797 = vadd.f32 %v6571, %v6796
        %v6798 = vpop.f32.mrb[0].mxu0
        %v6799 = vadd.f32 %v6575, %v6798
        %6800 = vmatprep.mubr.bf16.mxu0 0
        %6801 = vmatmul.mubr.bf16.gmra.mrb[0].mxu0 %v6532
        %v6802 = vpop.f32.mrb[0].mxu0
        %v6803 = vadd.f32 %v6571, %v6802
        %v6804 = vpop.f32.mrb[0].mxu0
        %v6805 = vadd.f32 %v6575, %v6804
        %v6806 = vpop.f32.mrb[0].mxu0
        %v6807 = vadd.f32 %v6571, %v6806
        %v6808 = vpop.f32.mrb[0].mxu0
        %v6809 = vadd.f32 %v6575, %v6808
        %6810 = vmatprep.mubr.bf16.mxu0 0
        %6811 = vmatmul.mubr.bf16.gmra.mrb[0].mxu0 %v6533
        %v6812 = vpop.f32.mrb[0].mxu0
        %v6813 = vadd.f32 %v6571, %v6812
        %v6814 = vpop.f32.mrb[0].mxu0
        %v6815 = vadd.f32 %v6575, %v6814
        %v6816 = vpop.f32.mrb[0].mxu0
        %v6817 = vadd.f32 %v6571, %v6816
        %v6818 = vpop.f32.mrb[0].mxu0
        %v6819 = vadd.f32 %v6575, %v6818
        %6820 = vdwg.mxu0
        %6821 = vmatprep.subr.bf16.mxu0 %v6687
        %6822 = vmatpush1.bf16.msra.mxu0 %v6686
        %6823 = vmatprep.subr.bf16.mxu0 %v6691
        %6824 = vmatpush1.bf16.msra.mxu0 %v6690
        %6825 = vmatprep.subr.bf16.mxu0 %v6695
        %6826 = vmatpush1.bf16.msra.mxu0 %v6694
        %6827 = vmatprep.subr.bf16.mxu0 %v6699
        %6828 = vmatpush1.bf16.msra.mxu0 %v6698
        %6829 = vmatprep.subr.bf16.mxu0 %v6703
        %6830 = vmatpush1.bf16.msra.mxu0 %v6702
        %6831 = vmatprep.subr.bf16.mxu0 %v6707
        %6832 = vmatpush1.bf16.msra.mxu0 %v6706
        %6833 = vmatprep.subr.bf16.mxu0 %v6711
        %6834 = vmatpush1.bf16.msra.mxu0 %v6710
        %6835 = vmatprep.subr.bf16.mxu0 %v6715
        %6836 = vmatpush1.bf16.msra.mxu0 %v6714
        %6837 = vmatprep.subr.bf16.mxu0 0
        %6838 = vmatpush1.bf16.msra.mxu0 0
        %6839 = vmatprep.subr.bf16.mxu0 0
        %6840 = vmatpush1.bf16.msra.mxu0 0
        %6841 = vmatprep.subr.bf16.mxu0 0
        %6842 = vmatpush1.bf16.msra.mxu0 0
        %6843 = vmatprep.subr.bf16.mxu0 0
        %6844 = vmatpush1.bf16.msra.mxu0 0
        %6845 = vmatprep.subr.bf16.mxu0 0
        %6846 = vmatpush1.bf16.msra.mxu0 0
        %6847 = vmatprep.subr.bf16.mxu0 0
        %6848 = vmatpush1.bf16.msra.mxu0 0
        %6849 = vmatprep.subr.bf16.mxu0 0
        %6850 = vmatpush1.bf16.msra.mxu0 0
        %6851 = vmatprep.subr.bf16.mxu0 0
        %6852 = vmatpush1.bf16.msra.mxu0 0
        %6853 = vmatprep.mubr.bf16.mxu0 0
        %6854 = vmatmul.mubr.bf16.gmra.mrb[0].mxu0 %v6530
        %v6855 = vpop.f32.mrb[0].mxu0
        %v6856 = vadd.f32 %v6579, %v6855
        %v6857 = vpop.f32.mrb[0].mxu0
        %v6858 = vadd.f32 %v6583, %v6857
        %v6859 = vpop.f32.mrb[0].mxu0
        %v6860 = vadd.f32 %v6579, %v6859
        %v6861 = vpop.f32.mrb[0].mxu0
        %v6862 = vadd.f32 %v6583, %v6861
        %6863 = vmatprep.mubr.bf16.mxu0 0
        %6864 = vmatmul.mubr.bf16.gmra.mrb[0].mxu0 %v6531
        %v6865 = vpop.f32.mrb[0].mxu0
        %v6866 = vadd.f32 %v6579, %v6865
        %v6867 = vpop.f32.mrb[0].mxu0
        %v6868 = vadd.f32 %v6583, %v6867
        %v6869 = vpop.f32.mrb[0].mxu0
        %v6870 = vadd.f32 %v6579, %v6869
        %v6871 = vpop.f32.mrb[0].mxu0
        %v6872 = vadd.f32 %v6583, %v6871
        %6873 = vmatprep.mubr.bf16.mxu0 0
        %6874 = vmatmul.mubr.bf16.gmra.mrb[0].mxu0 %v6532
        %v6875 = vpop.f32.mrb[0].mxu0
        %v6876 = vadd.f32 %v6579, %v6875
        %v6877 = vpop.f32.mrb[0].mxu0
        %v6878 = vadd.f32 %v6583, %v6877
        %v6879 = vpop.f32.mrb[0].mxu0
        %v6880 = vadd.f32 %v6579, %v6879
        %v6881 = vpop.f32.mrb[0].mxu0
        %v6882 = vadd.f32 %v6583, %v6881
        %6883 = vmatprep.mubr.bf16.mxu0 0
        %6884 = vmatmul.mubr.bf16.gmra.mrb[0].mxu0 %v6533
        %v6885 = vpop.f32.mrb[0].mxu0
        %v6886 = vadd.f32 %v6579, %v6885
        %v6887 = vpop.f32.mrb[0].mxu0
        %v6888 = vadd.f32 %v6583, %v6887
        %v6889 = vpop.f32.mrb[0].mxu0
        %v6890 = vadd.f32 %v6579, %v6889
        %v6891 = vpop.f32.mrb[0].mxu0
        %v6892 = vadd.f32 %v6583, %v6891
        %6893 = vdwg.mxu0
        %v6894 = vmax.f32 %v6783, 0.0
        %v6895 = vmax.f32 %v6785, 0.0
        %v6896 = vmax.f32 %v6856, 0.0
        %v6897 = vmax.f32 %v6858, 0.0
        %v6898 = vmax.f32 %v6787, 0.0
        %v6899 = vmax.f32 %v6789, 0.0
        %v6900 = vmax.f32 %v6860, 0.0
        %v6901 = vmax.f32 %v6862, 0.0
        %v6902 = vmax.f32 %v6793, 0.0
        %v6903 = vmax.f32 %v6795, 0.0
        %v6904 = vmax.f32 %v6866, 0.0
        %v6905 = vmax.f32 %v6868, 0.0
        %v6906 = vmax.f32 %v6797, 0.0
        %v6907 = vmax.f32 %v6799, 0.0
        %v6908 = vmax.f32 %v6870, 0.0
        %v6909 = vmax.f32 %v6872, 0.0
        %v6910 = vmax.f32 %v6803, 0.0
        %v6911 = vmax.f32 %v6805, 0.0
        %v6912 = vmax.f32 %v6876, 0.0
        %v6913 = vmax.f32 %v6878, 0.0
        %v6914 = vmax.f32 %v6807, 0.0
        %v6915 = vmax.f32 %v6809, 0.0
        %v6916 = vmax.f32 %v6880, 0.0
        %v6917 = vmax.f32 %v6882, 0.0
        %v6918 = vmax.f32 %v6813, 0.0
        %v6919 = vmax.f32 %v6815, 0.0
        %v6920 = vmax.f32 %v6886, 0.0
        %v6921 = vmax.f32 %v6888, 0.0
        %v6922 = vmax.f32 %v6817, 0.0
        %v6923 = vmax.f32 %v6819, 0.0
        %v6924 = vmax.f32 %v6890, 0.0
        %v6925 = vmax.f32 %v6892, 0.0
        %v6926 = vpack.c.bf16 %v6898, %v6894
        %v6927 = vpack.c.bf16 %v6899, %v6895
        %v6928 = vpack.c.bf16 %v6900, %v6896
        %v6929 = vpack.c.bf16 %v6901, %v6897
        %v6930 = vpack.c.bf16 %v6906, %v6902
        %v6931 = vpack.c.bf16 %v6907, %v6903
        %v6932 = vpack.c.bf16 %v6908, %v6904
        %v6933 = vpack.c.bf16 %v6909, %v6905
        %v6934 = vpack.c.bf16 %v6914, %v6910
        %v6935 = vpack.c.bf16 %v6915, %v6911
        %v6936 = vpack.c.bf16 %v6916, %v6912
        %v6937 = vpack.c.bf16 %v6917, %v6913
        %v6938 = vpack.c.bf16 %v6922, %v6918
        %v6939 = vpack.c.bf16 %v6923, %v6919
        %v6940 = vpack.c.bf16 %v6924, %v6920
        %v6941 = vpack.c.bf16 %v6925, %v6921
        %v6942 = vld [vmem:[#allocation16] sm:$0xf]
        %v6943 = vld [vmem:[#allocation16 + $0x4] sm:$0xf]
        %v6944 = vld [vmem:[#allocation16 + $0x8] sm:$0xf]
        %v6945 = vld [vmem:[#allocation16 + $0xc] sm:$0xf]
        %v6946 = vld [vmem:[#allocation16 + $0x10] sm:$0xf]
        %v6947 = vld [vmem:[#allocation16 + $0x14] sm:$0xf]
        %v6948 = vld [vmem:[#allocation16 + $0x18] sm:$0xf]
        %v6949 = vld [vmem:[#allocation16 + $0x1c] sm:$0xf]
        %v6950 = vld [vmem:[#allocation16 + $0x20] sm:$0xf]
        %v6951 = vld [vmem:[#allocation16 + $0x24] sm:$0xf]
        %v6952 = vld [vmem:[#allocation16 + $0x28] sm:$0xf]
        %v6953 = vld [vmem:[#allocation16 + $0x2c] sm:$0xf]
        %v6954 = vld [vmem:[#allocation16 + $0x30] sm:$0xf]
        %v6955 = vld [vmem:[#allocation16 + $0x34] sm:$0xf]
        %v6956 = vld [vmem:[#allocation16 + $0x38] sm:$0xf]
        %v6957 = vld [vmem:[#allocation16 + $0x3c] sm:$0xf]
        %v6958 = vld [vmem:[#allocation16 + $0x40] sm:$0xf]
        %v6959 = vld [vmem:[#allocation16 + $0x44] sm:$0xf]
        %v6960 = vld [vmem:[#allocation16 + $0x48] sm:$0xf]
        %v6961 = vld [vmem:[#allocation16 + $0x4c] sm:$0xf]
        %v6962 = vld [vmem:[#allocation16 + $0x50] sm:$0xf]
        %v6963 = vld [vmem:[#allocation16 + $0x54] sm:$0xf]
        %v6964 = vld [vmem:[#allocation16 + $0x58] sm:$0xf]
        %v6965 = vld [vmem:[#allocation16 + $0x5c] sm:$0xf]
        %v6966 = vld [vmem:[#allocation16 + $0x60] sm:$0xf]
        %v6967 = vld [vmem:[#allocation16 + $0x64] sm:$0xf]
        %v6968 = vld [vmem:[#allocation16 + $0x68] sm:$0xf]
        %v6969 = vld [vmem:[#allocation16 + $0x6c] sm:$0xf]
        %v6970 = vld [vmem:[#allocation16 + $0x70] sm:$0xf]
        %v6971 = vld [vmem:[#allocation16 + $0x74] sm:$0xf]
        %v6972 = vld [vmem:[#allocation16 + $0x78] sm:$0xf]
        %v6973 = vld [vmem:[#allocation16 + $0x7c] sm:$0xf]
        %v6974 = vld [vmem:[#allocation16 + $0x80] sm:$0xf]
        %v6975 = vld [vmem:[#allocation16 + $0x84] sm:$0xf]
        %v6976 = vld [vmem:[#allocation16 + $0x88] sm:$0xf]
        %v6977 = vld [vmem:[#allocation16 + $0x8c] sm:$0xf]
        %v6978 = vld [vmem:[#allocation16 + $0x90] sm:$0xf]
        %v6979 = vld [vmem:[#allocation16 + $0x94] sm:$0xf]
        %v6980 = vld [vmem:[#allocation16 + $0x98] sm:$0xf]
        %v6981 = vld [vmem:[#allocation16 + $0x9c] sm:$0xf]
        %v6982 = vld [vmem:[#allocation16 + $0xa0] sm:$0xf]
        %v6983 = vld [vmem:[#allocation16 + $0xa4] sm:$0xf]
        %v6984 = vld [vmem:[#allocation16 + $0xa8] sm:$0xf]
        %v6985 = vld [vmem:[#allocation16 + $0xac] sm:$0xf]
        %v6986 = vld [vmem:[#allocation16 + $0xb0] sm:$0xf]
        %v6987 = vld [vmem:[#allocation16 + $0xb4] sm:$0xf]
        %v6988 = vld [vmem:[#allocation16 + $0xb8] sm:$0xf]
        %v6989 = vld [vmem:[#allocation16 + $0xbc] sm:$0xf]
        %v6990 = vld [vmem:[#allocation16 + $0xc0] sm:$0xf]
        %v6991 = vld [vmem:[#allocation16 + $0xc4] sm:$0xf]
        %v6992 = vld [vmem:[#allocation16 + $0xc8] sm:$0xf]
        %v6993 = vld [vmem:[#allocation16 + $0xcc] sm:$0xf]
        %v6994 = vld [vmem:[#allocation16 + $0xd0] sm:$0xf]
        %v6995 = vld [vmem:[#allocation16 + $0xd4] sm:$0xf]
        %v6996 = vld [vmem:[#allocation16 + $0xd8] sm:$0xf]
        %v6997 = vld [vmem:[#allocation16 + $0xdc] sm:$0xf]
        %v6998 = vld [vmem:[#allocation16 + $0xe0] sm:$0xf]
        %v6999 = vld [vmem:[#allocation16 + $0xe4] sm:$0xf]
        %v7000 = vld [vmem:[#allocation16 + $0xe8] sm:$0xf]
        %v7001 = vld [vmem:[#allocation16 + $0xec] sm:$0xf]
        %v7002 = vld [vmem:[#allocation16 + $0xf0] sm:$0xf]
        %v7003 = vld [vmem:[#allocation16 + $0xf4] sm:$0xf]
        %v7004 = vld [vmem:[#allocation16 + $0xf8] sm:$0xf]
        %v7005 = vld [vmem:[#allocation16 + $0xfc] sm:$0xf]
        %v7006 = vld [vmem:[%s19] sm:$0x1]
        %v7008 = vlaneseq
        %v7009 = vshrl.u32 %v7008, 7
        %v7010 = vsub.s32 0, %v7009
        %v7011 = vrot.slane %v7006, %v7010
        %v7077 = vunpack.c.l.b16 %v6942
        %v7078 = vunpack.c.l.b16 %v6943
        %v7079 = vunpack.c.l.b16 %v6944
        %v7080 = vunpack.c.l.b16 %v6945
        %v7081 = vunpack.c.l.b16 %v6946
        %v7082 = vunpack.c.l.b16 %v6947
        %v7083 = vunpack.c.l.b16 %v6948
        %v7084 = vunpack.c.l.b16 %v6949
        %v7085 = vunpack.c.l.b16 %v6950
        %v7086 = vunpack.c.l.b16 %v6951
        %v7087 = vunpack.c.l.b16 %v6952
        %v7088 = vunpack.c.l.b16 %v6953
        %v7089 = vunpack.c.l.b16 %v6954
        %v7090 = vunpack.c.l.b16 %v6955
        %v7091 = vunpack.c.l.b16 %v6956
        %v7092 = vunpack.c.l.b16 %v6957
        %v7093 = vunpack.c.l.b16 %v6958
        %v7094 = vunpack.c.l.b16 %v6959
        %v7095 = vunpack.c.l.b16 %v6960
        %v7096 = vunpack.c.l.b16 %v6961
        %v7097 = vunpack.c.l.b16 %v6962
        %v7098 = vunpack.c.l.b16 %v6963
        %v7099 = vunpack.c.l.b16 %v6964
        %v7100 = vunpack.c.l.b16 %v6965
        %v7101 = vunpack.c.l.b16 %v6966
        %v7102 = vunpack.c.l.b16 %v6967
        %v7103 = vunpack.c.l.b16 %v6968
        %v7104 = vunpack.c.l.b16 %v6969
        %v7105 = vunpack.c.l.b16 %v6970
        %v7106 = vunpack.c.l.b16 %v6971
        %v7107 = vunpack.c.l.b16 %v6972
        %v7108 = vunpack.c.l.b16 %v6973
        %v7109 = vunpack.c.l.b16 %v6974
        %v7110 = vunpack.c.l.b16 %v6975
        %v7111 = vunpack.c.l.b16 %v6976
        %v7112 = vunpack.c.l.b16 %v6977
        %v7113 = vunpack.c.l.b16 %v6978
        %v7114 = vunpack.c.l.b16 %v6979
        %v7115 = vunpack.c.l.b16 %v6980
        %v7116 = vunpack.c.l.b16 %v6981
        %v7117 = vunpack.c.l.b16 %v6982
        %v7118 = vunpack.c.l.b16 %v6983
        %v7119 = vunpack.c.l.b16 %v6984
        %v7120 = vunpack.c.l.b16 %v6985
        %v7121 = vunpack.c.l.b16 %v6986
        %v7122 = vunpack.c.l.b16 %v6987
        %v7123 = vunpack.c.l.b16 %v6988
        %v7124 = vunpack.c.l.b16 %v6989
        %v7125 = vunpack.c.l.b16 %v6990
        %v7126 = vunpack.c.l.b16 %v6991
        %v7127 = vunpack.c.l.b16 %v6992
        %v7128 = vunpack.c.l.b16 %v6993
        %v7129 = vunpack.c.l.b16 %v6994
        %v7130 = vunpack.c.l.b16 %v6995
        %v7131 = vunpack.c.l.b16 %v6996
        %v7132 = vunpack.c.l.b16 %v6997
        %v7133 = vunpack.c.l.b16 %v6998
        %v7134 = vunpack.c.l.b16 %v6999
        %v7135 = vunpack.c.l.b16 %v7000
        %v7136 = vunpack.c.l.b16 %v7001
        %v7137 = vunpack.c.l.b16 %v7002
        %v7138 = vunpack.c.l.b16 %v7003
        %v7139 = vunpack.c.l.b16 %v7004
        %v7140 = vunpack.c.l.b16 %v7005
        %v7141 = vpack.c.b16 %v7078, %v7077
        %v7142 = vpack.c.b16 %v7080, %v7079
        %v7143 = vpack.c.b16 %v7082, %v7081
        %v7144 = vpack.c.b16 %v7084, %v7083
        %v7145 = vpack.c.b16 %v7086, %v7085
        %v7146 = vpack.c.b16 %v7088, %v7087
        %v7147 = vpack.c.b16 %v7090, %v7089
        %v7148 = vpack.c.b16 %v7092, %v7091
        %v7149 = vpack.c.b16 %v7094, %v7093
        %v7150 = vpack.c.b16 %v7096, %v7095
        %v7151 = vpack.c.b16 %v7098, %v7097
        %v7152 = vpack.c.b16 %v7100, %v7099
        %v7153 = vpack.c.b16 %v7102, %v7101
        %v7154 = vpack.c.b16 %v7104, %v7103
        %v7155 = vpack.c.b16 %v7106, %v7105
        %v7156 = vpack.c.b16 %v7108, %v7107
        %v7157 = vpack.c.b16 %v7110, %v7109
        %v7158 = vpack.c.b16 %v7112, %v7111
        %v7159 = vpack.c.b16 %v7114, %v7113
        %v7160 = vpack.c.b16 %v7116, %v7115
        %v7161 = vpack.c.b16 %v7118, %v7117
        %v7162 = vpack.c.b16 %v7120, %v7119
        %v7163 = vpack.c.b16 %v7122, %v7121
        %v7164 = vpack.c.b16 %v7124, %v7123
        %v7165 = vpack.c.b16 %v7126, %v7125
        %v7166 = vpack.c.b16 %v7128, %v7127
        %v7167 = vpack.c.b16 %v7130, %v7129
        %v7168 = vpack.c.b16 %v7132, %v7131
        %v7169 = vpack.c.b16 %v7134, %v7133
        %v7170 = vpack.c.b16 %v7136, %v7135
        %v7171 = vpack.c.b16 %v7138, %v7137
        %v7172 = vpack.c.b16 %v7140, %v7139
        %7205 = vmatprep.subr.bf16.mxu0 0
        %7206 = vmatpush1.bf16.msra.mxu0 %v7141
        %7207 = vmatprep.subr.bf16.mxu0 0
        %7208 = vmatpush1.bf16.msra.mxu0 %v7142
        %7209 = vmatprep.subr.bf16.mxu0 0
        %7210 = vmatpush1.bf16.msra.mxu0 %v7143
        %7211 = vmatprep.subr.bf16.mxu0 0
        %7212 = vmatpush1.bf16.msra.mxu0 %v7144
        %7213 = vmatprep.subr.bf16.mxu0 0
        %7214 = vmatpush1.bf16.msra.mxu0 %v7145
        %7215 = vmatprep.subr.bf16.mxu0 0
        %7216 = vmatpush1.bf16.msra.mxu0 %v7146
        %7217 = vmatprep.subr.bf16.mxu0 0
        %7218 = vmatpush1.bf16.msra.mxu0 %v7147
        %7219 = vmatprep.subr.bf16.mxu0 0
        %7220 = vmatpush1.bf16.msra.mxu0 %v7148
        %7221 = vmatprep.subr.bf16.mxu0 0
        %7222 = vmatpush1.bf16.msra.mxu0 %v7149
        %7223 = vmatprep.subr.bf16.mxu0 0
        %7224 = vmatpush1.bf16.msra.mxu0 %v7150
        %7225 = vmatprep.subr.bf16.mxu0 0
        %7226 = vmatpush1.bf16.msra.mxu0 %v7151
        %7227 = vmatprep.subr.bf16.mxu0 0
        %7228 = vmatpush1.bf16.msra.mxu0 %v7152
        %7229 = vmatprep.subr.bf16.mxu0 0
        %7230 = vmatpush1.bf16.msra.mxu0 %v7153
        %7231 = vmatprep.subr.bf16.mxu0 0
        %7232 = vmatpush1.bf16.msra.mxu0 %v7154
        %7233 = vmatprep.subr.bf16.mxu0 0
        %7234 = vmatpush1.bf16.msra.mxu0 %v7155
        %7235 = vmatprep.subr.bf16.mxu0 0
        %7236 = vmatpush1.bf16.msra.mxu0 %v7156
        %7237 = vmatprep.mubr.bf16.mxu0 %v6927
        %7238 = vmatmul.mubr.bf16.gmra.mrb[0].mxu0 %v6926
        %v7239 = vpop.f32.mrb[0].mxu0
        %v7240 = vadd.f32 %v7011, %v7239
        %v7241 = vpop.f32.mrb[0].mxu0
        %v7242 = vpop.f32.mrb[0].mxu0
        %v7243 = vadd.f32 %v7011, %v7242
        %v7244 = vpop.f32.mrb[0].mxu0
        %7245 = vmatprep.mubr.bf16.mxu0 %v6931
        %7246 = vmatmul.mubr.bf16.gmra.mrb[0].mxu0 %v6930
        %v7247 = vpop.f32.mrb[0].mxu0
        %v7248 = vadd.f32 %v7011, %v7247
        %v7249 = vpop.f32.mrb[0].mxu0
        %v7250 = vpop.f32.mrb[0].mxu0
        %v7251 = vadd.f32 %v7011, %v7250
        %v7252 = vpop.f32.mrb[0].mxu0
        %7253 = vmatprep.mubr.bf16.mxu0 %v6935
        %7254 = vmatmul.mubr.bf16.gmra.mrb[0].mxu0 %v6934
        %v7255 = vpop.f32.mrb[0].mxu0
        %v7256 = vadd.f32 %v7011, %v7255
        %v7257 = vpop.f32.mrb[0].mxu0
        %v7258 = vpop.f32.mrb[0].mxu0
        %v7259 = vadd.f32 %v7011, %v7258
        %v7260 = vpop.f32.mrb[0].mxu0
        %7261 = vmatprep.mubr.bf16.mxu0 %v6939
        %7262 = vmatmul.mubr.bf16.gmra.mrb[0].mxu0 %v6938
        %v7263 = vpop.f32.mrb[0].mxu0
        %v7264 = vadd.f32 %v7011, %v7263
        %v7265 = vpop.f32.mrb[0].mxu0
        %v7266 = vpop.f32.mrb[0].mxu0
        %v7267 = vadd.f32 %v7011, %v7266
        %v7268 = vpop.f32.mrb[0].mxu0
        %7269 = vdwg.mxu0
        %7270 = vmatprep.subr.bf16.mxu0 0
        %7271 = vmatpush1.bf16.msra.mxu0 %v7157
        %7272 = vmatprep.subr.bf16.mxu0 0
        %7273 = vmatpush1.bf16.msra.mxu0 %v7158
        %7274 = vmatprep.subr.bf16.mxu0 0
        %7275 = vmatpush1.bf16.msra.mxu0 %v7159
        %7276 = vmatprep.subr.bf16.mxu0 0
        %7277 = vmatpush1.bf16.msra.mxu0 %v7160
        %7278 = vmatprep.subr.bf16.mxu0 0
        %7279 = vmatpush1.bf16.msra.mxu0 %v7161
        %7280 = vmatprep.subr.bf16.mxu0 0
        %7281 = vmatpush1.bf16.msra.mxu0 %v7162
        %7282 = vmatprep.subr.bf16.mxu0 0
        %7283 = vmatpush1.bf16.msra.mxu0 %v7163
        %7284 = vmatprep.subr.bf16.mxu0 0
        %7285 = vmatpush1.bf16.msra.mxu0 %v7164
        %7286 = vmatprep.subr.bf16.mxu0 0
        %7287 = vmatpush1.bf16.msra.mxu0 %v7165
        %7288 = vmatprep.subr.bf16.mxu0 0
        %7289 = vmatpush1.bf16.msra.mxu0 %v7166
        %7290 = vmatprep.subr.bf16.mxu0 0
        %7291 = vmatpush1.bf16.msra.mxu0 %v7167
        %7292 = vmatprep.subr.bf16.mxu0 0
        %7293 = vmatpush1.bf16.msra.mxu0 %v7168
        %7294 = vmatprep.subr.bf16.mxu0 0
        %7295 = vmatpush1.bf16.msra.mxu0 %v7169
        %7296 = vmatprep.subr.bf16.mxu0 0
        %7297 = vmatpush1.bf16.msra.mxu0 %v7170
        %7298 = vmatprep.subr.bf16.mxu0 0
        %7299 = vmatpush1.bf16.msra.mxu0 %v7171
        %7300 = vmatprep.subr.bf16.mxu0 0
        %7301 = vmatpush1.bf16.msra.mxu0 %v7172
        %7302 = vmatprep.mubr.bf16.mxu0 %v6929
        %7303 = vmatmul.mubr.bf16.gmra.mrb[0].mxu0 %v6928
        %v7304 = vpop.f32.mrb[0].mxu0
        %v7305 = vadd.f32 %v7240, %v7304
        %v7306 = vpop.f32.mrb[0].mxu0
        %v7307 = vpop.f32.mrb[0].mxu0
        %v7308 = vadd.f32 %v7243, %v7307
        %v7309 = vpop.f32.mrb[0].mxu0
        %7310 = vmatprep.mubr.bf16.mxu0 %v6933
        %7311 = vmatmul.mubr.bf16.gmra.mrb[0].mxu0 %v6932
        %v7312 = vpop.f32.mrb[0].mxu0
        %v7313 = vadd.f32 %v7248, %v7312
        %v7314 = vpop.f32.mrb[0].mxu0
        %v7315 = vpop.f32.mrb[0].mxu0
        %v7316 = vadd.f32 %v7251, %v7315
        %v7317 = vpop.f32.mrb[0].mxu0
        %7318 = vmatprep.mubr.bf16.mxu0 %v6937
        %7319 = vmatmul.mubr.bf16.gmra.mrb[0].mxu0 %v6936
        %v7320 = vpop.f32.mrb[0].mxu0
        %v7321 = vadd.f32 %v7256, %v7320
        %v7322 = vpop.f32.mrb[0].mxu0
        %v7323 = vpop.f32.mrb[0].mxu0
        %v7324 = vadd.f32 %v7259, %v7323
        %v7325 = vpop.f32.mrb[0].mxu0
        %7326 = vmatprep.mubr.bf16.mxu0 %v6941
        %7327 = vmatmul.mubr.bf16.gmra.mrb[0].mxu0 %v6940
        %v7328 = vpop.f32.mrb[0].mxu0
        %v7329 = vadd.f32 %v7264, %v7328
        %v7330 = vpop.f32.mrb[0].mxu0
        %v7331 = vpop.f32.mrb[0].mxu0
        %v7332 = vadd.f32 %v7267, %v7331
        %v7333 = vpop.f32.mrb[0].mxu0
        %7334 = vdwg.mxu0
        %v7335 = vadd.f32 %v7305, %v6522
        %v7336 = vadd.f32 %v7308, %v6523
        %v7337 = vadd.f32 %v7313, %v6524
        %v7338 = vadd.f32 %v7316, %v6525
        %v7339 = vadd.f32 %v7321, %v6526
        %v7340 = vadd.f32 %v7324, %v6527
        %v7341 = vadd.f32 %v7329, %v6528
        %v7342 = vadd.f32 %v7332, %v6529
        %v7343 = vld [vmem:[%s20] sm:$0x1]
        %v7344 = vld [vmem:[%s21] sm:$0x1]
        %7345 = vadd.xlane.f32.xlu0 %v7335
        %v7346 = vpop.xlane.xlu0 %7345
        %7347 = vadd.xlane.f32.xlu0 %v7336
        %v7348 = vpop.xlane.xlu0 %7347
        %7349 = vadd.xlane.f32.xlu0 %v7337
        %v7350 = vpop.xlane.xlu0 %7349
        %7351 = vadd.xlane.f32.xlu0 %v7338
        %v7352 = vpop.xlane.xlu0 %7351
        %7353 = vadd.xlane.f32.xlu0 %v7339
        %v7354 = vpop.xlane.xlu0 %7353
        %7355 = vadd.xlane.f32.xlu0 %v7340
        %v7356 = vpop.xlane.xlu0 %7355
        %7357 = vadd.xlane.f32.xlu0 %v7341
        %v7358 = vpop.xlane.xlu0 %7357
        %7359 = vadd.xlane.f32.xlu0 %v7342
        %v7360 = vpop.xlane.xlu0 %7359
        %v7361 = vmul.f32 %v7346, %v3595
        %v7362 = vmul.f32 %v7348, %v3595
        %v7363 = vmul.f32 %v7350, %v3595
        %v7364 = vmul.f32 %v7352, %v3595
        %v7365 = vmul.f32 %v7354, %v3595
        %v7366 = vmul.f32 %v7356, %v3595
        %v7367 = vmul.f32 %v7358, %v3595
        %v7368 = vmul.f32 %v7360, %v3595
        %v7369 = vsub.f32 %v7335, %v7361
        %v7370 = vsub.f32 %v7336, %v7362
        %v7371 = vsub.f32 %v7337, %v7363
        %v7372 = vsub.f32 %v7338, %v7364
        %v7373 = vsub.f32 %v7339, %v7365
        %v7374 = vsub.f32 %v7340, %v7366
        %v7375 = vsub.f32 %v7341, %v7367
        %v7376 = vsub.f32 %v7342, %v7368
        %v7377 = vmul.f32 %v7369, %v7369
        %v7378 = vmul.f32 %v7370, %v7370
        %v7379 = vmul.f32 %v7371, %v7371
        %v7380 = vmul.f32 %v7372, %v7372
        %v7381 = vmul.f32 %v7373, %v7373
        %v7382 = vmul.f32 %v7374, %v7374
        %v7383 = vmul.f32 %v7375, %v7375
        %v7384 = vmul.f32 %v7376, %v7376
        %7385 = vadd.xlane.f32.xlu0 %v7377
        %v7386 = vpop.xlane.xlu0 %7385
        %7387 = vadd.xlane.f32.xlu0 %v7378
        %v7388 = vpop.xlane.xlu0 %7387
        %7389 = vadd.xlane.f32.xlu0 %v7379
        %v7390 = vpop.xlane.xlu0 %7389
        %7391 = vadd.xlane.f32.xlu0 %v7380
        %v7392 = vpop.xlane.xlu0 %7391
        %7393 = vadd.xlane.f32.xlu0 %v7381
        %v7394 = vpop.xlane.xlu0 %7393
        %7395 = vadd.xlane.f32.xlu0 %v7382
        %v7396 = vpop.xlane.xlu0 %7395
        %7397 = vadd.xlane.f32.xlu0 %v7383
        %v7398 = vpop.xlane.xlu0 %7397
        %7399 = vadd.xlane.f32.xlu0 %v7384
        %v7400 = vpop.xlane.xlu0 %7399
        %v7401 = vmul.f32 %v7386, %v3595
        %v7402 = vmul.f32 %v7388, %v3595
        %v7403 = vmul.f32 %v7390, %v3595
        %v7404 = vmul.f32 %v7392, %v3595
        %v7405 = vmul.f32 %v7394, %v3595
        %v7406 = vmul.f32 %v7396, %v3595
        %v7407 = vmul.f32 %v7398, %v3595
        %v7408 = vmul.f32 %v7400, %v3595
        %v7409 = vadd.f32 %v7401, 1e-05
        %v7410 = vadd.f32 %v7402, 1e-05
        %v7411 = vadd.f32 %v7403, 1e-05
        %v7412 = vadd.f32 %v7404, 1e-05
        %v7413 = vadd.f32 %v7405, 1e-05
        %v7414 = vadd.f32 %v7406, 1e-05
        %v7415 = vadd.f32 %v7407, 1e-05
        %v7416 = vadd.f32 %v7408, 1e-05
        %v7417 = vrsqrt.pop %v7409
        %v7418 = vrsqrt.pop %v7410
        %v7419 = vrsqrt.pop %v7411
        %v7420 = vrsqrt.pop %v7412
        %v7421 = vrsqrt.pop %v7413
        %v7422 = vrsqrt.pop %v7414
        %v7423 = vrsqrt.pop %v7415
        %v7424 = vrsqrt.pop %v7416
        %v7425 = vmul.f32 %v7369, %v7417
        %v7426 = vmul.f32 %v7370, %v7418
        %v7427 = vmul.f32 %v7371, %v7419
        %v7428 = vmul.f32 %v7372, %v7420
        %v7429 = vmul.f32 %v7373, %v7421
        %v7430 = vmul.f32 %v7374, %v7422
        %v7431 = vmul.f32 %v7375, %v7423
        %v7432 = vmul.f32 %v7376, %v7424
        %v7434 = vlaneseq
        %v7435 = vshrl.u32 %v7434, 7
        %v7436 = vsub.s32 0, %v7435
        %v7437 = vrot.slane %v7343, %v7436
        %v7439 = vmul.f32 %v7425, %v7437
        %v7440 = vmul.f32 %v7426, %v7437
        %v7441 = vmul.f32 %v7427, %v7437
        %v7442 = vmul.f32 %v7428, %v7437
        %v7443 = vmul.f32 %v7429, %v7437
        %v7444 = vmul.f32 %v7430, %v7437
        %v7445 = vmul.f32 %v7431, %v7437
        %v7446 = vmul.f32 %v7432, %v7437
        %v7448 = vlaneseq
        %v7449 = vshrl.u32 %v7448, 7
        %v7450 = vsub.s32 0, %v7449
        %v7451 = vrot.slane %v7344, %v7450
        %v7453 = vadd.f32 %v7439, %v7451
        %v7454 = vadd.f32 %v7440, %v7451
        %v7455 = vadd.f32 %v7441, %v7451
        %v7456 = vadd.f32 %v7442, %v7451
        %v7457 = vadd.f32 %v7443, %v7451
        %v7458 = vadd.f32 %v7444, %v7451
        %v7459 = vadd.f32 %v7445, %v7451
        %v7460 = vadd.f32 %v7446, %v7451
        %7461 = vst [vmem:[%s844] sm:$0xff] %v7453
        %7462 = vst [vmem:[%s844 + $0x8] sm:$0xff] %v7454
        %7463 = vst [vmem:[%s844 + $0x10] sm:$0xff] %v7455
        %7464 = vst [vmem:[%s844 + $0x18] sm:$0xff] %v7456
        %7465 = vst [vmem:[%s844 + $0x20] sm:$0xff] %v7457
        %7466 = vst [vmem:[%s844 + $0x28] sm:$0xff] %v7458
        %7467 = vst [vmem:[%s844 + $0x30] sm:$0xff] %v7459
        %7468 = vst [vmem:[%s844 + $0x38] sm:$0xff] %v7460
        %s7469 = sand.u32 %s525, 1
        %s7470 = scalar_lea.sflag [#allocation4], %s7469
        %s7471 = sand.u32 %s525, 1
        %s7472 = smul.addr %s7471, 64
        %s7473 = scalar_lea.vmem [#allocation17], %s7472
        // Predicated region
        $region145: #{tpu_custom_call.1} parent=107 // pred_check
          %p7474 = pneg %p535
        $region146: #{tpu_custom_call.1} parent=107 // pred_check_branch
          %7476 = sbr.rel (%p7474) target = $region148
        $region147: #{tpu_custom_call.1} parent=107 // pred_region
          %s7477 = smul.u32 4, %s45
          %s7479 = ssub.s32 1024, 1024
          %7480 = vsyncadd %s7470, %s7479
          %s7481 = smul.addr %s7477, 2
          %s7482 = smul.addr %s7481, 128
          %s7483 = scalar_lea.hbm %s22, %s7482
          %s7484 = sshll.u32 %s7473, 4
          %s7485 = int_to_ptr.vmem [resolvable:$true] %s7484
          %7490 = dma.vmem_to_hbm [thread:$0]  %s7485, 1024, %s7483, %s7470, 128, 128, 8
        $region148: #{tpu_custom_call.1} parent=107 // pred_fallthru
          _
      $region108: #{tpu_custom_call.1} parent=5 // pred_fallthru
        _
      %p7491 = scmp.le.s32.totalorder 2, %s40
      // Predicated region
      $region149: #{tpu_custom_call.1} parent=5 // pred_check
        %p7492 = pneg %p7491
      $region150: #{tpu_custom_call.1} parent=5 // pred_check_branch
        %7494 = sbr.rel (%p7492) target = $region152
      $region151: #{tpu_custom_call.1} parent=5 // pred_region
        %s7495 = ssub.s32 %s40, 2
        // Predicated region
        $region153: #{tpu_custom_call.1} parent=151 // pred_check
          %p7496 = pneg %p541
        $region154: #{tpu_custom_call.1} parent=151 // pred_check_branch
          %7498 = sbr.rel (%p7496) target = $region156
        $region155: #{tpu_custom_call.1} parent=151 // pred_region
          %s7499 = sand.u32 %s526, 1
          %s7500 = scalar_lea.sflag [#allocation4], %s7499
          %s7501 = sand.u32 %s526, 1
          %s7502 = smul.addr %s7501, 64
          %s7503 = scalar_lea.vmem [#allocation17], %s7502
          %7504 = dma.done %s7500, 1024
        $region156: #{tpu_custom_call.1} parent=151 // pred_fallthru
          _
      $region152: #{tpu_custom_call.1} parent=5 // pred_fallthru
        _
    $region6: #{tpu_custom_call.1} parent=1 // loop_footer
      %s44 = sadd.s32 1, %s40
    $region7: #{tpu_custom_call.1} parent=1 // loop_footer_branch
      %39 = sbr.rel target = $region3
    $region8: #{tpu_custom_call.1} parent=1 // loop_exit
      _
    %7505 = vsyncpa [#allocation3], 1
    %s7506 = scalar_lea.sflag [#allocation3], 1
    %7507 = vsyncpa %s7506, 1
    %7508 = vsyncpa [#allocation6], 1
    %s7509 = scalar_lea.sflag [#allocation6], 1
    %7510 = vsyncpa %s7509, 1
    %7511 = vsyncpa [#allocation9], 1
    %7512 = vsyncpa [#allocation12], 1
    %7513 = vsyncpa [#allocation15], 1
    %7514 = vsyncpa [#allocation4], 1
    %s7515 = scalar_lea.sflag [#allocation4], 1
    %7516 = vsyncpa %s7515, 1

</llo_original>
